<compile_context>
chip_gen: v7x
topology: tpu7x:2x2x1
jax: 0.10.0
libtpu: 0.0.40
codegen_flags: <defaults>
</compile_context>

<pallas_src>
import functools

import numpy as np
import jax
import jax.numpy as jnp
from jax.experimental import pallas as pl
from jax.experimental.pallas import tpu as pltpu

LANE = 128
NEG_SLOPE = 0.01
BN_EPS = 1e-5
VMEM_LIMIT_BYTES = 16 * 1024 * 1024


def _rup(c, m=LANE):
    return ((c + m - 1) // m) * m


def _leaky(x):
    # LeakyReLU(0.01) == max(x, 0.01*x) for slope in (0, 1).
    return jnp.maximum(x, NEG_SLOPE * x)


def _const_spec(shape):
    nd = len(shape)
    return pl.BlockSpec(shape, lambda i, _nd=nd: (0,) * _nd)


# ----------------------------------------------------------------------------
# In-kernel helpers (operate on register/VMEM values only)
# ----------------------------------------------------------------------------
def _pad_rows(x):
    """Add one zero halo row at each end of the length (sublane) axis."""
    z = jnp.zeros((1, x.shape[1]), x.dtype)
    return jnp.concatenate([z, x, z], axis=0)


def _conv_patch(slab, l_out, k):
    """im2col by lane concatenation: slab (l_out+k-1, C) -> (l_out, k*C).

    Column block j holds tap j, matching the (K*CinP, CoutP) weight layout.
    """
    return jnp.concatenate([slab[j:j + l_out, :] for j in range(k)], axis=1)


def _residual_block(x, w1, b1, w2, b2, wsc, bsc, sel):
    """BasicBlock1D: conv3(s)+BN+LeakyReLU -> conv3(1)+BN, residual, LeakyReLU.

    x: (L_in, Cin) f32 with zero-padded channel lanes.  BN is pre-folded into
    the bf16 weights / f32 biases.  `sel` (L_out, L_in) bf16 one-hot rows
    implement the stride-2 row subsampling as one exact MXU dot; None == s1.
    """
    l_in, cin = x.shape
    l_out = sel.shape[0] if sel is not None else l_in

    slab = _pad_rows(x)                                        # (L_in+2, Cin)
    patch = _conv_patch(slab.astype(jnp.bfloat16), l_in, 3)    # stride-1 taps
    if sel is not None:                                        # stride-2 rows
        patch = jnp.dot(sel, patch,
                        preferred_element_type=jnp.float32).astype(jnp.bfloat16)

    # conv1 + BN1 + LeakyReLU  (single K=3*Cin dot)
    h1 = _leaky(jnp.dot(patch, w1, preferred_element_type=jnp.float32) + b1)
    # TODO(synk): dropout between conv1 and conv2 is identity at inference.

    # conv2 + BN2 (k=3, stride 1, pad 1); halo via zero-row concat (no shift
    # matmuls, no iota masks).
    patch2 = _conv_patch(_pad_rows(h1.astype(jnp.bfloat16)), l_out, 3)
    h2 = jnp.dot(patch2, w2, preferred_element_type=jnp.float32) + b2

    # shortcut: the 1x1 conv reads x[stride*l], which is exactly tap-1 lanes
    # of the (already subsampled) patch.
    if wsc is not None:
        sc = jnp.dot(patch[:, cin:2 * cin], wsc,
                     preferred_element_type=jnp.float32) + bsc
    else:
        sc = x                                                 # identity (f32)
    return _leaky(h2 + sc)


def _fused_kernel(*refs, block_flags):
    """Whole network for one batch element: stem + blocks + pool + heads."""
    x_ref, *w_refs, out_ref = refs
    it = iter(w_refs)

    def nxt():
        return next(it)[...]

    # ---- stem: Conv1d(k=7, s=2, p=3) + BN1 + LeakyReLU ----------------------
    w0, b0, sel0 = nxt(), nxt(), nxt()
    xb = x_ref[0].astype(jnp.bfloat16)          # (L + 6, CinP), zero halo rows
    cin_p = xb.shape[1]
    k_stem = w0.shape[0] // cin_p
    patch = _conv_patch(xb, sel0.shape[1], k_stem)
    patch = jnp.dot(sel0, patch,
                    preferred_element_type=jnp.float32).astype(jnp.bfloat16)
    h = _leaky(jnp.dot(patch, w0, preferred_element_type=jnp.float32) + b0)

    # ---- residual blocks (layer1..layer4) -----------------------------------
    for has_sc, has_sel in block_flags:
        w1, b1, w2, b2 = nxt(), nxt(), nxt(), nxt()
        wsc = nxt() if has_sc else None
        bsc = nxt() if has_sc else None
        sel = nxt() if has_sel else None
        h = _residual_block(h, w1, b1, w2, b2, wsc, bsc, sel)

    # ---- AttentionPool + tanh heads ------------------------------------------
    wq, bq, wf, bf, wo, bo = nxt(), nxt(), nxt(), nxt(), nxt(), nxt()
    s = jnp.dot(h, wq, preferred_element_type=jnp.float32) + bq       # (L, 1)
    s = s - jnp.max(s, axis=0, keepdims=True)
    e = jnp.exp(s)
    a = e / jnp.sum(e, axis=0, keepdims=True)                         # softmax over L
    pooled = jnp.sum(h * a, axis=0, keepdims=True)                    # (1, C)
    freq = jnp.tanh(jnp.dot(pooled, wf, preferred_element_type=jnp.float32) + bf)
    off = jnp.tanh(jnp.dot(pooled, wo, preferred_element_type=jnp.float32) + bo)
    out_ref[0] = jnp.concatenate([freq, off], axis=0)                 # (2, P_pad)


# ----------------------------------------------------------------------------
# pallas_call wrapper (single fused call for the whole network)
# ----------------------------------------------------------------------------
def _fused_call(x_pad, prep):
    n, l_pad, cin_p = x_pad.shape
    arrays = [x_pad]
    specs = [pl.BlockSpec((1, l_pad, cin_p), lambda i: (i, 0, 0))]

    def add(a):
        arrays.append(a)
        specs.append(_const_spec(a.shape))

    stem = prep["stem"]
    add(stem["w"]); add(stem["b"]); add(stem["sel"])

    block_flags = []
    for blk in prep["blocks"]:
        add(blk["w1"]); add(blk["b1"]); add(blk["w2"]); add(blk["b2"])
        if blk["wsc"] is not None:
            add(blk["wsc"]); add(blk["bsc"])
        if blk["sel"] is not None:
            add(blk["sel"])
        block_flags.append((blk["wsc"] is not None, blk["sel"] is not None))

    for name in ("wq", "bq", "wf", "bf", "wo", "bo"):
        add(prep[name])

    p_pad = prep["wf"].shape[-1]
    kernel = functools.partial(_fused_kernel, block_flags=tuple(block_flags))
    return pl.pallas_call(
        kernel,
        out_shape=jax.ShapeDtypeStruct((n, 2, p_pad), jnp.float32),
        grid=(n,),
        in_specs=specs,
        out_specs=pl.BlockSpec((1, 2, p_pad), lambda i: (i, 0, 0)),
        compiler_params=pltpu.CompilerParams(
            # batch on the grid so v7x's two TensorCores each take a sample;
            # on single-core v5e/v6e the extra grid step costs <1 us.
            dimension_semantics=("parallel",),
            vmem_limit_bytes=VMEM_LIMIT_BYTES),
    )(*arrays)


def forward(x_ncl, prep, num_predictions):
    # PyTorch NCL -> channels-last (N, L, C); add the stem halo (k=7, pad=3)
    # and zero-pad channels to a lane-dense multiple of 128 once, up front.
    x = jnp.transpose(x_ncl, (0, 2, 1)).astype(jnp.float32)
    x = jnp.pad(x, ((0, 0), (3, 3), (0, prep["cin_pad"] - x.shape[-1])))
    out = _fused_call(x, prep)                                  # (N, 2, P_pad)
    freq = out[:, 0, :num_predictions]
    off = out[:, 1, :num_predictions]
    return jnp.stack([freq, off], axis=-1)                      # (N, P, 2)


# ----------------------------------------------------------------------------
# One-time parameter preparation (BN folding, transpose, padding, bf16, sel)
# ----------------------------------------------------------------------------
def _fold_conv_bn(w, bn, cin_pad, cout_pad, eps=BN_EPS):
    """PyTorch Conv1d weight (Cout, Cin, K) + BN running stats ->
    ((K*CinP, CoutP) bf16 weight, (1, CoutP) f32 bias), zero-padded lanes."""
    cout, cin, k = w.shape
    scale = bn["gamma"] * jax.lax.rsqrt(bn["var"] + eps)
    bias = bn["beta"] - bn["mean"] * scale
    wf = jnp.transpose(w, (2, 1, 0)) * scale[None, None, :]      # (K, Cin, Cout)
    wf = jnp.pad(wf, ((0, 0), (0, cin_pad - cin), (0, cout_pad - cout)))
    wf = wf.reshape(k * cin_pad, cout_pad)
    b = jnp.pad(bias, (0, cout_pad - cout)).reshape(1, cout_pad)
    return wf.astype(jnp.bfloat16), b.astype(jnp.float32)


def _pad_linear(lin, cin_pad, cout_pad):
    wt = jnp.transpose(lin["w"])                                 # (Cin, Cout)
    cin, cout = wt.shape
    wt = jnp.pad(wt, ((0, cin_pad - cin), (0, cout_pad - cout)))
    b = jnp.pad(lin["b"], (0, cout_pad - cout)).reshape(1, cout_pad)
    return wt.astype(jnp.float32), b.astype(jnp.float32)


def _sel_matrix(l_out, l_full, stride):
    sel = np.zeros((l_out, l_full), np.float32)
    sel[np.arange(l_out), stride * np.arange(l_out)] = 1.0
    return jnp.asarray(sel, dtype=jnp.bfloat16)


def prepare_params(params, num_predictions, input_len):
    cin = params["conv1_w"].shape[1]
    cout0 = params["conv1_w"].shape[0]
    cin_pad = _rup(cin)
    prep = {"cin_pad": cin_pad}

    # stem: k=7, stride=2, pad=3
    l_full = input_len + 2 * 3 - 7 + 1
    l_cur = (l_full - 1) // 2 + 1
    w0, b0 = _fold_conv_bn(params["conv1_w"], params["bn1"], cin_pad, _rup(cout0))
    prep["stem"] = {"w": w0, "b": b0, "sel": _sel_matrix(l_cur, l_full, 2)}

    blocks = []
    c_pad = _rup(cout0)
    for layer in params["layers"]:
        for blk in layer:
            stride = blk["stride"]
            cout_pad = _rup(blk["conv1_w"].shape[0])
            l_out = (l_cur - 1) // stride + 1           # k=3, pad=1
            w1, b1 = _fold_conv_bn(blk["conv1_w"], blk["bn1"], c_pad, cout_pad)
            w2, b2 = _fold_conv_bn(blk["conv2_w"], blk["bn2"], cout_pad, cout_pad)
            entry = {"w1": w1, "b1": b1, "w2": w2, "b2": b2,
                     "wsc": None, "bsc": None, "sel": None}
            if blk["shortcut"] is not None:
                entry["wsc"], entry["bsc"] = _fold_conv_bn(
                    blk["shortcut"]["w"], blk["shortcut"]["bn"], c_pad, cout_pad)
            if stride != 1:
                entry["sel"] = _sel_matrix(l_out, l_cur, stride)
            blocks.append(entry)
            l_cur, c_pad = l_out, cout_pad
    prep["blocks"] = blocks

    p_pad = _rup(num_predictions)
    prep["wq"], prep["bq"] = _pad_linear(params["pool"], c_pad, 1)
    prep["wf"], prep["bf"] = _pad_linear(params["freq"], c_pad, p_pad)
    prep["wo"], prep["bo"] = _pad_linear(params["offset"], c_pad, p_pad)
    return prep


# ----------------------------------------------------------------------------
# Deterministic parameter initialization (shapes from the module's __init__)
# ----------------------------------------------------------------------------
def init_params(key, num_output_features=2, num_predictions=1,
                num_blocks=(1, 1, 1, 1)):
    keys = iter(jax.random.split(key, 256))

    def nk():
        return next(keys)

    def conv_w(cout, cin, k):
        return jax.random.normal(nk(), (cout, cin, k), jnp.float32) * (
            1.0 / np.sqrt(cin * k))

    def bn(c):
        return {
            "gamma": 1.0 + 0.1 * jax.random.normal(nk(), (c,), jnp.float32),
            "beta": 0.1 * jax.random.normal(nk(), (c,), jnp.float32),
            "mean": 0.1 * jax.random.normal(nk(), (c,), jnp.float32),
            "var": 1.0 + 0.1 * jnp.abs(jax.random.normal(nk(), (c,), jnp.float32)),
        }

    def linear(cin, cout):
        return {
            "w": jax.random.normal(nk(), (cout, cin), jnp.float32)
            * (1.0 / np.sqrt(cin)),
            "b": 0.1 * jax.random.normal(nk(), (cout,), jnp.float32),
        }

    params = {"conv1_w": conv_w(64, 2, 7), "bn1": bn(64)}

    in_planes = 64
    layer_specs = [(64, num_blocks[0], 1), (128, num_blocks[1], 2),
                   (256, num_blocks[2], 2),
                   (num_output_features, num_blocks[3], 2)]
    layers = []
    for planes, nb, stride in layer_specs:
        strides = [stride] + [1] * (nb - 1)
        blks = []
        for s in strides:
            blk = {
                "stride": s,
                "conv1_w": conv_w(planes, in_planes, 3),
                "bn1": bn(planes),
                "conv2_w": conv_w(planes, planes, 3),
                "bn2": bn(planes),
            }
            if s != 1 or in_planes != planes:
                blk["shortcut"] = {"w": conv_w(planes, in_planes, 1),
                                   "bn": bn(planes)}
            else:
                blk["shortcut"] = None
            blks.append(blk)
            in_planes = planes
        layers.append(blks)
    params["layers"] = layers

    params["pool"] = linear(num_output_features, 1)                  # AttentionPool.query
    params["freq"] = linear(num_output_features, num_predictions)    # freq_head
    params["offset"] = linear(num_output_features, num_predictions)  # offset_head
    return params


# ----------------------------------------------------------------------------
# Pure-XLA f32 reference (same assumed block semantics) for a sanity check
# ----------------------------------------------------------------------------
def _reference_forward(x, params, num_predictions):
    def conv1d(h, w, stride, pad):
        return jax.lax.conv_general_dilated(
            h, w, window_strides=(stride,), padding=[(pad, pad)],
            dimension_numbers=("NCH", "OIH", "NCH"))

    def bnorm(h, p):
        s = p["gamma"] / jnp.sqrt(p["var"] + BN_EPS)
        return (h - p["mean"][None, :, None]) * s[None, :, None] + p["beta"][None, :, None]

    def leaky(h):
        return jnp.where(h >= 0, h, NEG_SLOPE * h)

    h = leaky(bnorm(conv1d(x, params["conv1_w"], 2, 3), params["bn1"]))
    for layer in params["layers"]:
        for blk in layer:
            y = leaky(bnorm(conv1d(h, blk["conv1_w"], blk["stride"], 1), blk["bn1"]))
            y = bnorm(conv1d(y, blk["conv2_w"], 1, 1), blk["bn2"])
            if blk["shortcut"] is not None:
                sc = bnorm(conv1d(h, blk["shortcut"]["w"], blk["stride"], 0),
                           blk["shortcut"]["bn"])
            else:
                sc = h
            h = leaky(y + sc)
    scores = jnp.einsum("ncl,c->nl", h, params["pool"]["w"][0]) + params["pool"]["b"][0]
    a = jax.nn.softmax(scores, axis=1)
    pooled = jnp.einsum("ncl,nl->nc", h, a)
    freq = jnp.tanh(pooled @ params["freq"]["w"].T + params["freq"]["b"])
    off = jnp.tanh(pooled @ params["offset"]["w"].T + params["offset"]["b"])
    return jnp.stack([freq, off], axis=-1).reshape(-1, num_predictions, 2)


# ----------------------------------------------------------------------------
if __name__ == "__main__":
    key = jax.random.PRNGKey(0)
    k_param, k_in = jax.random.split(key)

    num_output_features = 2
    num_predictions = 1
    raw_params = init_params(k_param, num_output_features, num_predictions,
                             num_blocks=(1, 1, 1, 1))

    # Input matches PyTorch Conv1d(in_channels=2, ...): shape (N, C=2, L)
    N, C_in, L = 2, 2, 64
    x = jax.random.normal(k_in, (N, C_in, L), jnp.float32)

    prep = prepare_params(raw_params, num_predictions, input_len=L)
    fwd = jax.jit(lambda inp: forward(inp, prep, num_predictions))
    out = jax.block_until_ready(fwd(x))

    assert out.shape == (N, num_predictions, 2), out.shape
    assert bool(jnp.all(jnp.isfinite(out)))

    ref = _reference_forward(x, raw_params, num_predictions)
    max_err = float(jnp.max(jnp.abs(out - ref)))
    assert max_err < 1e-1, max_err   # bf16 MXU path vs f32 reference

    print("KERNEL_OK")
</pallas_src>

<mosaic_0001>
module attributes {stable_mosaic.version = 11 : i64} {
  func.func @_fused_kernel(%arg0: i32, %arg1: memref<1x70x128xf32, #tpu.memory_space<vmem>>, %arg2: memref<896x128xbf16, #tpu.memory_space<vmem>>, %arg3: memref<1x128xf32, #tpu.memory_space<vmem>>, %arg4: memref<32x64xbf16, #tpu.memory_space<vmem>>, %arg5: memref<384x128xbf16, #tpu.memory_space<vmem>>, %arg6: memref<1x128xf32, #tpu.memory_space<vmem>>, %arg7: memref<384x128xbf16, #tpu.memory_space<vmem>>, %arg8: memref<1x128xf32, #tpu.memory_space<vmem>>, %arg9: memref<384x128xbf16, #tpu.memory_space<vmem>>, %arg10: memref<1x128xf32, #tpu.memory_space<vmem>>, %arg11: memref<384x128xbf16, #tpu.memory_space<vmem>>, %arg12: memref<1x128xf32, #tpu.memory_space<vmem>>, %arg13: memref<128x128xbf16, #tpu.memory_space<vmem>>, %arg14: memref<1x128xf32, #tpu.memory_space<vmem>>, %arg15: memref<16x32xbf16, #tpu.memory_space<vmem>>, %arg16: memref<384x256xbf16, #tpu.memory_space<vmem>>, %arg17: memref<1x256xf32, #tpu.memory_space<vmem>>, %arg18: memref<768x256xbf16, #tpu.memory_space<vmem>>, %arg19: memref<1x256xf32, #tpu.memory_space<vmem>>, %arg20: memref<128x256xbf16, #tpu.memory_space<vmem>>, %arg21: memref<1x256xf32, #tpu.memory_space<vmem>>, %arg22: memref<8x16xbf16, #tpu.memory_space<vmem>>, %arg23: memref<768x128xbf16, #tpu.memory_space<vmem>>, %arg24: memref<1x128xf32, #tpu.memory_space<vmem>>, %arg25: memref<384x128xbf16, #tpu.memory_space<vmem>>, %arg26: memref<1x128xf32, #tpu.memory_space<vmem>>, %arg27: memref<256x128xbf16, #tpu.memory_space<vmem>>, %arg28: memref<1x128xf32, #tpu.memory_space<vmem>>, %arg29: memref<4x8xbf16, #tpu.memory_space<vmem>>, %arg30: memref<128x1xf32, #tpu.memory_space<vmem>>, %arg31: memref<1x1xf32, #tpu.memory_space<vmem>>, %arg32: memref<128x128xf32, #tpu.memory_space<vmem>>, %arg33: memref<1x128xf32, #tpu.memory_space<vmem>>, %arg34: memref<128x128xf32, #tpu.memory_space<vmem>>, %arg35: memref<1x128xf32, #tpu.memory_space<vmem>>, %arg36: memref<1x2x128xf32, #tpu.memory_space<vmem>>) attributes {dimension_semantics = [#tpu.dimension_semantics<parallel>], iteration_bounds = array<i64: 2>, scalar_prefetch = 0 : i64, scratch_operands = 0 : i64, tpu.core_type = #tpu.core_type<tc>, window_params = [{transform_indices = @transform_0, window_bounds = array<i64: 1, 70, 128>}, {pipeline_mode = #tpu.pipeline_mode<synchronous>, transform_indices = @transform_1, window_bounds = array<i64: 896, 128>}, {pipeline_mode = #tpu.pipeline_mode<synchronous>, transform_indices = @transform_2, window_bounds = array<i64: 1, 128>}, {pipeline_mode = #tpu.pipeline_mode<synchronous>, transform_indices = @transform_3, window_bounds = array<i64: 32, 64>}, {pipeline_mode = #tpu.pipeline_mode<synchronous>, transform_indices = @transform_4, window_bounds = array<i64: 384, 128>}, {pipeline_mode = #tpu.pipeline_mode<synchronous>, transform_indices = @transform_5, window_bounds = array<i64: 1, 128>}, {pipeline_mode = #tpu.pipeline_mode<synchronous>, transform_indices = @transform_6, window_bounds = array<i64: 384, 128>}, {pipeline_mode = #tpu.pipeline_mode<synchronous>, transform_indices = @transform_7, window_bounds = array<i64: 1, 128>}, {pipeline_mode = #tpu.pipeline_mode<synchronous>, transform_indices = @transform_8, window_bounds = array<i64: 384, 128>}, {pipeline_mode = #tpu.pipeline_mode<synchronous>, transform_indices = @transform_9, window_bounds = array<i64: 1, 128>}, {pipeline_mode = #tpu.pipeline_mode<synchronous>, transform_indices = @transform_10, window_bounds = array<i64: 384, 128>}, {pipeline_mode = #tpu.pipeline_mode<synchronous>, transform_indices = @transform_11, window_bounds = array<i64: 1, 128>}, {pipeline_mode = #tpu.pipeline_mode<synchronous>, transform_indices = @transform_12, window_bounds = array<i64: 128, 128>}, {pipeline_mode = #tpu.pipeline_mode<synchronous>, transform_indices = @transform_13, window_bounds = array<i64: 1, 128>}, {pipeline_mode = #tpu.pipeline_mode<synchronous>, transform_indices = @transform_14, window_bounds = array<i64: 16, 32>}, {pipeline_mode = #tpu.pipeline_mode<synchronous>, transform_indices = @transform_15, window_bounds = array<i64: 384, 256>}, {pipeline_mode = #tpu.pipeline_mode<synchronous>, transform_indices = @transform_16, window_bounds = array<i64: 1, 256>}, {pipeline_mode = #tpu.pipeline_mode<synchronous>, transform_indices = @transform_17, window_bounds = array<i64: 768, 256>}, {pipeline_mode = #tpu.pipeline_mode<synchronous>, transform_indices = @transform_18, window_bounds = array<i64: 1, 256>}, {pipeline_mode = #tpu.pipeline_mode<synchronous>, transform_indices = @transform_19, window_bounds = array<i64: 128, 256>}, {pipeline_mode = #tpu.pipeline_mode<synchronous>, transform_indices = @transform_20, window_bounds = array<i64: 1, 256>}, {pipeline_mode = #tpu.pipeline_mode<synchronous>, transform_indices = @transform_21, window_bounds = array<i64: 8, 16>}, {pipeline_mode = #tpu.pipeline_mode<synchronous>, transform_indices = @transform_22, window_bounds = array<i64: 768, 128>}, {pipeline_mode = #tpu.pipeline_mode<synchronous>, transform_indices = @transform_23, window_bounds = array<i64: 1, 128>}, {pipeline_mode = #tpu.pipeline_mode<synchronous>, transform_indices = @transform_24, window_bounds = array<i64: 384, 128>}, {pipeline_mode = #tpu.pipeline_mode<synchronous>, transform_indices = @transform_25, window_bounds = array<i64: 1, 128>}, {pipeline_mode = #tpu.pipeline_mode<synchronous>, transform_indices = @transform_26, window_bounds = array<i64: 256, 128>}, {pipeline_mode = #tpu.pipeline_mode<synchronous>, transform_indices = @transform_27, window_bounds = array<i64: 1, 128>}, {pipeline_mode = #tpu.pipeline_mode<synchronous>, transform_indices = @transform_28, window_bounds = array<i64: 4, 8>}, {pipeline_mode = #tpu.pipeline_mode<synchronous>, transform_indices = @transform_29, window_bounds = array<i64: 128, 1>}, {pipeline_mode = #tpu.pipeline_mode<synchronous>, transform_indices = @transform_30, window_bounds = array<i64: 1, 1>}, {pipeline_mode = #tpu.pipeline_mode<synchronous>, transform_indices = @transform_31, window_bounds = array<i64: 128, 128>}, {pipeline_mode = #tpu.pipeline_mode<synchronous>, transform_indices = @transform_32, window_bounds = array<i64: 1, 128>}, {pipeline_mode = #tpu.pipeline_mode<synchronous>, transform_indices = @transform_33, window_bounds = array<i64: 128, 128>}, {pipeline_mode = #tpu.pipeline_mode<synchronous>, transform_indices = @transform_34, window_bounds = array<i64: 1, 128>}, {transform_indices = @transform_35, window_bounds = array<i64: 1, 2, 128>}]} {
    %c0 = arith.constant 0 : index
    %c0_0 = arith.constant 0 : index
    %0 = vector.load %arg2[%c0, %c0_0] : memref<896x128xbf16, #tpu.memory_space<vmem>>, vector<896x128xbf16>
    %c0_1 = arith.constant 0 : index
    %c0_2 = arith.constant 0 : index
    %1 = vector.load %arg3[%c0_1, %c0_2] : memref<1x128xf32, #tpu.memory_space<vmem>>, vector<1x128xf32>
    %c0_3 = arith.constant 0 : index
    %c0_4 = arith.constant 0 : index
    %2 = vector.load %arg4[%c0_3, %c0_4] : memref<32x64xbf16, #tpu.memory_space<vmem>>, vector<32x64xbf16>
    %c0_5 = arith.constant 0 : index
    %c0_6 = arith.constant 0 : index
    %c0_7 = arith.constant 0 : index
    %3 = vector.load %arg1[%c0_5, %c0_6, %c0_7] : memref<1x70x128xf32, #tpu.memory_space<vmem>>, vector<1x70x128xf32>
    %4 = vector.shape_cast %3 : vector<1x70x128xf32> to vector<70x128xf32>
    %5 = arith.truncf %4 : vector<70x128xf32> to vector<70x128xbf16>
    %6 = vector.extract_strided_slice %5 {offsets = [0, 0], sizes = [64, 128], strides = [1, 1]} : vector<70x128xbf16> to vector<64x128xbf16>
    %7 = vector.extract_strided_slice %5 {offsets = [1, 0], sizes = [64, 128], strides = [1, 1]} : vector<70x128xbf16> to vector<64x128xbf16>
    %8 = vector.extract_strided_slice %5 {offsets = [2, 0], sizes = [64, 128], strides = [1, 1]} : vector<70x128xbf16> to vector<64x128xbf16>
    %9 = vector.extract_strided_slice %5 {offsets = [3, 0], sizes = [64, 128], strides = [1, 1]} : vector<70x128xbf16> to vector<64x128xbf16>
    %10 = vector.extract_strided_slice %5 {offsets = [4, 0], sizes = [64, 128], strides = [1, 1]} : vector<70x128xbf16> to vector<64x128xbf16>
    %11 = vector.extract_strided_slice %5 {offsets = [5, 0], sizes = [64, 128], strides = [1, 1]} : vector<70x128xbf16> to vector<64x128xbf16>
    %12 = vector.extract_strided_slice %5 {offsets = [6, 0], sizes = [64, 128], strides = [1, 1]} : vector<70x128xbf16> to vector<64x128xbf16>
    %13 = tpu.concatenate %6, %7, %8, %9, %10, %11, %12 in 1 : vector<64x128xbf16>, vector<64x128xbf16>, vector<64x128xbf16>, vector<64x128xbf16>, vector<64x128xbf16>, vector<64x128xbf16>, vector<64x128xbf16> -> vector<64x896xbf16>
    %cst = arith.constant dense<0.000000e+00> : vector<32x896xf32>
    %14 = tpu.matmul %2, %13, %cst {dimension_numbers = #tpu.dot_dimension_numbers<[1], [0], [0], [1], [0, 0, 1, 1], [], []>} : vector<32x64xbf16>, vector<64x896xbf16>, vector<32x896xf32> -> vector<32x896xf32>
    %15 = arith.truncf %14 : vector<32x896xf32> to vector<32x896xbf16>
    %cst_8 = arith.constant dense<0.000000e+00> : vector<32x128xf32>
    %16 = tpu.matmul %15, %0, %cst_8 {dimension_numbers = #tpu.dot_dimension_numbers<[1], [0], [0], [1], [0, 0, 1, 1], [], []>} : vector<32x896xbf16>, vector<896x128xbf16>, vector<32x128xf32> -> vector<32x128xf32>
    %17 = vector.broadcast %1 : vector<1x128xf32> to vector<32x128xf32>
    %18 = arith.addf %16, %17 : vector<32x128xf32>
    %cst_9 = arith.constant 0.00999999977 : f32
    %19 = vector.broadcast %cst_9 : f32 to vector<32x128xf32>
    %20 = arith.mulf %19, %18 : vector<32x128xf32>
    %21 = arith.maximumf %18, %20 : vector<32x128xf32>
    %c0_10 = arith.constant 0 : index
    %c0_11 = arith.constant 0 : index
    %22 = vector.load %arg5[%c0_10, %c0_11] : memref<384x128xbf16, #tpu.memory_space<vmem>>, vector<384x128xbf16>
    %c0_12 = arith.constant 0 : index
    %c0_13 = arith.constant 0 : index
    %23 = vector.load %arg6[%c0_12, %c0_13] : memref<1x128xf32, #tpu.memory_space<vmem>>, vector<1x128xf32>
    %c0_14 = arith.constant 0 : index
    %c0_15 = arith.constant 0 : index
    %24 = vector.load %arg7[%c0_14, %c0_15] : memref<384x128xbf16, #tpu.memory_space<vmem>>, vector<384x128xbf16>
    %c0_16 = arith.constant 0 : index
    %c0_17 = arith.constant 0 : index
    %25 = vector.load %arg8[%c0_16, %c0_17] : memref<1x128xf32, #tpu.memory_space<vmem>>, vector<1x128xf32>
    %cst_18 = arith.constant 0.000000e+00 : f32
    %26 = vector.broadcast %cst_18 : f32 to vector<1x128xf32>
    %27 = tpu.concatenate %26, %21, %26 in 0 : vector<1x128xf32>, vector<32x128xf32>, vector<1x128xf32> -> vector<34x128xf32>
    %28 = arith.truncf %27 : vector<34x128xf32> to vector<34x128xbf16>
    %29 = vector.extract_strided_slice %28 {offsets = [0, 0], sizes = [32, 128], strides = [1, 1]} : vector<34x128xbf16> to vector<32x128xbf16>
    %30 = vector.extract_strided_slice %28 {offsets = [1, 0], sizes = [32, 128], strides = [1, 1]} : vector<34x128xbf16> to vector<32x128xbf16>
    %31 = vector.extract_strided_slice %28 {offsets = [2, 0], sizes = [32, 128], strides = [1, 1]} : vector<34x128xbf16> to vector<32x128xbf16>
    %32 = tpu.concatenate %29, %30, %31 in 1 : vector<32x128xbf16>, vector<32x128xbf16>, vector<32x128xbf16> -> vector<32x384xbf16>
    %cst_19 = arith.constant dense<0.000000e+00> : vector<32x128xf32>
    %33 = tpu.matmul %32, %22, %cst_19 {dimension_numbers = #tpu.dot_dimension_numbers<[1], [0], [0], [1], [0, 0, 1, 1], [], []>} : vector<32x384xbf16>, vector<384x128xbf16>, vector<32x128xf32> -> vector<32x128xf32>
    %34 = vector.broadcast %23 : vector<1x128xf32> to vector<32x128xf32>
    %35 = arith.addf %33, %34 : vector<32x128xf32>
    %cst_20 = arith.constant 0.00999999977 : f32
    %36 = vector.broadcast %cst_20 : f32 to vector<32x128xf32>
    %37 = arith.mulf %36, %35 : vector<32x128xf32>
    %38 = arith.maximumf %35, %37 : vector<32x128xf32>
    %39 = arith.truncf %38 : vector<32x128xf32> to vector<32x128xbf16>
    %cst_21 = arith.constant 0.000000e+00 : bf16
    %40 = vector.broadcast %cst_21 : bf16 to vector<1x128xbf16>
    %41 = tpu.concatenate %40, %39, %40 in 0 : vector<1x128xbf16>, vector<32x128xbf16>, vector<1x128xbf16> -> vector<34x128xbf16>
    %42 = vector.extract_strided_slice %41 {offsets = [0, 0], sizes = [32, 128], strides = [1, 1]} : vector<34x128xbf16> to vector<32x128xbf16>
    %43 = vector.extract_strided_slice %41 {offsets = [1, 0], sizes = [32, 128], strides = [1, 1]} : vector<34x128xbf16> to vector<32x128xbf16>
    %44 = vector.extract_strided_slice %41 {offsets = [2, 0], sizes = [32, 128], strides = [1, 1]} : vector<34x128xbf16> to vector<32x128xbf16>
    %45 = tpu.concatenate %42, %43, %44 in 1 : vector<32x128xbf16>, vector<32x128xbf16>, vector<32x128xbf16> -> vector<32x384xbf16>
    %cst_22 = arith.constant dense<0.000000e+00> : vector<32x128xf32>
    %46 = tpu.matmul %45, %24, %cst_22 {dimension_numbers = #tpu.dot_dimension_numbers<[1], [0], [0], [1], [0, 0, 1, 1], [], []>} : vector<32x384xbf16>, vector<384x128xbf16>, vector<32x128xf32> -> vector<32x128xf32>
    %47 = vector.broadcast %25 : vector<1x128xf32> to vector<32x128xf32>
    %48 = arith.addf %46, %47 : vector<32x128xf32>
    %49 = arith.addf %48, %21 : vector<32x128xf32>
    %cst_23 = arith.constant 0.00999999977 : f32
    %50 = vector.broadcast %cst_23 : f32 to vector<32x128xf32>
    %51 = arith.mulf %50, %49 : vector<32x128xf32>
    %52 = arith.maximumf %49, %51 : vector<32x128xf32>
    %c0_24 = arith.constant 0 : index
    %c0_25 = arith.constant 0 : index
    %53 = vector.load %arg9[%c0_24, %c0_25] : memref<384x128xbf16, #tpu.memory_space<vmem>>, vector<384x128xbf16>
    %c0_26 = arith.constant 0 : index
    %c0_27 = arith.constant 0 : index
    %54 = vector.load %arg10[%c0_26, %c0_27] : memref<1x128xf32, #tpu.memory_space<vmem>>, vector<1x128xf32>
    %c0_28 = arith.constant 0 : index
    %c0_29 = arith.constant 0 : index
    %55 = vector.load %arg11[%c0_28, %c0_29] : memref<384x128xbf16, #tpu.memory_space<vmem>>, vector<384x128xbf16>
    %c0_30 = arith.constant 0 : index
    %c0_31 = arith.constant 0 : index
    %56 = vector.load %arg12[%c0_30, %c0_31] : memref<1x128xf32, #tpu.memory_space<vmem>>, vector<1x128xf32>
    %c0_32 = arith.constant 0 : index
    %c0_33 = arith.constant 0 : index
    %57 = vector.load %arg13[%c0_32, %c0_33] : memref<128x128xbf16, #tpu.memory_space<vmem>>, vector<128x128xbf16>
    %c0_34 = arith.constant 0 : index
    %c0_35 = arith.constant 0 : index
    %58 = vector.load %arg14[%c0_34, %c0_35] : memref<1x128xf32, #tpu.memory_space<vmem>>, vector<1x128xf32>
    %c0_36 = arith.constant 0 : index
    %c0_37 = arith.constant 0 : index
    %59 = vector.load %arg15[%c0_36, %c0_37] : memref<16x32xbf16, #tpu.memory_space<vmem>>, vector<16x32xbf16>
    %cst_38 = arith.constant 0.000000e+00 : f32
    %60 = vector.broadcast %cst_38 : f32 to vector<1x128xf32>
    %61 = tpu.concatenate %60, %52, %60 in 0 : vector<1x128xf32>, vector<32x128xf32>, vector<1x128xf32> -> vector<34x128xf32>
    %62 = arith.truncf %61 : vector<34x128xf32> to vector<34x128xbf16>
    %63 = vector.extract_strided_slice %62 {offsets = [0, 0], sizes = [32, 128], strides = [1, 1]} : vector<34x128xbf16> to vector<32x128xbf16>
    %64 = vector.extract_strided_slice %62 {offsets = [1, 0], sizes = [32, 128], strides = [1, 1]} : vector<34x128xbf16> to vector<32x128xbf16>
    %65 = vector.extract_strided_slice %62 {offsets = [2, 0], sizes = [32, 128], strides = [1, 1]} : vector<34x128xbf16> to vector<32x128xbf16>
    %66 = tpu.concatenate %63, %64, %65 in 1 : vector<32x128xbf16>, vector<32x128xbf16>, vector<32x128xbf16> -> vector<32x384xbf16>
    %cst_39 = arith.constant dense<0.000000e+00> : vector<16x384xf32>
    %67 = tpu.matmul %59, %66, %cst_39 {dimension_numbers = #tpu.dot_dimension_numbers<[1], [0], [0], [1], [0, 0, 1, 1], [], []>} : vector<16x32xbf16>, vector<32x384xbf16>, vector<16x384xf32> -> vector<16x384xf32>
    %68 = arith.truncf %67 : vector<16x384xf32> to vector<16x384xbf16>
    %cst_40 = arith.constant dense<0.000000e+00> : vector<16x128xf32>
    %69 = tpu.matmul %68, %53, %cst_40 {dimension_numbers = #tpu.dot_dimension_numbers<[1], [0], [0], [1], [0, 0, 1, 1], [], []>} : vector<16x384xbf16>, vector<384x128xbf16>, vector<16x128xf32> -> vector<16x128xf32>
    %70 = vector.broadcast %54 : vector<1x128xf32> to vector<16x128xf32>
    %71 = arith.addf %69, %70 : vector<16x128xf32>
    %cst_41 = arith.constant 0.00999999977 : f32
    %72 = vector.broadcast %cst_41 : f32 to vector<16x128xf32>
    %73 = arith.mulf %72, %71 : vector<16x128xf32>
    %74 = arith.maximumf %71, %73 : vector<16x128xf32>
    %75 = arith.truncf %74 : vector<16x128xf32> to vector<16x128xbf16>
    %cst_42 = arith.constant 0.000000e+00 : bf16
    %76 = vector.broadcast %cst_42 : bf16 to vector<1x128xbf16>
    %77 = tpu.concatenate %76, %75, %76 in 0 : vector<1x128xbf16>, vector<16x128xbf16>, vector<1x128xbf16> -> vector<18x128xbf16>
    %78 = vector.extract_strided_slice %77 {offsets = [0, 0], sizes = [16, 128], strides = [1, 1]} : vector<18x128xbf16> to vector<16x128xbf16>
    %79 = vector.extract_strided_slice %77 {offsets = [1, 0], sizes = [16, 128], strides = [1, 1]} : vector<18x128xbf16> to vector<16x128xbf16>
    %80 = vector.extract_strided_slice %77 {offsets = [2, 0], sizes = [16, 128], strides = [1, 1]} : vector<18x128xbf16> to vector<16x128xbf16>
    %81 = tpu.concatenate %78, %79, %80 in 1 : vector<16x128xbf16>, vector<16x128xbf16>, vector<16x128xbf16> -> vector<16x384xbf16>
    %cst_43 = arith.constant dense<0.000000e+00> : vector<16x128xf32>
    %82 = tpu.matmul %81, %55, %cst_43 {dimension_numbers = #tpu.dot_dimension_numbers<[1], [0], [0], [1], [0, 0, 1, 1], [], []>} : vector<16x384xbf16>, vector<384x128xbf16>, vector<16x128xf32> -> vector<16x128xf32>
    %83 = vector.broadcast %56 : vector<1x128xf32> to vector<16x128xf32>
    %84 = arith.addf %82, %83 : vector<16x128xf32>
    %85 = vector.extract_strided_slice %68 {offsets = [0, 128], sizes = [16, 128], strides = [1, 1]} : vector<16x384xbf16> to vector<16x128xbf16>
    %cst_44 = arith.constant dense<0.000000e+00> : vector<16x128xf32>
    %86 = tpu.matmul %85, %57, %cst_44 {dimension_numbers = #tpu.dot_dimension_numbers<[1], [0], [0], [1], [0, 0, 1, 1], [], []>} : vector<16x128xbf16>, vector<128x128xbf16>, vector<16x128xf32> -> vector<16x128xf32>
    %87 = vector.broadcast %58 : vector<1x128xf32> to vector<16x128xf32>
    %88 = arith.addf %86, %87 : vector<16x128xf32>
    %89 = arith.addf %84, %88 : vector<16x128xf32>
    %cst_45 = arith.constant 0.00999999977 : f32
    %90 = vector.broadcast %cst_45 : f32 to vector<16x128xf32>
    %91 = arith.mulf %90, %89 : vector<16x128xf32>
    %92 = arith.maximumf %89, %91 : vector<16x128xf32>
    %c0_46 = arith.constant 0 : index
    %c0_47 = arith.constant 0 : index
    %93 = vector.load %arg16[%c0_46, %c0_47] : memref<384x256xbf16, #tpu.memory_space<vmem>>, vector<384x256xbf16>
    %c0_48 = arith.constant 0 : index
    %c0_49 = arith.constant 0 : index
    %94 = vector.load %arg17[%c0_48, %c0_49] : memref<1x256xf32, #tpu.memory_space<vmem>>, vector<1x256xf32>
    %c0_50 = arith.constant 0 : index
    %c0_51 = arith.constant 0 : index
    %95 = vector.load %arg18[%c0_50, %c0_51] : memref<768x256xbf16, #tpu.memory_space<vmem>>, vector<768x256xbf16>
    %c0_52 = arith.constant 0 : index
    %c0_53 = arith.constant 0 : index
    %96 = vector.load %arg19[%c0_52, %c0_53] : memref<1x256xf32, #tpu.memory_space<vmem>>, vector<1x256xf32>
    %c0_54 = arith.constant 0 : index
    %c0_55 = arith.constant 0 : index
    %97 = vector.load %arg20[%c0_54, %c0_55] : memref<128x256xbf16, #tpu.memory_space<vmem>>, vector<128x256xbf16>
    %c0_56 = arith.constant 0 : index
    %c0_57 = arith.constant 0 : index
    %98 = vector.load %arg21[%c0_56, %c0_57] : memref<1x256xf32, #tpu.memory_space<vmem>>, vector<1x256xf32>
    %c0_58 = arith.constant 0 : index
    %c0_59 = arith.constant 0 : index
    %99 = vector.load %arg22[%c0_58, %c0_59] : memref<8x16xbf16, #tpu.memory_space<vmem>>, vector<8x16xbf16>
    %cst_60 = arith.constant 0.000000e+00 : f32
    %100 = vector.broadcast %cst_60 : f32 to vector<1x128xf32>
    %101 = tpu.concatenate %100, %92, %100 in 0 : vector<1x128xf32>, vector<16x128xf32>, vector<1x128xf32> -> vector<18x128xf32>
    %102 = arith.truncf %101 : vector<18x128xf32> to vector<18x128xbf16>
    %103 = vector.extract_strided_slice %102 {offsets = [0, 0], sizes = [16, 128], strides = [1, 1]} : vector<18x128xbf16> to vector<16x128xbf16>
    %104 = vector.extract_strided_slice %102 {offsets = [1, 0], sizes = [16, 128], strides = [1, 1]} : vector<18x128xbf16> to vector<16x128xbf16>
    %105 = vector.extract_strided_slice %102 {offsets = [2, 0], sizes = [16, 128], strides = [1, 1]} : vector<18x128xbf16> to vector<16x128xbf16>
    %106 = tpu.concatenate %103, %104, %105 in 1 : vector<16x128xbf16>, vector<16x128xbf16>, vector<16x128xbf16> -> vector<16x384xbf16>
    %cst_61 = arith.constant dense<0.000000e+00> : vector<8x384xf32>
    %107 = tpu.matmul %99, %106, %cst_61 {dimension_numbers = #tpu.dot_dimension_numbers<[1], [0], [0], [1], [0, 0, 1, 1], [], []>} : vector<8x16xbf16>, vector<16x384xbf16>, vector<8x384xf32> -> vector<8x384xf32>
    %108 = arith.truncf %107 : vector<8x384xf32> to vector<8x384xbf16>
    %cst_62 = arith.constant dense<0.000000e+00> : vector<8x256xf32>
    %109 = tpu.matmul %108, %93, %cst_62 {dimension_numbers = #tpu.dot_dimension_numbers<[1], [0], [0], [1], [0, 0, 1, 1], [], []>} : vector<8x384xbf16>, vector<384x256xbf16>, vector<8x256xf32> -> vector<8x256xf32>
    %110 = vector.broadcast %94 : vector<1x256xf32> to vector<8x256xf32>
    %111 = arith.addf %109, %110 : vector<8x256xf32>
    %cst_63 = arith.constant 0.00999999977 : f32
    %112 = vector.broadcast %cst_63 : f32 to vector<8x256xf32>
    %113 = arith.mulf %112, %111 : vector<8x256xf32>
    %114 = arith.maximumf %111, %113 : vector<8x256xf32>
    %115 = arith.truncf %114 : vector<8x256xf32> to vector<8x256xbf16>
    %cst_64 = arith.constant 0.000000e+00 : bf16
    %116 = vector.broadcast %cst_64 : bf16 to vector<1x256xbf16>
    %117 = tpu.concatenate %116, %115, %116 in 0 : vector<1x256xbf16>, vector<8x256xbf16>, vector<1x256xbf16> -> vector<10x256xbf16>
    %118 = vector.extract_strided_slice %117 {offsets = [0, 0], sizes = [8, 256], strides = [1, 1]} : vector<10x256xbf16> to vector<8x256xbf16>
    %119 = vector.extract_strided_slice %117 {offsets = [1, 0], sizes = [8, 256], strides = [1, 1]} : vector<10x256xbf16> to vector<8x256xbf16>
    %120 = vector.extract_strided_slice %117 {offsets = [2, 0], sizes = [8, 256], strides = [1, 1]} : vector<10x256xbf16> to vector<8x256xbf16>
    %121 = tpu.concatenate %118, %119, %120 in 1 : vector<8x256xbf16>, vector<8x256xbf16>, vector<8x256xbf16> -> vector<8x768xbf16>
    %cst_65 = arith.constant dense<0.000000e+00> : vector<8x256xf32>
    %122 = tpu.matmul %121, %95, %cst_65 {dimension_numbers = #tpu.dot_dimension_numbers<[1], [0], [0], [1], [0, 0, 1, 1], [], []>} : vector<8x768xbf16>, vector<768x256xbf16>, vector<8x256xf32> -> vector<8x256xf32>
    %123 = vector.broadcast %96 : vector<1x256xf32> to vector<8x256xf32>
    %124 = arith.addf %122, %123 : vector<8x256xf32>
    %125 = vector.extract_strided_slice %108 {offsets = [0, 128], sizes = [8, 128], strides = [1, 1]} : vector<8x384xbf16> to vector<8x128xbf16>
    %cst_66 = arith.constant dense<0.000000e+00> : vector<8x256xf32>
    %126 = tpu.matmul %125, %97, %cst_66 {dimension_numbers = #tpu.dot_dimension_numbers<[1], [0], [0], [1], [0, 0, 1, 1], [], []>} : vector<8x128xbf16>, vector<128x256xbf16>, vector<8x256xf32> -> vector<8x256xf32>
    %127 = vector.broadcast %98 : vector<1x256xf32> to vector<8x256xf32>
    %128 = arith.addf %126, %127 : vector<8x256xf32>
    %129 = arith.addf %124, %128 : vector<8x256xf32>
    %cst_67 = arith.constant 0.00999999977 : f32
    %130 = vector.broadcast %cst_67 : f32 to vector<8x256xf32>
    %131 = arith.mulf %130, %129 : vector<8x256xf32>
    %132 = arith.maximumf %129, %131 : vector<8x256xf32>
    %c0_68 = arith.constant 0 : index
    %c0_69 = arith.constant 0 : index
    %133 = vector.load %arg23[%c0_68, %c0_69] : memref<768x128xbf16, #tpu.memory_space<vmem>>, vector<768x128xbf16>
    %c0_70 = arith.constant 0 : index
    %c0_71 = arith.constant 0 : index
    %134 = vector.load %arg24[%c0_70, %c0_71] : memref<1x128xf32, #tpu.memory_space<vmem>>, vector<1x128xf32>
    %c0_72 = arith.constant 0 : index
    %c0_73 = arith.constant 0 : index
    %135 = vector.load %arg25[%c0_72, %c0_73] : memref<384x128xbf16, #tpu.memory_space<vmem>>, vector<384x128xbf16>
    %c0_74 = arith.constant 0 : index
    %c0_75 = arith.constant 0 : index
    %136 = vector.load %arg26[%c0_74, %c0_75] : memref<1x128xf32, #tpu.memory_space<vmem>>, vector<1x128xf32>
    %c0_76 = arith.constant 0 : index
    %c0_77 = arith.constant 0 : index
    %137 = vector.load %arg27[%c0_76, %c0_77] : memref<256x128xbf16, #tpu.memory_space<vmem>>, vector<256x128xbf16>
    %c0_78 = arith.constant 0 : index
    %c0_79 = arith.constant 0 : index
    %138 = vector.load %arg28[%c0_78, %c0_79] : memref<1x128xf32, #tpu.memory_space<vmem>>, vector<1x128xf32>
    %c0_80 = arith.constant 0 : index
    %c0_81 = arith.constant 0 : index
    %139 = vector.load %arg29[%c0_80, %c0_81] : memref<4x8xbf16, #tpu.memory_space<vmem>>, vector<4x8xbf16>
    %cst_82 = arith.constant 0.000000e+00 : f32
    %140 = vector.broadcast %cst_82 : f32 to vector<1x256xf32>
    %141 = tpu.concatenate %140, %132, %140 in 0 : vector<1x256xf32>, vector<8x256xf32>, vector<1x256xf32> -> vector<10x256xf32>
    %142 = arith.truncf %141 : vector<10x256xf32> to vector<10x256xbf16>
    %143 = vector.extract_strided_slice %142 {offsets = [0, 0], sizes = [8, 256], strides = [1, 1]} : vector<10x256xbf16> to vector<8x256xbf16>
    %144 = vector.extract_strided_slice %142 {offsets = [1, 0], sizes = [8, 256], strides = [1, 1]} : vector<10x256xbf16> to vector<8x256xbf16>
    %145 = vector.extract_strided_slice %142 {offsets = [2, 0], sizes = [8, 256], strides = [1, 1]} : vector<10x256xbf16> to vector<8x256xbf16>
    %146 = tpu.concatenate %143, %144, %145 in 1 : vector<8x256xbf16>, vector<8x256xbf16>, vector<8x256xbf16> -> vector<8x768xbf16>
    %cst_83 = arith.constant dense<0.000000e+00> : vector<4x768xf32>
    %147 = tpu.matmul %139, %146, %cst_83 {dimension_numbers = #tpu.dot_dimension_numbers<[1], [0], [0], [1], [0, 0, 1, 1], [], []>} : vector<4x8xbf16>, vector<8x768xbf16>, vector<4x768xf32> -> vector<4x768xf32>
    %148 = arith.truncf %147 : vector<4x768xf32> to vector<4x768xbf16>
    %cst_84 = arith.constant dense<0.000000e+00> : vector<4x128xf32>
    %149 = tpu.matmul %148, %133, %cst_84 {dimension_numbers = #tpu.dot_dimension_numbers<[1], [0], [0], [1], [0, 0, 1, 1], [], []>} : vector<4x768xbf16>, vector<768x128xbf16>, vector<4x128xf32> -> vector<4x128xf32>
    %150 = vector.broadcast %134 : vector<1x128xf32> to vector<4x128xf32>
    %151 = arith.addf %149, %150 : vector<4x128xf32>
    %cst_85 = arith.constant 0.00999999977 : f32
    %152 = vector.broadcast %cst_85 : f32 to vector<4x128xf32>
    %153 = arith.mulf %152, %151 : vector<4x128xf32>
    %154 = arith.maximumf %151, %153 : vector<4x128xf32>
    %155 = arith.truncf %154 : vector<4x128xf32> to vector<4x128xbf16>
    %cst_86 = arith.constant 0.000000e+00 : bf16
    %156 = vector.broadcast %cst_86 : bf16 to vector<1x128xbf16>
    %157 = tpu.concatenate %156, %155, %156 in 0 : vector<1x128xbf16>, vector<4x128xbf16>, vector<1x128xbf16> -> vector<6x128xbf16>
    %158 = vector.extract_strided_slice %157 {offsets = [0, 0], sizes = [4, 128], strides = [1, 1]} : vector<6x128xbf16> to vector<4x128xbf16>
    %159 = vector.extract_strided_slice %157 {offsets = [1, 0], sizes = [4, 128], strides = [1, 1]} : vector<6x128xbf16> to vector<4x128xbf16>
    %160 = vector.extract_strided_slice %157 {offsets = [2, 0], sizes = [4, 128], strides = [1, 1]} : vector<6x128xbf16> to vector<4x128xbf16>
    %161 = tpu.concatenate %158, %159, %160 in 1 : vector<4x128xbf16>, vector<4x128xbf16>, vector<4x128xbf16> -> vector<4x384xbf16>
    %cst_87 = arith.constant dense<0.000000e+00> : vector<4x128xf32>
    %162 = tpu.matmul %161, %135, %cst_87 {dimension_numbers = #tpu.dot_dimension_numbers<[1], [0], [0], [1], [0, 0, 1, 1], [], []>} : vector<4x384xbf16>, vector<384x128xbf16>, vector<4x128xf32> -> vector<4x128xf32>
    %163 = vector.broadcast %136 : vector<1x128xf32> to vector<4x128xf32>
    %164 = arith.addf %162, %163 : vector<4x128xf32>
    %165 = vector.extract_strided_slice %148 {offsets = [0, 256], sizes = [4, 256], strides = [1, 1]} : vector<4x768xbf16> to vector<4x256xbf16>
    %cst_88 = arith.constant dense<0.000000e+00> : vector<4x128xf32>
    %166 = tpu.matmul %165, %137, %cst_88 {dimension_numbers = #tpu.dot_dimension_numbers<[1], [0], [0], [1], [0, 0, 1, 1], [], []>} : vector<4x256xbf16>, vector<256x128xbf16>, vector<4x128xf32> -> vector<4x128xf32>
    %167 = vector.broadcast %138 : vector<1x128xf32> to vector<4x128xf32>
    %168 = arith.addf %166, %167 : vector<4x128xf32>
    %169 = arith.addf %164, %168 : vector<4x128xf32>
    %cst_89 = arith.constant 0.00999999977 : f32
    %170 = vector.broadcast %cst_89 : f32 to vector<4x128xf32>
    %171 = arith.mulf %170, %169 : vector<4x128xf32>
    %172 = arith.maximumf %169, %171 : vector<4x128xf32>
    %c0_90 = arith.constant 0 : index
    %c0_91 = arith.constant 0 : index
    %173 = vector.load %arg30[%c0_90, %c0_91] : memref<128x1xf32, #tpu.memory_space<vmem>>, vector<128x1xf32>
    %c0_92 = arith.constant 0 : index
    %c0_93 = arith.constant 0 : index
    %174 = vector.load %arg31[%c0_92, %c0_93] : memref<1x1xf32, #tpu.memory_space<vmem>>, vector<1x1xf32>
    %c0_94 = arith.constant 0 : index
    %c0_95 = arith.constant 0 : index
    %175 = vector.load %arg32[%c0_94, %c0_95] : memref<128x128xf32, #tpu.memory_space<vmem>>, vector<128x128xf32>
    %c0_96 = arith.constant 0 : index
    %c0_97 = arith.constant 0 : index
    %176 = vector.load %arg33[%c0_96, %c0_97] : memref<1x128xf32, #tpu.memory_space<vmem>>, vector<1x128xf32>
    %c0_98 = arith.constant 0 : index
    %c0_99 = arith.constant 0 : index
    %177 = vector.load %arg34[%c0_98, %c0_99] : memref<128x128xf32, #tpu.memory_space<vmem>>, vector<128x128xf32>
    %c0_100 = arith.constant 0 : index
    %c0_101 = arith.constant 0 : index
    %178 = vector.load %arg35[%c0_100, %c0_101] : memref<1x128xf32, #tpu.memory_space<vmem>>, vector<1x128xf32>
    %cst_102 = arith.constant dense<0.000000e+00> : vector<4x1xf32>
    %179 = tpu.matmul %172, %173, %cst_102 {dimension_numbers = #tpu.dot_dimension_numbers<[1], [0], [0], [1], [0, 0, 1, 1], [], []>} : vector<4x128xf32>, vector<128x1xf32>, vector<4x1xf32> -> vector<4x1xf32>
    %180 = vector.broadcast %174 : vector<1x1xf32> to vector<4x1xf32>
    %181 = arith.addf %179, %180 : vector<4x1xf32>
    %cst_103 = arith.constant dense<0xFF800000> : vector<1xf32>
    %182 = vector.multi_reduction <maximumf>, %181, %cst_103 [0] : vector<4x1xf32> to vector<1xf32>
    %183 = vector.shape_cast %182 : vector<1xf32> to vector<1x1xf32>
    %184 = vector.broadcast %183 : vector<1x1xf32> to vector<4x1xf32>
    %185 = arith.subf %181, %184 : vector<4x1xf32>
    %186 = math.exp %185 : vector<4x1xf32>
    %cst_104 = arith.constant dense<0.000000e+00> : vector<1xf32>
    %187 = vector.multi_reduction <add>, %186, %cst_104 [0] : vector<4x1xf32> to vector<1xf32>
    %188 = vector.shape_cast %187 : vector<1xf32> to vector<1x1xf32>
    %189 = vector.broadcast %188 : vector<1x1xf32> to vector<4x1xf32>
    %190 = arith.divf %186, %189 : vector<4x1xf32>
    %191 = vector.broadcast %190 : vector<4x1xf32> to vector<4x128xf32>
    %192 = arith.mulf %172, %191 : vector<4x128xf32>
    %cst_105 = arith.constant dense<0.000000e+00> : vector<128xf32>
    %193 = vector.multi_reduction <add>, %192, %cst_105 [0] : vector<4x128xf32> to vector<128xf32>
    %194 = vector.shape_cast %193 : vector<128xf32> to vector<1x128xf32>
    %cst_106 = arith.constant dense<0.000000e+00> : vector<1x128xf32>
    %195 = tpu.matmul %194, %175, %cst_106 {dimension_numbers = #tpu.dot_dimension_numbers<[1], [0], [0], [1], [0, 0, 1, 1], [], []>} : vector<1x128xf32>, vector<128x128xf32>, vector<1x128xf32> -> vector<1x128xf32>
    %196 = arith.addf %195, %176 : vector<1x128xf32>
    %197 = math.tanh %196 : vector<1x128xf32>
    %cst_107 = arith.constant dense<0.000000e+00> : vector<1x128xf32>
    %198 = tpu.matmul %194, %177, %cst_107 {dimension_numbers = #tpu.dot_dimension_numbers<[1], [0], [0], [1], [0, 0, 1, 1], [], []>} : vector<1x128xf32>, vector<128x128xf32>, vector<1x128xf32> -> vector<1x128xf32>
    %199 = arith.addf %198, %178 : vector<1x128xf32>
    %200 = math.tanh %199 : vector<1x128xf32>
    %201 = tpu.concatenate %197, %200 in 0 : vector<1x128xf32>, vector<1x128xf32> -> vector<2x128xf32>
    %c0_108 = arith.constant 0 : index
    %c0_109 = arith.constant 0 : index
    %c0_110 = arith.constant 0 : index
    %202 = vector.load %arg36[%c0_108, %c0_109, %c0_110] : memref<1x2x128xf32, #tpu.memory_space<vmem>>, vector<1x2x128xf32>
    %203 = vector.shape_cast %202 : vector<1x2x128xf32> to vector<2x128xf32>
    %204 = vector.shape_cast %201 : vector<2x128xf32> to vector<1x2x128xf32>
    tpu.vector_store %arg36[%c0_108, %c0_109, %c0_110], %204 {strides = array<i32>} : memref<1x2x128xf32, #tpu.memory_space<vmem>>, vector<1x2x128xf32>,
    return
  }
  func.func @transform_0(%arg0: i32) -> (i32, i32, i32) {
    %c0_i32 = arith.constant 0 : i32
    %c0_i32_0 = arith.constant 0 : i32
    %c0_i32_1 = arith.constant 0 : i32
    return %arg0, %c0_i32, %c0_i32_0 : i32, i32, i32
  }
  func.func @transform_1(%arg0: i32) -> (i32, i32) {
    %c0_i32 = arith.constant 0 : i32
    %c0_i32_0 = arith.constant 0 : i32
    %c0_i32_1 = arith.constant 0 : i32
    return %c0_i32, %c0_i32_0 : i32, i32
  }
  func.func @transform_2(%arg0: i32) -> (i32, i32) {
    %c0_i32 = arith.constant 0 : i32
    %c0_i32_0 = arith.constant 0 : i32
    %c0_i32_1 = arith.constant 0 : i32
    return %c0_i32, %c0_i32_0 : i32, i32
  }
  func.func @transform_3(%arg0: i32) -> (i32, i32) {
    %c0_i32 = arith.constant 0 : i32
    %c0_i32_0 = arith.constant 0 : i32
    %c0_i32_1 = arith.constant 0 : i32
    return %c0_i32, %c0_i32_0 : i32, i32
  }
  func.func @transform_4(%arg0: i32) -> (i32, i32) {
    %c0_i32 = arith.constant 0 : i32
    %c0_i32_0 = arith.constant 0 : i32
    %c0_i32_1 = arith.constant 0 : i32
    return %c0_i32, %c0_i32_0 : i32, i32
  }
  func.func @transform_5(%arg0: i32) -> (i32, i32) {
    %c0_i32 = arith.constant 0 : i32
    %c0_i32_0 = arith.constant 0 : i32
    %c0_i32_1 = arith.constant 0 : i32
    return %c0_i32, %c0_i32_0 : i32, i32
  }
  func.func @transform_6(%arg0: i32) -> (i32, i32) {
    %c0_i32 = arith.constant 0 : i32
    %c0_i32_0 = arith.constant 0 : i32
    %c0_i32_1 = arith.constant 0 : i32
    return %c0_i32, %c0_i32_0 : i32, i32
  }
  func.func @transform_7(%arg0: i32) -> (i32, i32) {
    %c0_i32 = arith.constant 0 : i32
    %c0_i32_0 = arith.constant 0 : i32
    %c0_i32_1 = arith.constant 0 : i32
    return %c0_i32, %c0_i32_0 : i32, i32
  }
  func.func @transform_8(%arg0: i32) -> (i32, i32) {
    %c0_i32 = arith.constant 0 : i32
    %c0_i32_0 = arith.constant 0 : i32
    %c0_i32_1 = arith.constant 0 : i32
    return %c0_i32, %c0_i32_0 : i32, i32
  }
  func.func @transform_9(%arg0: i32) -> (i32, i32) {
    %c0_i32 = arith.constant 0 : i32
    %c0_i32_0 = arith.constant 0 : i32
    %c0_i32_1 = arith.constant 0 : i32
    return %c0_i32, %c0_i32_0 : i32, i32
  }
  func.func @transform_10(%arg0: i32) -> (i32, i32) {
    %c0_i32 = arith.constant 0 : i32
    %c0_i32_0 = arith.constant 0 : i32
    %c0_i32_1 = arith.constant 0 : i32
    return %c0_i32, %c0_i32_0 : i32, i32
  }
  func.func @transform_11(%arg0: i32) -> (i32, i32) {
    %c0_i32 = arith.constant 0 : i32
    %c0_i32_0 = arith.constant 0 : i32
    %c0_i32_1 = arith.constant 0 : i32
    return %c0_i32, %c0_i32_0 : i32, i32
  }
  func.func @transform_12(%arg0: i32) -> (i32, i32) {
    %c0_i32 = arith.constant 0 : i32
    %c0_i32_0 = arith.constant 0 : i32
    %c0_i32_1 = arith.constant 0 : i32
    return %c0_i32, %c0_i32_0 : i32, i32
  }
  func.func @transform_13(%arg0: i32) -> (i32, i32) {
    %c0_i32 = arith.constant 0 : i32
    %c0_i32_0 = arith.constant 0 : i32
    %c0_i32_1 = arith.constant 0 : i32
    return %c0_i32, %c0_i32_0 : i32, i32
  }
  func.func @transform_14(%arg0: i32) -> (i32, i32) {
    %c0_i32 = arith.constant 0 : i32
    %c0_i32_0 = arith.constant 0 : i32
    %c0_i32_1 = arith.constant 0 : i32
    return %c0_i32, %c0_i32_0 : i32, i32
  }
  func.func @transform_15(%arg0: i32) -> (i32, i32) {
    %c0_i32 = arith.constant 0 : i32
    %c0_i32_0 = arith.constant 0 : i32
    %c0_i32_1 = arith.constant 0 : i32
    return %c0_i32, %c0_i32_0 : i32, i32
  }
  func.func @transform_16(%arg0: i32) -> (i32, i32) {
    %c0_i32 = arith.constant 0 : i32
    %c0_i32_0 = arith.constant 0 : i32
    %c0_i32_1 = arith.constant 0 : i32
    return %c0_i32, %c0_i32_0 : i32, i32
  }
  func.func @transform_17(%arg0: i32) -> (i32, i32) {
    %c0_i32 = arith.constant 0 : i32
    %c0_i32_0 = arith.constant 0 : i32
    %c0_i32_1 = arith.constant 0 : i32
    return %c0_i32, %c0_i32_0 : i32, i32
  }
  func.func @transform_18(%arg0: i32) -> (i32, i32) {
    %c0_i32 = arith.constant 0 : i32
    %c0_i32_0 = arith.constant 0 : i32
    %c0_i32_1 = arith.constant 0 : i32
    return %c0_i32, %c0_i32_0 : i32, i32
  }
  func.func @transform_19(%arg0: i32) -> (i32, i32) {
    %c0_i32 = arith.constant 0 : i32
    %c0_i32_0 = arith.constant 0 : i32
    %c0_i32_1 = arith.constant 0 : i32
    return %c0_i32, %c0_i32_0 : i32, i32
  }
  func.func @transform_20(%arg0: i32) -> (i32, i32) {
    %c0_i32 = arith.constant 0 : i32
    %c0_i32_0 = arith.constant 0 : i32
    %c0_i32_1 = arith.constant 0 : i32
    return %c0_i32, %c0_i32_0 : i32, i32
  }
  func.func @transform_21(%arg0: i32) -> (i32, i32) {
    %c0_i32 = arith.constant 0 : i32
    %c0_i32_0 = arith.constant 0 : i32
    %c0_i32_1 = arith.constant 0 : i32
    return %c0_i32, %c0_i32_0 : i32, i32
  }
  func.func @transform_22(%arg0: i32) -> (i32, i32) {
    %c0_i32 = arith.constant 0 : i32
    %c0_i32_0 = arith.constant 0 : i32
    %c0_i32_1 = arith.constant 0 : i32
    return %c0_i32, %c0_i32_0 : i32, i32
  }
  func.func @transform_23(%arg0: i32) -> (i32, i32) {
    %c0_i32 = arith.constant 0 : i32
    %c0_i32_0 = arith.constant 0 : i32
    %c0_i32_1 = arith.constant 0 : i32
    return %c0_i32, %c0_i32_0 : i32, i32
  }
  func.func @transform_24(%arg0: i32) -> (i32, i32) {
    %c0_i32 = arith.constant 0 : i32
    %c0_i32_0 = arith.constant 0 : i32
    %c0_i32_1 = arith.constant 0 : i32
    return %c0_i32, %c0_i32_0 : i32, i32
  }
  func.func @transform_25(%arg0: i32) -> (i32, i32) {
    %c0_i32 = arith.constant 0 : i32
    %c0_i32_0 = arith.constant 0 : i32
    %c0_i32_1 = arith.constant 0 : i32
    return %c0_i32, %c0_i32_0 : i32, i32
  }
  func.func @transform_26(%arg0: i32) -> (i32, i32) {
    %c0_i32 = arith.constant 0 : i32
    %c0_i32_0 = arith.constant 0 : i32
    %c0_i32_1 = arith.constant 0 : i32
    return %c0_i32, %c0_i32_0 : i32, i32
  }
  func.func @transform_27(%arg0: i32) -> (i32, i32) {
    %c0_i32 = arith.constant 0 : i32
    %c0_i32_0 = arith.constant 0 : i32
    %c0_i32_1 = arith.constant 0 : i32
    return %c0_i32, %c0_i32_0 : i32, i32
  }
  func.func @transform_28(%arg0: i32) -> (i32, i32) {
    %c0_i32 = arith.constant 0 : i32
    %c0_i32_0 = arith.constant 0 : i32
    %c0_i32_1 = arith.constant 0 : i32
    return %c0_i32, %c0_i32_0 : i32, i32
  }
  func.func @transform_29(%arg0: i32) -> (i32, i32) {
    %c0_i32 = arith.constant 0 : i32
    %c0_i32_0 = arith.constant 0 : i32
    %c0_i32_1 = arith.constant 0 : i32
    return %c0_i32, %c0_i32_0 : i32, i32
  }
  func.func @transform_30(%arg0: i32) -> (i32, i32) {
    %c0_i32 = arith.constant 0 : i32
    %c0_i32_0 = arith.constant 0 : i32
    %c0_i32_1 = arith.constant 0 : i32
    return %c0_i32, %c0_i32_0 : i32, i32
  }
  func.func @transform_31(%arg0: i32) -> (i32, i32) {
    %c0_i32 = arith.constant 0 : i32
    %c0_i32_0 = arith.constant 0 : i32
    %c0_i32_1 = arith.constant 0 : i32
    return %c0_i32, %c0_i32_0 : i32, i32
  }
  func.func @transform_32(%arg0: i32) -> (i32, i32) {
    %c0_i32 = arith.constant 0 : i32
    %c0_i32_0 = arith.constant 0 : i32
    %c0_i32_1 = arith.constant 0 : i32
    return %c0_i32, %c0_i32_0 : i32, i32
  }
  func.func @transform_33(%arg0: i32) -> (i32, i32) {
    %c0_i32 = arith.constant 0 : i32
    %c0_i32_0 = arith.constant 0 : i32
    %c0_i32_1 = arith.constant 0 : i32
    return %c0_i32, %c0_i32_0 : i32, i32
  }
  func.func @transform_34(%arg0: i32) -> (i32, i32) {
    %c0_i32 = arith.constant 0 : i32
    %c0_i32_0 = arith.constant 0 : i32
    %c0_i32_1 = arith.constant 0 : i32
    return %c0_i32, %c0_i32_0 : i32, i32
  }
  func.func @transform_35(%arg0: i32) -> (i32, i32, i32) {
    %c0_i32 = arith.constant 0 : i32
    %c0_i32_0 = arith.constant 0 : i32
    %c0_i32_1 = arith.constant 0 : i32
    return %arg0, %c0_i32, %c0_i32_0 : i32, i32, i32
  }
}

</mosaic_0001>

<llo_original>
// kernel: _lambda_.1
$region0: #{_lambda_.1}
  #allocation0 [shape = 'u32[]', space=smem, size = 0x4, offset = 0x4, fixed_abs, tag = 'smem constant byte address 0x4 - core index']
  #allocation1 [shape = 'u32[144,128]{1,0:T(1,128)}', space=vmem, size = 0x12000, scoped, tag = 'internal scratch']
  #allocation2 [shape = 'f32[1,1]{1,0:T(1,128)S(1)}', space=vmem, size = 0x200, scoped, tag = 'scoped memory for _lambda_.1']
  %s0 = inlined_call_operand.smem [shape: u32[36], index: -1, kind: input, shape index: {}]
  %s1 = sld [smem:[%s0]]
  %s2 = scalar_lea.smem %s0, 1
  %s3 = sld [smem:[%s2]]
  %s4 = scalar_lea.smem %s0, 2
  %s5 = sld [smem:[%s4]]
  %s6 = scalar_lea.smem %s0, 3
  %s7 = sld [smem:[%s6]]
  %s8 = scalar_lea.smem %s0, 4
  %s9 = sld [smem:[%s8]]
  %s10 = scalar_lea.smem %s0, 5
  %s11 = sld [smem:[%s10]]
  %s12 = scalar_lea.smem %s0, 6
  %s13 = sld [smem:[%s12]]
  %s14 = scalar_lea.smem %s0, 7
  %s15 = sld [smem:[%s14]]
  %s16 = scalar_lea.smem %s0, 8
  %s17 = sld [smem:[%s16]]
  %s18 = scalar_lea.smem %s0, 9
  %s19 = sld [smem:[%s18]]
  %s20 = scalar_lea.smem %s0, 10
  %s21 = sld [smem:[%s20]]
  %s22 = scalar_lea.smem %s0, 11
  %s23 = sld [smem:[%s22]]
  %s24 = scalar_lea.smem %s0, 12
  %s25 = sld [smem:[%s24]]
  %s26 = scalar_lea.smem %s0, 13
  %s27 = sld [smem:[%s26]]
  %s28 = scalar_lea.smem %s0, 14
  %s29 = sld [smem:[%s28]]
  %s30 = scalar_lea.smem %s0, 15
  %s31 = sld [smem:[%s30]]
  %s32 = scalar_lea.smem %s0, 16
  %s33 = sld [smem:[%s32]]
  %s34 = scalar_lea.smem %s0, 17
  %s35 = sld [smem:[%s34]]
  %s36 = scalar_lea.smem %s0, 18
  %s37 = sld [smem:[%s36]]
  %s38 = scalar_lea.smem %s0, 19
  %s39 = sld [smem:[%s38]]
  %s40 = scalar_lea.smem %s0, 20
  %s41 = sld [smem:[%s40]]
  %s42 = scalar_lea.smem %s0, 21
  %s43 = sld [smem:[%s42]]
  %s44 = scalar_lea.smem %s0, 22
  %s45 = sld [smem:[%s44]]
  %s46 = scalar_lea.smem %s0, 23
  %s47 = sld [smem:[%s46]]
  %s48 = scalar_lea.smem %s0, 24
  %s49 = sld [smem:[%s48]]
  %s50 = scalar_lea.smem %s0, 25
  %s51 = sld [smem:[%s50]]
  %s52 = scalar_lea.smem %s0, 26
  %s53 = sld [smem:[%s52]]
  %s54 = scalar_lea.smem %s0, 27
  %s55 = sld [smem:[%s54]]
  %s56 = scalar_lea.smem %s0, 28
  %s57 = sld [smem:[%s56]]
  %s58 = scalar_lea.smem %s0, 29
  %s59 = sld [smem:[%s58]]
  %s60 = scalar_lea.smem %s0, 30
  %s61 = sld [smem:[%s60]]
  %s62 = scalar_lea.smem %s0, 31
  %s63 = sld [smem:[%s62]]
  %s64 = scalar_lea.smem %s0, 32
  %s65 = sld [smem:[%s64]]
  %s66 = scalar_lea.smem %s0, 33
  %s67 = sld [smem:[%s66]]
  %s68 = scalar_lea.smem %s0, 34
  %s69 = sld [smem:[%s68]]
  %s70 = scalar_lea.smem %s0, 35
  %s71 = sld [smem:[%s70]]
  %s72 = sld [smem:[#allocation0]]
  $region249: #{_lambda_.1} parent=0
    _
  %s74 = ssub.s32 1, %s72
  %s75 = scalar_select 0, %s74, %s72
  %v76 = vstv %s61
  %77 = vst [vmem:[#allocation2] sm:$0x1] %v76
  $region1: #{_lambda_.1} parent=0
    #allocation3 [shape = 'u8[512]{0}', space=vmem, size = 0x400, scoped, tag = 'input window, operand 2, single buffered']
    #allocation4 [shape = 's32[2]{0}', space=sflag, size = 0x8, scoped, tag = 'scoped memory for _lambda_.1']
    #allocation5 [shape = 'u8[512]{0}', space=vmem, size = 0x400, scoped, tag = 'input window, operand 5, single buffered']
    #allocation6 [shape = 's32[1]{0}', space=sflag, size = 0x4, scoped, tag = 'scoped memory for _lambda_.1']
    #allocation7 [shape = 'u8[512]{0}', space=vmem, size = 0x400, scoped, tag = 'input window, operand 7, single buffered']
    #allocation8 [shape = 'u8[512]{0}', space=vmem, size = 0x400, scoped, tag = 'input window, operand 9, single buffered']
    #allocation9 [shape = 's32[1]{0}', space=sflag, size = 0x4, scoped, tag = 'scoped memory for _lambda_.1']
    #allocation10 [shape = 'u8[512]{0}', space=vmem, size = 0x400, scoped, tag = 'input window, operand 11, single buffered']
    #allocation11 [shape = 'u8[32768]{0}', space=vmem, size = 0x8000, scoped, tag = 'input window, operand 12, single buffered']
    #allocation12 [shape = 's32[1]{0}', space=sflag, size = 0x4, scoped, tag = 'scoped memory for _lambda_.1']
    #allocation13 [shape = 'u8[512]{0}', space=vmem, size = 0x400, scoped, tag = 'input window, operand 13, single buffered']
    #allocation14 [shape = 'u8[1024]{0}', space=vmem, size = 0x400, scoped, tag = 'input window, operand 16, single buffered']
    #allocation15 [shape = 's32[1]{0}', space=sflag, size = 0x4, scoped, tag = 'scoped memory for _lambda_.1']
    #allocation16 [shape = 'u8[1024]{0}', space=vmem, size = 0x400, scoped, tag = 'input window, operand 18, single buffered']
    #allocation17 [shape = 'u8[1024]{0}', space=vmem, size = 0x400, scoped, tag = 'input window, operand 20, single buffered']
    #allocation18 [shape = 's32[1]{0}', space=sflag, size = 0x4, scoped, tag = 'scoped memory for _lambda_.1']
    #allocation19 [shape = 'u8[2048]{0}', space=vmem, size = 0x800, scoped, tag = 'input window, operand 21, single buffered']
    #allocation20 [shape = 'u8[512]{0}', space=vmem, size = 0x400, scoped, tag = 'input window, operand 23, single buffered']
    #allocation21 [shape = 's32[1]{0}', space=sflag, size = 0x4, scoped, tag = 'scoped memory for _lambda_.1']
    #allocation22 [shape = 'u8[512]{0}', space=vmem, size = 0x400, scoped, tag = 'input window, operand 25, single buffered']
    #allocation23 [shape = 'u8[512]{0}', space=vmem, size = 0x400, scoped, tag = 'input window, operand 27, single buffered']
    #allocation24 [shape = 's32[1]{0}', space=sflag, size = 0x4, scoped, tag = 'scoped memory for _lambda_.1']
    #allocation25 [shape = 'u8[65536]{0}', space=vmem, size = 0x10000, scoped, tag = 'input window, operand 29, single buffered']
    #allocation26 [shape = 'u8[65536]{0}', space=vmem, size = 0x10000, scoped, tag = 'input window, operand 31, single buffered']
    #allocation27 [shape = 's32[1]{0}', space=sflag, size = 0x4, scoped, tag = 'scoped memory for _lambda_.1']
    #allocation28 [shape = 'u8[512]{0}', space=vmem, size = 0x400, scoped, tag = 'input window, operand 32, single buffered']
    #allocation29 [shape = 'u8[65536]{0}', space=vmem, size = 0x10000, scoped, tag = 'input window, operand 33, single buffered']
    #allocation30 [shape = 's32[1]{0}', space=sflag, size = 0x4, scoped, tag = 'scoped memory for _lambda_.1']
    #allocation31 [shape = 'u8[512]{0}', space=vmem, size = 0x400, scoped, tag = 'input window, operand 34, single buffered']
    %78 = vsyncpa [#allocation4], 0
    %79 = vsyncpa [#allocation6], 0
    %80 = vsyncpa [#allocation9], 0
    %81 = vsyncpa [#allocation12], 0
    %82 = vsyncpa [#allocation15], 0
    %83 = vsyncpa [#allocation18], 0
    %84 = vsyncpa [#allocation21], 0
    %85 = vsyncpa [#allocation24], 0
    %86 = vsyncpa [#allocation27], 0
    %87 = vsyncpa [#allocation30], 0
    loop: start=0, step=1, limit=4
    $region2: #{_lambda_.1} parent=1 // loop_pre_header
      _
    $region3: #{_lambda_.1} parent=1 // loop_header
      %s89 = sphi 0, %s93
      %p90 = scmp.ge.s32.totalorder %s89, 4
      %s99 = sphi 0, %s101
      %s102 = sphi 0, %s99
      %s103 = sphi 0, %s102
      %s119 = sphi 0, %s103
      %s123 = sphi 0, %s123
      %s125 = sphi 0, %s123
      %s126 = sphi 0, %s125
      %s140 = sphi 0, %s126
      %s144 = sphi 0, %s144
      %s146 = sphi 0, %s144
      %s147 = sphi 0, %s146
      %s161 = sphi 0, %s147
      %s165 = sphi 0, %s165
      %s167 = sphi 0, %s165
      %s168 = sphi 0, %s167
      %s182 = sphi 0, %s168
      %s186 = sphi 0, %s186
      %s188 = sphi 0, %s186
      %s189 = sphi 0, %s188
      %s203 = sphi 0, %s189
      %s207 = sphi 0, %s207
      %s209 = sphi 0, %s207
      %s210 = sphi 0, %s209
      %s224 = sphi 0, %s210
      %s228 = sphi 0, %s228
      %s230 = sphi 0, %s228
      %s231 = sphi 0, %s230
      %s245 = sphi 0, %s231
      %s249 = sphi 0, %s249
      %s251 = sphi 0, %s249
      %s252 = sphi 0, %s251
      %s266 = sphi 0, %s252
      %s270 = sphi 0, %s270
      %s272 = sphi 0, %s270
      %s273 = sphi 0, %s272
      %s287 = sphi 0, %s273
      %s291 = sphi 0, %s291
      %s293 = sphi 0, %s291
      %s294 = sphi 0, %s293
      %s308 = sphi 0, %s294
      %s312 = sphi 0, %s312
      %s314 = sphi 0, %s312
      %s315 = sphi 0, %s314
      %s329 = sphi 0, %s315
      %s333 = sphi 0, %s333
      %s335 = sphi 0, %s333
      %s336 = sphi 0, %s335
      %s350 = sphi 0, %s336
      %s354 = sphi 0, %s354
      %s356 = sphi 0, %s354
      %s357 = sphi 0, %s356
      %s371 = sphi 0, %s357
      %s375 = sphi 0, %s375
      %s377 = sphi 0, %s375
      %s378 = sphi 0, %s377
      %s392 = sphi 0, %s378
      %s396 = sphi 0, %s396
      %s398 = sphi 0, %s396
      %s399 = sphi 0, %s398
      %s413 = sphi 0, %s399
      %s417 = sphi 0, %s417
      %s419 = sphi 0, %s417
      %s420 = sphi 0, %s419
      %s434 = sphi 0, %s420
      %s438 = sphi 0, %s438
      %s440 = sphi 0, %s438
      %s441 = sphi 0, %s440
      %s455 = sphi 0, %s441
      %s459 = sphi 0, %s459
      %s461 = sphi 0, %s459
      %s462 = sphi 0, %s461
      %s476 = sphi 0, %s462
      %s480 = sphi 0, %s480
      %s482 = sphi 0, %s480
      %s483 = sphi 0, %s482
      %s497 = sphi 0, %s483
      %s501 = sphi 0, %s501
      %s503 = sphi 0, %s501
      %s504 = sphi 0, %s503
      %s518 = sphi 0, %s504
      %s522 = sphi 0, %s522
      %s524 = sphi 0, %s522
      %s525 = sphi 0, %s524
      %s539 = sphi 0, %s525
      %s543 = sphi 0, %s543
      %s545 = sphi 0, %s543
      %s546 = sphi 0, %s545
      %s560 = sphi 0, %s546
      %s564 = sphi 0, %s564
      %s566 = sphi 0, %s564
      %s567 = sphi 0, %s566
      %s581 = sphi 0, %s567
      %s585 = sphi 0, %s585
      %s587 = sphi 0, %s585
      %s588 = sphi 0, %s587
      %s602 = sphi 0, %s588
      %s606 = sphi 0, %s606
      %s608 = sphi 0, %s606
      %s609 = sphi 0, %s608
      %s623 = sphi 0, %s609
      %s627 = sphi 0, %s627
      %s629 = sphi 0, %s627
      %s630 = sphi 0, %s629
      %s644 = sphi 0, %s630
      %s648 = sphi 0, %s648
      %s650 = sphi 0, %s648
      %s651 = sphi 0, %s650
      %s665 = sphi 0, %s651
      %s669 = sphi 0, %s669
      %s671 = sphi 0, %s669
      %s672 = sphi 0, %s671
      %s686 = sphi 0, %s672
      %s690 = sphi 0, %s690
      %s692 = sphi 0, %s690
      %s693 = sphi 0, %s692
      %s707 = sphi 0, %s693
      %s711 = sphi 0, %s711
      %s713 = sphi 0, %s711
      %s714 = sphi 0, %s713
      %s728 = sphi 0, %s714
      %s732 = sphi 0, %s732
      %s734 = sphi 0, %s732
      %s735 = sphi 0, %s734
      %s749 = sphi 0, %s735
      %s753 = sphi 0, %s753
      %s755 = sphi 0, %s753
      %s756 = sphi 0, %s755
      %s770 = sphi 0, %s756
      %s774 = sphi 0, %s774
      %s776 = sphi 0, %s774
      %s777 = sphi 0, %s776
      %s791 = sphi 0, %s777
      %s795 = sphi 0, %s795
      %s797 = sphi 0, %s795
      %s798 = sphi 0, %s797
      %s812 = sphi 0, %s798
      %s816 = sphi 0, %s816
      %s818 = sphi 0, %s816
      %s819 = sphi 0, %s818
      %s833 = sphi 0, %s819
      %s839 = sphi 0, %s841
      %s842 = sphi 0, %s839
      %s843 = sphi 0, %s842
      %s859 = sphi 0, %s843
    $region4: #{_lambda_.1} parent=1 // loop_header_branch
      %92 = sbr.rel (%p90) target = $region8
    $region5: #{_lambda_.1} parent=1 // loop_body
      %s94 = ssub.s32 %s89, 1
      %s95 = ssub.s32 %s89, 2
      %s96 = sadd.s32 %s89, 1
      %s97 = ssub.s32 %s89, %s96
      %p98 = scmp.eq.s32.totalorder %s97, 0
      %s100 = sadd.s32 %s99, 1
      %s101 = scalar_select %p98, %s99, %s100
      %p104 = pneg %p98
      %p105 = scmp.eq.s32.totalorder %s89, 1
      %p106 = por %p104, %p105
      %p107 = scmp.ne.s32.totalorder %s99, %s102
      %p108 = scmp.eq.s32.totalorder %s89, 0
      %p109 = por %p107, %p108
      %p110 = scmp.ne.s32.totalorder %s99, %s102
      %p111 = scmp.eq.s32.totalorder %s94, 1
      %p112 = por %p110, %p111
      %p113 = scmp.ne.s32.totalorder %s102, %s103
      %p114 = scmp.eq.s32.totalorder %s94, 0
      %p115 = por %p113, %p114
      %p116 = scmp.ne.s32.totalorder %s102, %s103
      %p117 = scmp.eq.s32.totalorder %s95, 1
      %p118 = por %p116, %p117
      %p120 = scmp.ne.s32.totalorder %s103, %s119
      %p121 = scmp.eq.s32.totalorder %s95, 0
      %p122 = por %p120, %p121
      %s124 = sadd.s32 %s123, 1
      %p127 = scmp.eq.s32.totalorder %s89, 1
      %p128 = scmp.ne.s32.totalorder %s123, %s125
      %p129 = scmp.eq.s32.totalorder %s89, 0
      %p130 = por %p128, %p129
      %p131 = scmp.ne.s32.totalorder %s123, %s125
      %p132 = scmp.eq.s32.totalorder %s94, 1
      %p133 = por %p131, %p132
      %p134 = scmp.ne.s32.totalorder %s125, %s126
      %p135 = scmp.eq.s32.totalorder %s94, 0
      %p136 = por %p134, %p135
      %p137 = scmp.ne.s32.totalorder %s125, %s126
      %p138 = scmp.eq.s32.totalorder %s95, 1
      %p139 = por %p137, %p138
      %p141 = scmp.ne.s32.totalorder %s126, %s140
      %p142 = scmp.eq.s32.totalorder %s95, 0
      %p143 = por %p141, %p142
      %s145 = sadd.s32 %s144, 1
      %p148 = scmp.eq.s32.totalorder %s89, 1
      %p149 = scmp.ne.s32.totalorder %s144, %s146
      %p150 = scmp.eq.s32.totalorder %s89, 0
      %p151 = por %p149, %p150
      %p152 = scmp.ne.s32.totalorder %s144, %s146
      %p153 = scmp.eq.s32.totalorder %s94, 1
      %p154 = por %p152, %p153
      %p155 = scmp.ne.s32.totalorder %s146, %s147
      %p156 = scmp.eq.s32.totalorder %s94, 0
      %p157 = por %p155, %p156
      %p158 = scmp.ne.s32.totalorder %s146, %s147
      %p159 = scmp.eq.s32.totalorder %s95, 1
      %p160 = por %p158, %p159
      %p162 = scmp.ne.s32.totalorder %s147, %s161
      %p163 = scmp.eq.s32.totalorder %s95, 0
      %p164 = por %p162, %p163
      %s166 = sadd.s32 %s165, 1
      %p169 = scmp.eq.s32.totalorder %s89, 1
      %p170 = scmp.ne.s32.totalorder %s165, %s167
      %p171 = scmp.eq.s32.totalorder %s89, 0
      %p172 = por %p170, %p171
      %p173 = scmp.ne.s32.totalorder %s165, %s167
      %p174 = scmp.eq.s32.totalorder %s94, 1
      %p175 = por %p173, %p174
      %p176 = scmp.ne.s32.totalorder %s167, %s168
      %p177 = scmp.eq.s32.totalorder %s94, 0
      %p178 = por %p176, %p177
      %p179 = scmp.ne.s32.totalorder %s167, %s168
      %p180 = scmp.eq.s32.totalorder %s95, 1
      %p181 = por %p179, %p180
      %p183 = scmp.ne.s32.totalorder %s168, %s182
      %p184 = scmp.eq.s32.totalorder %s95, 0
      %p185 = por %p183, %p184
      %s187 = sadd.s32 %s186, 1
      %p190 = scmp.eq.s32.totalorder %s89, 1
      %p191 = scmp.ne.s32.totalorder %s186, %s188
      %p192 = scmp.eq.s32.totalorder %s89, 0
      %p193 = por %p191, %p192
      %p194 = scmp.ne.s32.totalorder %s186, %s188
      %p195 = scmp.eq.s32.totalorder %s94, 1
      %p196 = por %p194, %p195
      %p197 = scmp.ne.s32.totalorder %s188, %s189
      %p198 = scmp.eq.s32.totalorder %s94, 0
      %p199 = por %p197, %p198
      %p200 = scmp.ne.s32.totalorder %s188, %s189
      %p201 = scmp.eq.s32.totalorder %s95, 1
      %p202 = por %p200, %p201
      %p204 = scmp.ne.s32.totalorder %s189, %s203
      %p205 = scmp.eq.s32.totalorder %s95, 0
      %p206 = por %p204, %p205
      %s208 = sadd.s32 %s207, 1
      %p211 = scmp.eq.s32.totalorder %s89, 1
      %p212 = scmp.ne.s32.totalorder %s207, %s209
      %p213 = scmp.eq.s32.totalorder %s89, 0
      %p214 = por %p212, %p213
      %p215 = scmp.ne.s32.totalorder %s207, %s209
      %p216 = scmp.eq.s32.totalorder %s94, 1
      %p217 = por %p215, %p216
      %p218 = scmp.ne.s32.totalorder %s209, %s210
      %p219 = scmp.eq.s32.totalorder %s94, 0
      %p220 = por %p218, %p219
      %p221 = scmp.ne.s32.totalorder %s209, %s210
      %p222 = scmp.eq.s32.totalorder %s95, 1
      %p223 = por %p221, %p222
      %p225 = scmp.ne.s32.totalorder %s210, %s224
      %p226 = scmp.eq.s32.totalorder %s95, 0
      %p227 = por %p225, %p226
      %s229 = sadd.s32 %s228, 1
      %p232 = scmp.eq.s32.totalorder %s89, 1
      %p233 = scmp.ne.s32.totalorder %s228, %s230
      %p234 = scmp.eq.s32.totalorder %s89, 0
      %p235 = por %p233, %p234
      %p236 = scmp.ne.s32.totalorder %s228, %s230
      %p237 = scmp.eq.s32.totalorder %s94, 1
      %p238 = por %p236, %p237
      %p239 = scmp.ne.s32.totalorder %s230, %s231
      %p240 = scmp.eq.s32.totalorder %s94, 0
      %p241 = por %p239, %p240
      %p242 = scmp.ne.s32.totalorder %s230, %s231
      %p243 = scmp.eq.s32.totalorder %s95, 1
      %p244 = por %p242, %p243
      %p246 = scmp.ne.s32.totalorder %s231, %s245
      %p247 = scmp.eq.s32.totalorder %s95, 0
      %p248 = por %p246, %p247
      %s250 = sadd.s32 %s249, 1
      %p253 = scmp.eq.s32.totalorder %s89, 1
      %p254 = scmp.ne.s32.totalorder %s249, %s251
      %p255 = scmp.eq.s32.totalorder %s89, 0
      %p256 = por %p254, %p255
      %p257 = scmp.ne.s32.totalorder %s249, %s251
      %p258 = scmp.eq.s32.totalorder %s94, 1
      %p259 = por %p257, %p258
      %p260 = scmp.ne.s32.totalorder %s251, %s252
      %p261 = scmp.eq.s32.totalorder %s94, 0
      %p262 = por %p260, %p261
      %p263 = scmp.ne.s32.totalorder %s251, %s252
      %p264 = scmp.eq.s32.totalorder %s95, 1
      %p265 = por %p263, %p264
      %p267 = scmp.ne.s32.totalorder %s252, %s266
      %p268 = scmp.eq.s32.totalorder %s95, 0
      %p269 = por %p267, %p268
      %s271 = sadd.s32 %s270, 1
      %p274 = scmp.eq.s32.totalorder %s89, 1
      %p275 = scmp.ne.s32.totalorder %s270, %s272
      %p276 = scmp.eq.s32.totalorder %s89, 0
      %p277 = por %p275, %p276
      %p278 = scmp.ne.s32.totalorder %s270, %s272
      %p279 = scmp.eq.s32.totalorder %s94, 1
      %p280 = por %p278, %p279
      %p281 = scmp.ne.s32.totalorder %s272, %s273
      %p282 = scmp.eq.s32.totalorder %s94, 0
      %p283 = por %p281, %p282
      %p284 = scmp.ne.s32.totalorder %s272, %s273
      %p285 = scmp.eq.s32.totalorder %s95, 1
      %p286 = por %p284, %p285
      %p288 = scmp.ne.s32.totalorder %s273, %s287
      %p289 = scmp.eq.s32.totalorder %s95, 0
      %p290 = por %p288, %p289
      %s292 = sadd.s32 %s291, 1
      %p295 = scmp.eq.s32.totalorder %s89, 1
      %p296 = scmp.ne.s32.totalorder %s291, %s293
      %p297 = scmp.eq.s32.totalorder %s89, 0
      %p298 = por %p296, %p297
      %p299 = scmp.ne.s32.totalorder %s291, %s293
      %p300 = scmp.eq.s32.totalorder %s94, 1
      %p301 = por %p299, %p300
      %p302 = scmp.ne.s32.totalorder %s293, %s294
      %p303 = scmp.eq.s32.totalorder %s94, 0
      %p304 = por %p302, %p303
      %p305 = scmp.ne.s32.totalorder %s293, %s294
      %p306 = scmp.eq.s32.totalorder %s95, 1
      %p307 = por %p305, %p306
      %p309 = scmp.ne.s32.totalorder %s294, %s308
      %p310 = scmp.eq.s32.totalorder %s95, 0
      %p311 = por %p309, %p310
      %s313 = sadd.s32 %s312, 1
      %p316 = scmp.eq.s32.totalorder %s89, 1
      %p317 = scmp.ne.s32.totalorder %s312, %s314
      %p318 = scmp.eq.s32.totalorder %s89, 0
      %p319 = por %p317, %p318
      %p320 = scmp.ne.s32.totalorder %s312, %s314
      %p321 = scmp.eq.s32.totalorder %s94, 1
      %p322 = por %p320, %p321
      %p323 = scmp.ne.s32.totalorder %s314, %s315
      %p324 = scmp.eq.s32.totalorder %s94, 0
      %p325 = por %p323, %p324
      %p326 = scmp.ne.s32.totalorder %s314, %s315
      %p327 = scmp.eq.s32.totalorder %s95, 1
      %p328 = por %p326, %p327
      %p330 = scmp.ne.s32.totalorder %s315, %s329
      %p331 = scmp.eq.s32.totalorder %s95, 0
      %p332 = por %p330, %p331
      %s334 = sadd.s32 %s333, 1
      %p337 = scmp.eq.s32.totalorder %s89, 1
      %p338 = scmp.ne.s32.totalorder %s333, %s335
      %p339 = scmp.eq.s32.totalorder %s89, 0
      %p340 = por %p338, %p339
      %p341 = scmp.ne.s32.totalorder %s333, %s335
      %p342 = scmp.eq.s32.totalorder %s94, 1
      %p343 = por %p341, %p342
      %p344 = scmp.ne.s32.totalorder %s335, %s336
      %p345 = scmp.eq.s32.totalorder %s94, 0
      %p346 = por %p344, %p345
      %p347 = scmp.ne.s32.totalorder %s335, %s336
      %p348 = scmp.eq.s32.totalorder %s95, 1
      %p349 = por %p347, %p348
      %p351 = scmp.ne.s32.totalorder %s336, %s350
      %p352 = scmp.eq.s32.totalorder %s95, 0
      %p353 = por %p351, %p352
      %s355 = sadd.s32 %s354, 1
      %p358 = scmp.eq.s32.totalorder %s89, 1
      %p359 = scmp.ne.s32.totalorder %s354, %s356
      %p360 = scmp.eq.s32.totalorder %s89, 0
      %p361 = por %p359, %p360
      %p362 = scmp.ne.s32.totalorder %s354, %s356
      %p363 = scmp.eq.s32.totalorder %s94, 1
      %p364 = por %p362, %p363
      %p365 = scmp.ne.s32.totalorder %s356, %s357
      %p366 = scmp.eq.s32.totalorder %s94, 0
      %p367 = por %p365, %p366
      %p368 = scmp.ne.s32.totalorder %s356, %s357
      %p369 = scmp.eq.s32.totalorder %s95, 1
      %p370 = por %p368, %p369
      %p372 = scmp.ne.s32.totalorder %s357, %s371
      %p373 = scmp.eq.s32.totalorder %s95, 0
      %p374 = por %p372, %p373
      %s376 = sadd.s32 %s375, 1
      %p379 = scmp.eq.s32.totalorder %s89, 1
      %p380 = scmp.ne.s32.totalorder %s375, %s377
      %p381 = scmp.eq.s32.totalorder %s89, 0
      %p382 = por %p380, %p381
      %p383 = scmp.ne.s32.totalorder %s375, %s377
      %p384 = scmp.eq.s32.totalorder %s94, 1
      %p385 = por %p383, %p384
      %p386 = scmp.ne.s32.totalorder %s377, %s378
      %p387 = scmp.eq.s32.totalorder %s94, 0
      %p388 = por %p386, %p387
      %p389 = scmp.ne.s32.totalorder %s377, %s378
      %p390 = scmp.eq.s32.totalorder %s95, 1
      %p391 = por %p389, %p390
      %p393 = scmp.ne.s32.totalorder %s378, %s392
      %p394 = scmp.eq.s32.totalorder %s95, 0
      %p395 = por %p393, %p394
      %s397 = sadd.s32 %s396, 1
      %p400 = scmp.eq.s32.totalorder %s89, 1
      %p401 = scmp.ne.s32.totalorder %s396, %s398
      %p402 = scmp.eq.s32.totalorder %s89, 0
      %p403 = por %p401, %p402
      %p404 = scmp.ne.s32.totalorder %s396, %s398
      %p405 = scmp.eq.s32.totalorder %s94, 1
      %p406 = por %p404, %p405
      %p407 = scmp.ne.s32.totalorder %s398, %s399
      %p408 = scmp.eq.s32.totalorder %s94, 0
      %p409 = por %p407, %p408
      %p410 = scmp.ne.s32.totalorder %s398, %s399
      %p411 = scmp.eq.s32.totalorder %s95, 1
      %p412 = por %p410, %p411
      %p414 = scmp.ne.s32.totalorder %s399, %s413
      %p415 = scmp.eq.s32.totalorder %s95, 0
      %p416 = por %p414, %p415
      %s418 = sadd.s32 %s417, 1
      %p421 = scmp.eq.s32.totalorder %s89, 1
      %p422 = scmp.ne.s32.totalorder %s417, %s419
      %p423 = scmp.eq.s32.totalorder %s89, 0
      %p424 = por %p422, %p423
      %p425 = scmp.ne.s32.totalorder %s417, %s419
      %p426 = scmp.eq.s32.totalorder %s94, 1
      %p427 = por %p425, %p426
      %p428 = scmp.ne.s32.totalorder %s419, %s420
      %p429 = scmp.eq.s32.totalorder %s94, 0
      %p430 = por %p428, %p429
      %p431 = scmp.ne.s32.totalorder %s419, %s420
      %p432 = scmp.eq.s32.totalorder %s95, 1
      %p433 = por %p431, %p432
      %p435 = scmp.ne.s32.totalorder %s420, %s434
      %p436 = scmp.eq.s32.totalorder %s95, 0
      %p437 = por %p435, %p436
      %s439 = sadd.s32 %s438, 1
      %p442 = scmp.eq.s32.totalorder %s89, 1
      %p443 = scmp.ne.s32.totalorder %s438, %s440
      %p444 = scmp.eq.s32.totalorder %s89, 0
      %p445 = por %p443, %p444
      %p446 = scmp.ne.s32.totalorder %s438, %s440
      %p447 = scmp.eq.s32.totalorder %s94, 1
      %p448 = por %p446, %p447
      %p449 = scmp.ne.s32.totalorder %s440, %s441
      %p450 = scmp.eq.s32.totalorder %s94, 0
      %p451 = por %p449, %p450
      %p452 = scmp.ne.s32.totalorder %s440, %s441
      %p453 = scmp.eq.s32.totalorder %s95, 1
      %p454 = por %p452, %p453
      %p456 = scmp.ne.s32.totalorder %s441, %s455
      %p457 = scmp.eq.s32.totalorder %s95, 0
      %p458 = por %p456, %p457
      %s460 = sadd.s32 %s459, 1
      %p463 = scmp.eq.s32.totalorder %s89, 1
      %p464 = scmp.ne.s32.totalorder %s459, %s461
      %p465 = scmp.eq.s32.totalorder %s89, 0
      %p466 = por %p464, %p465
      %p467 = scmp.ne.s32.totalorder %s459, %s461
      %p468 = scmp.eq.s32.totalorder %s94, 1
      %p469 = por %p467, %p468
      %p470 = scmp.ne.s32.totalorder %s461, %s462
      %p471 = scmp.eq.s32.totalorder %s94, 0
      %p472 = por %p470, %p471
      %p473 = scmp.ne.s32.totalorder %s461, %s462
      %p474 = scmp.eq.s32.totalorder %s95, 1
      %p475 = por %p473, %p474
      %p477 = scmp.ne.s32.totalorder %s462, %s476
      %p478 = scmp.eq.s32.totalorder %s95, 0
      %p479 = por %p477, %p478
      %s481 = sadd.s32 %s480, 1
      %p484 = scmp.eq.s32.totalorder %s89, 1
      %p485 = scmp.ne.s32.totalorder %s480, %s482
      %p486 = scmp.eq.s32.totalorder %s89, 0
      %p487 = por %p485, %p486
      %p488 = scmp.ne.s32.totalorder %s480, %s482
      %p489 = scmp.eq.s32.totalorder %s94, 1
      %p490 = por %p488, %p489
      %p491 = scmp.ne.s32.totalorder %s482, %s483
      %p492 = scmp.eq.s32.totalorder %s94, 0
      %p493 = por %p491, %p492
      %p494 = scmp.ne.s32.totalorder %s482, %s483
      %p495 = scmp.eq.s32.totalorder %s95, 1
      %p496 = por %p494, %p495
      %p498 = scmp.ne.s32.totalorder %s483, %s497
      %p499 = scmp.eq.s32.totalorder %s95, 0
      %p500 = por %p498, %p499
      %s502 = sadd.s32 %s501, 1
      %p505 = scmp.eq.s32.totalorder %s89, 1
      %p506 = scmp.ne.s32.totalorder %s501, %s503
      %p507 = scmp.eq.s32.totalorder %s89, 0
      %p508 = por %p506, %p507
      %p509 = scmp.ne.s32.totalorder %s501, %s503
      %p510 = scmp.eq.s32.totalorder %s94, 1
      %p511 = por %p509, %p510
      %p512 = scmp.ne.s32.totalorder %s503, %s504
      %p513 = scmp.eq.s32.totalorder %s94, 0
      %p514 = por %p512, %p513
      %p515 = scmp.ne.s32.totalorder %s503, %s504
      %p516 = scmp.eq.s32.totalorder %s95, 1
      %p517 = por %p515, %p516
      %p519 = scmp.ne.s32.totalorder %s504, %s518
      %p520 = scmp.eq.s32.totalorder %s95, 0
      %p521 = por %p519, %p520
      %s523 = sadd.s32 %s522, 1
      %p526 = scmp.eq.s32.totalorder %s89, 1
      %p527 = scmp.ne.s32.totalorder %s522, %s524
      %p528 = scmp.eq.s32.totalorder %s89, 0
      %p529 = por %p527, %p528
      %p530 = scmp.ne.s32.totalorder %s522, %s524
      %p531 = scmp.eq.s32.totalorder %s94, 1
      %p532 = por %p530, %p531
      %p533 = scmp.ne.s32.totalorder %s524, %s525
      %p534 = scmp.eq.s32.totalorder %s94, 0
      %p535 = por %p533, %p534
      %p536 = scmp.ne.s32.totalorder %s524, %s525
      %p537 = scmp.eq.s32.totalorder %s95, 1
      %p538 = por %p536, %p537
      %p540 = scmp.ne.s32.totalorder %s525, %s539
      %p541 = scmp.eq.s32.totalorder %s95, 0
      %p542 = por %p540, %p541
      %s544 = sadd.s32 %s543, 1
      %p547 = scmp.eq.s32.totalorder %s89, 1
      %p548 = scmp.ne.s32.totalorder %s543, %s545
      %p549 = scmp.eq.s32.totalorder %s89, 0
      %p550 = por %p548, %p549
      %p551 = scmp.ne.s32.totalorder %s543, %s545
      %p552 = scmp.eq.s32.totalorder %s94, 1
      %p553 = por %p551, %p552
      %p554 = scmp.ne.s32.totalorder %s545, %s546
      %p555 = scmp.eq.s32.totalorder %s94, 0
      %p556 = por %p554, %p555
      %p557 = scmp.ne.s32.totalorder %s545, %s546
      %p558 = scmp.eq.s32.totalorder %s95, 1
      %p559 = por %p557, %p558
      %p561 = scmp.ne.s32.totalorder %s546, %s560
      %p562 = scmp.eq.s32.totalorder %s95, 0
      %p563 = por %p561, %p562
      %s565 = sadd.s32 %s564, 1
      %p568 = scmp.eq.s32.totalorder %s89, 1
      %p569 = scmp.ne.s32.totalorder %s564, %s566
      %p570 = scmp.eq.s32.totalorder %s89, 0
      %p571 = por %p569, %p570
      %p572 = scmp.ne.s32.totalorder %s564, %s566
      %p573 = scmp.eq.s32.totalorder %s94, 1
      %p574 = por %p572, %p573
      %p575 = scmp.ne.s32.totalorder %s566, %s567
      %p576 = scmp.eq.s32.totalorder %s94, 0
      %p577 = por %p575, %p576
      %p578 = scmp.ne.s32.totalorder %s566, %s567
      %p579 = scmp.eq.s32.totalorder %s95, 1
      %p580 = por %p578, %p579
      %p582 = scmp.ne.s32.totalorder %s567, %s581
      %p583 = scmp.eq.s32.totalorder %s95, 0
      %p584 = por %p582, %p583
      %s586 = sadd.s32 %s585, 1
      %p589 = scmp.eq.s32.totalorder %s89, 1
      %p590 = scmp.ne.s32.totalorder %s585, %s587
      %p591 = scmp.eq.s32.totalorder %s89, 0
      %p592 = por %p590, %p591
      %p593 = scmp.ne.s32.totalorder %s585, %s587
      %p594 = scmp.eq.s32.totalorder %s94, 1
      %p595 = por %p593, %p594
      %p596 = scmp.ne.s32.totalorder %s587, %s588
      %p597 = scmp.eq.s32.totalorder %s94, 0
      %p598 = por %p596, %p597
      %p599 = scmp.ne.s32.totalorder %s587, %s588
      %p600 = scmp.eq.s32.totalorder %s95, 1
      %p601 = por %p599, %p600
      %p603 = scmp.ne.s32.totalorder %s588, %s602
      %p604 = scmp.eq.s32.totalorder %s95, 0
      %p605 = por %p603, %p604
      %s607 = sadd.s32 %s606, 1
      %p610 = scmp.eq.s32.totalorder %s89, 1
      %p611 = scmp.ne.s32.totalorder %s606, %s608
      %p612 = scmp.eq.s32.totalorder %s89, 0
      %p613 = por %p611, %p612
      %p614 = scmp.ne.s32.totalorder %s606, %s608
      %p615 = scmp.eq.s32.totalorder %s94, 1
      %p616 = por %p614, %p615
      %p617 = scmp.ne.s32.totalorder %s608, %s609
      %p618 = scmp.eq.s32.totalorder %s94, 0
      %p619 = por %p617, %p618
      %p620 = scmp.ne.s32.totalorder %s608, %s609
      %p621 = scmp.eq.s32.totalorder %s95, 1
      %p622 = por %p620, %p621
      %p624 = scmp.ne.s32.totalorder %s609, %s623
      %p625 = scmp.eq.s32.totalorder %s95, 0
      %p626 = por %p624, %p625
      %s628 = sadd.s32 %s627, 1
      %p631 = scmp.eq.s32.totalorder %s89, 1
      %p632 = scmp.ne.s32.totalorder %s627, %s629
      %p633 = scmp.eq.s32.totalorder %s89, 0
      %p634 = por %p632, %p633
      %p635 = scmp.ne.s32.totalorder %s627, %s629
      %p636 = scmp.eq.s32.totalorder %s94, 1
      %p637 = por %p635, %p636
      %p638 = scmp.ne.s32.totalorder %s629, %s630
      %p639 = scmp.eq.s32.totalorder %s94, 0
      %p640 = por %p638, %p639
      %p641 = scmp.ne.s32.totalorder %s629, %s630
      %p642 = scmp.eq.s32.totalorder %s95, 1
      %p643 = por %p641, %p642
      %p645 = scmp.ne.s32.totalorder %s630, %s644
      %p646 = scmp.eq.s32.totalorder %s95, 0
      %p647 = por %p645, %p646
      %s649 = sadd.s32 %s648, 1
      %p652 = scmp.eq.s32.totalorder %s89, 1
      %p653 = scmp.ne.s32.totalorder %s648, %s650
      %p654 = scmp.eq.s32.totalorder %s89, 0
      %p655 = por %p653, %p654
      %p656 = scmp.ne.s32.totalorder %s648, %s650
      %p657 = scmp.eq.s32.totalorder %s94, 1
      %p658 = por %p656, %p657
      %p659 = scmp.ne.s32.totalorder %s650, %s651
      %p660 = scmp.eq.s32.totalorder %s94, 0
      %p661 = por %p659, %p660
      %p662 = scmp.ne.s32.totalorder %s650, %s651
      %p663 = scmp.eq.s32.totalorder %s95, 1
      %p664 = por %p662, %p663
      %p666 = scmp.ne.s32.totalorder %s651, %s665
      %p667 = scmp.eq.s32.totalorder %s95, 0
      %p668 = por %p666, %p667
      %s670 = sadd.s32 %s669, 1
      %p673 = scmp.eq.s32.totalorder %s89, 1
      %p674 = scmp.ne.s32.totalorder %s669, %s671
      %p675 = scmp.eq.s32.totalorder %s89, 0
      %p676 = por %p674, %p675
      %p677 = scmp.ne.s32.totalorder %s669, %s671
      %p678 = scmp.eq.s32.totalorder %s94, 1
      %p679 = por %p677, %p678
      %p680 = scmp.ne.s32.totalorder %s671, %s672
      %p681 = scmp.eq.s32.totalorder %s94, 0
      %p682 = por %p680, %p681
      %p683 = scmp.ne.s32.totalorder %s671, %s672
      %p684 = scmp.eq.s32.totalorder %s95, 1
      %p685 = por %p683, %p684
      %p687 = scmp.ne.s32.totalorder %s672, %s686
      %p688 = scmp.eq.s32.totalorder %s95, 0
      %p689 = por %p687, %p688
      %s691 = sadd.s32 %s690, 1
      %p694 = scmp.eq.s32.totalorder %s89, 1
      %p695 = scmp.ne.s32.totalorder %s690, %s692
      %p696 = scmp.eq.s32.totalorder %s89, 0
      %p697 = por %p695, %p696
      %p698 = scmp.ne.s32.totalorder %s690, %s692
      %p699 = scmp.eq.s32.totalorder %s94, 1
      %p700 = por %p698, %p699
      %p701 = scmp.ne.s32.totalorder %s692, %s693
      %p702 = scmp.eq.s32.totalorder %s94, 0
      %p703 = por %p701, %p702
      %p704 = scmp.ne.s32.totalorder %s692, %s693
      %p705 = scmp.eq.s32.totalorder %s95, 1
      %p706 = por %p704, %p705
      %p708 = scmp.ne.s32.totalorder %s693, %s707
      %p709 = scmp.eq.s32.totalorder %s95, 0
      %p710 = por %p708, %p709
      %s712 = sadd.s32 %s711, 1
      %p715 = scmp.eq.s32.totalorder %s89, 1
      %p716 = scmp.ne.s32.totalorder %s711, %s713
      %p717 = scmp.eq.s32.totalorder %s89, 0
      %p718 = por %p716, %p717
      %p719 = scmp.ne.s32.totalorder %s711, %s713
      %p720 = scmp.eq.s32.totalorder %s94, 1
      %p721 = por %p719, %p720
      %p722 = scmp.ne.s32.totalorder %s713, %s714
      %p723 = scmp.eq.s32.totalorder %s94, 0
      %p724 = por %p722, %p723
      %p725 = scmp.ne.s32.totalorder %s713, %s714
      %p726 = scmp.eq.s32.totalorder %s95, 1
      %p727 = por %p725, %p726
      %p729 = scmp.ne.s32.totalorder %s714, %s728
      %p730 = scmp.eq.s32.totalorder %s95, 0
      %p731 = por %p729, %p730
      %s733 = sadd.s32 %s732, 1
      %p736 = scmp.eq.s32.totalorder %s89, 1
      %p737 = scmp.ne.s32.totalorder %s732, %s734
      %p738 = scmp.eq.s32.totalorder %s89, 0
      %p739 = por %p737, %p738
      %p740 = scmp.ne.s32.totalorder %s732, %s734
      %p741 = scmp.eq.s32.totalorder %s94, 1
      %p742 = por %p740, %p741
      %p743 = scmp.ne.s32.totalorder %s734, %s735
      %p744 = scmp.eq.s32.totalorder %s94, 0
      %p745 = por %p743, %p744
      %p746 = scmp.ne.s32.totalorder %s734, %s735
      %p747 = scmp.eq.s32.totalorder %s95, 1
      %p748 = por %p746, %p747
      %p750 = scmp.ne.s32.totalorder %s735, %s749
      %p751 = scmp.eq.s32.totalorder %s95, 0
      %p752 = por %p750, %p751
      %s754 = sadd.s32 %s753, 1
      %p757 = scmp.eq.s32.totalorder %s89, 1
      %p758 = scmp.ne.s32.totalorder %s753, %s755
      %p759 = scmp.eq.s32.totalorder %s89, 0
      %p760 = por %p758, %p759
      %p761 = scmp.ne.s32.totalorder %s753, %s755
      %p762 = scmp.eq.s32.totalorder %s94, 1
      %p763 = por %p761, %p762
      %p764 = scmp.ne.s32.totalorder %s755, %s756
      %p765 = scmp.eq.s32.totalorder %s94, 0
      %p766 = por %p764, %p765
      %p767 = scmp.ne.s32.totalorder %s755, %s756
      %p768 = scmp.eq.s32.totalorder %s95, 1
      %p769 = por %p767, %p768
      %p771 = scmp.ne.s32.totalorder %s756, %s770
      %p772 = scmp.eq.s32.totalorder %s95, 0
      %p773 = por %p771, %p772
      %s775 = sadd.s32 %s774, 1
      %p778 = scmp.eq.s32.totalorder %s89, 1
      %p779 = scmp.ne.s32.totalorder %s774, %s776
      %p780 = scmp.eq.s32.totalorder %s89, 0
      %p781 = por %p779, %p780
      %p782 = scmp.ne.s32.totalorder %s774, %s776
      %p783 = scmp.eq.s32.totalorder %s94, 1
      %p784 = por %p782, %p783
      %p785 = scmp.ne.s32.totalorder %s776, %s777
      %p786 = scmp.eq.s32.totalorder %s94, 0
      %p787 = por %p785, %p786
      %p788 = scmp.ne.s32.totalorder %s776, %s777
      %p789 = scmp.eq.s32.totalorder %s95, 1
      %p790 = por %p788, %p789
      %p792 = scmp.ne.s32.totalorder %s777, %s791
      %p793 = scmp.eq.s32.totalorder %s95, 0
      %p794 = por %p792, %p793
      %s796 = sadd.s32 %s795, 1
      %p799 = scmp.eq.s32.totalorder %s89, 1
      %p800 = scmp.ne.s32.totalorder %s795, %s797
      %p801 = scmp.eq.s32.totalorder %s89, 0
      %p802 = por %p800, %p801
      %p803 = scmp.ne.s32.totalorder %s795, %s797
      %p804 = scmp.eq.s32.totalorder %s94, 1
      %p805 = por %p803, %p804
      %p806 = scmp.ne.s32.totalorder %s797, %s798
      %p807 = scmp.eq.s32.totalorder %s94, 0
      %p808 = por %p806, %p807
      %p809 = scmp.ne.s32.totalorder %s797, %s798
      %p810 = scmp.eq.s32.totalorder %s95, 1
      %p811 = por %p809, %p810
      %p813 = scmp.ne.s32.totalorder %s798, %s812
      %p814 = scmp.eq.s32.totalorder %s95, 0
      %p815 = por %p813, %p814
      %s817 = sadd.s32 %s816, 1
      %p820 = scmp.eq.s32.totalorder %s89, 1
      %p821 = scmp.ne.s32.totalorder %s816, %s818
      %p822 = scmp.eq.s32.totalorder %s89, 0
      %p823 = por %p821, %p822
      %p824 = scmp.ne.s32.totalorder %s816, %s818
      %p825 = scmp.eq.s32.totalorder %s94, 1
      %p826 = por %p824, %p825
      %p827 = scmp.ne.s32.totalorder %s818, %s819
      %p828 = scmp.eq.s32.totalorder %s94, 0
      %p829 = por %p827, %p828
      %p830 = scmp.ne.s32.totalorder %s818, %s819
      %p831 = scmp.eq.s32.totalorder %s95, 1
      %p832 = por %p830, %p831
      %p834 = scmp.ne.s32.totalorder %s819, %s833
      %p835 = scmp.eq.s32.totalorder %s95, 0
      %p836 = por %p834, %p835
      %s837 = ssub.s32 %s89, %s96
      %p838 = scmp.eq.s32.totalorder %s837, 0
      %s840 = sadd.s32 %s839, 1
      %s841 = scalar_select %p838, %s839, %s840
      %p844 = pneg %p838
      %p845 = scmp.eq.s32.totalorder %s89, 1
      %p846 = por %p844, %p845
      %p847 = scmp.ne.s32.totalorder %s839, %s842
      %p848 = scmp.eq.s32.totalorder %s89, 0
      %p849 = por %p847, %p848
      %p850 = scmp.ne.s32.totalorder %s839, %s842
      %p851 = scmp.eq.s32.totalorder %s94, 1
      %p852 = por %p850, %p851
      %p853 = scmp.ne.s32.totalorder %s842, %s843
      %p854 = scmp.eq.s32.totalorder %s94, 0
      %p855 = por %p853, %p854
      %p856 = scmp.ne.s32.totalorder %s842, %s843
      %p857 = scmp.eq.s32.totalorder %s95, 1
      %p858 = por %p856, %p857
      %p860 = scmp.ne.s32.totalorder %s843, %s859
      %p861 = scmp.eq.s32.totalorder %s95, 0
      %p862 = por %p860, %p861
      %p863 = scmp.le.s32.totalorder 1, %s89
      %p864 = scmp.lt.s32.totalorder %s89, 3
      %p865 = pnand %p863, %p864
      %p866 = pneg %p865
      // Predicated region
      $region9: #{_lambda_.1} parent=5 // pred_check
        _
      $region10: #{_lambda_.1} parent=5 // pred_check_branch
        %868 = sbr.rel (%p865) target = $region12
      $region11: #{_lambda_.1} parent=5 // pred_region
        %s869 = ssub.s32 %s89, 1
        // Predicated region
        $region13: #{_lambda_.1} parent=11 // pred_check
          %p870 = pneg %p136
        $region14: #{_lambda_.1} parent=11 // pred_check_branch
          %872 = sbr.rel (%p870) target = $region16
        $region15: #{_lambda_.1} parent=11 // pred_region
          _
        $region16: #{_lambda_.1} parent=11 // pred_fallthru
          _
        // Predicated region
        $region17: #{_lambda_.1} parent=11 // pred_check
          %p873 = pneg %p157
        $region18: #{_lambda_.1} parent=11 // pred_check_branch
          %875 = sbr.rel (%p873) target = $region20
        $region19: #{_lambda_.1} parent=11 // pred_region
          %s877 = ssub.s32 16, 16
          %878 = vsyncadd [#allocation4], %s877
          %s880 = sshll.u32 [#allocation3], 4
          %s881 = int_to_ptr.vmem [resolvable:$true] %s880
          %883 = dma.hbm_to_vmem [thread:$0]  %s5, 16, %s881, [#allocation4]
        $region20: #{_lambda_.1} parent=11 // pred_fallthru
          _
        // Predicated region
        $region21: #{_lambda_.1} parent=11 // pred_check
          %p884 = pneg %p178
        $region22: #{_lambda_.1} parent=11 // pred_check_branch
          %886 = sbr.rel (%p884) target = $region24
        $region23: #{_lambda_.1} parent=11 // pred_region
          _
        $region24: #{_lambda_.1} parent=11 // pred_fallthru
          _
        // Predicated region
        $region25: #{_lambda_.1} parent=11 // pred_check
          %p887 = pneg %p199
        $region26: #{_lambda_.1} parent=11 // pred_check_branch
          %889 = sbr.rel (%p887) target = $region28
        $region27: #{_lambda_.1} parent=11 // pred_region
          _
        $region28: #{_lambda_.1} parent=11 // pred_fallthru
          _
        // Predicated region
        $region29: #{_lambda_.1} parent=11 // pred_check
          %p890 = pneg %p220
        $region30: #{_lambda_.1} parent=11 // pred_check_branch
          %892 = sbr.rel (%p890) target = $region32
        $region31: #{_lambda_.1} parent=11 // pred_region
          %s894 = ssub.s32 16, 16
          %895 = vsyncadd [#allocation6], %s894
          %s897 = sshll.u32 [#allocation5], 4
          %s898 = int_to_ptr.vmem [resolvable:$true] %s897
          %900 = dma.hbm_to_vmem [thread:$0]  %s11, 16, %s898, [#allocation6]
        $region32: #{_lambda_.1} parent=11 // pred_fallthru
          _
        // Predicated region
        $region33: #{_lambda_.1} parent=11 // pred_check
          %p901 = pneg %p241
        $region34: #{_lambda_.1} parent=11 // pred_check_branch
          %903 = sbr.rel (%p901) target = $region36
        $region35: #{_lambda_.1} parent=11 // pred_region
          _
        $region36: #{_lambda_.1} parent=11 // pred_fallthru
          _
        // Predicated region
        $region37: #{_lambda_.1} parent=11 // pred_check
          %p904 = pneg %p262
        $region38: #{_lambda_.1} parent=11 // pred_check_branch
          %906 = sbr.rel (%p904) target = $region40
        $region39: #{_lambda_.1} parent=11 // pred_region
          %s908 = ssub.s32 16, 16
          %909 = vsyncadd [#allocation6], %s908
          %s911 = sshll.u32 [#allocation7], 4
          %s912 = int_to_ptr.vmem [resolvable:$true] %s911
          %914 = dma.hbm_to_vmem [thread:$0]  %s15, 16, %s912, [#allocation6]
        $region40: #{_lambda_.1} parent=11 // pred_fallthru
          _
        // Predicated region
        $region41: #{_lambda_.1} parent=11 // pred_check
          %p915 = pneg %p283
        $region42: #{_lambda_.1} parent=11 // pred_check_branch
          %917 = sbr.rel (%p915) target = $region44
        $region43: #{_lambda_.1} parent=11 // pred_region
          _
        $region44: #{_lambda_.1} parent=11 // pred_fallthru
          _
        // Predicated region
        $region45: #{_lambda_.1} parent=11 // pred_check
          %p918 = pneg %p304
        $region46: #{_lambda_.1} parent=11 // pred_check_branch
          %920 = sbr.rel (%p918) target = $region48
        $region47: #{_lambda_.1} parent=11 // pred_region
          %s922 = ssub.s32 16, 16
          %923 = vsyncadd [#allocation9], %s922
          %s925 = sshll.u32 [#allocation8], 4
          %s926 = int_to_ptr.vmem [resolvable:$true] %s925
          %928 = dma.hbm_to_vmem [thread:$0]  %s19, 16, %s926, [#allocation9]
        $region48: #{_lambda_.1} parent=11 // pred_fallthru
          _
        // Predicated region
        $region49: #{_lambda_.1} parent=11 // pred_check
          %p929 = pneg %p325
        $region50: #{_lambda_.1} parent=11 // pred_check_branch
          %931 = sbr.rel (%p929) target = $region52
        $region51: #{_lambda_.1} parent=11 // pred_region
          _
        $region52: #{_lambda_.1} parent=11 // pred_fallthru
          _
        // Predicated region
        $region53: #{_lambda_.1} parent=11 // pred_check
          %p932 = pneg %p346
        $region54: #{_lambda_.1} parent=11 // pred_check_branch
          %934 = sbr.rel (%p932) target = $region56
        $region55: #{_lambda_.1} parent=11 // pred_region
          %s936 = ssub.s32 16, 16
          %937 = vsyncadd [#allocation9], %s936
          %s939 = sshll.u32 [#allocation10], 4
          %s940 = int_to_ptr.vmem [resolvable:$true] %s939
          %942 = dma.hbm_to_vmem [thread:$0]  %s23, 16, %s940, [#allocation9]
        $region56: #{_lambda_.1} parent=11 // pred_fallthru
          _
        // Predicated region
        $region57: #{_lambda_.1} parent=11 // pred_check
          %p943 = pneg %p367
        $region58: #{_lambda_.1} parent=11 // pred_check_branch
          %945 = sbr.rel (%p943) target = $region60
        $region59: #{_lambda_.1} parent=11 // pred_region
          %s947 = ssub.s32 1024, 1024
          %948 = vsyncadd [#allocation12], %s947
          %s949 = sshll.u32 [#allocation11], 4
          %s950 = int_to_ptr.vmem [resolvable:$true] %s949
          %955 = dma.hbm_to_vmem [thread:$0]  %s25, 1024, %s950, [#allocation12], 64, 64, 4
        $region60: #{_lambda_.1} parent=11 // pred_fallthru
          _
        // Predicated region
        $region61: #{_lambda_.1} parent=11 // pred_check
          %p956 = pneg %p388
        $region62: #{_lambda_.1} parent=11 // pred_check_branch
          %958 = sbr.rel (%p956) target = $region64
        $region63: #{_lambda_.1} parent=11 // pred_region
          %s960 = ssub.s32 16, 16
          %961 = vsyncadd [#allocation12], %s960
          %s963 = sshll.u32 [#allocation13], 4
          %s964 = int_to_ptr.vmem [resolvable:$true] %s963
          %966 = dma.hbm_to_vmem [thread:$0]  %s27, 16, %s964, [#allocation12]
        $region64: #{_lambda_.1} parent=11 // pred_fallthru
          _
        // Predicated region
        $region65: #{_lambda_.1} parent=11 // pred_check
          %p967 = pneg %p409
        $region66: #{_lambda_.1} parent=11 // pred_check_branch
          %969 = sbr.rel (%p967) target = $region68
        $region67: #{_lambda_.1} parent=11 // pred_region
          _
        $region68: #{_lambda_.1} parent=11 // pred_fallthru
          _
        // Predicated region
        $region69: #{_lambda_.1} parent=11 // pred_check
          %p970 = pneg %p430
        $region70: #{_lambda_.1} parent=11 // pred_check_branch
          %972 = sbr.rel (%p970) target = $region72
        $region71: #{_lambda_.1} parent=11 // pred_region
          _
        $region72: #{_lambda_.1} parent=11 // pred_fallthru
          _
        // Predicated region
        $region73: #{_lambda_.1} parent=11 // pred_check
          %p973 = pneg %p451
        $region74: #{_lambda_.1} parent=11 // pred_check_branch
          %975 = sbr.rel (%p973) target = $region76
        $region75: #{_lambda_.1} parent=11 // pred_region
          %s977 = ssub.s32 32, 32
          %978 = vsyncadd [#allocation15], %s977
          %s980 = sshll.u32 [#allocation14], 4
          %s981 = int_to_ptr.vmem [resolvable:$true] %s980
          %983 = dma.hbm_to_vmem [thread:$0]  %s33, 32, %s981, [#allocation15]
        $region76: #{_lambda_.1} parent=11 // pred_fallthru
          _
        // Predicated region
        $region77: #{_lambda_.1} parent=11 // pred_check
          %p984 = pneg %p472
        $region78: #{_lambda_.1} parent=11 // pred_check_branch
          %986 = sbr.rel (%p984) target = $region80
        $region79: #{_lambda_.1} parent=11 // pred_region
          _
        $region80: #{_lambda_.1} parent=11 // pred_fallthru
          _
        // Predicated region
        $region81: #{_lambda_.1} parent=11 // pred_check
          %p987 = pneg %p493
        $region82: #{_lambda_.1} parent=11 // pred_check_branch
          %989 = sbr.rel (%p987) target = $region84
        $region83: #{_lambda_.1} parent=11 // pred_region
          %s991 = ssub.s32 32, 32
          %992 = vsyncadd [#allocation15], %s991
          %s994 = sshll.u32 [#allocation16], 4
          %s995 = int_to_ptr.vmem [resolvable:$true] %s994
          %997 = dma.hbm_to_vmem [thread:$0]  %s37, 32, %s995, [#allocation15]
        $region84: #{_lambda_.1} parent=11 // pred_fallthru
          _
        // Predicated region
        $region85: #{_lambda_.1} parent=11 // pred_check
          %p998 = pneg %p514
        $region86: #{_lambda_.1} parent=11 // pred_check_branch
          %1000 = sbr.rel (%p998) target = $region88
        $region87: #{_lambda_.1} parent=11 // pred_region
          _
        $region88: #{_lambda_.1} parent=11 // pred_fallthru
          _
        // Predicated region
        $region89: #{_lambda_.1} parent=11 // pred_check
          %p1001 = pneg %p535
        $region90: #{_lambda_.1} parent=11 // pred_check_branch
          %1003 = sbr.rel (%p1001) target = $region92
        $region91: #{_lambda_.1} parent=11 // pred_region
          %s1005 = ssub.s32 32, 32
          %1006 = vsyncadd [#allocation18], %s1005
          %s1008 = sshll.u32 [#allocation17], 4
          %s1009 = int_to_ptr.vmem [resolvable:$true] %s1008
          %1011 = dma.hbm_to_vmem [thread:$0]  %s41, 32, %s1009, [#allocation18]
        $region92: #{_lambda_.1} parent=11 // pred_fallthru
          _
        // Predicated region
        $region93: #{_lambda_.1} parent=11 // pred_check
          %p1012 = pneg %p556
        $region94: #{_lambda_.1} parent=11 // pred_check_branch
          %1014 = sbr.rel (%p1012) target = $region96
        $region95: #{_lambda_.1} parent=11 // pred_region
          %s1016 = ssub.s32 64, 64
          %1017 = vsyncadd [#allocation18], %s1016
          %s1019 = sshll.u32 [#allocation19], 4
          %s1020 = int_to_ptr.vmem [resolvable:$true] %s1019
          %1022 = dma.hbm_to_vmem [thread:$0]  %s43, 64, %s1020, [#allocation18]
        $region96: #{_lambda_.1} parent=11 // pred_fallthru
          _
        // Predicated region
        $region97: #{_lambda_.1} parent=11 // pred_check
          %p1023 = pneg %p577
        $region98: #{_lambda_.1} parent=11 // pred_check_branch
          %1025 = sbr.rel (%p1023) target = $region100
        $region99: #{_lambda_.1} parent=11 // pred_region
          _
        $region100: #{_lambda_.1} parent=11 // pred_fallthru
          _
        // Predicated region
        $region101: #{_lambda_.1} parent=11 // pred_check
          %p1026 = pneg %p598
        $region102: #{_lambda_.1} parent=11 // pred_check_branch
          %1028 = sbr.rel (%p1026) target = $region104
        $region103: #{_lambda_.1} parent=11 // pred_region
          %s1030 = ssub.s32 16, 16
          %1031 = vsyncadd [#allocation21], %s1030
          %s1033 = sshll.u32 [#allocation20], 4
          %s1034 = int_to_ptr.vmem [resolvable:$true] %s1033
          %1036 = dma.hbm_to_vmem [thread:$0]  %s47, 16, %s1034, [#allocation21]
        $region104: #{_lambda_.1} parent=11 // pred_fallthru
          _
        // Predicated region
        $region105: #{_lambda_.1} parent=11 // pred_check
          %p1037 = pneg %p619
        $region106: #{_lambda_.1} parent=11 // pred_check_branch
          %1039 = sbr.rel (%p1037) target = $region108
        $region107: #{_lambda_.1} parent=11 // pred_region
          _
        $region108: #{_lambda_.1} parent=11 // pred_fallthru
          _
        // Predicated region
        $region109: #{_lambda_.1} parent=11 // pred_check
          %p1040 = pneg %p640
        $region110: #{_lambda_.1} parent=11 // pred_check_branch
          %1042 = sbr.rel (%p1040) target = $region112
        $region111: #{_lambda_.1} parent=11 // pred_region
          %s1044 = ssub.s32 16, 16
          %1045 = vsyncadd [#allocation21], %s1044
          %s1047 = sshll.u32 [#allocation22], 4
          %s1048 = int_to_ptr.vmem [resolvable:$true] %s1047
          %1050 = dma.hbm_to_vmem [thread:$0]  %s51, 16, %s1048, [#allocation21]
        $region112: #{_lambda_.1} parent=11 // pred_fallthru
          _
        // Predicated region
        $region113: #{_lambda_.1} parent=11 // pred_check
          %p1051 = pneg %p661
        $region114: #{_lambda_.1} parent=11 // pred_check_branch
          %1053 = sbr.rel (%p1051) target = $region116
        $region115: #{_lambda_.1} parent=11 // pred_region
          _
        $region116: #{_lambda_.1} parent=11 // pred_fallthru
          _
        // Predicated region
        $region117: #{_lambda_.1} parent=11 // pred_check
          %p1054 = pneg %p682
        $region118: #{_lambda_.1} parent=11 // pred_check_branch
          %1056 = sbr.rel (%p1054) target = $region120
        $region119: #{_lambda_.1} parent=11 // pred_region
          %s1058 = ssub.s32 16, 16
          %1059 = vsyncadd [#allocation24], %s1058
          %s1061 = sshll.u32 [#allocation23], 4
          %s1062 = int_to_ptr.vmem [resolvable:$true] %s1061
          %1064 = dma.hbm_to_vmem [thread:$0]  %s55, 16, %s1062, [#allocation24]
        $region120: #{_lambda_.1} parent=11 // pred_fallthru
          _
        // Predicated region
        $region121: #{_lambda_.1} parent=11 // pred_check
          %p1065 = pneg %p703
        $region122: #{_lambda_.1} parent=11 // pred_check_branch
          %1067 = sbr.rel (%p1065) target = $region124
        $region123: #{_lambda_.1} parent=11 // pred_region
          _
        $region124: #{_lambda_.1} parent=11 // pred_fallthru
          _
        // Predicated region
        $region125: #{_lambda_.1} parent=11 // pred_check
          %p1068 = pneg %p724
        $region126: #{_lambda_.1} parent=11 // pred_check_branch
          %1070 = sbr.rel (%p1068) target = $region128
        $region127: #{_lambda_.1} parent=11 // pred_region
          %s1072 = ssub.s32 2048, 2048
          %1073 = vsyncadd [#allocation24], %s1072
          %s1074 = sshll.u32 [#allocation25], 4
          %s1075 = int_to_ptr.vmem [resolvable:$true] %s1074
          %1080 = dma.hbm_to_vmem [thread:$0]  %s59, 2048, %s1075, [#allocation24], 128, 128, 8
        $region128: #{_lambda_.1} parent=11 // pred_fallthru
          _
        // Predicated region
        $region129: #{_lambda_.1} parent=11 // pred_check
          %p1081 = pneg %p745
        $region130: #{_lambda_.1} parent=11 // pred_check_branch
          %1083 = sbr.rel (%p1081) target = $region132
        $region131: #{_lambda_.1} parent=11 // pred_region
          _
        $region132: #{_lambda_.1} parent=11 // pred_fallthru
          _
        // Predicated region
        $region133: #{_lambda_.1} parent=11 // pred_check
          %p1084 = pneg %p766
        $region134: #{_lambda_.1} parent=11 // pred_check_branch
          %1086 = sbr.rel (%p1084) target = $region136
        $region135: #{_lambda_.1} parent=11 // pred_region
          %s1088 = ssub.s32 2048, 2048
          %1089 = vsyncadd [#allocation27], %s1088
          %s1090 = sshll.u32 [#allocation26], 4
          %s1091 = int_to_ptr.vmem [resolvable:$true] %s1090
          %1096 = dma.hbm_to_vmem [thread:$0]  %s63, 2048, %s1091, [#allocation27], 128, 128, 8
        $region136: #{_lambda_.1} parent=11 // pred_fallthru
          _
        // Predicated region
        $region137: #{_lambda_.1} parent=11 // pred_check
          %p1097 = pneg %p787
        $region138: #{_lambda_.1} parent=11 // pred_check_branch
          %1099 = sbr.rel (%p1097) target = $region140
        $region139: #{_lambda_.1} parent=11 // pred_region
          %s1101 = ssub.s32 16, 16
          %1102 = vsyncadd [#allocation27], %s1101
          %s1104 = sshll.u32 [#allocation28], 4
          %s1105 = int_to_ptr.vmem [resolvable:$true] %s1104
          %1107 = dma.hbm_to_vmem [thread:$0]  %s65, 16, %s1105, [#allocation27]
        $region140: #{_lambda_.1} parent=11 // pred_fallthru
          _
        // Predicated region
        $region141: #{_lambda_.1} parent=11 // pred_check
          %p1108 = pneg %p808
        $region142: #{_lambda_.1} parent=11 // pred_check_branch
          %1110 = sbr.rel (%p1108) target = $region144
        $region143: #{_lambda_.1} parent=11 // pred_region
          %s1112 = ssub.s32 2048, 2048
          %1113 = vsyncadd [#allocation30], %s1112
          %s1114 = sshll.u32 [#allocation29], 4
          %s1115 = int_to_ptr.vmem [resolvable:$true] %s1114
          %1120 = dma.hbm_to_vmem [thread:$0]  %s67, 2048, %s1115, [#allocation30], 128, 128, 8
        $region144: #{_lambda_.1} parent=11 // pred_fallthru
          _
        // Predicated region
        $region145: #{_lambda_.1} parent=11 // pred_check
          %p1121 = pneg %p829
        $region146: #{_lambda_.1} parent=11 // pred_check_branch
          %1123 = sbr.rel (%p1121) target = $region148
        $region147: #{_lambda_.1} parent=11 // pred_region
          %s1125 = ssub.s32 16, 16
          %1126 = vsyncadd [#allocation30], %s1125
          %s1128 = sshll.u32 [#allocation31], 4
          %s1129 = int_to_ptr.vmem [resolvable:$true] %s1128
          %1131 = dma.hbm_to_vmem [thread:$0]  %s69, 16, %s1129, [#allocation30]
        $region148: #{_lambda_.1} parent=11 // pred_fallthru
          _
      $region12: #{_lambda_.1} parent=5 // pred_fallthru
        _
      %p1132 = scmp.lt.s32.totalorder %s89, 2
      // Predicated region
      $region149: #{_lambda_.1} parent=5 // pred_check
        %p1133 = pneg %p1132
      $region150: #{_lambda_.1} parent=5 // pred_check_branch
        %1135 = sbr.rel (%p1133) target = $region152
      $region151: #{_lambda_.1} parent=5 // pred_region
        // Predicated region
        $region153: #{_lambda_.1} parent=151 // pred_check
          %p1136 = pneg %p109
        $region154: #{_lambda_.1} parent=151 // pred_check_branch
          %1138 = sbr.rel (%p1136) target = $region156
        $region155: #{_lambda_.1} parent=151 // pred_region
          %p1139 = scmp.lt.s32.totalorder %s89, 1
          %s1140 = scalar_select %p1139, %s89, 1
          %s1141 = smul.addr %s1140, 9
          %s1142 = smul.addr %s1141, 8
          %s1143 = scalar_lea.vmem %s1, %s1142
        $region156: #{_lambda_.1} parent=151 // pred_fallthru
          _
      $region152: #{_lambda_.1} parent=5 // pred_fallthru
        _
      %p1144 = scmp.le.s32.totalorder 1, %s89
      %p1145 = scmp.lt.s32.totalorder %s89, 3
      %p1146 = pnand %p1144, %p1145
      %p1147 = pneg %p1146
      // Predicated region
      $region157: #{_lambda_.1} parent=5 // pred_check
        _
      $region158: #{_lambda_.1} parent=5 // pred_check_branch
        %1149 = sbr.rel (%p1146) target = $region160
      $region159: #{_lambda_.1} parent=5 // pred_region
        %s1150 = ssub.s32 %s89, 1
        // Predicated region
        $region161: #{_lambda_.1} parent=159 // pred_check
          %p1151 = pneg %p157
        $region162: #{_lambda_.1} parent=159 // pred_check_branch
          %1153 = sbr.rel (%p1151) target = $region164
        $region163: #{_lambda_.1} parent=159 // pred_region
          %1154 = dma.done [#allocation4], 16
        $region164: #{_lambda_.1} parent=159 // pred_fallthru
          _
        // Predicated region
        $region165: #{_lambda_.1} parent=159 // pred_check
          %p1155 = pneg %p220
        $region166: #{_lambda_.1} parent=159 // pred_check_branch
          %1157 = sbr.rel (%p1155) target = $region168
        $region167: #{_lambda_.1} parent=159 // pred_region
          %1158 = dma.done [#allocation6], 16
        $region168: #{_lambda_.1} parent=159 // pred_fallthru
          _
        // Predicated region
        $region169: #{_lambda_.1} parent=159 // pred_check
          %p1159 = pneg %p262
        $region170: #{_lambda_.1} parent=159 // pred_check_branch
          %1161 = sbr.rel (%p1159) target = $region172
        $region171: #{_lambda_.1} parent=159 // pred_region
          %1162 = dma.done [#allocation6], 16
        $region172: #{_lambda_.1} parent=159 // pred_fallthru
          _
        // Predicated region
        $region173: #{_lambda_.1} parent=159 // pred_check
          %p1163 = pneg %p304
        $region174: #{_lambda_.1} parent=159 // pred_check_branch
          %1165 = sbr.rel (%p1163) target = $region176
        $region175: #{_lambda_.1} parent=159 // pred_region
          %1166 = dma.done [#allocation9], 16
        $region176: #{_lambda_.1} parent=159 // pred_fallthru
          _
        // Predicated region
        $region177: #{_lambda_.1} parent=159 // pred_check
          %p1167 = pneg %p346
        $region178: #{_lambda_.1} parent=159 // pred_check_branch
          %1169 = sbr.rel (%p1167) target = $region180
        $region179: #{_lambda_.1} parent=159 // pred_region
          %1170 = dma.done [#allocation9], 16
        $region180: #{_lambda_.1} parent=159 // pred_fallthru
          _
        // Predicated region
        $region181: #{_lambda_.1} parent=159 // pred_check
          %p1171 = pneg %p367
        $region182: #{_lambda_.1} parent=159 // pred_check_branch
          %1173 = sbr.rel (%p1171) target = $region184
        $region183: #{_lambda_.1} parent=159 // pred_region
          %1174 = dma.done [#allocation12], 1024
        $region184: #{_lambda_.1} parent=159 // pred_fallthru
          _
        // Predicated region
        $region185: #{_lambda_.1} parent=159 // pred_check
          %p1175 = pneg %p388
        $region186: #{_lambda_.1} parent=159 // pred_check_branch
          %1177 = sbr.rel (%p1175) target = $region188
        $region187: #{_lambda_.1} parent=159 // pred_region
          %1178 = dma.done [#allocation12], 16
        $region188: #{_lambda_.1} parent=159 // pred_fallthru
          _
        // Predicated region
        $region189: #{_lambda_.1} parent=159 // pred_check
          %p1179 = pneg %p451
        $region190: #{_lambda_.1} parent=159 // pred_check_branch
          %1181 = sbr.rel (%p1179) target = $region192
        $region191: #{_lambda_.1} parent=159 // pred_region
          %1182 = dma.done [#allocation15], 32
        $region192: #{_lambda_.1} parent=159 // pred_fallthru
          _
        // Predicated region
        $region193: #{_lambda_.1} parent=159 // pred_check
          %p1183 = pneg %p493
        $region194: #{_lambda_.1} parent=159 // pred_check_branch
          %1185 = sbr.rel (%p1183) target = $region196
        $region195: #{_lambda_.1} parent=159 // pred_region
          %1186 = dma.done [#allocation15], 32
        $region196: #{_lambda_.1} parent=159 // pred_fallthru
          _
        // Predicated region
        $region197: #{_lambda_.1} parent=159 // pred_check
          %p1187 = pneg %p535
        $region198: #{_lambda_.1} parent=159 // pred_check_branch
          %1189 = sbr.rel (%p1187) target = $region200
        $region199: #{_lambda_.1} parent=159 // pred_region
          %1190 = dma.done [#allocation18], 32
        $region200: #{_lambda_.1} parent=159 // pred_fallthru
          _
        // Predicated region
        $region201: #{_lambda_.1} parent=159 // pred_check
          %p1191 = pneg %p556
        $region202: #{_lambda_.1} parent=159 // pred_check_branch
          %1193 = sbr.rel (%p1191) target = $region204
        $region203: #{_lambda_.1} parent=159 // pred_region
          %1194 = dma.done [#allocation18], 64
        $region204: #{_lambda_.1} parent=159 // pred_fallthru
          _
        // Predicated region
        $region205: #{_lambda_.1} parent=159 // pred_check
          %p1195 = pneg %p598
        $region206: #{_lambda_.1} parent=159 // pred_check_branch
          %1197 = sbr.rel (%p1195) target = $region208
        $region207: #{_lambda_.1} parent=159 // pred_region
          %1198 = dma.done [#allocation21], 16
        $region208: #{_lambda_.1} parent=159 // pred_fallthru
          _
        // Predicated region
        $region209: #{_lambda_.1} parent=159 // pred_check
          %p1199 = pneg %p640
        $region210: #{_lambda_.1} parent=159 // pred_check_branch
          %1201 = sbr.rel (%p1199) target = $region212
        $region211: #{_lambda_.1} parent=159 // pred_region
          %1202 = dma.done [#allocation21], 16
        $region212: #{_lambda_.1} parent=159 // pred_fallthru
          _
        // Predicated region
        $region213: #{_lambda_.1} parent=159 // pred_check
          %p1203 = pneg %p682
        $region214: #{_lambda_.1} parent=159 // pred_check_branch
          %1205 = sbr.rel (%p1203) target = $region216
        $region215: #{_lambda_.1} parent=159 // pred_region
          %1206 = dma.done [#allocation24], 16
        $region216: #{_lambda_.1} parent=159 // pred_fallthru
          _
        // Predicated region
        $region217: #{_lambda_.1} parent=159 // pred_check
          %p1207 = pneg %p724
        $region218: #{_lambda_.1} parent=159 // pred_check_branch
          %1209 = sbr.rel (%p1207) target = $region220
        $region219: #{_lambda_.1} parent=159 // pred_region
          %1210 = dma.done [#allocation24], 2048
        $region220: #{_lambda_.1} parent=159 // pred_fallthru
          _
        // Predicated region
        $region221: #{_lambda_.1} parent=159 // pred_check
          %p1211 = pneg %p766
        $region222: #{_lambda_.1} parent=159 // pred_check_branch
          %1213 = sbr.rel (%p1211) target = $region224
        $region223: #{_lambda_.1} parent=159 // pred_region
          %1214 = dma.done [#allocation27], 2048
        $region224: #{_lambda_.1} parent=159 // pred_fallthru
          _
        // Predicated region
        $region225: #{_lambda_.1} parent=159 // pred_check
          %p1215 = pneg %p787
        $region226: #{_lambda_.1} parent=159 // pred_check_branch
          %1217 = sbr.rel (%p1215) target = $region228
        $region227: #{_lambda_.1} parent=159 // pred_region
          %1218 = dma.done [#allocation27], 16
        $region228: #{_lambda_.1} parent=159 // pred_fallthru
          _
        // Predicated region
        $region229: #{_lambda_.1} parent=159 // pred_check
          %p1219 = pneg %p808
        $region230: #{_lambda_.1} parent=159 // pred_check_branch
          %1221 = sbr.rel (%p1219) target = $region232
        $region231: #{_lambda_.1} parent=159 // pred_region
          %1222 = dma.done [#allocation30], 2048
        $region232: #{_lambda_.1} parent=159 // pred_fallthru
          _
        // Predicated region
        $region233: #{_lambda_.1} parent=159 // pred_check
          %p1223 = pneg %p829
        $region234: #{_lambda_.1} parent=159 // pred_check_branch
          %1225 = sbr.rel (%p1223) target = $region236
        $region235: #{_lambda_.1} parent=159 // pred_region
          %1226 = dma.done [#allocation30], 16
        $region236: #{_lambda_.1} parent=159 // pred_fallthru
          _
        %p1227 = scmp.lt.s32.totalorder %s94, 1
        %s1228 = scalar_select %p1227, %s94, 1
        %s1229 = smul.addr %s1228, 9
        %s1230 = smul.addr %s1229, 8
        %s1231 = scalar_lea.vmem %s1, %s1230
        %p1232 = pneg %p115
        %p1233 = pneg %p112
        %p1234 = pneg %p136
        %p1235 = pneg %p133
        %p1236 = pneg %p157
        %p1237 = pneg %p154
        %p1238 = pneg %p178
        %p1239 = pneg %p175
        %p1240 = pneg %p199
        %p1241 = pneg %p196
        %p1242 = pneg %p220
        %p1243 = pneg %p217
        %p1244 = pneg %p241
        %p1245 = pneg %p238
        %p1246 = pneg %p262
        %p1247 = pneg %p259
        %p1248 = pneg %p283
        %p1249 = pneg %p280
        %p1250 = pneg %p304
        %p1251 = pneg %p301
        %p1252 = pneg %p325
        %p1253 = pneg %p322
        %p1254 = pneg %p346
        %p1255 = pneg %p343
        %p1256 = pneg %p367
        %p1257 = pneg %p364
        %p1258 = pneg %p388
        %p1259 = pneg %p385
        %p1260 = pneg %p409
        %p1261 = pneg %p406
        %p1262 = pneg %p430
        %p1263 = pneg %p427
        %p1264 = pneg %p451
        %p1265 = pneg %p448
        %p1266 = pneg %p472
        %p1267 = pneg %p469
        %p1268 = pneg %p493
        %p1269 = pneg %p490
        %p1270 = pneg %p514
        %p1271 = pneg %p511
        %p1272 = pneg %p535
        %p1273 = pneg %p532
        %p1274 = pneg %p556
        %p1275 = pneg %p553
        %p1276 = pneg %p577
        %p1277 = pneg %p574
        %p1278 = pneg %p598
        %p1279 = pneg %p595
        %p1280 = pneg %p619
        %p1281 = pneg %p616
        %p1282 = pneg %p640
        %p1283 = pneg %p637
        %p1284 = pneg %p661
        %p1285 = pneg %p658
        %p1286 = pneg %p682
        %p1287 = pneg %p679
        %p1288 = pneg %p703
        %p1289 = pneg %p700
        %p1290 = pneg %p724
        %p1291 = pneg %p721
        %p1292 = pneg %p745
        %p1293 = pneg %p742
        %p1294 = pneg %p766
        %p1295 = pneg %p763
        %p1296 = pneg %p787
        %p1297 = pneg %p784
        %p1298 = pneg %p808
        %p1299 = pneg %p805
        %p1300 = pneg %p829
        %p1301 = pneg %p826
        %p1302 = pneg %p855
        %p1303 = pneg %p852
        %p1304 = scmp.lt.s32.totalorder %s94, 1
        %s1305 = scalar_select %p1304, %s94, 1
        %s1306 = smul.addr %s1305, 2
        %s1307 = scalar_lea.vmem %s71, %s1306
        %p1308 = scmp.lt.s32.totalorder %s94, 1
        %s1309 = scalar_select %p1308, %s94, 1
        %s1310 = smul.addr %s1309, 9
        %s1311 = smul.addr %s1310, 8
        %s1312 = scalar_lea.vmem %s1, %s1311
        %p1313 = scmp.lt.s32.totalorder %s94, 1
        %s1314 = scalar_select %p1313, %s94, 1
        %s1315 = smul.addr %s1314, 2
        %s1316 = scalar_lea.vmem %s71, %s1315
        %v1318 = vld [vmem:[%s3] sm:$0xf]
        %v1319 = vld [vmem:[%s3 + $0x4] sm:$0xf]
        %v1320 = vld [vmem:[%s3 + $0x8] sm:$0xf]
        %v1321 = vld [vmem:[%s3 + $0xc] sm:$0xf]
        %v1322 = vld [vmem:[%s3 + $0x10] sm:$0xf]
        %v1323 = vld [vmem:[%s3 + $0x14] sm:$0xf]
        %v1324 = vld [vmem:[%s3 + $0x18] sm:$0xf]
        %v1325 = vld [vmem:[%s3 + $0x1c] sm:$0xf]
        %v1326 = vld [vmem:[%s3 + $0x20] sm:$0xf]
        %v1327 = vld [vmem:[%s3 + $0x24] sm:$0xf]
        %v1328 = vld [vmem:[%s3 + $0x28] sm:$0xf]
        %v1329 = vld [vmem:[%s3 + $0x2c] sm:$0xf]
        %v1330 = vld [vmem:[%s3 + $0x30] sm:$0xf]
        %v1331 = vld [vmem:[%s3 + $0x34] sm:$0xf]
        %v1332 = vld [vmem:[%s3 + $0x38] sm:$0xf]
        %v1333 = vld [vmem:[%s3 + $0x3c] sm:$0xf]
        %v1334 = vld [vmem:[%s3 + $0x40] sm:$0xf]
        %v1335 = vld [vmem:[%s3 + $0x44] sm:$0xf]
        %v1336 = vld [vmem:[%s3 + $0x48] sm:$0xf]
        %v1337 = vld [vmem:[%s3 + $0x4c] sm:$0xf]
        %v1338 = vld [vmem:[%s3 + $0x50] sm:$0xf]
        %v1339 = vld [vmem:[%s3 + $0x54] sm:$0xf]
        %v1340 = vld [vmem:[%s3 + $0x58] sm:$0xf]
        %v1341 = vld [vmem:[%s3 + $0x5c] sm:$0xf]
        %v1342 = vld [vmem:[%s3 + $0x60] sm:$0xf]
        %v1343 = vld [vmem:[%s3 + $0x64] sm:$0xf]
        %v1344 = vld [vmem:[%s3 + $0x68] sm:$0xf]
        %v1345 = vld [vmem:[%s3 + $0x6c] sm:$0xf]
        %v1346 = vld [vmem:[%s3 + $0x70] sm:$0xf]
        %v1347 = vld [vmem:[%s3 + $0x74] sm:$0xf]
        %v1348 = vld [vmem:[%s3 + $0x78] sm:$0xf]
        %v1349 = vld [vmem:[%s3 + $0x7c] sm:$0xf]
        %v1350 = vld [vmem:[%s3 + $0x80] sm:$0xf]
        %v1351 = vld [vmem:[%s3 + $0x84] sm:$0xf]
        %v1352 = vld [vmem:[%s3 + $0x88] sm:$0xf]
        %v1353 = vld [vmem:[%s3 + $0x8c] sm:$0xf]
        %v1354 = vld [vmem:[%s3 + $0x90] sm:$0xf]
        %v1355 = vld [vmem:[%s3 + $0x94] sm:$0xf]
        %v1356 = vld [vmem:[%s3 + $0x98] sm:$0xf]
        %v1357 = vld [vmem:[%s3 + $0x9c] sm:$0xf]
        %v1358 = vld [vmem:[%s3 + $0xa0] sm:$0xf]
        %v1359 = vld [vmem:[%s3 + $0xa4] sm:$0xf]
        %v1360 = vld [vmem:[%s3 + $0xa8] sm:$0xf]
        %v1361 = vld [vmem:[%s3 + $0xac] sm:$0xf]
        %v1362 = vld [vmem:[%s3 + $0xb0] sm:$0xf]
        %v1363 = vld [vmem:[%s3 + $0xb4] sm:$0xf]
        %v1364 = vld [vmem:[%s3 + $0xb8] sm:$0xf]
        %v1365 = vld [vmem:[%s3 + $0xbc] sm:$0xf]
        %v1366 = vld [vmem:[%s3 + $0xc0] sm:$0xf]
        %v1367 = vld [vmem:[%s3 + $0xc4] sm:$0xf]
        %v1368 = vld [vmem:[%s3 + $0xc8] sm:$0xf]
        %v1369 = vld [vmem:[%s3 + $0xcc] sm:$0xf]
        %v1370 = vld [vmem:[%s3 + $0xd0] sm:$0xf]
        %v1371 = vld [vmem:[%s3 + $0xd4] sm:$0xf]
        %v1372 = vld [vmem:[%s3 + $0xd8] sm:$0xf]
        %v1373 = vld [vmem:[%s3 + $0xdc] sm:$0xf]
        %v1374 = vld [vmem:[%s3 + $0xe0] sm:$0xf]
        %v1375 = vld [vmem:[%s3 + $0xe4] sm:$0xf]
        %v1376 = vld [vmem:[%s3 + $0xe8] sm:$0xf]
        %v1377 = vld [vmem:[%s3 + $0xec] sm:$0xf]
        %v1378 = vld [vmem:[%s3 + $0xf0] sm:$0xf]
        %v1379 = vld [vmem:[%s3 + $0xf4] sm:$0xf]
        %v1380 = vld [vmem:[%s3 + $0xf8] sm:$0xf]
        %v1381 = vld [vmem:[%s3 + $0xfc] sm:$0xf]
        %v1382 = vld [vmem:[%s3 + $0x100] sm:$0xf]
        %v1383 = vld [vmem:[%s3 + $0x104] sm:$0xf]
        %v1384 = vld [vmem:[%s3 + $0x108] sm:$0xf]
        %v1385 = vld [vmem:[%s3 + $0x10c] sm:$0xf]
        %v1386 = vld [vmem:[%s3 + $0x110] sm:$0xf]
        %v1387 = vld [vmem:[%s3 + $0x114] sm:$0xf]
        %v1388 = vld [vmem:[%s3 + $0x118] sm:$0xf]
        %v1389 = vld [vmem:[%s3 + $0x11c] sm:$0xf]
        %v1390 = vld [vmem:[%s3 + $0x120] sm:$0xf]
        %v1391 = vld [vmem:[%s3 + $0x124] sm:$0xf]
        %v1392 = vld [vmem:[%s3 + $0x128] sm:$0xf]
        %v1393 = vld [vmem:[%s3 + $0x12c] sm:$0xf]
        %v1394 = vld [vmem:[%s3 + $0x130] sm:$0xf]
        %v1395 = vld [vmem:[%s3 + $0x134] sm:$0xf]
        %v1396 = vld [vmem:[%s3 + $0x138] sm:$0xf]
        %v1397 = vld [vmem:[%s3 + $0x13c] sm:$0xf]
        %v1398 = vld [vmem:[%s3 + $0x140] sm:$0xf]
        %v1399 = vld [vmem:[%s3 + $0x144] sm:$0xf]
        %v1400 = vld [vmem:[%s3 + $0x148] sm:$0xf]
        %v1401 = vld [vmem:[%s3 + $0x14c] sm:$0xf]
        %v1402 = vld [vmem:[%s3 + $0x150] sm:$0xf]
        %v1403 = vld [vmem:[%s3 + $0x154] sm:$0xf]
        %v1404 = vld [vmem:[%s3 + $0x158] sm:$0xf]
        %v1405 = vld [vmem:[%s3 + $0x15c] sm:$0xf]
        %v1406 = vld [vmem:[%s3 + $0x160] sm:$0xf]
        %v1407 = vld [vmem:[%s3 + $0x164] sm:$0xf]
        %v1408 = vld [vmem:[%s3 + $0x168] sm:$0xf]
        %v1409 = vld [vmem:[%s3 + $0x16c] sm:$0xf]
        %v1410 = vld [vmem:[%s3 + $0x170] sm:$0xf]
        %v1411 = vld [vmem:[%s3 + $0x174] sm:$0xf]
        %v1412 = vld [vmem:[%s3 + $0x178] sm:$0xf]
        %v1413 = vld [vmem:[%s3 + $0x17c] sm:$0xf]
        %v1414 = vld [vmem:[%s3 + $0x180] sm:$0xf]
        %v1415 = vld [vmem:[%s3 + $0x184] sm:$0xf]
        %v1416 = vld [vmem:[%s3 + $0x188] sm:$0xf]
        %v1417 = vld [vmem:[%s3 + $0x18c] sm:$0xf]
        %v1418 = vld [vmem:[%s3 + $0x190] sm:$0xf]
        %v1419 = vld [vmem:[%s3 + $0x194] sm:$0xf]
        %v1420 = vld [vmem:[%s3 + $0x198] sm:$0xf]
        %v1421 = vld [vmem:[%s3 + $0x19c] sm:$0xf]
        %v1422 = vld [vmem:[%s3 + $0x1a0] sm:$0xf]
        %v1423 = vld [vmem:[%s3 + $0x1a4] sm:$0xf]
        %v1424 = vld [vmem:[%s3 + $0x1a8] sm:$0xf]
        %v1425 = vld [vmem:[%s3 + $0x1ac] sm:$0xf]
        %v1426 = vld [vmem:[%s3 + $0x1b0] sm:$0xf]
        %v1427 = vld [vmem:[%s3 + $0x1b4] sm:$0xf]
        %v1428 = vld [vmem:[%s3 + $0x1b8] sm:$0xf]
        %v1429 = vld [vmem:[%s3 + $0x1bc] sm:$0xf]
        %v1430 = vld [vmem:[#allocation3] sm:$0x1]
        %v1431 = vld [vmem:[%s7] sm:$0xf]
        %v1432 = vld [vmem:[%s7 + $0x4] sm:$0xf]
        %v1433 = vld [vmem:[%s7 + $0x8] sm:$0xf]
        %v1434 = vld [vmem:[%s7 + $0xc] sm:$0xf]
        %v1435 = vld [vmem:[%s1312] sm:$0xff]
        %v1436 = vld [vmem:[%s1312 + $0x8] sm:$0xff]
        %v1437 = vld [vmem:[%s1312 + $0x10] sm:$0xff]
        %v1438 = vld [vmem:[%s1312 + $0x18] sm:$0xff]
        %v1439 = vld [vmem:[%s1312 + $0x20] sm:$0xff]
        %v1440 = vld [vmem:[%s1312 + $0x28] sm:$0xff]
        %v1441 = vld [vmem:[%s1312 + $0x30] sm:$0xff]
        %v1442 = vld [vmem:[%s1312 + $0x38] sm:$0xff]
        %v1443 = vld [vmem:[%s1312 + $0x40] sm:$0x3f]
        %v1444 = vpack.c.bf16 %v1436, %v1435
        %v1445 = vpack.c.bf16 %v1438, %v1437
        %v1446 = vpack.c.bf16 %v1440, %v1439
        %v1447 = vpack.c.bf16 %v1442, %v1441
        %v1448 = vpack.c.bf16 %v1443, %v1443
        %vm1449 = vsmask.f32 7424
        %v1451 = vshrl.u32 %v1444, 16
        %v1453 = vshll.u32 %v1444, 16
        %v1455 = vrot.slane %v1453, 1
        %v1456 = vor.u32 %v1451, %v1455
        %v1458 = vshll.u32 %v1445, 16
        %v1460 = vrot.slane %v1458, 1
        %v1461 = vsel %vm1449, %v1456, %v1460
        %v1462 = vshrl.u32 %v1445, 16
        %v1464 = vor.u32 %v1462, %v1460
        %v1466 = vshll.u32 %v1446, 16
        %v1468 = vrot.slane %v1466, 1
        %v1469 = vsel %vm1449, %v1464, %v1468
        %v1470 = vshrl.u32 %v1446, 16
        %v1472 = vor.u32 %v1470, %v1468
        %v1474 = vshll.u32 %v1447, 16
        %v1476 = vrot.slane %v1474, 1
        %v1477 = vsel %vm1449, %v1472, %v1476
        %v1478 = vshrl.u32 %v1447, 16
        %v1480 = vor.u32 %v1478, %v1476
        %v1482 = vshll.u32 %v1448, 16
        %v1484 = vrot.slane %v1482, 1
        %v1485 = vsel %vm1449, %v1480, %v1484
        %vm1495 = vcmask 1046528
        %v1496 = vrot.slane %v1444, 1
        %v1497 = vrot.slane %v1445, 1
        %v1498 = vsel %vm1495, %v1496, %v1497
        %v1499 = vrot.slane %v1446, 1
        %v1500 = vsel %vm1495, %v1497, %v1499
        %v1501 = vrot.slane %v1447, 1
        %v1502 = vsel %vm1495, %v1499, %v1501
        %v1503 = vrot.slane %v1448, 1
        %v1504 = vsel %vm1495, %v1501, %v1503
        %vm1509 = vsmask.f32 6400
        %v1510 = vrot.slane %v1451, 1
        %v1511 = vrot.slane %v1453, 2
        %v1512 = vor.u32 %v1510, %v1511
        %v1513 = vrot.slane %v1462, 1
        %v1514 = vrot.slane %v1458, 2
        %v1515 = vor.u32 %v1513, %v1514
        %v1516 = vsel %vm1509, %v1512, %v1515
        %v1517 = vrot.slane %v1470, 1
        %v1518 = vrot.slane %v1466, 2
        %v1519 = vor.u32 %v1517, %v1518
        %v1520 = vsel %vm1509, %v1515, %v1519
        %v1521 = vrot.slane %v1478, 1
        %v1522 = vrot.slane %v1474, 2
        %v1523 = vor.u32 %v1521, %v1522
        %v1524 = vsel %vm1509, %v1519, %v1523
        %v1525 = vshrl.u32 %v1448, 16
        %v1527 = vrot.slane %v1525, 1
        %v1528 = vrot.slane %v1482, 2
        %v1529 = vor.u32 %v1527, %v1528
        %v1530 = vsel %vm1509, %v1523, %v1529
        %vm1535 = vcmask 1045504
        %v1536 = vrot.slane %v1444, 2
        %v1537 = vrot.slane %v1445, 2
        %v1538 = vsel %vm1535, %v1536, %v1537
        %v1539 = vrot.slane %v1446, 2
        %v1540 = vsel %vm1535, %v1537, %v1539
        %v1541 = vrot.slane %v1447, 2
        %v1542 = vsel %vm1535, %v1539, %v1541
        %v1543 = vrot.slane %v1448, 2
        %v1544 = vsel %vm1535, %v1541, %v1543
        %vm1549 = vsmask.f32 5376
        %v1550 = vrot.slane %v1451, 2
        %v1551 = vrot.slane %v1453, 3
        %v1552 = vor.u32 %v1550, %v1551
        %v1553 = vrot.slane %v1462, 2
        %v1554 = vrot.slane %v1458, 3
        %v1555 = vor.u32 %v1553, %v1554
        %v1556 = vsel %vm1549, %v1552, %v1555
        %v1557 = vrot.slane %v1470, 2
        %v1558 = vrot.slane %v1466, 3
        %v1559 = vor.u32 %v1557, %v1558
        %v1560 = vsel %vm1549, %v1555, %v1559
        %v1561 = vrot.slane %v1478, 2
        %v1562 = vrot.slane %v1474, 3
        %v1563 = vor.u32 %v1561, %v1562
        %v1564 = vsel %vm1549, %v1559, %v1563
        %v1565 = vrot.slane %v1525, 2
        %v1566 = vrot.slane %v1482, 3
        %v1567 = vor.u32 %v1565, %v1566
        %v1568 = vsel %vm1549, %v1563, %v1567
        %vm1573 = vcmask 1044480
        %v1574 = vrot.slane %v1444, 3
        %v1575 = vrot.slane %v1445, 3
        %v1576 = vsel %vm1573, %v1574, %v1575
        %v1577 = vrot.slane %v1446, 3
        %v1578 = vsel %vm1573, %v1575, %v1577
        %v1579 = vrot.slane %v1447, 3
        %v1580 = vsel %vm1573, %v1577, %v1579
        %v1581 = vrot.slane %v1448, 3
        %v1582 = vsel %vm1573, %v1579, %v1581
        %v1591 = vunpack.c.l.b16 %v1431
        %v1592 = vunpack.c.l.b16 %v1432
        %v1593 = vunpack.c.l.b16 %v1433
        %v1594 = vunpack.c.l.b16 %v1434
        %v1595 = vpack.c.b16 %v1592, %v1591
        %v1596 = vpack.c.b16 %v1594, %v1593
        %vm1597 = vcmask 523264
        %v1599 = vsel %vm1597, %v1595, 0
        %v1602 = vsel %vm1597, %v1596, 0
        %1604 = vmatprep.subr.bf16.mxu0 %v1461
        %1605 = vmatpush1.bf16.msra.mxu0 %v1444
        %1606 = vmatprep.subr.bf16.mxu0 %v1469
        %1607 = vmatpush1.bf16.msra.mxu0 %v1445
        %1608 = vmatprep.subr.bf16.mxu0 %v1477
        %1609 = vmatpush1.bf16.msra.mxu0 %v1446
        %1610 = vmatprep.subr.bf16.mxu0 %v1485
        %1611 = vmatpush1.bf16.msra.mxu0 %v1447
        %1612 = vmatprep.subr.bf16.mxu0 0
        %1613 = vmatpush1.bf16.msra.mxu0 0
        %1614 = vmatprep.subr.bf16.mxu0 0
        %1615 = vmatpush1.bf16.msra.mxu0 0
        %1616 = vmatprep.subr.bf16.mxu0 0
        %1617 = vmatpush1.bf16.msra.mxu0 0
        %1618 = vmatprep.subr.bf16.mxu0 0
        %1619 = vmatpush1.bf16.msra.mxu0 0
        %1620 = vmatprep.subr.bf16.mxu0 0
        %1621 = vmatpush1.bf16.msra.mxu0 0
        %1622 = vmatprep.subr.bf16.mxu0 0
        %1623 = vmatpush1.bf16.msra.mxu0 0
        %1624 = vmatprep.subr.bf16.mxu0 0
        %1625 = vmatpush1.bf16.msra.mxu0 0
        %1626 = vmatprep.subr.bf16.mxu0 0
        %1627 = vmatpush1.bf16.msra.mxu0 0
        %1628 = vmatprep.subr.bf16.mxu0 0
        %1629 = vmatpush1.bf16.msra.mxu0 0
        %1630 = vmatprep.subr.bf16.mxu0 0
        %1631 = vmatpush1.bf16.msra.mxu0 0
        %1632 = vmatprep.subr.bf16.mxu0 0
        %1633 = vmatpush1.bf16.msra.mxu0 0
        %1634 = vmatprep.subr.bf16.mxu0 0
        %1635 = vmatpush1.bf16.msra.mxu0 0
        %1636 = vmatprep.mubr.bf16.mxu0 0
        %1637 = vmatmul.mubr.bf16.gmra.mrb[0].mxu0 %v1599
        %v1638 = vpop.f32.mrb[0].mxu0
        %v1639 = vadd.f32 0.0, %v1638
        %v1640 = vpop.f32.mrb[0].mxu0
        %v1641 = vadd.f32 0.0, %v1640
        %v1642 = vpop.f32.mrb[0].mxu0
        %v1643 = vadd.f32 0.0, %v1642
        %v1644 = vpop.f32.mrb[0].mxu0
        %v1645 = vadd.f32 0.0, %v1644
        %1646 = vmatprep.mubr.bf16.mxu0 0
        %1647 = vmatmul.mubr.bf16.gmra.mrb[0].mxu0 %v1602
        %v1648 = vpop.f32.mrb[0].mxu0
        %v1649 = vadd.f32 0.0, %v1648
        %v1650 = vpop.f32.mrb[0].mxu0
        %v1651 = vadd.f32 0.0, %v1650
        %v1652 = vpop.f32.mrb[0].mxu0
        %v1653 = vadd.f32 0.0, %v1652
        %v1654 = vpop.f32.mrb[0].mxu0
        %v1655 = vadd.f32 0.0, %v1654
        %1656 = vdwg.mxu0
        %1657 = vmatprep.subr.bf16.mxu0 %v1516
        %1658 = vmatpush1.bf16.msra.mxu0 %v1498
        %1659 = vmatprep.subr.bf16.mxu0 %v1520
        %1660 = vmatpush1.bf16.msra.mxu0 %v1500
        %1661 = vmatprep.subr.bf16.mxu0 %v1524
        %1662 = vmatpush1.bf16.msra.mxu0 %v1502
        %1663 = vmatprep.subr.bf16.mxu0 %v1530
        %1664 = vmatpush1.bf16.msra.mxu0 %v1504
        %1665 = vmatprep.subr.bf16.mxu0 0
        %1666 = vmatpush1.bf16.msra.mxu0 0
        %1667 = vmatprep.subr.bf16.mxu0 0
        %1668 = vmatpush1.bf16.msra.mxu0 0
        %1669 = vmatprep.subr.bf16.mxu0 0
        %1670 = vmatpush1.bf16.msra.mxu0 0
        %1671 = vmatprep.subr.bf16.mxu0 0
        %1672 = vmatpush1.bf16.msra.mxu0 0
        %1673 = vmatprep.subr.bf16.mxu0 0
        %1674 = vmatpush1.bf16.msra.mxu0 0
        %1675 = vmatprep.subr.bf16.mxu0 0
        %1676 = vmatpush1.bf16.msra.mxu0 0
        %1677 = vmatprep.subr.bf16.mxu0 0
        %1678 = vmatpush1.bf16.msra.mxu0 0
        %1679 = vmatprep.subr.bf16.mxu0 0
        %1680 = vmatpush1.bf16.msra.mxu0 0
        %1681 = vmatprep.subr.bf16.mxu0 0
        %1682 = vmatpush1.bf16.msra.mxu0 0
        %1683 = vmatprep.subr.bf16.mxu0 0
        %1684 = vmatpush1.bf16.msra.mxu0 0
        %1685 = vmatprep.subr.bf16.mxu0 0
        %1686 = vmatpush1.bf16.msra.mxu0 0
        %1687 = vmatprep.subr.bf16.mxu0 0
        %1688 = vmatpush1.bf16.msra.mxu0 0
        %1689 = vmatprep.mubr.bf16.mxu0 0
        %1690 = vmatmul.mubr.bf16.gmra.mrb[0].mxu0 %v1599
        %v1691 = vpop.f32.mrb[0].mxu0
        %v1692 = vadd.f32 0.0, %v1691
        %v1693 = vpop.f32.mrb[0].mxu0
        %v1694 = vadd.f32 0.0, %v1693
        %v1695 = vpop.f32.mrb[0].mxu0
        %v1696 = vadd.f32 0.0, %v1695
        %v1697 = vpop.f32.mrb[0].mxu0
        %v1698 = vadd.f32 0.0, %v1697
        %1699 = vmatprep.mubr.bf16.mxu0 0
        %1700 = vmatmul.mubr.bf16.gmra.mrb[0].mxu0 %v1602
        %v1701 = vpop.f32.mrb[0].mxu0
        %v1702 = vadd.f32 0.0, %v1701
        %v1703 = vpop.f32.mrb[0].mxu0
        %v1704 = vadd.f32 0.0, %v1703
        %v1705 = vpop.f32.mrb[0].mxu0
        %v1706 = vadd.f32 0.0, %v1705
        %v1707 = vpop.f32.mrb[0].mxu0
        %v1708 = vadd.f32 0.0, %v1707
        %1709 = vdwg.mxu0
        %1710 = vmatprep.subr.bf16.mxu0 %v1556
        %1711 = vmatpush1.bf16.msra.mxu0 %v1538
        %1712 = vmatprep.subr.bf16.mxu0 %v1560
        %1713 = vmatpush1.bf16.msra.mxu0 %v1540
        %1714 = vmatprep.subr.bf16.mxu0 %v1564
        %1715 = vmatpush1.bf16.msra.mxu0 %v1542
        %1716 = vmatprep.subr.bf16.mxu0 %v1568
        %1717 = vmatpush1.bf16.msra.mxu0 %v1544
        %1718 = vmatprep.subr.bf16.mxu0 0
        %1719 = vmatpush1.bf16.msra.mxu0 0
        %1720 = vmatprep.subr.bf16.mxu0 0
        %1721 = vmatpush1.bf16.msra.mxu0 0
        %1722 = vmatprep.subr.bf16.mxu0 0
        %1723 = vmatpush1.bf16.msra.mxu0 0
        %1724 = vmatprep.subr.bf16.mxu0 0
        %1725 = vmatpush1.bf16.msra.mxu0 0
        %1726 = vmatprep.subr.bf16.mxu0 0
        %1727 = vmatpush1.bf16.msra.mxu0 0
        %1728 = vmatprep.subr.bf16.mxu0 0
        %1729 = vmatpush1.bf16.msra.mxu0 0
        %1730 = vmatprep.subr.bf16.mxu0 0
        %1731 = vmatpush1.bf16.msra.mxu0 0
        %1732 = vmatprep.subr.bf16.mxu0 0
        %1733 = vmatpush1.bf16.msra.mxu0 0
        %1734 = vmatprep.subr.bf16.mxu0 0
        %1735 = vmatpush1.bf16.msra.mxu0 0
        %1736 = vmatprep.subr.bf16.mxu0 0
        %1737 = vmatpush1.bf16.msra.mxu0 0
        %1738 = vmatprep.subr.bf16.mxu0 0
        %1739 = vmatpush1.bf16.msra.mxu0 0
        %1740 = vmatprep.subr.bf16.mxu0 0
        %1741 = vmatpush1.bf16.msra.mxu0 0
        %1742 = vmatprep.mubr.bf16.mxu0 0
        %1743 = vmatmul.mubr.bf16.gmra.mrb[0].mxu0 %v1599
        %v1744 = vpop.f32.mrb[0].mxu0
        %v1745 = vadd.f32 0.0, %v1744
        %v1746 = vpop.f32.mrb[0].mxu0
        %v1747 = vadd.f32 0.0, %v1746
        %v1748 = vpop.f32.mrb[0].mxu0
        %v1749 = vadd.f32 0.0, %v1748
        %v1750 = vpop.f32.mrb[0].mxu0
        %v1751 = vadd.f32 0.0, %v1750
        %1752 = vmatprep.mubr.bf16.mxu0 0
        %1753 = vmatmul.mubr.bf16.gmra.mrb[0].mxu0 %v1602
        %v1754 = vpop.f32.mrb[0].mxu0
        %v1755 = vadd.f32 0.0, %v1754
        %v1756 = vpop.f32.mrb[0].mxu0
        %v1757 = vadd.f32 0.0, %v1756
        %v1758 = vpop.f32.mrb[0].mxu0
        %v1759 = vadd.f32 0.0, %v1758
        %v1760 = vpop.f32.mrb[0].mxu0
        %v1761 = vadd.f32 0.0, %v1760
        %1762 = vdwg.mxu0
        %1763 = vmatprep.subr.bf16.mxu0 0
        %1764 = vmatpush1.bf16.msra.mxu0 %v1576
        %1765 = vmatprep.subr.bf16.mxu0 0
        %1766 = vmatpush1.bf16.msra.mxu0 %v1578
        %1767 = vmatprep.subr.bf16.mxu0 0
        %1768 = vmatpush1.bf16.msra.mxu0 %v1580
        %1769 = vmatprep.subr.bf16.mxu0 0
        %1770 = vmatpush1.bf16.msra.mxu0 %v1582
        %1771 = vmatprep.subr.bf16.mxu0 0
        %1772 = vmatpush1.bf16.msra.mxu0 0
        %1773 = vmatprep.subr.bf16.mxu0 0
        %1774 = vmatpush1.bf16.msra.mxu0 0
        %1775 = vmatprep.subr.bf16.mxu0 0
        %1776 = vmatpush1.bf16.msra.mxu0 0
        %1777 = vmatprep.subr.bf16.mxu0 0
        %1778 = vmatpush1.bf16.msra.mxu0 0
        %1779 = vmatprep.subr.bf16.mxu0 0
        %1780 = vmatpush1.bf16.msra.mxu0 0
        %1781 = vmatprep.subr.bf16.mxu0 0
        %1782 = vmatpush1.bf16.msra.mxu0 0
        %1783 = vmatprep.subr.bf16.mxu0 0
        %1784 = vmatpush1.bf16.msra.mxu0 0
        %1785 = vmatprep.subr.bf16.mxu0 0
        %1786 = vmatpush1.bf16.msra.mxu0 0
        %1787 = vmatprep.subr.bf16.mxu0 0
        %1788 = vmatpush1.bf16.msra.mxu0 0
        %1789 = vmatprep.subr.bf16.mxu0 0
        %1790 = vmatpush1.bf16.msra.mxu0 0
        %1791 = vmatprep.subr.bf16.mxu0 0
        %1792 = vmatpush1.bf16.msra.mxu0 0
        %1793 = vmatprep.subr.bf16.mxu0 0
        %1794 = vmatpush1.bf16.msra.mxu0 0
        %1795 = vmatprep.mubr.bf16.mxu0 0
        %1796 = vmatmul.mubr.bf16.gmra.mrb[0].mxu0 %v1599
        %v1797 = vpop.f32.mrb[0].mxu0
        %v1798 = vadd.f32 0.0, %v1797
        %v1799 = vpop.f32.mrb[0].mxu0
        %v1800 = vpop.f32.mrb[0].mxu0
        %v1801 = vadd.f32 0.0, %v1800
        %v1802 = vpop.f32.mrb[0].mxu0
        %1803 = vmatprep.mubr.bf16.mxu0 0
        %1804 = vmatmul.mubr.bf16.gmra.mrb[0].mxu0 %v1602
        %v1805 = vpop.f32.mrb[0].mxu0
        %v1806 = vadd.f32 0.0, %v1805
        %v1807 = vpop.f32.mrb[0].mxu0
        %v1808 = vpop.f32.mrb[0].mxu0
        %v1809 = vadd.f32 0.0, %v1808
        %v1810 = vpop.f32.mrb[0].mxu0
        %1811 = vdwg.mxu0
        %v1812 = vpack.c.bf16 %v1643, %v1639
        %v1813 = vpack.c.bf16 %v1645, %v1641
        %v1814 = vpack.c.bf16 %v1696, %v1692
        %v1815 = vpack.c.bf16 %v1698, %v1694
        %v1816 = vpack.c.bf16 %v1749, %v1745
        %v1817 = vpack.c.bf16 %v1751, %v1747
        %v1818 = vpack.c.bf16 %v1801, %v1798
        %v1819 = vpack.c.bf16 %v1653, %v1649
        %v1820 = vpack.c.bf16 %v1655, %v1651
        %v1821 = vpack.c.bf16 %v1706, %v1702
        %v1822 = vpack.c.bf16 %v1708, %v1704
        %v1823 = vpack.c.bf16 %v1759, %v1755
        %v1824 = vpack.c.bf16 %v1761, %v1757
        %v1825 = vpack.c.bf16 %v1809, %v1806
        %v1827 = vlaneseq
        %v1828 = vshrl.u32 %v1827, 7
        %v1829 = vsub.s32 0, %v1828
        %v1830 = vrot.slane %v1430, %v1829
        %v1944 = vunpack.c.l.b16 %v1318
        %v1945 = vunpack.c.l.b16 %v1319
        %v1946 = vunpack.c.l.b16 %v1320
        %v1947 = vunpack.c.l.b16 %v1321
        %v1948 = vunpack.c.l.b16 %v1322
        %v1949 = vunpack.c.l.b16 %v1323
        %v1950 = vunpack.c.l.b16 %v1324
        %v1951 = vunpack.c.l.b16 %v1325
        %v1952 = vunpack.c.l.b16 %v1326
        %v1953 = vunpack.c.l.b16 %v1327
        %v1954 = vunpack.c.l.b16 %v1328
        %v1955 = vunpack.c.l.b16 %v1329
        %v1956 = vunpack.c.l.b16 %v1330
        %v1957 = vunpack.c.l.b16 %v1331
        %v1958 = vunpack.c.l.b16 %v1332
        %v1959 = vunpack.c.l.b16 %v1333
        %v1960 = vunpack.c.l.b16 %v1334
        %v1961 = vunpack.c.l.b16 %v1335
        %v1962 = vunpack.c.l.b16 %v1336
        %v1963 = vunpack.c.l.b16 %v1337
        %v1964 = vunpack.c.l.b16 %v1338
        %v1965 = vunpack.c.l.b16 %v1339
        %v1966 = vunpack.c.l.b16 %v1340
        %v1967 = vunpack.c.l.b16 %v1341
        %v1968 = vunpack.c.l.b16 %v1342
        %v1969 = vunpack.c.l.b16 %v1343
        %v1970 = vunpack.c.l.b16 %v1344
        %v1971 = vunpack.c.l.b16 %v1345
        %v1972 = vunpack.c.l.b16 %v1346
        %v1973 = vunpack.c.l.b16 %v1347
        %v1974 = vunpack.c.l.b16 %v1348
        %v1975 = vunpack.c.l.b16 %v1349
        %v1976 = vunpack.c.l.b16 %v1350
        %v1977 = vunpack.c.l.b16 %v1351
        %v1978 = vunpack.c.l.b16 %v1352
        %v1979 = vunpack.c.l.b16 %v1353
        %v1980 = vunpack.c.l.b16 %v1354
        %v1981 = vunpack.c.l.b16 %v1355
        %v1982 = vunpack.c.l.b16 %v1356
        %v1983 = vunpack.c.l.b16 %v1357
        %v1984 = vunpack.c.l.b16 %v1358
        %v1985 = vunpack.c.l.b16 %v1359
        %v1986 = vunpack.c.l.b16 %v1360
        %v1987 = vunpack.c.l.b16 %v1361
        %v1988 = vunpack.c.l.b16 %v1362
        %v1989 = vunpack.c.l.b16 %v1363
        %v1990 = vunpack.c.l.b16 %v1364
        %v1991 = vunpack.c.l.b16 %v1365
        %v1992 = vunpack.c.l.b16 %v1366
        %v1993 = vunpack.c.l.b16 %v1367
        %v1994 = vunpack.c.l.b16 %v1368
        %v1995 = vunpack.c.l.b16 %v1369
        %v1996 = vunpack.c.l.b16 %v1370
        %v1997 = vunpack.c.l.b16 %v1371
        %v1998 = vunpack.c.l.b16 %v1372
        %v1999 = vunpack.c.l.b16 %v1373
        %v2000 = vunpack.c.l.b16 %v1374
        %v2001 = vunpack.c.l.b16 %v1375
        %v2002 = vunpack.c.l.b16 %v1376
        %v2003 = vunpack.c.l.b16 %v1377
        %v2004 = vunpack.c.l.b16 %v1378
        %v2005 = vunpack.c.l.b16 %v1379
        %v2006 = vunpack.c.l.b16 %v1380
        %v2007 = vunpack.c.l.b16 %v1381
        %v2008 = vunpack.c.l.b16 %v1382
        %v2009 = vunpack.c.l.b16 %v1383
        %v2010 = vunpack.c.l.b16 %v1384
        %v2011 = vunpack.c.l.b16 %v1385
        %v2012 = vunpack.c.l.b16 %v1386
        %v2013 = vunpack.c.l.b16 %v1387
        %v2014 = vunpack.c.l.b16 %v1388
        %v2015 = vunpack.c.l.b16 %v1389
        %v2016 = vunpack.c.l.b16 %v1390
        %v2017 = vunpack.c.l.b16 %v1391
        %v2018 = vunpack.c.l.b16 %v1392
        %v2019 = vunpack.c.l.b16 %v1393
        %v2020 = vunpack.c.l.b16 %v1394
        %v2021 = vunpack.c.l.b16 %v1395
        %v2022 = vunpack.c.l.b16 %v1396
        %v2023 = vunpack.c.l.b16 %v1397
        %v2024 = vunpack.c.l.b16 %v1398
        %v2025 = vunpack.c.l.b16 %v1399
        %v2026 = vunpack.c.l.b16 %v1400
        %v2027 = vunpack.c.l.b16 %v1401
        %v2028 = vunpack.c.l.b16 %v1402
        %v2029 = vunpack.c.l.b16 %v1403
        %v2030 = vunpack.c.l.b16 %v1404
        %v2031 = vunpack.c.l.b16 %v1405
        %v2032 = vunpack.c.l.b16 %v1406
        %v2033 = vunpack.c.l.b16 %v1407
        %v2034 = vunpack.c.l.b16 %v1408
        %v2035 = vunpack.c.l.b16 %v1409
        %v2036 = vunpack.c.l.b16 %v1410
        %v2037 = vunpack.c.l.b16 %v1411
        %v2038 = vunpack.c.l.b16 %v1412
        %v2039 = vunpack.c.l.b16 %v1413
        %v2040 = vunpack.c.l.b16 %v1414
        %v2041 = vunpack.c.l.b16 %v1415
        %v2042 = vunpack.c.l.b16 %v1416
        %v2043 = vunpack.c.l.b16 %v1417
        %v2044 = vunpack.c.l.b16 %v1418
        %v2045 = vunpack.c.l.b16 %v1419
        %v2046 = vunpack.c.l.b16 %v1420
        %v2047 = vunpack.c.l.b16 %v1421
        %v2048 = vunpack.c.l.b16 %v1422
        %v2049 = vunpack.c.l.b16 %v1423
        %v2050 = vunpack.c.l.b16 %v1424
        %v2051 = vunpack.c.l.b16 %v1425
        %v2052 = vunpack.c.l.b16 %v1426
        %v2053 = vunpack.c.l.b16 %v1427
        %v2054 = vunpack.c.l.b16 %v1428
        %v2055 = vunpack.c.l.b16 %v1429
        %v2056 = vpack.c.b16 %v1945, %v1944
        %v2057 = vpack.c.b16 %v1947, %v1946
        %v2058 = vpack.c.b16 %v1949, %v1948
        %v2059 = vpack.c.b16 %v1951, %v1950
        %v2060 = vpack.c.b16 %v1953, %v1952
        %v2061 = vpack.c.b16 %v1955, %v1954
        %v2062 = vpack.c.b16 %v1957, %v1956
        %v2063 = vpack.c.b16 %v1959, %v1958
        %v2064 = vpack.c.b16 %v1961, %v1960
        %v2065 = vpack.c.b16 %v1963, %v1962
        %v2066 = vpack.c.b16 %v1965, %v1964
        %v2067 = vpack.c.b16 %v1967, %v1966
        %v2068 = vpack.c.b16 %v1969, %v1968
        %v2069 = vpack.c.b16 %v1971, %v1970
        %v2070 = vpack.c.b16 %v1973, %v1972
        %v2071 = vpack.c.b16 %v1975, %v1974
        %v2072 = vpack.c.b16 %v1977, %v1976
        %v2073 = vpack.c.b16 %v1979, %v1978
        %v2074 = vpack.c.b16 %v1981, %v1980
        %v2075 = vpack.c.b16 %v1983, %v1982
        %v2076 = vpack.c.b16 %v1985, %v1984
        %v2077 = vpack.c.b16 %v1987, %v1986
        %v2078 = vpack.c.b16 %v1989, %v1988
        %v2079 = vpack.c.b16 %v1991, %v1990
        %v2080 = vpack.c.b16 %v1993, %v1992
        %v2081 = vpack.c.b16 %v1995, %v1994
        %v2082 = vpack.c.b16 %v1997, %v1996
        %v2083 = vpack.c.b16 %v1999, %v1998
        %v2084 = vpack.c.b16 %v2001, %v2000
        %v2085 = vpack.c.b16 %v2003, %v2002
        %v2086 = vpack.c.b16 %v2005, %v2004
        %v2087 = vpack.c.b16 %v2007, %v2006
        %v2088 = vpack.c.b16 %v2009, %v2008
        %v2089 = vpack.c.b16 %v2011, %v2010
        %v2090 = vpack.c.b16 %v2013, %v2012
        %v2091 = vpack.c.b16 %v2015, %v2014
        %v2092 = vpack.c.b16 %v2017, %v2016
        %v2093 = vpack.c.b16 %v2019, %v2018
        %v2094 = vpack.c.b16 %v2021, %v2020
        %v2095 = vpack.c.b16 %v2023, %v2022
        %v2096 = vpack.c.b16 %v2025, %v2024
        %v2097 = vpack.c.b16 %v2027, %v2026
        %v2098 = vpack.c.b16 %v2029, %v2028
        %v2099 = vpack.c.b16 %v2031, %v2030
        %v2100 = vpack.c.b16 %v2033, %v2032
        %v2101 = vpack.c.b16 %v2035, %v2034
        %v2102 = vpack.c.b16 %v2037, %v2036
        %v2103 = vpack.c.b16 %v2039, %v2038
        %v2104 = vpack.c.b16 %v2041, %v2040
        %v2105 = vpack.c.b16 %v2043, %v2042
        %v2106 = vpack.c.b16 %v2045, %v2044
        %v2107 = vpack.c.b16 %v2047, %v2046
        %v2108 = vpack.c.b16 %v2049, %v2048
        %v2109 = vpack.c.b16 %v2051, %v2050
        %v2110 = vpack.c.b16 %v2053, %v2052
        %v2111 = vpack.c.b16 %v2055, %v2054
        %2168 = vmatprep.subr.bf16.mxu0 0
        %2169 = vmatpush1.bf16.msra.mxu0 %v2056
        %2170 = vmatprep.subr.bf16.mxu0 0
        %2171 = vmatpush1.bf16.msra.mxu0 %v2057
        %2172 = vmatprep.subr.bf16.mxu0 0
        %2173 = vmatpush1.bf16.msra.mxu0 %v2058
        %2174 = vmatprep.subr.bf16.mxu0 0
        %2175 = vmatpush1.bf16.msra.mxu0 %v2059
        %2176 = vmatprep.subr.bf16.mxu0 0
        %2177 = vmatpush1.bf16.msra.mxu0 %v2060
        %2178 = vmatprep.subr.bf16.mxu0 0
        %2179 = vmatpush1.bf16.msra.mxu0 %v2061
        %2180 = vmatprep.subr.bf16.mxu0 0
        %2181 = vmatpush1.bf16.msra.mxu0 %v2062
        %2182 = vmatprep.subr.bf16.mxu0 0
        %2183 = vmatpush1.bf16.msra.mxu0 %v2063
        %2184 = vmatprep.subr.bf16.mxu0 0
        %2185 = vmatpush1.bf16.msra.mxu0 %v2064
        %2186 = vmatprep.subr.bf16.mxu0 0
        %2187 = vmatpush1.bf16.msra.mxu0 %v2065
        %2188 = vmatprep.subr.bf16.mxu0 0
        %2189 = vmatpush1.bf16.msra.mxu0 %v2066
        %2190 = vmatprep.subr.bf16.mxu0 0
        %2191 = vmatpush1.bf16.msra.mxu0 %v2067
        %2192 = vmatprep.subr.bf16.mxu0 0
        %2193 = vmatpush1.bf16.msra.mxu0 %v2068
        %2194 = vmatprep.subr.bf16.mxu0 0
        %2195 = vmatpush1.bf16.msra.mxu0 %v2069
        %2196 = vmatprep.subr.bf16.mxu0 0
        %2197 = vmatpush1.bf16.msra.mxu0 %v2070
        %2198 = vmatprep.subr.bf16.mxu0 0
        %2199 = vmatpush1.bf16.msra.mxu0 %v2071
        %2200 = vmatprep.mubr.bf16.mxu0 %v1813
        %2201 = vmatmul.mubr.bf16.gmra.mrb[0].mxu0 %v1812
        %v2202 = vpop.f32.mrb[0].mxu0
        %v2203 = vadd.f32 %v1830, %v2202
        %v2204 = vpop.f32.mrb[0].mxu0
        %v2205 = vpop.f32.mrb[0].mxu0
        %v2206 = vadd.f32 %v1830, %v2205
        %v2207 = vpop.f32.mrb[0].mxu0
        %2208 = vmatprep.mubr.bf16.mxu0 %v1820
        %2209 = vmatmul.mubr.bf16.gmra.mrb[0].mxu0 %v1819
        %v2210 = vpop.f32.mrb[0].mxu0
        %v2211 = vadd.f32 %v1830, %v2210
        %v2212 = vpop.f32.mrb[0].mxu0
        %v2213 = vpop.f32.mrb[0].mxu0
        %v2214 = vadd.f32 %v1830, %v2213
        %v2215 = vpop.f32.mrb[0].mxu0
        %2216 = vdwg.mxu0
        %2217 = vmatprep.subr.bf16.mxu0 0
        %2218 = vmatpush1.bf16.msra.mxu0 %v2072
        %2219 = vmatprep.subr.bf16.mxu0 0
        %2220 = vmatpush1.bf16.msra.mxu0 %v2073
        %2221 = vmatprep.subr.bf16.mxu0 0
        %2222 = vmatpush1.bf16.msra.mxu0 %v2074
        %2223 = vmatprep.subr.bf16.mxu0 0
        %2224 = vmatpush1.bf16.msra.mxu0 %v2075
        %2225 = vmatprep.subr.bf16.mxu0 0
        %2226 = vmatpush1.bf16.msra.mxu0 %v2076
        %2227 = vmatprep.subr.bf16.mxu0 0
        %2228 = vmatpush1.bf16.msra.mxu0 %v2077
        %2229 = vmatprep.subr.bf16.mxu0 0
        %2230 = vmatpush1.bf16.msra.mxu0 %v2078
        %2231 = vmatprep.subr.bf16.mxu0 0
        %2232 = vmatpush1.bf16.msra.mxu0 %v2079
        %2233 = vmatprep.subr.bf16.mxu0 0
        %2234 = vmatpush1.bf16.msra.mxu0 %v2080
        %2235 = vmatprep.subr.bf16.mxu0 0
        %2236 = vmatpush1.bf16.msra.mxu0 %v2081
        %2237 = vmatprep.subr.bf16.mxu0 0
        %2238 = vmatpush1.bf16.msra.mxu0 %v2082
        %2239 = vmatprep.subr.bf16.mxu0 0
        %2240 = vmatpush1.bf16.msra.mxu0 %v2083
        %2241 = vmatprep.subr.bf16.mxu0 0
        %2242 = vmatpush1.bf16.msra.mxu0 %v2084
        %2243 = vmatprep.subr.bf16.mxu0 0
        %2244 = vmatpush1.bf16.msra.mxu0 %v2085
        %2245 = vmatprep.subr.bf16.mxu0 0
        %2246 = vmatpush1.bf16.msra.mxu0 %v2086
        %2247 = vmatprep.subr.bf16.mxu0 0
        %2248 = vmatpush1.bf16.msra.mxu0 %v2087
        %2249 = vmatprep.mubr.bf16.mxu0 %v1815
        %2250 = vmatmul.mubr.bf16.gmra.mrb[0].mxu0 %v1814
        %v2251 = vpop.f32.mrb[0].mxu0
        %v2252 = vadd.f32 %v2203, %v2251
        %v2253 = vpop.f32.mrb[0].mxu0
        %v2254 = vpop.f32.mrb[0].mxu0
        %v2255 = vadd.f32 %v2206, %v2254
        %v2256 = vpop.f32.mrb[0].mxu0
        %2257 = vmatprep.mubr.bf16.mxu0 %v1822
        %2258 = vmatmul.mubr.bf16.gmra.mrb[0].mxu0 %v1821
        %v2259 = vpop.f32.mrb[0].mxu0
        %v2260 = vadd.f32 %v2211, %v2259
        %v2261 = vpop.f32.mrb[0].mxu0
        %v2262 = vpop.f32.mrb[0].mxu0
        %v2263 = vadd.f32 %v2214, %v2262
        %v2264 = vpop.f32.mrb[0].mxu0
        %2265 = vdwg.mxu0
        %2266 = vmatprep.subr.bf16.mxu0 0
        %2267 = vmatpush1.bf16.msra.mxu0 %v2088
        %2268 = vmatprep.subr.bf16.mxu0 0
        %2269 = vmatpush1.bf16.msra.mxu0 %v2089
        %2270 = vmatprep.subr.bf16.mxu0 0
        %2271 = vmatpush1.bf16.msra.mxu0 %v2090
        %2272 = vmatprep.subr.bf16.mxu0 0
        %2273 = vmatpush1.bf16.msra.mxu0 %v2091
        %2274 = vmatprep.subr.bf16.mxu0 0
        %2275 = vmatpush1.bf16.msra.mxu0 %v2092
        %2276 = vmatprep.subr.bf16.mxu0 0
        %2277 = vmatpush1.bf16.msra.mxu0 %v2093
        %2278 = vmatprep.subr.bf16.mxu0 0
        %2279 = vmatpush1.bf16.msra.mxu0 %v2094
        %2280 = vmatprep.subr.bf16.mxu0 0
        %2281 = vmatpush1.bf16.msra.mxu0 %v2095
        %2282 = vmatprep.subr.bf16.mxu0 0
        %2283 = vmatpush1.bf16.msra.mxu0 %v2096
        %2284 = vmatprep.subr.bf16.mxu0 0
        %2285 = vmatpush1.bf16.msra.mxu0 %v2097
        %2286 = vmatprep.subr.bf16.mxu0 0
        %2287 = vmatpush1.bf16.msra.mxu0 %v2098
        %2288 = vmatprep.subr.bf16.mxu0 0
        %2289 = vmatpush1.bf16.msra.mxu0 %v2099
        %2290 = vmatprep.subr.bf16.mxu0 0
        %2291 = vmatpush1.bf16.msra.mxu0 %v2100
        %2292 = vmatprep.subr.bf16.mxu0 0
        %2293 = vmatpush1.bf16.msra.mxu0 %v2101
        %2294 = vmatprep.subr.bf16.mxu0 0
        %2295 = vmatpush1.bf16.msra.mxu0 %v2102
        %2296 = vmatprep.subr.bf16.mxu0 0
        %2297 = vmatpush1.bf16.msra.mxu0 %v2103
        %2298 = vmatprep.mubr.bf16.mxu0 %v1817
        %2299 = vmatmul.mubr.bf16.gmra.mrb[0].mxu0 %v1816
        %v2300 = vpop.f32.mrb[0].mxu0
        %v2301 = vadd.f32 %v2252, %v2300
        %v2302 = vpop.f32.mrb[0].mxu0
        %v2303 = vpop.f32.mrb[0].mxu0
        %v2304 = vadd.f32 %v2255, %v2303
        %v2305 = vpop.f32.mrb[0].mxu0
        %2306 = vmatprep.mubr.bf16.mxu0 %v1824
        %2307 = vmatmul.mubr.bf16.gmra.mrb[0].mxu0 %v1823
        %v2308 = vpop.f32.mrb[0].mxu0
        %v2309 = vadd.f32 %v2260, %v2308
        %v2310 = vpop.f32.mrb[0].mxu0
        %v2311 = vpop.f32.mrb[0].mxu0
        %v2312 = vadd.f32 %v2263, %v2311
        %v2313 = vpop.f32.mrb[0].mxu0
        %2314 = vdwg.mxu0
        %2315 = vmatprep.subr.bf16.mxu0 0
        %2316 = vmatpush1.bf16.msra.mxu0 %v2104
        %2317 = vmatprep.subr.bf16.mxu0 0
        %2318 = vmatpush1.bf16.msra.mxu0 %v2105
        %2319 = vmatprep.subr.bf16.mxu0 0
        %2320 = vmatpush1.bf16.msra.mxu0 %v2106
        %2321 = vmatprep.subr.bf16.mxu0 0
        %2322 = vmatpush1.bf16.msra.mxu0 %v2107
        %2323 = vmatprep.subr.bf16.mxu0 0
        %2324 = vmatpush1.bf16.msra.mxu0 %v2108
        %2325 = vmatprep.subr.bf16.mxu0 0
        %2326 = vmatpush1.bf16.msra.mxu0 %v2109
        %2327 = vmatprep.subr.bf16.mxu0 0
        %2328 = vmatpush1.bf16.msra.mxu0 %v2110
        %2329 = vmatprep.subr.bf16.mxu0 0
        %2330 = vmatpush1.bf16.msra.mxu0 %v2111
        %2331 = vmatprep.subr.bf16.mxu0 0
        %2332 = vmatpush1.bf16.msra.mxu0 0
        %2333 = vmatprep.subr.bf16.mxu0 0
        %2334 = vmatpush1.bf16.msra.mxu0 0
        %2335 = vmatprep.subr.bf16.mxu0 0
        %2336 = vmatpush1.bf16.msra.mxu0 0
        %2337 = vmatprep.subr.bf16.mxu0 0
        %2338 = vmatpush1.bf16.msra.mxu0 0
        %2339 = vmatprep.subr.bf16.mxu0 0
        %2340 = vmatpush1.bf16.msra.mxu0 0
        %2341 = vmatprep.subr.bf16.mxu0 0
        %2342 = vmatpush1.bf16.msra.mxu0 0
        %2343 = vmatprep.subr.bf16.mxu0 0
        %2344 = vmatpush1.bf16.msra.mxu0 0
        %2345 = vmatprep.subr.bf16.mxu0 0
        %2346 = vmatpush1.bf16.msra.mxu0 0
        %2347 = vmatprep.mubr.bf16.mxu0 0
        %2348 = vmatmul.mubr.bf16.gmra.mrb[0].mxu0 %v1818
        %v2349 = vpop.f32.mrb[0].mxu0
        %v2350 = vadd.f32 %v2301, %v2349
        %v2351 = vpop.f32.mrb[0].mxu0
        %v2352 = vpop.f32.mrb[0].mxu0
        %v2353 = vadd.f32 %v2304, %v2352
        %v2354 = vpop.f32.mrb[0].mxu0
        %2355 = vmatprep.mubr.bf16.mxu0 0
        %2356 = vmatmul.mubr.bf16.gmra.mrb[0].mxu0 %v1825
        %v2357 = vpop.f32.mrb[0].mxu0
        %v2358 = vadd.f32 %v2309, %v2357
        %v2359 = vpop.f32.mrb[0].mxu0
        %v2360 = vpop.f32.mrb[0].mxu0
        %v2361 = vadd.f32 %v2312, %v2360
        %v2362 = vpop.f32.mrb[0].mxu0
        %2363 = vdwg.mxu0
        %v2364 = vmul.f32 %v2350, 0.01
        %v2365 = vmul.f32 %v2353, 0.01
        %v2366 = vmul.f32 %v2358, 0.01
        %v2367 = vmul.f32 %v2361, 0.01
        %v2368 = vmax.f32 %v2350, %v2364
        %v2369 = vmax.f32 %v2353, %v2365
        %v2370 = vmax.f32 %v2358, %v2366
        %v2371 = vmax.f32 %v2361, %v2367
        %v2372 = vld [vmem:[%s9] sm:$0xf]
        %v2373 = vld [vmem:[%s9 + $0x4] sm:$0xf]
        %v2374 = vld [vmem:[%s9 + $0x8] sm:$0xf]
        %v2375 = vld [vmem:[%s9 + $0xc] sm:$0xf]
        %v2376 = vld [vmem:[%s9 + $0x10] sm:$0xf]
        %v2377 = vld [vmem:[%s9 + $0x14] sm:$0xf]
        %v2378 = vld [vmem:[%s9 + $0x18] sm:$0xf]
        %v2379 = vld [vmem:[%s9 + $0x1c] sm:$0xf]
        %v2380 = vld [vmem:[%s9 + $0x20] sm:$0xf]
        %v2381 = vld [vmem:[%s9 + $0x24] sm:$0xf]
        %v2382 = vld [vmem:[%s9 + $0x28] sm:$0xf]
        %v2383 = vld [vmem:[%s9 + $0x2c] sm:$0xf]
        %v2384 = vld [vmem:[%s9 + $0x30] sm:$0xf]
        %v2385 = vld [vmem:[%s9 + $0x34] sm:$0xf]
        %v2386 = vld [vmem:[%s9 + $0x38] sm:$0xf]
        %v2387 = vld [vmem:[%s9 + $0x3c] sm:$0xf]
        %v2388 = vld [vmem:[%s9 + $0x40] sm:$0xf]
        %v2389 = vld [vmem:[%s9 + $0x44] sm:$0xf]
        %v2390 = vld [vmem:[%s9 + $0x48] sm:$0xf]
        %v2391 = vld [vmem:[%s9 + $0x4c] sm:$0xf]
        %v2392 = vld [vmem:[%s9 + $0x50] sm:$0xf]
        %v2393 = vld [vmem:[%s9 + $0x54] sm:$0xf]
        %v2394 = vld [vmem:[%s9 + $0x58] sm:$0xf]
        %v2395 = vld [vmem:[%s9 + $0x5c] sm:$0xf]
        %v2396 = vld [vmem:[%s9 + $0x60] sm:$0xf]
        %v2397 = vld [vmem:[%s9 + $0x64] sm:$0xf]
        %v2398 = vld [vmem:[%s9 + $0x68] sm:$0xf]
        %v2399 = vld [vmem:[%s9 + $0x6c] sm:$0xf]
        %v2400 = vld [vmem:[%s9 + $0x70] sm:$0xf]
        %v2401 = vld [vmem:[%s9 + $0x74] sm:$0xf]
        %v2402 = vld [vmem:[%s9 + $0x78] sm:$0xf]
        %v2403 = vld [vmem:[%s9 + $0x7c] sm:$0xf]
        %v2404 = vld [vmem:[%s9 + $0x80] sm:$0xf]
        %v2405 = vld [vmem:[%s9 + $0x84] sm:$0xf]
        %v2406 = vld [vmem:[%s9 + $0x88] sm:$0xf]
        %v2407 = vld [vmem:[%s9 + $0x8c] sm:$0xf]
        %v2408 = vld [vmem:[%s9 + $0x90] sm:$0xf]
        %v2409 = vld [vmem:[%s9 + $0x94] sm:$0xf]
        %v2410 = vld [vmem:[%s9 + $0x98] sm:$0xf]
        %v2411 = vld [vmem:[%s9 + $0x9c] sm:$0xf]
        %v2412 = vld [vmem:[%s9 + $0xa0] sm:$0xf]
        %v2413 = vld [vmem:[%s9 + $0xa4] sm:$0xf]
        %v2414 = vld [vmem:[%s9 + $0xa8] sm:$0xf]
        %v2415 = vld [vmem:[%s9 + $0xac] sm:$0xf]
        %v2416 = vld [vmem:[%s9 + $0xb0] sm:$0xf]
        %v2417 = vld [vmem:[%s9 + $0xb4] sm:$0xf]
        %v2418 = vld [vmem:[%s9 + $0xb8] sm:$0xf]
        %v2419 = vld [vmem:[%s9 + $0xbc] sm:$0xf]
        %v2420 = vld [vmem:[#allocation5] sm:$0x1]
        %v2421 = vld [vmem:[%s13] sm:$0xf]
        %v2422 = vld [vmem:[%s13 + $0x4] sm:$0xf]
        %v2423 = vld [vmem:[%s13 + $0x8] sm:$0xf]
        %v2424 = vld [vmem:[%s13 + $0xc] sm:$0xf]
        %v2425 = vld [vmem:[%s13 + $0x10] sm:$0xf]
        %v2426 = vld [vmem:[%s13 + $0x14] sm:$0xf]
        %v2427 = vld [vmem:[%s13 + $0x18] sm:$0xf]
        %v2428 = vld [vmem:[%s13 + $0x1c] sm:$0xf]
        %v2429 = vld [vmem:[%s13 + $0x20] sm:$0xf]
        %v2430 = vld [vmem:[%s13 + $0x24] sm:$0xf]
        %v2431 = vld [vmem:[%s13 + $0x28] sm:$0xf]
        %v2432 = vld [vmem:[%s13 + $0x2c] sm:$0xf]
        %v2433 = vld [vmem:[%s13 + $0x30] sm:$0xf]
        %v2434 = vld [vmem:[%s13 + $0x34] sm:$0xf]
        %v2435 = vld [vmem:[%s13 + $0x38] sm:$0xf]
        %v2436 = vld [vmem:[%s13 + $0x3c] sm:$0xf]
        %v2437 = vld [vmem:[%s13 + $0x40] sm:$0xf]
        %v2438 = vld [vmem:[%s13 + $0x44] sm:$0xf]
        %v2439 = vld [vmem:[%s13 + $0x48] sm:$0xf]
        %v2440 = vld [vmem:[%s13 + $0x4c] sm:$0xf]
        %v2441 = vld [vmem:[%s13 + $0x50] sm:$0xf]
        %v2442 = vld [vmem:[%s13 + $0x54] sm:$0xf]
        %v2443 = vld [vmem:[%s13 + $0x58] sm:$0xf]
        %v2444 = vld [vmem:[%s13 + $0x5c] sm:$0xf]
        %v2445 = vld [vmem:[%s13 + $0x60] sm:$0xf]
        %v2446 = vld [vmem:[%s13 + $0x64] sm:$0xf]
        %v2447 = vld [vmem:[%s13 + $0x68] sm:$0xf]
        %v2448 = vld [vmem:[%s13 + $0x6c] sm:$0xf]
        %v2449 = vld [vmem:[%s13 + $0x70] sm:$0xf]
        %v2450 = vld [vmem:[%s13 + $0x74] sm:$0xf]
        %v2451 = vld [vmem:[%s13 + $0x78] sm:$0xf]
        %v2452 = vld [vmem:[%s13 + $0x7c] sm:$0xf]
        %v2453 = vld [vmem:[%s13 + $0x80] sm:$0xf]
        %v2454 = vld [vmem:[%s13 + $0x84] sm:$0xf]
        %v2455 = vld [vmem:[%s13 + $0x88] sm:$0xf]
        %v2456 = vld [vmem:[%s13 + $0x8c] sm:$0xf]
        %v2457 = vld [vmem:[%s13 + $0x90] sm:$0xf]
        %v2458 = vld [vmem:[%s13 + $0x94] sm:$0xf]
        %v2459 = vld [vmem:[%s13 + $0x98] sm:$0xf]
        %v2460 = vld [vmem:[%s13 + $0x9c] sm:$0xf]
        %v2461 = vld [vmem:[%s13 + $0xa0] sm:$0xf]
        %v2462 = vld [vmem:[%s13 + $0xa4] sm:$0xf]
        %v2463 = vld [vmem:[%s13 + $0xa8] sm:$0xf]
        %v2464 = vld [vmem:[%s13 + $0xac] sm:$0xf]
        %v2465 = vld [vmem:[%s13 + $0xb0] sm:$0xf]
        %v2466 = vld [vmem:[%s13 + $0xb4] sm:$0xf]
        %v2467 = vld [vmem:[%s13 + $0xb8] sm:$0xf]
        %v2468 = vld [vmem:[%s13 + $0xbc] sm:$0xf]
        %v2469 = vld [vmem:[#allocation7] sm:$0x1]
        %vm2474 = vcmask 1040384
        %v2475 = vrot.slane %v2368, 7
        %v2476 = vrot.slane %v2369, 7
        %v2477 = vsel %vm2474, %v2475, %v2476
        %v2478 = vrot.slane %v2370, 7
        %v2479 = vsel %vm2474, %v2476, %v2478
        %v2480 = vrot.slane %v2371, 7
        %v2481 = vsel %vm2474, %v2478, %v2480
        %v2487 = vsel %vm2474, 0.0, %v2475
        %v2488 = vsel %vm2474, %v2480, 0.0
        %v2489 = vpack.c.bf16 %v2477, %v2487
        %v2490 = vpack.c.bf16 %v2481, %v2479
        %v2491 = vpack.c.bf16 %v2488, %v2488
        %v2493 = vshrl.u32 %v2489, 16
        %v2495 = vshll.u32 %v2489, 16
        %v2497 = vrot.slane %v2495, 1
        %v2498 = vor.u32 %v2493, %v2497
        %v2500 = vshll.u32 %v2490, 16
        %v2502 = vrot.slane %v2500, 1
        %v2503 = vsel %vm1449, %v2498, %v2502
        %v2504 = vshrl.u32 %v2490, 16
        %v2506 = vor.u32 %v2504, %v2502
        %v2508 = vshll.u32 %v2491, 16
        %v2510 = vrot.slane %v2508, 1
        %v2511 = vsel %vm1449, %v2506, %v2510
        %v2517 = vrot.slane %v2489, 1
        %v2518 = vrot.slane %v2490, 1
        %v2519 = vsel %vm1495, %v2517, %v2518
        %v2520 = vrot.slane %v2491, 1
        %v2521 = vsel %vm1495, %v2518, %v2520
        %v2525 = vlaneseq
        %v2526 = vshrl.u32 %v2525, 7
        %v2527 = vsub.s32 0, %v2526
        %v2528 = vrot.slane %v2420, %v2527
        %v2578 = vunpack.c.l.b16 %v2372
        %v2579 = vunpack.c.l.b16 %v2373
        %v2580 = vunpack.c.l.b16 %v2374
        %v2581 = vunpack.c.l.b16 %v2375
        %v2582 = vunpack.c.l.b16 %v2376
        %v2583 = vunpack.c.l.b16 %v2377
        %v2584 = vunpack.c.l.b16 %v2378
        %v2585 = vunpack.c.l.b16 %v2379
        %v2586 = vunpack.c.l.b16 %v2380
        %v2587 = vunpack.c.l.b16 %v2381
        %v2588 = vunpack.c.l.b16 %v2382
        %v2589 = vunpack.c.l.b16 %v2383
        %v2590 = vunpack.c.l.b16 %v2384
        %v2591 = vunpack.c.l.b16 %v2385
        %v2592 = vunpack.c.l.b16 %v2386
        %v2593 = vunpack.c.l.b16 %v2387
        %v2594 = vunpack.c.l.b16 %v2388
        %v2595 = vunpack.c.l.b16 %v2389
        %v2596 = vunpack.c.l.b16 %v2390
        %v2597 = vunpack.c.l.b16 %v2391
        %v2598 = vunpack.c.l.b16 %v2392
        %v2599 = vunpack.c.l.b16 %v2393
        %v2600 = vunpack.c.l.b16 %v2394
        %v2601 = vunpack.c.l.b16 %v2395
        %v2602 = vunpack.c.l.b16 %v2396
        %v2603 = vunpack.c.l.b16 %v2397
        %v2604 = vunpack.c.l.b16 %v2398
        %v2605 = vunpack.c.l.b16 %v2399
        %v2606 = vunpack.c.l.b16 %v2400
        %v2607 = vunpack.c.l.b16 %v2401
        %v2608 = vunpack.c.l.b16 %v2402
        %v2609 = vunpack.c.l.b16 %v2403
        %v2610 = vunpack.c.l.b16 %v2404
        %v2611 = vunpack.c.l.b16 %v2405
        %v2612 = vunpack.c.l.b16 %v2406
        %v2613 = vunpack.c.l.b16 %v2407
        %v2614 = vunpack.c.l.b16 %v2408
        %v2615 = vunpack.c.l.b16 %v2409
        %v2616 = vunpack.c.l.b16 %v2410
        %v2617 = vunpack.c.l.b16 %v2411
        %v2618 = vunpack.c.l.b16 %v2412
        %v2619 = vunpack.c.l.b16 %v2413
        %v2620 = vunpack.c.l.b16 %v2414
        %v2621 = vunpack.c.l.b16 %v2415
        %v2622 = vunpack.c.l.b16 %v2416
        %v2623 = vunpack.c.l.b16 %v2417
        %v2624 = vunpack.c.l.b16 %v2418
        %v2625 = vunpack.c.l.b16 %v2419
        %v2626 = vpack.c.b16 %v2579, %v2578
        %v2627 = vpack.c.b16 %v2581, %v2580
        %v2628 = vpack.c.b16 %v2583, %v2582
        %v2629 = vpack.c.b16 %v2585, %v2584
        %v2630 = vpack.c.b16 %v2587, %v2586
        %v2631 = vpack.c.b16 %v2589, %v2588
        %v2632 = vpack.c.b16 %v2591, %v2590
        %v2633 = vpack.c.b16 %v2593, %v2592
        %v2634 = vpack.c.b16 %v2595, %v2594
        %v2635 = vpack.c.b16 %v2597, %v2596
        %v2636 = vpack.c.b16 %v2599, %v2598
        %v2637 = vpack.c.b16 %v2601, %v2600
        %v2638 = vpack.c.b16 %v2603, %v2602
        %v2639 = vpack.c.b16 %v2605, %v2604
        %v2640 = vpack.c.b16 %v2607, %v2606
        %v2641 = vpack.c.b16 %v2609, %v2608
        %v2642 = vpack.c.b16 %v2611, %v2610
        %v2643 = vpack.c.b16 %v2613, %v2612
        %v2644 = vpack.c.b16 %v2615, %v2614
        %v2645 = vpack.c.b16 %v2617, %v2616
        %v2646 = vpack.c.b16 %v2619, %v2618
        %v2647 = vpack.c.b16 %v2621, %v2620
        %v2648 = vpack.c.b16 %v2623, %v2622
        %v2649 = vpack.c.b16 %v2625, %v2624
        %2674 = vmatprep.subr.bf16.mxu0 0
        %2675 = vmatpush1.bf16.msra.mxu0 %v2626
        %2676 = vmatprep.subr.bf16.mxu0 0
        %2677 = vmatpush1.bf16.msra.mxu0 %v2627
        %2678 = vmatprep.subr.bf16.mxu0 0
        %2679 = vmatpush1.bf16.msra.mxu0 %v2628
        %2680 = vmatprep.subr.bf16.mxu0 0
        %2681 = vmatpush1.bf16.msra.mxu0 %v2629
        %2682 = vmatprep.subr.bf16.mxu0 0
        %2683 = vmatpush1.bf16.msra.mxu0 %v2630
        %2684 = vmatprep.subr.bf16.mxu0 0
        %2685 = vmatpush1.bf16.msra.mxu0 %v2631
        %2686 = vmatprep.subr.bf16.mxu0 0
        %2687 = vmatpush1.bf16.msra.mxu0 %v2632
        %2688 = vmatprep.subr.bf16.mxu0 0
        %2689 = vmatpush1.bf16.msra.mxu0 %v2633
        %2690 = vmatprep.subr.bf16.mxu0 0
        %2691 = vmatpush1.bf16.msra.mxu0 %v2634
        %2692 = vmatprep.subr.bf16.mxu0 0
        %2693 = vmatpush1.bf16.msra.mxu0 %v2635
        %2694 = vmatprep.subr.bf16.mxu0 0
        %2695 = vmatpush1.bf16.msra.mxu0 %v2636
        %2696 = vmatprep.subr.bf16.mxu0 0
        %2697 = vmatpush1.bf16.msra.mxu0 %v2637
        %2698 = vmatprep.subr.bf16.mxu0 0
        %2699 = vmatpush1.bf16.msra.mxu0 %v2638
        %2700 = vmatprep.subr.bf16.mxu0 0
        %2701 = vmatpush1.bf16.msra.mxu0 %v2639
        %2702 = vmatprep.subr.bf16.mxu0 0
        %2703 = vmatpush1.bf16.msra.mxu0 %v2640
        %2704 = vmatprep.subr.bf16.mxu0 0
        %2705 = vmatpush1.bf16.msra.mxu0 %v2641
        %2706 = vmatprep.mubr.bf16.mxu0 %v2503
        %2707 = vmatmul.mubr.bf16.gmra.mrb[0].mxu0 %v2489
        %v2708 = vpop.f32.mrb[0].mxu0
        %v2709 = vadd.f32 %v2528, %v2708
        %v2710 = vpop.f32.mrb[0].mxu0
        %v2711 = vpop.f32.mrb[0].mxu0
        %v2712 = vadd.f32 %v2528, %v2711
        %v2713 = vpop.f32.mrb[0].mxu0
        %2714 = vmatprep.mubr.bf16.mxu0 %v2511
        %2715 = vmatmul.mubr.bf16.gmra.mrb[0].mxu0 %v2490
        %v2716 = vpop.f32.mrb[0].mxu0
        %v2717 = vadd.f32 %v2528, %v2716
        %v2718 = vpop.f32.mrb[0].mxu0
        %v2719 = vpop.f32.mrb[0].mxu0
        %v2720 = vadd.f32 %v2528, %v2719
        %v2721 = vpop.f32.mrb[0].mxu0
        %2722 = vdwg.mxu0
        %2723 = vmatprep.subr.bf16.mxu0 0
        %2724 = vmatpush1.bf16.msra.mxu0 %v2642
        %2725 = vmatprep.subr.bf16.mxu0 0
        %2726 = vmatpush1.bf16.msra.mxu0 %v2643
        %2727 = vmatprep.subr.bf16.mxu0 0
        %2728 = vmatpush1.bf16.msra.mxu0 %v2644
        %2729 = vmatprep.subr.bf16.mxu0 0
        %2730 = vmatpush1.bf16.msra.mxu0 %v2645
        %2731 = vmatprep.subr.bf16.mxu0 0
        %2732 = vmatpush1.bf16.msra.mxu0 %v2646
        %2733 = vmatprep.subr.bf16.mxu0 0
        %2734 = vmatpush1.bf16.msra.mxu0 %v2647
        %2735 = vmatprep.subr.bf16.mxu0 0
        %2736 = vmatpush1.bf16.msra.mxu0 %v2648
        %2737 = vmatprep.subr.bf16.mxu0 0
        %2738 = vmatpush1.bf16.msra.mxu0 %v2649
        %2739 = vmatprep.subr.bf16.mxu0 0
        %2740 = vmatpush1.bf16.msra.mxu0 0
        %2741 = vmatprep.subr.bf16.mxu0 0
        %2742 = vmatpush1.bf16.msra.mxu0 0
        %2743 = vmatprep.subr.bf16.mxu0 0
        %2744 = vmatpush1.bf16.msra.mxu0 0
        %2745 = vmatprep.subr.bf16.mxu0 0
        %2746 = vmatpush1.bf16.msra.mxu0 0
        %2747 = vmatprep.subr.bf16.mxu0 0
        %2748 = vmatpush1.bf16.msra.mxu0 0
        %2749 = vmatprep.subr.bf16.mxu0 0
        %2750 = vmatpush1.bf16.msra.mxu0 0
        %2751 = vmatprep.subr.bf16.mxu0 0
        %2752 = vmatpush1.bf16.msra.mxu0 0
        %2753 = vmatprep.subr.bf16.mxu0 0
        %2754 = vmatpush1.bf16.msra.mxu0 0
        %2755 = vmatprep.mubr.bf16.mxu0 0
        %2756 = vmatmul.mubr.bf16.gmra.mrb[0].mxu0 %v2519
        %v2757 = vpop.f32.mrb[0].mxu0
        %v2758 = vadd.f32 %v2709, %v2757
        %v2759 = vpop.f32.mrb[0].mxu0
        %v2760 = vpop.f32.mrb[0].mxu0
        %v2761 = vadd.f32 %v2712, %v2760
        %v2762 = vpop.f32.mrb[0].mxu0
        %2763 = vmatprep.mubr.bf16.mxu0 0
        %2764 = vmatmul.mubr.bf16.gmra.mrb[0].mxu0 %v2521
        %v2765 = vpop.f32.mrb[0].mxu0
        %v2766 = vadd.f32 %v2717, %v2765
        %v2767 = vpop.f32.mrb[0].mxu0
        %v2768 = vpop.f32.mrb[0].mxu0
        %v2769 = vadd.f32 %v2720, %v2768
        %v2770 = vpop.f32.mrb[0].mxu0
        %2771 = vdwg.mxu0
        %v2772 = vmul.f32 %v2758, 0.01
        %v2773 = vmul.f32 %v2761, 0.01
        %v2774 = vmul.f32 %v2766, 0.01
        %v2775 = vmul.f32 %v2769, 0.01
        %v2776 = vmax.f32 %v2758, %v2772
        %v2777 = vmax.f32 %v2761, %v2773
        %v2778 = vmax.f32 %v2766, %v2774
        %v2779 = vmax.f32 %v2769, %v2775
        %v2780 = vpack.c.bf16 %v2777, %v2776
        %v2781 = vpack.c.bf16 %v2779, %v2778
        %vm2782 = vsmask.f32 256
        %v2784 = vshrl.u32 %v2780, 16
        %v2786 = vrot.slane %v2784, 7
        %v2787 = vshll.u32 %v2780, 16
        %v2789 = vor.u32 %v2786, %v2787
        %v2791 = vshrl.u32 %v2781, 16
        %v2793 = vrot.slane %v2791, 7
        %v2794 = vshll.u32 %v2781, 16
        %v2796 = vor.u32 %v2793, %v2794
        %v2797 = vsel %vm2782, %v2786, %v2796
        %vm2801 = vcmask 1040384
        %vm2802 = vmand %vm2801, %vm2782
        %v2803 = vsel %vm2802, 0, %v2789
        %v2804 = vsel %vm2802, %v2793, 0
        %v2806 = vshrl.u32 %v2803, 16
        %v2808 = vshll.u32 %v2803, 16
        %v2810 = vrot.slane %v2808, 1
        %v2811 = vor.u32 %v2806, %v2810
        %v2813 = vshll.u32 %v2797, 16
        %v2815 = vrot.slane %v2813, 1
        %v2816 = vsel %vm1449, %v2811, %v2815
        %v2817 = vshrl.u32 %v2797, 16
        %v2819 = vor.u32 %v2817, %v2815
        %v2821 = vshll.u32 %v2804, 16
        %v2823 = vrot.slane %v2821, 1
        %v2824 = vsel %vm1449, %v2819, %v2823
        %v2829 = vrot.slane %v2803, 1
        %v2830 = vrot.slane %v2797, 1
        %v2831 = vsel %vm1495, %v2829, %v2830
        %v2832 = vrot.slane %v2804, 1
        %v2833 = vsel %vm1495, %v2830, %v2832
        %v2837 = vlaneseq
        %v2838 = vshrl.u32 %v2837, 7
        %v2839 = vsub.s32 0, %v2838
        %v2840 = vrot.slane %v2469, %v2839
        %v2890 = vunpack.c.l.b16 %v2421
        %v2891 = vunpack.c.l.b16 %v2422
        %v2892 = vunpack.c.l.b16 %v2423
        %v2893 = vunpack.c.l.b16 %v2424
        %v2894 = vunpack.c.l.b16 %v2425
        %v2895 = vunpack.c.l.b16 %v2426
        %v2896 = vunpack.c.l.b16 %v2427
        %v2897 = vunpack.c.l.b16 %v2428
        %v2898 = vunpack.c.l.b16 %v2429
        %v2899 = vunpack.c.l.b16 %v2430
        %v2900 = vunpack.c.l.b16 %v2431
        %v2901 = vunpack.c.l.b16 %v2432
        %v2902 = vunpack.c.l.b16 %v2433
        %v2903 = vunpack.c.l.b16 %v2434
        %v2904 = vunpack.c.l.b16 %v2435
        %v2905 = vunpack.c.l.b16 %v2436
        %v2906 = vunpack.c.l.b16 %v2437
        %v2907 = vunpack.c.l.b16 %v2438
        %v2908 = vunpack.c.l.b16 %v2439
        %v2909 = vunpack.c.l.b16 %v2440
        %v2910 = vunpack.c.l.b16 %v2441
        %v2911 = vunpack.c.l.b16 %v2442
        %v2912 = vunpack.c.l.b16 %v2443
        %v2913 = vunpack.c.l.b16 %v2444
        %v2914 = vunpack.c.l.b16 %v2445
        %v2915 = vunpack.c.l.b16 %v2446
        %v2916 = vunpack.c.l.b16 %v2447
        %v2917 = vunpack.c.l.b16 %v2448
        %v2918 = vunpack.c.l.b16 %v2449
        %v2919 = vunpack.c.l.b16 %v2450
        %v2920 = vunpack.c.l.b16 %v2451
        %v2921 = vunpack.c.l.b16 %v2452
        %v2922 = vunpack.c.l.b16 %v2453
        %v2923 = vunpack.c.l.b16 %v2454
        %v2924 = vunpack.c.l.b16 %v2455
        %v2925 = vunpack.c.l.b16 %v2456
        %v2926 = vunpack.c.l.b16 %v2457
        %v2927 = vunpack.c.l.b16 %v2458
        %v2928 = vunpack.c.l.b16 %v2459
        %v2929 = vunpack.c.l.b16 %v2460
        %v2930 = vunpack.c.l.b16 %v2461
        %v2931 = vunpack.c.l.b16 %v2462
        %v2932 = vunpack.c.l.b16 %v2463
        %v2933 = vunpack.c.l.b16 %v2464
        %v2934 = vunpack.c.l.b16 %v2465
        %v2935 = vunpack.c.l.b16 %v2466
        %v2936 = vunpack.c.l.b16 %v2467
        %v2937 = vunpack.c.l.b16 %v2468
        %v2938 = vpack.c.b16 %v2891, %v2890
        %v2939 = vpack.c.b16 %v2893, %v2892
        %v2940 = vpack.c.b16 %v2895, %v2894
        %v2941 = vpack.c.b16 %v2897, %v2896
        %v2942 = vpack.c.b16 %v2899, %v2898
        %v2943 = vpack.c.b16 %v2901, %v2900
        %v2944 = vpack.c.b16 %v2903, %v2902
        %v2945 = vpack.c.b16 %v2905, %v2904
        %v2946 = vpack.c.b16 %v2907, %v2906
        %v2947 = vpack.c.b16 %v2909, %v2908
        %v2948 = vpack.c.b16 %v2911, %v2910
        %v2949 = vpack.c.b16 %v2913, %v2912
        %v2950 = vpack.c.b16 %v2915, %v2914
        %v2951 = vpack.c.b16 %v2917, %v2916
        %v2952 = vpack.c.b16 %v2919, %v2918
        %v2953 = vpack.c.b16 %v2921, %v2920
        %v2954 = vpack.c.b16 %v2923, %v2922
        %v2955 = vpack.c.b16 %v2925, %v2924
        %v2956 = vpack.c.b16 %v2927, %v2926
        %v2957 = vpack.c.b16 %v2929, %v2928
        %v2958 = vpack.c.b16 %v2931, %v2930
        %v2959 = vpack.c.b16 %v2933, %v2932
        %v2960 = vpack.c.b16 %v2935, %v2934
        %v2961 = vpack.c.b16 %v2937, %v2936
        %2986 = vmatprep.subr.bf16.mxu0 0
        %2987 = vmatpush1.bf16.msra.mxu0 %v2938
        %2988 = vmatprep.subr.bf16.mxu0 0
        %2989 = vmatpush1.bf16.msra.mxu0 %v2939
        %2990 = vmatprep.subr.bf16.mxu0 0
        %2991 = vmatpush1.bf16.msra.mxu0 %v2940
        %2992 = vmatprep.subr.bf16.mxu0 0
        %2993 = vmatpush1.bf16.msra.mxu0 %v2941
        %2994 = vmatprep.subr.bf16.mxu0 0
        %2995 = vmatpush1.bf16.msra.mxu0 %v2942
        %2996 = vmatprep.subr.bf16.mxu0 0
        %2997 = vmatpush1.bf16.msra.mxu0 %v2943
        %2998 = vmatprep.subr.bf16.mxu0 0
        %2999 = vmatpush1.bf16.msra.mxu0 %v2944
        %3000 = vmatprep.subr.bf16.mxu0 0
        %3001 = vmatpush1.bf16.msra.mxu0 %v2945
        %3002 = vmatprep.subr.bf16.mxu0 0
        %3003 = vmatpush1.bf16.msra.mxu0 %v2946
        %3004 = vmatprep.subr.bf16.mxu0 0
        %3005 = vmatpush1.bf16.msra.mxu0 %v2947
        %3006 = vmatprep.subr.bf16.mxu0 0
        %3007 = vmatpush1.bf16.msra.mxu0 %v2948
        %3008 = vmatprep.subr.bf16.mxu0 0
        %3009 = vmatpush1.bf16.msra.mxu0 %v2949
        %3010 = vmatprep.subr.bf16.mxu0 0
        %3011 = vmatpush1.bf16.msra.mxu0 %v2950
        %3012 = vmatprep.subr.bf16.mxu0 0
        %3013 = vmatpush1.bf16.msra.mxu0 %v2951
        %3014 = vmatprep.subr.bf16.mxu0 0
        %3015 = vmatpush1.bf16.msra.mxu0 %v2952
        %3016 = vmatprep.subr.bf16.mxu0 0
        %3017 = vmatpush1.bf16.msra.mxu0 %v2953
        %3018 = vmatprep.mubr.bf16.mxu0 %v2816
        %3019 = vmatmul.mubr.bf16.gmra.mrb[0].mxu0 %v2803
        %v3020 = vpop.f32.mrb[0].mxu0
        %v3021 = vadd.f32 %v2840, %v3020
        %v3022 = vpop.f32.mrb[0].mxu0
        %v3023 = vpop.f32.mrb[0].mxu0
        %v3024 = vadd.f32 %v2840, %v3023
        %v3025 = vpop.f32.mrb[0].mxu0
        %3026 = vmatprep.mubr.bf16.mxu0 %v2824
        %3027 = vmatmul.mubr.bf16.gmra.mrb[0].mxu0 %v2797
        %v3028 = vpop.f32.mrb[0].mxu0
        %v3029 = vadd.f32 %v2840, %v3028
        %v3030 = vpop.f32.mrb[0].mxu0
        %v3031 = vpop.f32.mrb[0].mxu0
        %v3032 = vadd.f32 %v2840, %v3031
        %v3033 = vpop.f32.mrb[0].mxu0
        %3034 = vdwg.mxu0
        %3035 = vmatprep.subr.bf16.mxu0 0
        %3036 = vmatpush1.bf16.msra.mxu0 %v2954
        %3037 = vmatprep.subr.bf16.mxu0 0
        %3038 = vmatpush1.bf16.msra.mxu0 %v2955
        %3039 = vmatprep.subr.bf16.mxu0 0
        %3040 = vmatpush1.bf16.msra.mxu0 %v2956
        %3041 = vmatprep.subr.bf16.mxu0 0
        %3042 = vmatpush1.bf16.msra.mxu0 %v2957
        %3043 = vmatprep.subr.bf16.mxu0 0
        %3044 = vmatpush1.bf16.msra.mxu0 %v2958
        %3045 = vmatprep.subr.bf16.mxu0 0
        %3046 = vmatpush1.bf16.msra.mxu0 %v2959
        %3047 = vmatprep.subr.bf16.mxu0 0
        %3048 = vmatpush1.bf16.msra.mxu0 %v2960
        %3049 = vmatprep.subr.bf16.mxu0 0
        %3050 = vmatpush1.bf16.msra.mxu0 %v2961
        %3051 = vmatprep.subr.bf16.mxu0 0
        %3052 = vmatpush1.bf16.msra.mxu0 0
        %3053 = vmatprep.subr.bf16.mxu0 0
        %3054 = vmatpush1.bf16.msra.mxu0 0
        %3055 = vmatprep.subr.bf16.mxu0 0
        %3056 = vmatpush1.bf16.msra.mxu0 0
        %3057 = vmatprep.subr.bf16.mxu0 0
        %3058 = vmatpush1.bf16.msra.mxu0 0
        %3059 = vmatprep.subr.bf16.mxu0 0
        %3060 = vmatpush1.bf16.msra.mxu0 0
        %3061 = vmatprep.subr.bf16.mxu0 0
        %3062 = vmatpush1.bf16.msra.mxu0 0
        %3063 = vmatprep.subr.bf16.mxu0 0
        %3064 = vmatpush1.bf16.msra.mxu0 0
        %3065 = vmatprep.subr.bf16.mxu0 0
        %3066 = vmatpush1.bf16.msra.mxu0 0
        %3067 = vmatprep.mubr.bf16.mxu0 0
        %3068 = vmatmul.mubr.bf16.gmra.mrb[0].mxu0 %v2831
        %v3069 = vpop.f32.mrb[0].mxu0
        %v3070 = vadd.f32 %v3021, %v3069
        %v3071 = vpop.f32.mrb[0].mxu0
        %v3072 = vpop.f32.mrb[0].mxu0
        %v3073 = vadd.f32 %v3024, %v3072
        %v3074 = vpop.f32.mrb[0].mxu0
        %3075 = vmatprep.mubr.bf16.mxu0 0
        %3076 = vmatmul.mubr.bf16.gmra.mrb[0].mxu0 %v2833
        %v3077 = vpop.f32.mrb[0].mxu0
        %v3078 = vadd.f32 %v3029, %v3077
        %v3079 = vpop.f32.mrb[0].mxu0
        %v3080 = vpop.f32.mrb[0].mxu0
        %v3081 = vadd.f32 %v3032, %v3080
        %v3082 = vpop.f32.mrb[0].mxu0
        %3083 = vdwg.mxu0
        %v3084 = vadd.f32 %v3070, %v2368
        %v3085 = vadd.f32 %v3073, %v2369
        %v3086 = vadd.f32 %v3078, %v2370
        %v3087 = vadd.f32 %v3081, %v2371
        %v3088 = vmul.f32 %v3084, 0.01
        %v3089 = vmul.f32 %v3085, 0.01
        %v3090 = vmul.f32 %v3086, 0.01
        %v3091 = vmul.f32 %v3087, 0.01
        %v3092 = vmax.f32 %v3084, %v3088
        %v3093 = vmax.f32 %v3085, %v3089
        %v3094 = vmax.f32 %v3086, %v3090
        %v3095 = vmax.f32 %v3087, %v3091
        %v3096 = vld [vmem:[%s17] sm:$0xf]
        %v3097 = vld [vmem:[%s17 + $0x4] sm:$0xf]
        %v3098 = vld [vmem:[%s17 + $0x8] sm:$0xf]
        %v3099 = vld [vmem:[%s17 + $0xc] sm:$0xf]
        %v3100 = vld [vmem:[%s17 + $0x10] sm:$0xf]
        %v3101 = vld [vmem:[%s17 + $0x14] sm:$0xf]
        %v3102 = vld [vmem:[%s17 + $0x18] sm:$0xf]
        %v3103 = vld [vmem:[%s17 + $0x1c] sm:$0xf]
        %v3104 = vld [vmem:[%s17 + $0x20] sm:$0xf]
        %v3105 = vld [vmem:[%s17 + $0x24] sm:$0xf]
        %v3106 = vld [vmem:[%s17 + $0x28] sm:$0xf]
        %v3107 = vld [vmem:[%s17 + $0x2c] sm:$0xf]
        %v3108 = vld [vmem:[%s17 + $0x30] sm:$0xf]
        %v3109 = vld [vmem:[%s17 + $0x34] sm:$0xf]
        %v3110 = vld [vmem:[%s17 + $0x38] sm:$0xf]
        %v3111 = vld [vmem:[%s17 + $0x3c] sm:$0xf]
        %v3112 = vld [vmem:[%s17 + $0x40] sm:$0xf]
        %v3113 = vld [vmem:[%s17 + $0x44] sm:$0xf]
        %v3114 = vld [vmem:[%s17 + $0x48] sm:$0xf]
        %v3115 = vld [vmem:[%s17 + $0x4c] sm:$0xf]
        %v3116 = vld [vmem:[%s17 + $0x50] sm:$0xf]
        %v3117 = vld [vmem:[%s17 + $0x54] sm:$0xf]
        %v3118 = vld [vmem:[%s17 + $0x58] sm:$0xf]
        %v3119 = vld [vmem:[%s17 + $0x5c] sm:$0xf]
        %v3120 = vld [vmem:[%s17 + $0x60] sm:$0xf]
        %v3121 = vld [vmem:[%s17 + $0x64] sm:$0xf]
        %v3122 = vld [vmem:[%s17 + $0x68] sm:$0xf]
        %v3123 = vld [vmem:[%s17 + $0x6c] sm:$0xf]
        %v3124 = vld [vmem:[%s17 + $0x70] sm:$0xf]
        %v3125 = vld [vmem:[%s17 + $0x74] sm:$0xf]
        %v3126 = vld [vmem:[%s17 + $0x78] sm:$0xf]
        %v3127 = vld [vmem:[%s17 + $0x7c] sm:$0xf]
        %v3128 = vld [vmem:[%s17 + $0x80] sm:$0xf]
        %v3129 = vld [vmem:[%s17 + $0x84] sm:$0xf]
        %v3130 = vld [vmem:[%s17 + $0x88] sm:$0xf]
        %v3131 = vld [vmem:[%s17 + $0x8c] sm:$0xf]
        %v3132 = vld [vmem:[%s17 + $0x90] sm:$0xf]
        %v3133 = vld [vmem:[%s17 + $0x94] sm:$0xf]
        %v3134 = vld [vmem:[%s17 + $0x98] sm:$0xf]
        %v3135 = vld [vmem:[%s17 + $0x9c] sm:$0xf]
        %v3136 = vld [vmem:[%s17 + $0xa0] sm:$0xf]
        %v3137 = vld [vmem:[%s17 + $0xa4] sm:$0xf]
        %v3138 = vld [vmem:[%s17 + $0xa8] sm:$0xf]
        %v3139 = vld [vmem:[%s17 + $0xac] sm:$0xf]
        %v3140 = vld [vmem:[%s17 + $0xb0] sm:$0xf]
        %v3141 = vld [vmem:[%s17 + $0xb4] sm:$0xf]
        %v3142 = vld [vmem:[%s17 + $0xb8] sm:$0xf]
        %v3143 = vld [vmem:[%s17 + $0xbc] sm:$0xf]
        %v3144 = vld [vmem:[#allocation8] sm:$0x1]
        %v3145 = vld [vmem:[%s21] sm:$0xf]
        %v3146 = vld [vmem:[%s21 + $0x4] sm:$0xf]
        %v3147 = vld [vmem:[%s21 + $0x8] sm:$0xf]
        %v3148 = vld [vmem:[%s21 + $0xc] sm:$0xf]
        %v3149 = vld [vmem:[%s21 + $0x10] sm:$0xf]
        %v3150 = vld [vmem:[%s21 + $0x14] sm:$0xf]
        %v3151 = vld [vmem:[%s21 + $0x18] sm:$0xf]
        %v3152 = vld [vmem:[%s21 + $0x1c] sm:$0xf]
        %v3153 = vld [vmem:[%s21 + $0x20] sm:$0xf]
        %v3154 = vld [vmem:[%s21 + $0x24] sm:$0xf]
        %v3155 = vld [vmem:[%s21 + $0x28] sm:$0xf]
        %v3156 = vld [vmem:[%s21 + $0x2c] sm:$0xf]
        %v3157 = vld [vmem:[%s21 + $0x30] sm:$0xf]
        %v3158 = vld [vmem:[%s21 + $0x34] sm:$0xf]
        %v3159 = vld [vmem:[%s21 + $0x38] sm:$0xf]
        %v3160 = vld [vmem:[%s21 + $0x3c] sm:$0xf]
        %v3161 = vld [vmem:[%s21 + $0x40] sm:$0xf]
        %v3162 = vld [vmem:[%s21 + $0x44] sm:$0xf]
        %v3163 = vld [vmem:[%s21 + $0x48] sm:$0xf]
        %v3164 = vld [vmem:[%s21 + $0x4c] sm:$0xf]
        %v3165 = vld [vmem:[%s21 + $0x50] sm:$0xf]
        %v3166 = vld [vmem:[%s21 + $0x54] sm:$0xf]
        %v3167 = vld [vmem:[%s21 + $0x58] sm:$0xf]
        %v3168 = vld [vmem:[%s21 + $0x5c] sm:$0xf]
        %v3169 = vld [vmem:[%s21 + $0x60] sm:$0xf]
        %v3170 = vld [vmem:[%s21 + $0x64] sm:$0xf]
        %v3171 = vld [vmem:[%s21 + $0x68] sm:$0xf]
        %v3172 = vld [vmem:[%s21 + $0x6c] sm:$0xf]
        %v3173 = vld [vmem:[%s21 + $0x70] sm:$0xf]
        %v3174 = vld [vmem:[%s21 + $0x74] sm:$0xf]
        %v3175 = vld [vmem:[%s21 + $0x78] sm:$0xf]
        %v3176 = vld [vmem:[%s21 + $0x7c] sm:$0xf]
        %v3177 = vld [vmem:[%s21 + $0x80] sm:$0xf]
        %v3178 = vld [vmem:[%s21 + $0x84] sm:$0xf]
        %v3179 = vld [vmem:[%s21 + $0x88] sm:$0xf]
        %v3180 = vld [vmem:[%s21 + $0x8c] sm:$0xf]
        %v3181 = vld [vmem:[%s21 + $0x90] sm:$0xf]
        %v3182 = vld [vmem:[%s21 + $0x94] sm:$0xf]
        %v3183 = vld [vmem:[%s21 + $0x98] sm:$0xf]
        %v3184 = vld [vmem:[%s21 + $0x9c] sm:$0xf]
        %v3185 = vld [vmem:[%s21 + $0xa0] sm:$0xf]
        %v3186 = vld [vmem:[%s21 + $0xa4] sm:$0xf]
        %v3187 = vld [vmem:[%s21 + $0xa8] sm:$0xf]
        %v3188 = vld [vmem:[%s21 + $0xac] sm:$0xf]
        %v3189 = vld [vmem:[%s21 + $0xb0] sm:$0xf]
        %v3190 = vld [vmem:[%s21 + $0xb4] sm:$0xf]
        %v3191 = vld [vmem:[%s21 + $0xb8] sm:$0xf]
        %v3192 = vld [vmem:[%s21 + $0xbc] sm:$0xf]
        %v3193 = vld [vmem:[#allocation10] sm:$0x1]
        %v3194 = vld [vmem:[#allocation11] sm:$0xf]
        %v3195 = vld [vmem:[#allocation11 + $0x4] sm:$0xf]
        %v3196 = vld [vmem:[#allocation11 + $0x8] sm:$0xf]
        %v3197 = vld [vmem:[#allocation11 + $0xc] sm:$0xf]
        %v3198 = vld [vmem:[#allocation11 + $0x10] sm:$0xf]
        %v3199 = vld [vmem:[#allocation11 + $0x14] sm:$0xf]
        %v3200 = vld [vmem:[#allocation11 + $0x18] sm:$0xf]
        %v3201 = vld [vmem:[#allocation11 + $0x1c] sm:$0xf]
        %v3202 = vld [vmem:[#allocation11 + $0x20] sm:$0xf]
        %v3203 = vld [vmem:[#allocation11 + $0x24] sm:$0xf]
        %v3204 = vld [vmem:[#allocation11 + $0x28] sm:$0xf]
        %v3205 = vld [vmem:[#allocation11 + $0x2c] sm:$0xf]
        %v3206 = vld [vmem:[#allocation11 + $0x30] sm:$0xf]
        %v3207 = vld [vmem:[#allocation11 + $0x34] sm:$0xf]
        %v3208 = vld [vmem:[#allocation11 + $0x38] sm:$0xf]
        %v3209 = vld [vmem:[#allocation11 + $0x3c] sm:$0xf]
        %v3210 = vld [vmem:[#allocation13] sm:$0x1]
        %v3211 = vld [vmem:[%s29] sm:$0xf]
        %v3212 = vld [vmem:[%s29 + $0x4] sm:$0xf]
        %v3217 = vrot.slane %v3092, 7
        %v3218 = vrot.slane %v3093, 7
        %v3219 = vsel %vm2474, %v3217, %v3218
        %v3220 = vrot.slane %v3094, 7
        %v3221 = vsel %vm2474, %v3218, %v3220
        %v3222 = vrot.slane %v3095, 7
        %v3223 = vsel %vm2474, %v3220, %v3222
        %v3229 = vsel %vm2474, 0.0, %v3217
        %v3230 = vsel %vm2474, %v3222, 0.0
        %v3231 = vpack.c.bf16 %v3219, %v3229
        %v3232 = vpack.c.bf16 %v3223, %v3221
        %v3233 = vpack.c.bf16 %v3230, %v3230
        %v3235 = vshrl.u32 %v3231, 16
        %v3237 = vshll.u32 %v3231, 16
        %v3239 = vrot.slane %v3237, 1
        %v3240 = vor.u32 %v3235, %v3239
        %v3242 = vshll.u32 %v3232, 16
        %v3244 = vrot.slane %v3242, 1
        %v3245 = vsel %vm1449, %v3240, %v3244
        %v3246 = vshrl.u32 %v3232, 16
        %v3248 = vor.u32 %v3246, %v3244
        %v3250 = vshll.u32 %v3233, 16
        %v3252 = vrot.slane %v3250, 1
        %v3253 = vsel %vm1449, %v3248, %v3252
        %v3259 = vrot.slane %v3231, 1
        %v3260 = vrot.slane %v3232, 1
        %v3261 = vsel %vm1495, %v3259, %v3260
        %v3262 = vrot.slane %v3233, 1
        %v3263 = vsel %vm1495, %v3260, %v3262
        %v3268 = vunpack.c.l.b16 %v3211
        %v3269 = vunpack.c.l.b16 %v3212
        %v3270 = vpack.c.b16 %v3269, %v3268
        %vm3271 = vcmask 261120
        %v3273 = vsel %vm3271, %v3270, 0
        %3275 = vmatprep.subr.bf16.mxu0 %v3245
        %3276 = vmatpush1.bf16.msra.mxu0 %v3231
        %3277 = vmatprep.subr.bf16.mxu0 %v3253
        %3278 = vmatpush1.bf16.msra.mxu0 %v3232
        %3279 = vmatprep.subr.bf16.mxu0 0
        %3280 = vmatpush1.bf16.msra.mxu0 0
        %3281 = vmatprep.subr.bf16.mxu0 0
        %3282 = vmatpush1.bf16.msra.mxu0 0
        %3283 = vmatprep.subr.bf16.mxu0 0
        %3284 = vmatpush1.bf16.msra.mxu0 0
        %3285 = vmatprep.subr.bf16.mxu0 0
        %3286 = vmatpush1.bf16.msra.mxu0 0
        %3287 = vmatprep.subr.bf16.mxu0 0
        %3288 = vmatpush1.bf16.msra.mxu0 0
        %3289 = vmatprep.subr.bf16.mxu0 0
        %3290 = vmatpush1.bf16.msra.mxu0 0
        %3291 = vmatprep.subr.bf16.mxu0 0
        %3292 = vmatpush1.bf16.msra.mxu0 0
        %3293 = vmatprep.subr.bf16.mxu0 0
        %3294 = vmatpush1.bf16.msra.mxu0 0
        %3295 = vmatprep.subr.bf16.mxu0 0
        %3296 = vmatpush1.bf16.msra.mxu0 0
        %3297 = vmatprep.subr.bf16.mxu0 0
        %3298 = vmatpush1.bf16.msra.mxu0 0
        %3299 = vmatprep.subr.bf16.mxu0 0
        %3300 = vmatpush1.bf16.msra.mxu0 0
        %3301 = vmatprep.subr.bf16.mxu0 0
        %3302 = vmatpush1.bf16.msra.mxu0 0
        %3303 = vmatprep.subr.bf16.mxu0 0
        %3304 = vmatpush1.bf16.msra.mxu0 0
        %3305 = vmatprep.subr.bf16.mxu0 0
        %3306 = vmatpush1.bf16.msra.mxu0 0
        %3307 = vmatprep.mubr.bf16.mxu0 0
        %3308 = vmatmul.mubr.bf16.gmra.mrb[0].mxu0 %v3273
        %v3309 = vpop.f32.mrb[0].mxu0
        %v3310 = vadd.f32 0.0, %v3309
        %v3311 = vpop.f32.mrb[0].mxu0
        %v3312 = vadd.f32 0.0, %v3311
        %v3313 = vpop.f32.mrb[0].mxu0
        %v3314 = vadd.f32 0.0, %v3313
        %v3315 = vpop.f32.mrb[0].mxu0
        %v3316 = vadd.f32 0.0, %v3315
        %3317 = vdwg.mxu0
        %3318 = vmatprep.subr.bf16.mxu0 0
        %3319 = vmatpush1.bf16.msra.mxu0 %v3261
        %3320 = vmatprep.subr.bf16.mxu0 0
        %3321 = vmatpush1.bf16.msra.mxu0 %v3263
        %3322 = vmatprep.subr.bf16.mxu0 0
        %3323 = vmatpush1.bf16.msra.mxu0 0
        %3324 = vmatprep.subr.bf16.mxu0 0
        %3325 = vmatpush1.bf16.msra.mxu0 0
        %3326 = vmatprep.subr.bf16.mxu0 0
        %3327 = vmatpush1.bf16.msra.mxu0 0
        %3328 = vmatprep.subr.bf16.mxu0 0
        %3329 = vmatpush1.bf16.msra.mxu0 0
        %3330 = vmatprep.subr.bf16.mxu0 0
        %3331 = vmatpush1.bf16.msra.mxu0 0
        %3332 = vmatprep.subr.bf16.mxu0 0
        %3333 = vmatpush1.bf16.msra.mxu0 0
        %3334 = vmatprep.subr.bf16.mxu0 0
        %3335 = vmatpush1.bf16.msra.mxu0 0
        %3336 = vmatprep.subr.bf16.mxu0 0
        %3337 = vmatpush1.bf16.msra.mxu0 0
        %3338 = vmatprep.subr.bf16.mxu0 0
        %3339 = vmatpush1.bf16.msra.mxu0 0
        %3340 = vmatprep.subr.bf16.mxu0 0
        %3341 = vmatpush1.bf16.msra.mxu0 0
        %3342 = vmatprep.subr.bf16.mxu0 0
        %3343 = vmatpush1.bf16.msra.mxu0 0
        %3344 = vmatprep.subr.bf16.mxu0 0
        %3345 = vmatpush1.bf16.msra.mxu0 0
        %3346 = vmatprep.subr.bf16.mxu0 0
        %3347 = vmatpush1.bf16.msra.mxu0 0
        %3348 = vmatprep.subr.bf16.mxu0 0
        %3349 = vmatpush1.bf16.msra.mxu0 0
        %3350 = vmatprep.mubr.bf16.mxu0 0
        %3351 = vmatmul.mubr.bf16.gmra.mrb[0].mxu0 %v3273
        %v3352 = vpop.f32.mrb[0].mxu0
        %v3353 = vadd.f32 0.0, %v3352
        %v3354 = vpop.f32.mrb[0].mxu0
        %v3355 = vpop.f32.mrb[0].mxu0
        %v3356 = vadd.f32 0.0, %v3355
        %v3357 = vpop.f32.mrb[0].mxu0
        %3358 = vdwg.mxu0
        %v3359 = vpack.c.bf16 %v3314, %v3310
        %v3360 = vpack.c.bf16 %v3316, %v3312
        %v3361 = vpack.c.bf16 %v3356, %v3353
        %v3363 = vlaneseq
        %v3364 = vshrl.u32 %v3363, 7
        %v3365 = vsub.s32 0, %v3364
        %v3366 = vrot.slane %v3144, %v3365
        %v3416 = vunpack.c.l.b16 %v3096
        %v3417 = vunpack.c.l.b16 %v3097
        %v3418 = vunpack.c.l.b16 %v3098
        %v3419 = vunpack.c.l.b16 %v3099
        %v3420 = vunpack.c.l.b16 %v3100
        %v3421 = vunpack.c.l.b16 %v3101
        %v3422 = vunpack.c.l.b16 %v3102
        %v3423 = vunpack.c.l.b16 %v3103
        %v3424 = vunpack.c.l.b16 %v3104
        %v3425 = vunpack.c.l.b16 %v3105
        %v3426 = vunpack.c.l.b16 %v3106
        %v3427 = vunpack.c.l.b16 %v3107
        %v3428 = vunpack.c.l.b16 %v3108
        %v3429 = vunpack.c.l.b16 %v3109
        %v3430 = vunpack.c.l.b16 %v3110
        %v3431 = vunpack.c.l.b16 %v3111
        %v3432 = vunpack.c.l.b16 %v3112
        %v3433 = vunpack.c.l.b16 %v3113
        %v3434 = vunpack.c.l.b16 %v3114
        %v3435 = vunpack.c.l.b16 %v3115
        %v3436 = vunpack.c.l.b16 %v3116
        %v3437 = vunpack.c.l.b16 %v3117
        %v3438 = vunpack.c.l.b16 %v3118
        %v3439 = vunpack.c.l.b16 %v3119
        %v3440 = vunpack.c.l.b16 %v3120
        %v3441 = vunpack.c.l.b16 %v3121
        %v3442 = vunpack.c.l.b16 %v3122
        %v3443 = vunpack.c.l.b16 %v3123
        %v3444 = vunpack.c.l.b16 %v3124
        %v3445 = vunpack.c.l.b16 %v3125
        %v3446 = vunpack.c.l.b16 %v3126
        %v3447 = vunpack.c.l.b16 %v3127
        %v3448 = vunpack.c.l.b16 %v3128
        %v3449 = vunpack.c.l.b16 %v3129
        %v3450 = vunpack.c.l.b16 %v3130
        %v3451 = vunpack.c.l.b16 %v3131
        %v3452 = vunpack.c.l.b16 %v3132
        %v3453 = vunpack.c.l.b16 %v3133
        %v3454 = vunpack.c.l.b16 %v3134
        %v3455 = vunpack.c.l.b16 %v3135
        %v3456 = vunpack.c.l.b16 %v3136
        %v3457 = vunpack.c.l.b16 %v3137
        %v3458 = vunpack.c.l.b16 %v3138
        %v3459 = vunpack.c.l.b16 %v3139
        %v3460 = vunpack.c.l.b16 %v3140
        %v3461 = vunpack.c.l.b16 %v3141
        %v3462 = vunpack.c.l.b16 %v3142
        %v3463 = vunpack.c.l.b16 %v3143
        %v3464 = vpack.c.b16 %v3417, %v3416
        %v3465 = vpack.c.b16 %v3419, %v3418
        %v3466 = vpack.c.b16 %v3421, %v3420
        %v3467 = vpack.c.b16 %v3423, %v3422
        %v3468 = vpack.c.b16 %v3425, %v3424
        %v3469 = vpack.c.b16 %v3427, %v3426
        %v3470 = vpack.c.b16 %v3429, %v3428
        %v3471 = vpack.c.b16 %v3431, %v3430
        %v3472 = vpack.c.b16 %v3433, %v3432
        %v3473 = vpack.c.b16 %v3435, %v3434
        %v3474 = vpack.c.b16 %v3437, %v3436
        %v3475 = vpack.c.b16 %v3439, %v3438
        %v3476 = vpack.c.b16 %v3441, %v3440
        %v3477 = vpack.c.b16 %v3443, %v3442
        %v3478 = vpack.c.b16 %v3445, %v3444
        %v3479 = vpack.c.b16 %v3447, %v3446
        %v3480 = vpack.c.b16 %v3449, %v3448
        %v3481 = vpack.c.b16 %v3451, %v3450
        %v3482 = vpack.c.b16 %v3453, %v3452
        %v3483 = vpack.c.b16 %v3455, %v3454
        %v3484 = vpack.c.b16 %v3457, %v3456
        %v3485 = vpack.c.b16 %v3459, %v3458
        %v3486 = vpack.c.b16 %v3461, %v3460
        %v3487 = vpack.c.b16 %v3463, %v3462
        %3512 = vmatprep.subr.bf16.mxu0 0
        %3513 = vmatpush1.bf16.msra.mxu0 %v3464
        %3514 = vmatprep.subr.bf16.mxu0 0
        %3515 = vmatpush1.bf16.msra.mxu0 %v3465
        %3516 = vmatprep.subr.bf16.mxu0 0
        %3517 = vmatpush1.bf16.msra.mxu0 %v3466
        %3518 = vmatprep.subr.bf16.mxu0 0
        %3519 = vmatpush1.bf16.msra.mxu0 %v3467
        %3520 = vmatprep.subr.bf16.mxu0 0
        %3521 = vmatpush1.bf16.msra.mxu0 %v3468
        %3522 = vmatprep.subr.bf16.mxu0 0
        %3523 = vmatpush1.bf16.msra.mxu0 %v3469
        %3524 = vmatprep.subr.bf16.mxu0 0
        %3525 = vmatpush1.bf16.msra.mxu0 %v3470
        %3526 = vmatprep.subr.bf16.mxu0 0
        %3527 = vmatpush1.bf16.msra.mxu0 %v3471
        %3528 = vmatprep.subr.bf16.mxu0 0
        %3529 = vmatpush1.bf16.msra.mxu0 %v3472
        %3530 = vmatprep.subr.bf16.mxu0 0
        %3531 = vmatpush1.bf16.msra.mxu0 %v3473
        %3532 = vmatprep.subr.bf16.mxu0 0
        %3533 = vmatpush1.bf16.msra.mxu0 %v3474
        %3534 = vmatprep.subr.bf16.mxu0 0
        %3535 = vmatpush1.bf16.msra.mxu0 %v3475
        %3536 = vmatprep.subr.bf16.mxu0 0
        %3537 = vmatpush1.bf16.msra.mxu0 %v3476
        %3538 = vmatprep.subr.bf16.mxu0 0
        %3539 = vmatpush1.bf16.msra.mxu0 %v3477
        %3540 = vmatprep.subr.bf16.mxu0 0
        %3541 = vmatpush1.bf16.msra.mxu0 %v3478
        %3542 = vmatprep.subr.bf16.mxu0 0
        %3543 = vmatpush1.bf16.msra.mxu0 %v3479
        %3544 = vmatprep.mubr.bf16.mxu0 %v3360
        %3545 = vmatmul.mubr.bf16.gmra.mrb[0].mxu0 %v3359
        %v3546 = vpop.f32.mrb[0].mxu0
        %v3547 = vadd.f32 %v3366, %v3546
        %v3548 = vpop.f32.mrb[0].mxu0
        %v3549 = vpop.f32.mrb[0].mxu0
        %v3550 = vadd.f32 %v3366, %v3549
        %v3551 = vpop.f32.mrb[0].mxu0
        %3552 = vdwg.mxu0
        %3553 = vmatprep.subr.bf16.mxu0 0
        %3554 = vmatpush1.bf16.msra.mxu0 %v3480
        %3555 = vmatprep.subr.bf16.mxu0 0
        %3556 = vmatpush1.bf16.msra.mxu0 %v3481
        %3557 = vmatprep.subr.bf16.mxu0 0
        %3558 = vmatpush1.bf16.msra.mxu0 %v3482
        %3559 = vmatprep.subr.bf16.mxu0 0
        %3560 = vmatpush1.bf16.msra.mxu0 %v3483
        %3561 = vmatprep.subr.bf16.mxu0 0
        %3562 = vmatpush1.bf16.msra.mxu0 %v3484
        %3563 = vmatprep.subr.bf16.mxu0 0
        %3564 = vmatpush1.bf16.msra.mxu0 %v3485
        %3565 = vmatprep.subr.bf16.mxu0 0
        %3566 = vmatpush1.bf16.msra.mxu0 %v3486
        %3567 = vmatprep.subr.bf16.mxu0 0
        %3568 = vmatpush1.bf16.msra.mxu0 %v3487
        %3569 = vmatprep.subr.bf16.mxu0 0
        %3570 = vmatpush1.bf16.msra.mxu0 0
        %3571 = vmatprep.subr.bf16.mxu0 0
        %3572 = vmatpush1.bf16.msra.mxu0 0
        %3573 = vmatprep.subr.bf16.mxu0 0
        %3574 = vmatpush1.bf16.msra.mxu0 0
        %3575 = vmatprep.subr.bf16.mxu0 0
        %3576 = vmatpush1.bf16.msra.mxu0 0
        %3577 = vmatprep.subr.bf16.mxu0 0
        %3578 = vmatpush1.bf16.msra.mxu0 0
        %3579 = vmatprep.subr.bf16.mxu0 0
        %3580 = vmatpush1.bf16.msra.mxu0 0
        %3581 = vmatprep.subr.bf16.mxu0 0
        %3582 = vmatpush1.bf16.msra.mxu0 0
        %3583 = vmatprep.subr.bf16.mxu0 0
        %3584 = vmatpush1.bf16.msra.mxu0 0
        %3585 = vmatprep.mubr.bf16.mxu0 0
        %3586 = vmatmul.mubr.bf16.gmra.mrb[0].mxu0 %v3361
        %v3587 = vpop.f32.mrb[0].mxu0
        %v3588 = vadd.f32 %v3547, %v3587
        %v3589 = vpop.f32.mrb[0].mxu0
        %v3590 = vpop.f32.mrb[0].mxu0
        %v3591 = vadd.f32 %v3550, %v3590
        %v3592 = vpop.f32.mrb[0].mxu0
        %3593 = vdwg.mxu0
        %v3594 = vmul.f32 %v3588, 0.01
        %v3595 = vmul.f32 %v3591, 0.01
        %v3596 = vmax.f32 %v3588, %v3594
        %v3597 = vmax.f32 %v3591, %v3595
        %v3598 = vpack.c.bf16 %v3597, %v3596
        %v3600 = vshrl.u32 %v3598, 16
        %v3602 = vrot.slane %v3600, 7
        %v3603 = vshll.u32 %v3598, 16
        %v3605 = vor.u32 %v3602, %v3603
        %v3608 = vsel %vm2802, 0, %v3605
        %v3609 = vsel %vm2802, %v3602, 0
        %v3611 = vshrl.u32 %v3608, 16
        %v3613 = vshll.u32 %v3608, 16
        %v3615 = vrot.slane %v3613, 1
        %v3616 = vor.u32 %v3611, %v3615
        %v3618 = vshll.u32 %v3609, 16
        %v3620 = vrot.slane %v3618, 1
        %v3621 = vsel %vm1449, %v3616, %v3620
        %v3625 = vrot.slane %v3608, 1
        %v3626 = vrot.slane %v3609, 1
        %v3627 = vsel %vm1495, %v3625, %v3626
        %v3630 = vlaneseq
        %v3631 = vshrl.u32 %v3630, 7
        %v3632 = vsub.s32 0, %v3631
        %v3633 = vrot.slane %v3193, %v3632
        %v3683 = vunpack.c.l.b16 %v3145
        %v3684 = vunpack.c.l.b16 %v3146
        %v3685 = vunpack.c.l.b16 %v3147
        %v3686 = vunpack.c.l.b16 %v3148
        %v3687 = vunpack.c.l.b16 %v3149
        %v3688 = vunpack.c.l.b16 %v3150
        %v3689 = vunpack.c.l.b16 %v3151
        %v3690 = vunpack.c.l.b16 %v3152
        %v3691 = vunpack.c.l.b16 %v3153
        %v3692 = vunpack.c.l.b16 %v3154
        %v3693 = vunpack.c.l.b16 %v3155
        %v3694 = vunpack.c.l.b16 %v3156
        %v3695 = vunpack.c.l.b16 %v3157
        %v3696 = vunpack.c.l.b16 %v3158
        %v3697 = vunpack.c.l.b16 %v3159
        %v3698 = vunpack.c.l.b16 %v3160
        %v3699 = vunpack.c.l.b16 %v3161
        %v3700 = vunpack.c.l.b16 %v3162
        %v3701 = vunpack.c.l.b16 %v3163
        %v3702 = vunpack.c.l.b16 %v3164
        %v3703 = vunpack.c.l.b16 %v3165
        %v3704 = vunpack.c.l.b16 %v3166
        %v3705 = vunpack.c.l.b16 %v3167
        %v3706 = vunpack.c.l.b16 %v3168
        %v3707 = vunpack.c.l.b16 %v3169
        %v3708 = vunpack.c.l.b16 %v3170
        %v3709 = vunpack.c.l.b16 %v3171
        %v3710 = vunpack.c.l.b16 %v3172
        %v3711 = vunpack.c.l.b16 %v3173
        %v3712 = vunpack.c.l.b16 %v3174
        %v3713 = vunpack.c.l.b16 %v3175
        %v3714 = vunpack.c.l.b16 %v3176
        %v3715 = vunpack.c.l.b16 %v3177
        %v3716 = vunpack.c.l.b16 %v3178
        %v3717 = vunpack.c.l.b16 %v3179
        %v3718 = vunpack.c.l.b16 %v3180
        %v3719 = vunpack.c.l.b16 %v3181
        %v3720 = vunpack.c.l.b16 %v3182
        %v3721 = vunpack.c.l.b16 %v3183
        %v3722 = vunpack.c.l.b16 %v3184
        %v3723 = vunpack.c.l.b16 %v3185
        %v3724 = vunpack.c.l.b16 %v3186
        %v3725 = vunpack.c.l.b16 %v3187
        %v3726 = vunpack.c.l.b16 %v3188
        %v3727 = vunpack.c.l.b16 %v3189
        %v3728 = vunpack.c.l.b16 %v3190
        %v3729 = vunpack.c.l.b16 %v3191
        %v3730 = vunpack.c.l.b16 %v3192
        %v3731 = vpack.c.b16 %v3684, %v3683
        %v3732 = vpack.c.b16 %v3686, %v3685
        %v3733 = vpack.c.b16 %v3688, %v3687
        %v3734 = vpack.c.b16 %v3690, %v3689
        %v3735 = vpack.c.b16 %v3692, %v3691
        %v3736 = vpack.c.b16 %v3694, %v3693
        %v3737 = vpack.c.b16 %v3696, %v3695
        %v3738 = vpack.c.b16 %v3698, %v3697
        %v3739 = vpack.c.b16 %v3700, %v3699
        %v3740 = vpack.c.b16 %v3702, %v3701
        %v3741 = vpack.c.b16 %v3704, %v3703
        %v3742 = vpack.c.b16 %v3706, %v3705
        %v3743 = vpack.c.b16 %v3708, %v3707
        %v3744 = vpack.c.b16 %v3710, %v3709
        %v3745 = vpack.c.b16 %v3712, %v3711
        %v3746 = vpack.c.b16 %v3714, %v3713
        %v3747 = vpack.c.b16 %v3716, %v3715
        %v3748 = vpack.c.b16 %v3718, %v3717
        %v3749 = vpack.c.b16 %v3720, %v3719
        %v3750 = vpack.c.b16 %v3722, %v3721
        %v3751 = vpack.c.b16 %v3724, %v3723
        %v3752 = vpack.c.b16 %v3726, %v3725
        %v3753 = vpack.c.b16 %v3728, %v3727
        %v3754 = vpack.c.b16 %v3730, %v3729
        %3779 = vmatprep.subr.bf16.mxu0 0
        %3780 = vmatpush1.bf16.msra.mxu0 %v3731
        %3781 = vmatprep.subr.bf16.mxu0 0
        %3782 = vmatpush1.bf16.msra.mxu0 %v3732
        %3783 = vmatprep.subr.bf16.mxu0 0
        %3784 = vmatpush1.bf16.msra.mxu0 %v3733
        %3785 = vmatprep.subr.bf16.mxu0 0
        %3786 = vmatpush1.bf16.msra.mxu0 %v3734
        %3787 = vmatprep.subr.bf16.mxu0 0
        %3788 = vmatpush1.bf16.msra.mxu0 %v3735
        %3789 = vmatprep.subr.bf16.mxu0 0
        %3790 = vmatpush1.bf16.msra.mxu0 %v3736
        %3791 = vmatprep.subr.bf16.mxu0 0
        %3792 = vmatpush1.bf16.msra.mxu0 %v3737
        %3793 = vmatprep.subr.bf16.mxu0 0
        %3794 = vmatpush1.bf16.msra.mxu0 %v3738
        %3795 = vmatprep.subr.bf16.mxu0 0
        %3796 = vmatpush1.bf16.msra.mxu0 %v3739
        %3797 = vmatprep.subr.bf16.mxu0 0
        %3798 = vmatpush1.bf16.msra.mxu0 %v3740
        %3799 = vmatprep.subr.bf16.mxu0 0
        %3800 = vmatpush1.bf16.msra.mxu0 %v3741
        %3801 = vmatprep.subr.bf16.mxu0 0
        %3802 = vmatpush1.bf16.msra.mxu0 %v3742
        %3803 = vmatprep.subr.bf16.mxu0 0
        %3804 = vmatpush1.bf16.msra.mxu0 %v3743
        %3805 = vmatprep.subr.bf16.mxu0 0
        %3806 = vmatpush1.bf16.msra.mxu0 %v3744
        %3807 = vmatprep.subr.bf16.mxu0 0
        %3808 = vmatpush1.bf16.msra.mxu0 %v3745
        %3809 = vmatprep.subr.bf16.mxu0 0
        %3810 = vmatpush1.bf16.msra.mxu0 %v3746
        %3811 = vmatprep.mubr.bf16.mxu0 %v3621
        %3812 = vmatmul.mubr.bf16.gmra.mrb[0].mxu0 %v3608
        %v3813 = vpop.f32.mrb[0].mxu0
        %v3814 = vadd.f32 %v3633, %v3813
        %v3815 = vpop.f32.mrb[0].mxu0
        %v3816 = vpop.f32.mrb[0].mxu0
        %v3817 = vadd.f32 %v3633, %v3816
        %v3818 = vpop.f32.mrb[0].mxu0
        %3819 = vdwg.mxu0
        %3820 = vmatprep.subr.bf16.mxu0 0
        %3821 = vmatpush1.bf16.msra.mxu0 %v3747
        %3822 = vmatprep.subr.bf16.mxu0 0
        %3823 = vmatpush1.bf16.msra.mxu0 %v3748
        %3824 = vmatprep.subr.bf16.mxu0 0
        %3825 = vmatpush1.bf16.msra.mxu0 %v3749
        %3826 = vmatprep.subr.bf16.mxu0 0
        %3827 = vmatpush1.bf16.msra.mxu0 %v3750
        %3828 = vmatprep.subr.bf16.mxu0 0
        %3829 = vmatpush1.bf16.msra.mxu0 %v3751
        %3830 = vmatprep.subr.bf16.mxu0 0
        %3831 = vmatpush1.bf16.msra.mxu0 %v3752
        %3832 = vmatprep.subr.bf16.mxu0 0
        %3833 = vmatpush1.bf16.msra.mxu0 %v3753
        %3834 = vmatprep.subr.bf16.mxu0 0
        %3835 = vmatpush1.bf16.msra.mxu0 %v3754
        %3836 = vmatprep.subr.bf16.mxu0 0
        %3837 = vmatpush1.bf16.msra.mxu0 0
        %3838 = vmatprep.subr.bf16.mxu0 0
        %3839 = vmatpush1.bf16.msra.mxu0 0
        %3840 = vmatprep.subr.bf16.mxu0 0
        %3841 = vmatpush1.bf16.msra.mxu0 0
        %3842 = vmatprep.subr.bf16.mxu0 0
        %3843 = vmatpush1.bf16.msra.mxu0 0
        %3844 = vmatprep.subr.bf16.mxu0 0
        %3845 = vmatpush1.bf16.msra.mxu0 0
        %3846 = vmatprep.subr.bf16.mxu0 0
        %3847 = vmatpush1.bf16.msra.mxu0 0
        %3848 = vmatprep.subr.bf16.mxu0 0
        %3849 = vmatpush1.bf16.msra.mxu0 0
        %3850 = vmatprep.subr.bf16.mxu0 0
        %3851 = vmatpush1.bf16.msra.mxu0 0
        %3852 = vmatprep.mubr.bf16.mxu0 0
        %3853 = vmatmul.mubr.bf16.gmra.mrb[0].mxu0 %v3627
        %v3854 = vpop.f32.mrb[0].mxu0
        %v3855 = vadd.f32 %v3814, %v3854
        %v3856 = vpop.f32.mrb[0].mxu0
        %v3857 = vpop.f32.mrb[0].mxu0
        %v3858 = vadd.f32 %v3817, %v3857
        %v3859 = vpop.f32.mrb[0].mxu0
        %3860 = vdwg.mxu0
        %v3862 = vlaneseq
        %v3863 = vshrl.u32 %v3862, 7
        %v3864 = vsub.s32 0, %v3863
        %v3865 = vrot.slane %v3210, %v3864
        %v3883 = vunpack.c.l.b16 %v3194
        %v3884 = vunpack.c.l.b16 %v3195
        %v3885 = vunpack.c.l.b16 %v3196
        %v3886 = vunpack.c.l.b16 %v3197
        %v3887 = vunpack.c.l.b16 %v3198
        %v3888 = vunpack.c.l.b16 %v3199
        %v3889 = vunpack.c.l.b16 %v3200
        %v3890 = vunpack.c.l.b16 %v3201
        %v3891 = vunpack.c.l.b16 %v3202
        %v3892 = vunpack.c.l.b16 %v3203
        %v3893 = vunpack.c.l.b16 %v3204
        %v3894 = vunpack.c.l.b16 %v3205
        %v3895 = vunpack.c.l.b16 %v3206
        %v3896 = vunpack.c.l.b16 %v3207
        %v3897 = vunpack.c.l.b16 %v3208
        %v3898 = vunpack.c.l.b16 %v3209
        %v3899 = vpack.c.b16 %v3884, %v3883
        %v3900 = vpack.c.b16 %v3886, %v3885
        %v3901 = vpack.c.b16 %v3888, %v3887
        %v3902 = vpack.c.b16 %v3890, %v3889
        %v3903 = vpack.c.b16 %v3892, %v3891
        %v3904 = vpack.c.b16 %v3894, %v3893
        %v3905 = vpack.c.b16 %v3896, %v3895
        %v3906 = vpack.c.b16 %v3898, %v3897
        %3915 = vmatprep.subr.bf16.mxu0 0
        %3916 = vmatpush1.bf16.msra.mxu0 %v3899
        %3917 = vmatprep.subr.bf16.mxu0 0
        %3918 = vmatpush1.bf16.msra.mxu0 %v3900
        %3919 = vmatprep.subr.bf16.mxu0 0
        %3920 = vmatpush1.bf16.msra.mxu0 %v3901
        %3921 = vmatprep.subr.bf16.mxu0 0
        %3922 = vmatpush1.bf16.msra.mxu0 %v3902
        %3923 = vmatprep.subr.bf16.mxu0 0
        %3924 = vmatpush1.bf16.msra.mxu0 %v3903
        %3925 = vmatprep.subr.bf16.mxu0 0
        %3926 = vmatpush1.bf16.msra.mxu0 %v3904
        %3927 = vmatprep.subr.bf16.mxu0 0
        %3928 = vmatpush1.bf16.msra.mxu0 %v3905
        %3929 = vmatprep.subr.bf16.mxu0 0
        %3930 = vmatpush1.bf16.msra.mxu0 %v3906
        %3931 = vmatprep.subr.bf16.mxu0 0
        %3932 = vmatpush1.bf16.msra.mxu0 0
        %3933 = vmatprep.subr.bf16.mxu0 0
        %3934 = vmatpush1.bf16.msra.mxu0 0
        %3935 = vmatprep.subr.bf16.mxu0 0
        %3936 = vmatpush1.bf16.msra.mxu0 0
        %3937 = vmatprep.subr.bf16.mxu0 0
        %3938 = vmatpush1.bf16.msra.mxu0 0
        %3939 = vmatprep.subr.bf16.mxu0 0
        %3940 = vmatpush1.bf16.msra.mxu0 0
        %3941 = vmatprep.subr.bf16.mxu0 0
        %3942 = vmatpush1.bf16.msra.mxu0 0
        %3943 = vmatprep.subr.bf16.mxu0 0
        %3944 = vmatpush1.bf16.msra.mxu0 0
        %3945 = vmatprep.subr.bf16.mxu0 0
        %3946 = vmatpush1.bf16.msra.mxu0 0
        %3947 = vmatprep.mubr.bf16.mxu0 0
        %3948 = vmatmul.mubr.bf16.gmra.mrb[0].mxu0 %v3360
        %v3949 = vpop.f32.mrb[0].mxu0
        %v3950 = vadd.f32 %v3865, %v3949
        %v3951 = vpop.f32.mrb[0].mxu0
        %v3952 = vpop.f32.mrb[0].mxu0
        %v3953 = vadd.f32 %v3865, %v3952
        %v3954 = vpop.f32.mrb[0].mxu0
        %3955 = vdwg.mxu0
        %v3956 = vadd.f32 %v3855, %v3950
        %v3957 = vadd.f32 %v3858, %v3953
        %v3958 = vmul.f32 %v3956, 0.01
        %v3959 = vmul.f32 %v3957, 0.01
        %v3960 = vmax.f32 %v3956, %v3958
        %v3961 = vmax.f32 %v3957, %v3959
        %v3962 = vld [vmem:[%s31] sm:$0xff]
        %v3963 = vld [vmem:[%s31 + $0x8] sm:$0xff]
        %v3964 = vld [vmem:[%s31 + $0x10] sm:$0xff]
        %v3965 = vld [vmem:[%s31 + $0x18] sm:$0xff]
        %v3966 = vld [vmem:[%s31 + $0x20] sm:$0xff]
        %v3967 = vld [vmem:[%s31 + $0x28] sm:$0xff]
        %v3968 = vld [vmem:[%s31 + $0x30] sm:$0xff]
        %v3969 = vld [vmem:[%s31 + $0x38] sm:$0xff]
        %v3970 = vld [vmem:[%s31 + $0x40] sm:$0xff]
        %v3971 = vld [vmem:[%s31 + $0x48] sm:$0xff]
        %v3972 = vld [vmem:[%s31 + $0x50] sm:$0xff]
        %v3973 = vld [vmem:[%s31 + $0x58] sm:$0xff]
        %v3974 = vld [vmem:[%s31 + $0x60] sm:$0xff]
        %v3975 = vld [vmem:[%s31 + $0x68] sm:$0xff]
        %v3976 = vld [vmem:[%s31 + $0x70] sm:$0xff]
        %v3977 = vld [vmem:[%s31 + $0x78] sm:$0xff]
        %v3978 = vld [vmem:[%s31 + $0x80] sm:$0xff]
        %v3979 = vld [vmem:[%s31 + $0x88] sm:$0xff]
        %v3980 = vld [vmem:[%s31 + $0x90] sm:$0xff]
        %v3981 = vld [vmem:[%s31 + $0x98] sm:$0xff]
        %v3982 = vld [vmem:[%s31 + $0xa0] sm:$0xff]
        %v3983 = vld [vmem:[%s31 + $0xa8] sm:$0xff]
        %v3984 = vld [vmem:[%s31 + $0xb0] sm:$0xff]
        %v3985 = vld [vmem:[%s31 + $0xb8] sm:$0xff]
        %v3986 = vld [vmem:[%s31 + $0xc0] sm:$0xff]
        %v3987 = vld [vmem:[%s31 + $0xc8] sm:$0xff]
        %v3988 = vld [vmem:[%s31 + $0xd0] sm:$0xff]
        %v3989 = vld [vmem:[%s31 + $0xd8] sm:$0xff]
        %v3990 = vld [vmem:[%s31 + $0xe0] sm:$0xff]
        %v3991 = vld [vmem:[%s31 + $0xe8] sm:$0xff]
        %v3992 = vld [vmem:[%s31 + $0xf0] sm:$0xff]
        %v3993 = vld [vmem:[%s31 + $0xf8] sm:$0xff]
        %v3994 = vld [vmem:[%s31 + $0x100] sm:$0xff]
        %v3995 = vld [vmem:[%s31 + $0x108] sm:$0xff]
        %v3996 = vld [vmem:[%s31 + $0x110] sm:$0xff]
        %v3997 = vld [vmem:[%s31 + $0x118] sm:$0xff]
        %v3998 = vld [vmem:[%s31 + $0x120] sm:$0xff]
        %v3999 = vld [vmem:[%s31 + $0x128] sm:$0xff]
        %v4000 = vld [vmem:[%s31 + $0x130] sm:$0xff]
        %v4001 = vld [vmem:[%s31 + $0x138] sm:$0xff]
        %v4002 = vld [vmem:[%s31 + $0x140] sm:$0xff]
        %v4003 = vld [vmem:[%s31 + $0x148] sm:$0xff]
        %v4004 = vld [vmem:[%s31 + $0x150] sm:$0xff]
        %v4005 = vld [vmem:[%s31 + $0x158] sm:$0xff]
        %v4006 = vld [vmem:[%s31 + $0x160] sm:$0xff]
        %v4007 = vld [vmem:[%s31 + $0x168] sm:$0xff]
        %v4008 = vld [vmem:[%s31 + $0x170] sm:$0xff]
        %v4009 = vld [vmem:[%s31 + $0x178] sm:$0xff]
        %v4010 = vld [vmem:[#allocation14] sm:$0x3]
        %v4011 = vld [vmem:[%s35] sm:$0xff]
        %v4012 = vld [vmem:[%s35 + $0x8] sm:$0xff]
        %v4013 = vld [vmem:[%s35 + $0x10] sm:$0xff]
        %v4014 = vld [vmem:[%s35 + $0x18] sm:$0xff]
        %v4015 = vld [vmem:[%s35 + $0x20] sm:$0xff]
        %v4016 = vld [vmem:[%s35 + $0x28] sm:$0xff]
        %v4017 = vld [vmem:[%s35 + $0x30] sm:$0xff]
        %v4018 = vld [vmem:[%s35 + $0x38] sm:$0xff]
        %v4019 = vld [vmem:[%s35 + $0x40] sm:$0xff]
        %v4020 = vld [vmem:[%s35 + $0x48] sm:$0xff]
        %v4021 = vld [vmem:[%s35 + $0x50] sm:$0xff]
        %v4022 = vld [vmem:[%s35 + $0x58] sm:$0xff]
        %v4023 = vld [vmem:[%s35 + $0x60] sm:$0xff]
        %v4024 = vld [vmem:[%s35 + $0x68] sm:$0xff]
        %v4025 = vld [vmem:[%s35 + $0x70] sm:$0xff]
        %v4026 = vld [vmem:[%s35 + $0x78] sm:$0xff]
        %v4027 = vld [vmem:[%s35 + $0x80] sm:$0xff]
        %v4028 = vld [vmem:[%s35 + $0x88] sm:$0xff]
        %v4029 = vld [vmem:[%s35 + $0x90] sm:$0xff]
        %v4030 = vld [vmem:[%s35 + $0x98] sm:$0xff]
        %v4031 = vld [vmem:[%s35 + $0xa0] sm:$0xff]
        %v4032 = vld [vmem:[%s35 + $0xa8] sm:$0xff]
        %v4033 = vld [vmem:[%s35 + $0xb0] sm:$0xff]
        %v4034 = vld [vmem:[%s35 + $0xb8] sm:$0xff]
        %v4035 = vld [vmem:[%s35 + $0xc0] sm:$0xff]
        %v4036 = vld [vmem:[%s35 + $0xc8] sm:$0xff]
        %v4037 = vld [vmem:[%s35 + $0xd0] sm:$0xff]
        %v4038 = vld [vmem:[%s35 + $0xd8] sm:$0xff]
        %v4039 = vld [vmem:[%s35 + $0xe0] sm:$0xff]
        %v4040 = vld [vmem:[%s35 + $0xe8] sm:$0xff]
        %v4041 = vld [vmem:[%s35 + $0xf0] sm:$0xff]
        %v4042 = vld [vmem:[%s35 + $0xf8] sm:$0xff]
        %v4043 = vld [vmem:[%s35 + $0x100] sm:$0xff]
        %v4044 = vld [vmem:[%s35 + $0x108] sm:$0xff]
        %v4045 = vld [vmem:[%s35 + $0x110] sm:$0xff]
        %v4046 = vld [vmem:[%s35 + $0x118] sm:$0xff]
        %v4047 = vld [vmem:[%s35 + $0x120] sm:$0xff]
        %v4048 = vld [vmem:[%s35 + $0x128] sm:$0xff]
        %v4049 = vld [vmem:[%s35 + $0x130] sm:$0xff]
        %v4050 = vld [vmem:[%s35 + $0x138] sm:$0xff]
        %v4051 = vld [vmem:[%s35 + $0x140] sm:$0xff]
        %v4052 = vld [vmem:[%s35 + $0x148] sm:$0xff]
        %v4053 = vld [vmem:[%s35 + $0x150] sm:$0xff]
        %v4054 = vld [vmem:[%s35 + $0x158] sm:$0xff]
        %v4055 = vld [vmem:[%s35 + $0x160] sm:$0xff]
        %v4056 = vld [vmem:[%s35 + $0x168] sm:$0xff]
        %v4057 = vld [vmem:[%s35 + $0x170] sm:$0xff]
        %v4058 = vld [vmem:[%s35 + $0x178] sm:$0xff]
        %v4059 = vld [vmem:[%s35 + $0x180] sm:$0xff]
        %v4060 = vld [vmem:[%s35 + $0x188] sm:$0xff]
        %v4061 = vld [vmem:[%s35 + $0x190] sm:$0xff]
        %v4062 = vld [vmem:[%s35 + $0x198] sm:$0xff]
        %v4063 = vld [vmem:[%s35 + $0x1a0] sm:$0xff]
        %v4064 = vld [vmem:[%s35 + $0x1a8] sm:$0xff]
        %v4065 = vld [vmem:[%s35 + $0x1b0] sm:$0xff]
        %v4066 = vld [vmem:[%s35 + $0x1b8] sm:$0xff]
        %v4067 = vld [vmem:[%s35 + $0x1c0] sm:$0xff]
        %v4068 = vld [vmem:[%s35 + $0x1c8] sm:$0xff]
        %v4069 = vld [vmem:[%s35 + $0x1d0] sm:$0xff]
        %v4070 = vld [vmem:[%s35 + $0x1d8] sm:$0xff]
        %v4071 = vld [vmem:[%s35 + $0x1e0] sm:$0xff]
        %v4072 = vld [vmem:[%s35 + $0x1e8] sm:$0xff]
        %v4073 = vld [vmem:[%s35 + $0x1f0] sm:$0xff]
        %v4074 = vld [vmem:[%s35 + $0x1f8] sm:$0xff]
        %v4075 = vld [vmem:[%s35 + $0x200] sm:$0xff]
        %v4076 = vld [vmem:[%s35 + $0x208] sm:$0xff]
        %v4077 = vld [vmem:[%s35 + $0x210] sm:$0xff]
        %v4078 = vld [vmem:[%s35 + $0x218] sm:$0xff]
        %v4079 = vld [vmem:[%s35 + $0x220] sm:$0xff]
        %v4080 = vld [vmem:[%s35 + $0x228] sm:$0xff]
        %v4081 = vld [vmem:[%s35 + $0x230] sm:$0xff]
        %v4082 = vld [vmem:[%s35 + $0x238] sm:$0xff]
        %v4083 = vld [vmem:[%s35 + $0x240] sm:$0xff]
        %v4084 = vld [vmem:[%s35 + $0x248] sm:$0xff]
        %v4085 = vld [vmem:[%s35 + $0x250] sm:$0xff]
        %v4086 = vld [vmem:[%s35 + $0x258] sm:$0xff]
        %v4087 = vld [vmem:[%s35 + $0x260] sm:$0xff]
        %v4088 = vld [vmem:[%s35 + $0x268] sm:$0xff]
        %v4089 = vld [vmem:[%s35 + $0x270] sm:$0xff]
        %v4090 = vld [vmem:[%s35 + $0x278] sm:$0xff]
        %v4091 = vld [vmem:[%s35 + $0x280] sm:$0xff]
        %v4092 = vld [vmem:[%s35 + $0x288] sm:$0xff]
        %v4093 = vld [vmem:[%s35 + $0x290] sm:$0xff]
        %v4094 = vld [vmem:[%s35 + $0x298] sm:$0xff]
        %v4095 = vld [vmem:[%s35 + $0x2a0] sm:$0xff]
        %v4096 = vld [vmem:[%s35 + $0x2a8] sm:$0xff]
        %v4097 = vld [vmem:[%s35 + $0x2b0] sm:$0xff]
        %v4098 = vld [vmem:[%s35 + $0x2b8] sm:$0xff]
        %v4099 = vld [vmem:[%s35 + $0x2c0] sm:$0xff]
        %v4100 = vld [vmem:[%s35 + $0x2c8] sm:$0xff]
        %v4101 = vld [vmem:[%s35 + $0x2d0] sm:$0xff]
        %v4102 = vld [vmem:[%s35 + $0x2d8] sm:$0xff]
        %v4103 = vld [vmem:[%s35 + $0x2e0] sm:$0xff]
        %v4104 = vld [vmem:[%s35 + $0x2e8] sm:$0xff]
        %v4105 = vld [vmem:[%s35 + $0x2f0] sm:$0xff]
        %v4106 = vld [vmem:[%s35 + $0x2f8] sm:$0xff]
        %v4107 = vld [vmem:[#allocation16] sm:$0x3]
        %v4108 = vld [vmem:[%s39] sm:$0xff]
        %v4109 = vld [vmem:[%s39 + $0x8] sm:$0xff]
        %v4110 = vld [vmem:[%s39 + $0x10] sm:$0xff]
        %v4111 = vld [vmem:[%s39 + $0x18] sm:$0xff]
        %v4112 = vld [vmem:[%s39 + $0x20] sm:$0xff]
        %v4113 = vld [vmem:[%s39 + $0x28] sm:$0xff]
        %v4114 = vld [vmem:[%s39 + $0x30] sm:$0xff]
        %v4115 = vld [vmem:[%s39 + $0x38] sm:$0xff]
        %v4116 = vld [vmem:[%s39 + $0x40] sm:$0xff]
        %v4117 = vld [vmem:[%s39 + $0x48] sm:$0xff]
        %v4118 = vld [vmem:[%s39 + $0x50] sm:$0xff]
        %v4119 = vld [vmem:[%s39 + $0x58] sm:$0xff]
        %v4120 = vld [vmem:[%s39 + $0x60] sm:$0xff]
        %v4121 = vld [vmem:[%s39 + $0x68] sm:$0xff]
        %v4122 = vld [vmem:[%s39 + $0x70] sm:$0xff]
        %v4123 = vld [vmem:[%s39 + $0x78] sm:$0xff]
        %v4124 = vld [vmem:[#allocation17] sm:$0x3]
        %v4125 = vld [vmem:[#allocation19] sm:$0xf]
        %v4128 = vrot.slane %v3960, 7
        %v4129 = vrot.slane %v3961, 7
        %v4130 = vsel %vm2474, %v4128, %v4129
        %v4134 = vsel %vm2474, 0.0, %v4128
        %v4135 = vsel %vm2474, %v4129, 0.0
        %v4136 = vpack.c.bf16 %v4130, %v4134
        %v4137 = vpack.c.bf16 %v4135, %v4135
        %v4139 = vshrl.u32 %v4136, 16
        %v4141 = vshll.u32 %v4136, 16
        %v4143 = vrot.slane %v4141, 1
        %v4144 = vor.u32 %v4139, %v4143
        %v4146 = vshll.u32 %v4137, 16
        %v4148 = vrot.slane %v4146, 1
        %v4149 = vsel %vm1449, %v4144, %v4148
        %v4153 = vrot.slane %v4136, 1
        %v4154 = vrot.slane %v4137, 1
        %v4155 = vsel %vm1495, %v4153, %v4154
        %vm4157 = vcmask 130048
        %v4159 = vsel %vm4157, %v4125, 0
        %4161 = vmatprep.subr.bf16.mxu0 %v4149
        %4162 = vmatpush1.bf16.msra.mxu0 %v4136
        %4163 = vmatprep.subr.bf16.mxu0 0
        %4164 = vmatpush1.bf16.msra.mxu0 0
        %4165 = vmatprep.subr.bf16.mxu0 0
        %4166 = vmatpush1.bf16.msra.mxu0 0
        %4167 = vmatprep.subr.bf16.mxu0 0
        %4168 = vmatpush1.bf16.msra.mxu0 0
        %4169 = vmatprep.subr.bf16.mxu0 0
        %4170 = vmatpush1.bf16.msra.mxu0 0
        %4171 = vmatprep.subr.bf16.mxu0 0
        %4172 = vmatpush1.bf16.msra.mxu0 0
        %4173 = vmatprep.subr.bf16.mxu0 0
        %4174 = vmatpush1.bf16.msra.mxu0 0
        %4175 = vmatprep.subr.bf16.mxu0 0
        %4176 = vmatpush1.bf16.msra.mxu0 0
        %4177 = vmatprep.subr.bf16.mxu0 0
        %4178 = vmatpush1.bf16.msra.mxu0 0
        %4179 = vmatprep.subr.bf16.mxu0 0
        %4180 = vmatpush1.bf16.msra.mxu0 0
        %4181 = vmatprep.subr.bf16.mxu0 0
        %4182 = vmatpush1.bf16.msra.mxu0 0
        %4183 = vmatprep.subr.bf16.mxu0 0
        %4184 = vmatpush1.bf16.msra.mxu0 0
        %4185 = vmatprep.subr.bf16.mxu0 0
        %4186 = vmatpush1.bf16.msra.mxu0 0
        %4187 = vmatprep.subr.bf16.mxu0 0
        %4188 = vmatpush1.bf16.msra.mxu0 0
        %4189 = vmatprep.subr.bf16.mxu0 0
        %4190 = vmatpush1.bf16.msra.mxu0 0
        %4191 = vmatprep.subr.bf16.mxu0 0
        %4192 = vmatpush1.bf16.msra.mxu0 0
        %4193 = vmatprep.mubr.bf16.mxu0 0
        %4194 = vmatmul.mubr.bf16.gmra.mrb[0].mxu0 %v4159
        %v4195 = vpop.f32.mrb[0].mxu0
        %v4196 = vadd.f32 0.0, %v4195
        %v4197 = vpop.f32.mrb[0].mxu0
        %v4198 = vadd.f32 0.0, %v4197
        %v4199 = vpop.f32.mrb[0].mxu0
        %v4200 = vpop.f32.mrb[0].mxu0
        %4201 = vdwg.mxu0
        %4202 = vmatprep.subr.bf16.mxu0 0
        %4203 = vmatpush1.bf16.msra.mxu0 %v4155
        %4204 = vmatprep.subr.bf16.mxu0 0
        %4205 = vmatpush1.bf16.msra.mxu0 0
        %4206 = vmatprep.subr.bf16.mxu0 0
        %4207 = vmatpush1.bf16.msra.mxu0 0
        %4208 = vmatprep.subr.bf16.mxu0 0
        %4209 = vmatpush1.bf16.msra.mxu0 0
        %4210 = vmatprep.subr.bf16.mxu0 0
        %4211 = vmatpush1.bf16.msra.mxu0 0
        %4212 = vmatprep.subr.bf16.mxu0 0
        %4213 = vmatpush1.bf16.msra.mxu0 0
        %4214 = vmatprep.subr.bf16.mxu0 0
        %4215 = vmatpush1.bf16.msra.mxu0 0
        %4216 = vmatprep.subr.bf16.mxu0 0
        %4217 = vmatpush1.bf16.msra.mxu0 0
        %4218 = vmatprep.subr.bf16.mxu0 0
        %4219 = vmatpush1.bf16.msra.mxu0 0
        %4220 = vmatprep.subr.bf16.mxu0 0
        %4221 = vmatpush1.bf16.msra.mxu0 0
        %4222 = vmatprep.subr.bf16.mxu0 0
        %4223 = vmatpush1.bf16.msra.mxu0 0
        %4224 = vmatprep.subr.bf16.mxu0 0
        %4225 = vmatpush1.bf16.msra.mxu0 0
        %4226 = vmatprep.subr.bf16.mxu0 0
        %4227 = vmatpush1.bf16.msra.mxu0 0
        %4228 = vmatprep.subr.bf16.mxu0 0
        %4229 = vmatpush1.bf16.msra.mxu0 0
        %4230 = vmatprep.subr.bf16.mxu0 0
        %4231 = vmatpush1.bf16.msra.mxu0 0
        %4232 = vmatprep.subr.bf16.mxu0 0
        %4233 = vmatpush1.bf16.msra.mxu0 0
        %4234 = vmatprep.mubr.bf16.mxu0 0
        %4235 = vmatmul.mubr.bf16.gmra.mrb[0].mxu0 %v4159
        %v4236 = vpop.f32.mrb[0].mxu0
        %v4237 = vadd.f32 0.0, %v4236
        %v4238 = vpop.f32.mrb[0].mxu0
        %v4239 = vpop.f32.mrb[0].mxu0
        %v4240 = vpop.f32.mrb[0].mxu0
        %4241 = vdwg.mxu0
        %v4242 = vpack.c.bf16 %v4196, %v4196
        %v4243 = vpack.c.bf16 %v4198, %v4198
        %v4244 = vpack.c.bf16 %v4237, %v4237
        %v4246 = vlaneseq
        %v4247 = vshrl.u32 %v4246, 7
        %v4248 = vsub.s32 0, %v4247
        %v4249 = vrot.slane %v4010, %v4248
        %v4250 = vlaneseq
        %v4251 = vshrl.u32 %v4250, 7
        %v4252 = vsub.s32 1, %v4251
        %v4253 = vrot.slane %v4010, %v4252
        %v4304 = vunpack.c.l.b16 %v3962
        %v4305 = vunpack.c.h.b16 %v3962
        %v4306 = vunpack.c.l.b16 %v3963
        %v4307 = vunpack.c.h.b16 %v3963
        %v4308 = vunpack.c.l.b16 %v3964
        %v4309 = vunpack.c.h.b16 %v3964
        %v4310 = vunpack.c.l.b16 %v3965
        %v4311 = vunpack.c.h.b16 %v3965
        %v4312 = vunpack.c.l.b16 %v3966
        %v4313 = vunpack.c.h.b16 %v3966
        %v4314 = vunpack.c.l.b16 %v3967
        %v4315 = vunpack.c.h.b16 %v3967
        %v4316 = vunpack.c.l.b16 %v3968
        %v4317 = vunpack.c.h.b16 %v3968
        %v4318 = vunpack.c.l.b16 %v3969
        %v4319 = vunpack.c.h.b16 %v3969
        %v4320 = vunpack.c.l.b16 %v3970
        %v4321 = vunpack.c.h.b16 %v3970
        %v4322 = vunpack.c.l.b16 %v3971
        %v4323 = vunpack.c.h.b16 %v3971
        %v4324 = vunpack.c.l.b16 %v3972
        %v4325 = vunpack.c.h.b16 %v3972
        %v4326 = vunpack.c.l.b16 %v3973
        %v4327 = vunpack.c.h.b16 %v3973
        %v4328 = vunpack.c.l.b16 %v3974
        %v4329 = vunpack.c.h.b16 %v3974
        %v4330 = vunpack.c.l.b16 %v3975
        %v4331 = vunpack.c.h.b16 %v3975
        %v4332 = vunpack.c.l.b16 %v3976
        %v4333 = vunpack.c.h.b16 %v3976
        %v4334 = vunpack.c.l.b16 %v3977
        %v4335 = vunpack.c.h.b16 %v3977
        %v4336 = vunpack.c.l.b16 %v3978
        %v4337 = vunpack.c.h.b16 %v3978
        %v4338 = vunpack.c.l.b16 %v3979
        %v4339 = vunpack.c.h.b16 %v3979
        %v4340 = vunpack.c.l.b16 %v3980
        %v4341 = vunpack.c.h.b16 %v3980
        %v4342 = vunpack.c.l.b16 %v3981
        %v4343 = vunpack.c.h.b16 %v3981
        %v4344 = vunpack.c.l.b16 %v3982
        %v4345 = vunpack.c.h.b16 %v3982
        %v4346 = vunpack.c.l.b16 %v3983
        %v4347 = vunpack.c.h.b16 %v3983
        %v4348 = vunpack.c.l.b16 %v3984
        %v4349 = vunpack.c.h.b16 %v3984
        %v4350 = vunpack.c.l.b16 %v3985
        %v4351 = vunpack.c.h.b16 %v3985
        %v4352 = vunpack.c.l.b16 %v3986
        %v4353 = vunpack.c.h.b16 %v3986
        %v4354 = vunpack.c.l.b16 %v3987
        %v4355 = vunpack.c.h.b16 %v3987
        %v4356 = vunpack.c.l.b16 %v3988
        %v4357 = vunpack.c.h.b16 %v3988
        %v4358 = vunpack.c.l.b16 %v3989
        %v4359 = vunpack.c.h.b16 %v3989
        %v4360 = vunpack.c.l.b16 %v3990
        %v4361 = vunpack.c.h.b16 %v3990
        %v4362 = vunpack.c.l.b16 %v3991
        %v4363 = vunpack.c.h.b16 %v3991
        %v4364 = vunpack.c.l.b16 %v3992
        %v4365 = vunpack.c.h.b16 %v3992
        %v4366 = vunpack.c.l.b16 %v3993
        %v4367 = vunpack.c.h.b16 %v3993
        %v4368 = vunpack.c.l.b16 %v3994
        %v4369 = vunpack.c.h.b16 %v3994
        %v4370 = vunpack.c.l.b16 %v3995
        %v4371 = vunpack.c.h.b16 %v3995
        %v4372 = vunpack.c.l.b16 %v3996
        %v4373 = vunpack.c.h.b16 %v3996
        %v4374 = vunpack.c.l.b16 %v3997
        %v4375 = vunpack.c.h.b16 %v3997
        %v4376 = vunpack.c.l.b16 %v3998
        %v4377 = vunpack.c.h.b16 %v3998
        %v4378 = vunpack.c.l.b16 %v3999
        %v4379 = vunpack.c.h.b16 %v3999
        %v4380 = vunpack.c.l.b16 %v4000
        %v4381 = vunpack.c.h.b16 %v4000
        %v4382 = vunpack.c.l.b16 %v4001
        %v4383 = vunpack.c.h.b16 %v4001
        %v4384 = vunpack.c.l.b16 %v4002
        %v4385 = vunpack.c.h.b16 %v4002
        %v4386 = vunpack.c.l.b16 %v4003
        %v4387 = vunpack.c.h.b16 %v4003
        %v4388 = vunpack.c.l.b16 %v4004
        %v4389 = vunpack.c.h.b16 %v4004
        %v4390 = vunpack.c.l.b16 %v4005
        %v4391 = vunpack.c.h.b16 %v4005
        %v4392 = vunpack.c.l.b16 %v4006
        %v4393 = vunpack.c.h.b16 %v4006
        %v4394 = vunpack.c.l.b16 %v4007
        %v4395 = vunpack.c.h.b16 %v4007
        %v4396 = vunpack.c.l.b16 %v4008
        %v4397 = vunpack.c.h.b16 %v4008
        %v4398 = vunpack.c.l.b16 %v4009
        %v4399 = vunpack.c.h.b16 %v4009
        %v4400 = vpack.c.b16 %v4306, %v4304
        %v4401 = vpack.c.b16 %v4307, %v4305
        %v4402 = vpack.c.b16 %v4310, %v4308
        %v4403 = vpack.c.b16 %v4311, %v4309
        %v4404 = vpack.c.b16 %v4314, %v4312
        %v4405 = vpack.c.b16 %v4315, %v4313
        %v4406 = vpack.c.b16 %v4318, %v4316
        %v4407 = vpack.c.b16 %v4319, %v4317
        %v4408 = vpack.c.b16 %v4322, %v4320
        %v4409 = vpack.c.b16 %v4323, %v4321
        %v4410 = vpack.c.b16 %v4326, %v4324
        %v4411 = vpack.c.b16 %v4327, %v4325
        %v4412 = vpack.c.b16 %v4330, %v4328
        %v4413 = vpack.c.b16 %v4331, %v4329
        %v4414 = vpack.c.b16 %v4334, %v4332
        %v4415 = vpack.c.b16 %v4335, %v4333
        %v4416 = vpack.c.b16 %v4338, %v4336
        %v4417 = vpack.c.b16 %v4339, %v4337
        %v4418 = vpack.c.b16 %v4342, %v4340
        %v4419 = vpack.c.b16 %v4343, %v4341
        %v4420 = vpack.c.b16 %v4346, %v4344
        %v4421 = vpack.c.b16 %v4347, %v4345
        %v4422 = vpack.c.b16 %v4350, %v4348
        %v4423 = vpack.c.b16 %v4351, %v4349
        %v4424 = vpack.c.b16 %v4354, %v4352
        %v4425 = vpack.c.b16 %v4355, %v4353
        %v4426 = vpack.c.b16 %v4358, %v4356
        %v4427 = vpack.c.b16 %v4359, %v4357
        %v4428 = vpack.c.b16 %v4362, %v4360
        %v4429 = vpack.c.b16 %v4363, %v4361
        %v4430 = vpack.c.b16 %v4366, %v4364
        %v4431 = vpack.c.b16 %v4367, %v4365
        %v4432 = vpack.c.b16 %v4370, %v4368
        %v4433 = vpack.c.b16 %v4371, %v4369
        %v4434 = vpack.c.b16 %v4374, %v4372
        %v4435 = vpack.c.b16 %v4375, %v4373
        %v4436 = vpack.c.b16 %v4378, %v4376
        %v4437 = vpack.c.b16 %v4379, %v4377
        %v4438 = vpack.c.b16 %v4382, %v4380
        %v4439 = vpack.c.b16 %v4383, %v4381
        %v4440 = vpack.c.b16 %v4386, %v4384
        %v4441 = vpack.c.b16 %v4387, %v4385
        %v4442 = vpack.c.b16 %v4390, %v4388
        %v4443 = vpack.c.b16 %v4391, %v4389
        %v4444 = vpack.c.b16 %v4394, %v4392
        %v4445 = vpack.c.b16 %v4395, %v4393
        %v4446 = vpack.c.b16 %v4398, %v4396
        %v4447 = vpack.c.b16 %v4399, %v4397
        %4496 = vmatprep.subr.bf16.mxu0 %v4401
        %4497 = vmatpush1.bf16.msra.mxu0 %v4400
        %4498 = vmatprep.subr.bf16.mxu0 %v4403
        %4499 = vmatpush1.bf16.msra.mxu0 %v4402
        %4500 = vmatprep.subr.bf16.mxu0 %v4405
        %4501 = vmatpush1.bf16.msra.mxu0 %v4404
        %4502 = vmatprep.subr.bf16.mxu0 %v4407
        %4503 = vmatpush1.bf16.msra.mxu0 %v4406
        %4504 = vmatprep.subr.bf16.mxu0 %v4409
        %4505 = vmatpush1.bf16.msra.mxu0 %v4408
        %4506 = vmatprep.subr.bf16.mxu0 %v4411
        %4507 = vmatpush1.bf16.msra.mxu0 %v4410
        %4508 = vmatprep.subr.bf16.mxu0 %v4413
        %4509 = vmatpush1.bf16.msra.mxu0 %v4412
        %4510 = vmatprep.subr.bf16.mxu0 %v4415
        %4511 = vmatpush1.bf16.msra.mxu0 %v4414
        %4512 = vmatprep.subr.bf16.mxu0 %v4417
        %4513 = vmatpush1.bf16.msra.mxu0 %v4416
        %4514 = vmatprep.subr.bf16.mxu0 %v4419
        %4515 = vmatpush1.bf16.msra.mxu0 %v4418
        %4516 = vmatprep.subr.bf16.mxu0 %v4421
        %4517 = vmatpush1.bf16.msra.mxu0 %v4420
        %4518 = vmatprep.subr.bf16.mxu0 %v4423
        %4519 = vmatpush1.bf16.msra.mxu0 %v4422
        %4520 = vmatprep.subr.bf16.mxu0 %v4425
        %4521 = vmatpush1.bf16.msra.mxu0 %v4424
        %4522 = vmatprep.subr.bf16.mxu0 %v4427
        %4523 = vmatpush1.bf16.msra.mxu0 %v4426
        %4524 = vmatprep.subr.bf16.mxu0 %v4429
        %4525 = vmatpush1.bf16.msra.mxu0 %v4428
        %4526 = vmatprep.subr.bf16.mxu0 %v4431
        %4527 = vmatpush1.bf16.msra.mxu0 %v4430
        %4528 = vmatprep.mubr.bf16.mxu0 %v4243
        %4529 = vmatmul.mubr.bf16.gmra.mrb[0].mxu0 %v4242
        %v4530 = vpop.f32.mrb[0].mxu0
        %v4531 = vadd.f32 %v4249, %v4530
        %v4532 = vpop.f32.mrb[0].mxu0
        %v4533 = vadd.f32 %v4253, %v4532
        %v4534 = vpop.f32.mrb[0].mxu0
        %v4535 = vpop.f32.mrb[0].mxu0
        %4536 = vdwg.mxu0
        %4537 = vmatprep.subr.bf16.mxu0 %v4433
        %4538 = vmatpush1.bf16.msra.mxu0 %v4432
        %4539 = vmatprep.subr.bf16.mxu0 %v4435
        %4540 = vmatpush1.bf16.msra.mxu0 %v4434
        %4541 = vmatprep.subr.bf16.mxu0 %v4437
        %4542 = vmatpush1.bf16.msra.mxu0 %v4436
        %4543 = vmatprep.subr.bf16.mxu0 %v4439
        %4544 = vmatpush1.bf16.msra.mxu0 %v4438
        %4545 = vmatprep.subr.bf16.mxu0 %v4441
        %4546 = vmatpush1.bf16.msra.mxu0 %v4440
        %4547 = vmatprep.subr.bf16.mxu0 %v4443
        %4548 = vmatpush1.bf16.msra.mxu0 %v4442
        %4549 = vmatprep.subr.bf16.mxu0 %v4445
        %4550 = vmatpush1.bf16.msra.mxu0 %v4444
        %4551 = vmatprep.subr.bf16.mxu0 %v4447
        %4552 = vmatpush1.bf16.msra.mxu0 %v4446
        %4553 = vmatprep.subr.bf16.mxu0 0
        %4554 = vmatpush1.bf16.msra.mxu0 0
        %4555 = vmatprep.subr.bf16.mxu0 0
        %4556 = vmatpush1.bf16.msra.mxu0 0
        %4557 = vmatprep.subr.bf16.mxu0 0
        %4558 = vmatpush1.bf16.msra.mxu0 0
        %4559 = vmatprep.subr.bf16.mxu0 0
        %4560 = vmatpush1.bf16.msra.mxu0 0
        %4561 = vmatprep.subr.bf16.mxu0 0
        %4562 = vmatpush1.bf16.msra.mxu0 0
        %4563 = vmatprep.subr.bf16.mxu0 0
        %4564 = vmatpush1.bf16.msra.mxu0 0
        %4565 = vmatprep.subr.bf16.mxu0 0
        %4566 = vmatpush1.bf16.msra.mxu0 0
        %4567 = vmatprep.subr.bf16.mxu0 0
        %4568 = vmatpush1.bf16.msra.mxu0 0
        %4569 = vmatprep.mubr.bf16.mxu0 0
        %4570 = vmatmul.mubr.bf16.gmra.mrb[0].mxu0 %v4244
        %v4571 = vpop.f32.mrb[0].mxu0
        %v4572 = vadd.f32 %v4531, %v4571
        %v4573 = vpop.f32.mrb[0].mxu0
        %v4574 = vadd.f32 %v4533, %v4573
        %v4575 = vpop.f32.mrb[0].mxu0
        %v4576 = vpop.f32.mrb[0].mxu0
        %4577 = vdwg.mxu0
        %v4578 = vmul.f32 %v4572, 0.01
        %v4579 = vmul.f32 %v4574, 0.01
        %v4580 = vmax.f32 %v4572, %v4578
        %v4581 = vmax.f32 %v4574, %v4579
        %v4582 = vpack.c.bf16 %v4580, %v4580
        %v4583 = vpack.c.bf16 %v4581, %v4581
        %v4585 = vshrl.u32 %v4582, 16
        %v4587 = vrot.slane %v4585, 7
        %v4588 = vshll.u32 %v4582, 16
        %v4590 = vor.u32 %v4587, %v4588
        %v4592 = vshrl.u32 %v4583, 16
        %v4594 = vrot.slane %v4592, 7
        %v4595 = vshll.u32 %v4583, 16
        %v4597 = vor.u32 %v4594, %v4595
        %v4600 = vsel %vm2802, 0, %v4590
        %v4601 = vsel %vm2802, 0, %v4597
        %vm4602 = vsmask.f32 4352
        %vm4603 = vmand %vm1573, %vm4602
        %v4604 = vsel %vm4603, %v4600, 0
        %v4605 = vsel %vm4603, %v4601, 0
        %v4607 = vshrl.u32 %v4604, 16
        %v4609 = vshll.u32 %v4604, 16
        %v4611 = vrot.slane %v4609, 1
        %v4612 = vor.u32 %v4607, %v4611
        %v4614 = vshrl.u32 %v4605, 16
        %v4616 = vshll.u32 %v4605, 16
        %v4618 = vrot.slane %v4616, 1
        %v4619 = vor.u32 %v4614, %v4618
        %v4624 = vrot.slane %v4604, 1
        %v4625 = vrot.slane %v4605, 1
        %v4629 = vlaneseq
        %v4630 = vshrl.u32 %v4629, 7
        %v4631 = vsub.s32 0, %v4630
        %v4632 = vrot.slane %v4107, %v4631
        %v4633 = vlaneseq
        %v4634 = vshrl.u32 %v4633, 7
        %v4635 = vsub.s32 1, %v4634
        %v4636 = vrot.slane %v4107, %v4635
        %v4735 = vunpack.c.l.b16 %v4011
        %v4736 = vunpack.c.h.b16 %v4011
        %v4737 = vunpack.c.l.b16 %v4012
        %v4738 = vunpack.c.h.b16 %v4012
        %v4739 = vunpack.c.l.b16 %v4013
        %v4740 = vunpack.c.h.b16 %v4013
        %v4741 = vunpack.c.l.b16 %v4014
        %v4742 = vunpack.c.h.b16 %v4014
        %v4743 = vunpack.c.l.b16 %v4015
        %v4744 = vunpack.c.h.b16 %v4015
        %v4745 = vunpack.c.l.b16 %v4016
        %v4746 = vunpack.c.h.b16 %v4016
        %v4747 = vunpack.c.l.b16 %v4017
        %v4748 = vunpack.c.h.b16 %v4017
        %v4749 = vunpack.c.l.b16 %v4018
        %v4750 = vunpack.c.h.b16 %v4018
        %v4751 = vunpack.c.l.b16 %v4019
        %v4752 = vunpack.c.h.b16 %v4019
        %v4753 = vunpack.c.l.b16 %v4020
        %v4754 = vunpack.c.h.b16 %v4020
        %v4755 = vunpack.c.l.b16 %v4021
        %v4756 = vunpack.c.h.b16 %v4021
        %v4757 = vunpack.c.l.b16 %v4022
        %v4758 = vunpack.c.h.b16 %v4022
        %v4759 = vunpack.c.l.b16 %v4023
        %v4760 = vunpack.c.h.b16 %v4023
        %v4761 = vunpack.c.l.b16 %v4024
        %v4762 = vunpack.c.h.b16 %v4024
        %v4763 = vunpack.c.l.b16 %v4025
        %v4764 = vunpack.c.h.b16 %v4025
        %v4765 = vunpack.c.l.b16 %v4026
        %v4766 = vunpack.c.h.b16 %v4026
        %v4767 = vunpack.c.l.b16 %v4027
        %v4768 = vunpack.c.h.b16 %v4027
        %v4769 = vunpack.c.l.b16 %v4028
        %v4770 = vunpack.c.h.b16 %v4028
        %v4771 = vunpack.c.l.b16 %v4029
        %v4772 = vunpack.c.h.b16 %v4029
        %v4773 = vunpack.c.l.b16 %v4030
        %v4774 = vunpack.c.h.b16 %v4030
        %v4775 = vunpack.c.l.b16 %v4031
        %v4776 = vunpack.c.h.b16 %v4031
        %v4777 = vunpack.c.l.b16 %v4032
        %v4778 = vunpack.c.h.b16 %v4032
        %v4779 = vunpack.c.l.b16 %v4033
        %v4780 = vunpack.c.h.b16 %v4033
        %v4781 = vunpack.c.l.b16 %v4034
        %v4782 = vunpack.c.h.b16 %v4034
        %v4783 = vunpack.c.l.b16 %v4035
        %v4784 = vunpack.c.h.b16 %v4035
        %v4785 = vunpack.c.l.b16 %v4036
        %v4786 = vunpack.c.h.b16 %v4036
        %v4787 = vunpack.c.l.b16 %v4037
        %v4788 = vunpack.c.h.b16 %v4037
        %v4789 = vunpack.c.l.b16 %v4038
        %v4790 = vunpack.c.h.b16 %v4038
        %v4791 = vunpack.c.l.b16 %v4039
        %v4792 = vunpack.c.h.b16 %v4039
        %v4793 = vunpack.c.l.b16 %v4040
        %v4794 = vunpack.c.h.b16 %v4040
        %v4795 = vunpack.c.l.b16 %v4041
        %v4796 = vunpack.c.h.b16 %v4041
        %v4797 = vunpack.c.l.b16 %v4042
        %v4798 = vunpack.c.h.b16 %v4042
        %v4799 = vunpack.c.l.b16 %v4043
        %v4800 = vunpack.c.h.b16 %v4043
        %v4801 = vunpack.c.l.b16 %v4044
        %v4802 = vunpack.c.h.b16 %v4044
        %v4803 = vunpack.c.l.b16 %v4045
        %v4804 = vunpack.c.h.b16 %v4045
        %v4805 = vunpack.c.l.b16 %v4046
        %v4806 = vunpack.c.h.b16 %v4046
        %v4807 = vunpack.c.l.b16 %v4047
        %v4808 = vunpack.c.h.b16 %v4047
        %v4809 = vunpack.c.l.b16 %v4048
        %v4810 = vunpack.c.h.b16 %v4048
        %v4811 = vunpack.c.l.b16 %v4049
        %v4812 = vunpack.c.h.b16 %v4049
        %v4813 = vunpack.c.l.b16 %v4050
        %v4814 = vunpack.c.h.b16 %v4050
        %v4815 = vunpack.c.l.b16 %v4051
        %v4816 = vunpack.c.h.b16 %v4051
        %v4817 = vunpack.c.l.b16 %v4052
        %v4818 = vunpack.c.h.b16 %v4052
        %v4819 = vunpack.c.l.b16 %v4053
        %v4820 = vunpack.c.h.b16 %v4053
        %v4821 = vunpack.c.l.b16 %v4054
        %v4822 = vunpack.c.h.b16 %v4054
        %v4823 = vunpack.c.l.b16 %v4055
        %v4824 = vunpack.c.h.b16 %v4055
        %v4825 = vunpack.c.l.b16 %v4056
        %v4826 = vunpack.c.h.b16 %v4056
        %v4827 = vunpack.c.l.b16 %v4057
        %v4828 = vunpack.c.h.b16 %v4057
        %v4829 = vunpack.c.l.b16 %v4058
        %v4830 = vunpack.c.h.b16 %v4058
        %v4831 = vunpack.c.l.b16 %v4059
        %v4832 = vunpack.c.h.b16 %v4059
        %v4833 = vunpack.c.l.b16 %v4060
        %v4834 = vunpack.c.h.b16 %v4060
        %v4835 = vunpack.c.l.b16 %v4061
        %v4836 = vunpack.c.h.b16 %v4061
        %v4837 = vunpack.c.l.b16 %v4062
        %v4838 = vunpack.c.h.b16 %v4062
        %v4839 = vunpack.c.l.b16 %v4063
        %v4840 = vunpack.c.h.b16 %v4063
        %v4841 = vunpack.c.l.b16 %v4064
        %v4842 = vunpack.c.h.b16 %v4064
        %v4843 = vunpack.c.l.b16 %v4065
        %v4844 = vunpack.c.h.b16 %v4065
        %v4845 = vunpack.c.l.b16 %v4066
        %v4846 = vunpack.c.h.b16 %v4066
        %v4847 = vunpack.c.l.b16 %v4067
        %v4848 = vunpack.c.h.b16 %v4067
        %v4849 = vunpack.c.l.b16 %v4068
        %v4850 = vunpack.c.h.b16 %v4068
        %v4851 = vunpack.c.l.b16 %v4069
        %v4852 = vunpack.c.h.b16 %v4069
        %v4853 = vunpack.c.l.b16 %v4070
        %v4854 = vunpack.c.h.b16 %v4070
        %v4855 = vunpack.c.l.b16 %v4071
        %v4856 = vunpack.c.h.b16 %v4071
        %v4857 = vunpack.c.l.b16 %v4072
        %v4858 = vunpack.c.h.b16 %v4072
        %v4859 = vunpack.c.l.b16 %v4073
        %v4860 = vunpack.c.h.b16 %v4073
        %v4861 = vunpack.c.l.b16 %v4074
        %v4862 = vunpack.c.h.b16 %v4074
        %v4863 = vunpack.c.l.b16 %v4075
        %v4864 = vunpack.c.h.b16 %v4075
        %v4865 = vunpack.c.l.b16 %v4076
        %v4866 = vunpack.c.h.b16 %v4076
        %v4867 = vunpack.c.l.b16 %v4077
        %v4868 = vunpack.c.h.b16 %v4077
        %v4869 = vunpack.c.l.b16 %v4078
        %v4870 = vunpack.c.h.b16 %v4078
        %v4871 = vunpack.c.l.b16 %v4079
        %v4872 = vunpack.c.h.b16 %v4079
        %v4873 = vunpack.c.l.b16 %v4080
        %v4874 = vunpack.c.h.b16 %v4080
        %v4875 = vunpack.c.l.b16 %v4081
        %v4876 = vunpack.c.h.b16 %v4081
        %v4877 = vunpack.c.l.b16 %v4082
        %v4878 = vunpack.c.h.b16 %v4082
        %v4879 = vunpack.c.l.b16 %v4083
        %v4880 = vunpack.c.h.b16 %v4083
        %v4881 = vunpack.c.l.b16 %v4084
        %v4882 = vunpack.c.h.b16 %v4084
        %v4883 = vunpack.c.l.b16 %v4085
        %v4884 = vunpack.c.h.b16 %v4085
        %v4885 = vunpack.c.l.b16 %v4086
        %v4886 = vunpack.c.h.b16 %v4086
        %v4887 = vunpack.c.l.b16 %v4087
        %v4888 = vunpack.c.h.b16 %v4087
        %v4889 = vunpack.c.l.b16 %v4088
        %v4890 = vunpack.c.h.b16 %v4088
        %v4891 = vunpack.c.l.b16 %v4089
        %v4892 = vunpack.c.h.b16 %v4089
        %v4893 = vunpack.c.l.b16 %v4090
        %v4894 = vunpack.c.h.b16 %v4090
        %v4895 = vunpack.c.l.b16 %v4091
        %v4896 = vunpack.c.h.b16 %v4091
        %v4897 = vunpack.c.l.b16 %v4092
        %v4898 = vunpack.c.h.b16 %v4092
        %v4899 = vunpack.c.l.b16 %v4093
        %v4900 = vunpack.c.h.b16 %v4093
        %v4901 = vunpack.c.l.b16 %v4094
        %v4902 = vunpack.c.h.b16 %v4094
        %v4903 = vunpack.c.l.b16 %v4095
        %v4904 = vunpack.c.h.b16 %v4095
        %v4905 = vunpack.c.l.b16 %v4096
        %v4906 = vunpack.c.h.b16 %v4096
        %v4907 = vunpack.c.l.b16 %v4097
        %v4908 = vunpack.c.h.b16 %v4097
        %v4909 = vunpack.c.l.b16 %v4098
        %v4910 = vunpack.c.h.b16 %v4098
        %v4911 = vunpack.c.l.b16 %v4099
        %v4912 = vunpack.c.h.b16 %v4099
        %v4913 = vunpack.c.l.b16 %v4100
        %v4914 = vunpack.c.h.b16 %v4100
        %v4915 = vunpack.c.l.b16 %v4101
        %v4916 = vunpack.c.h.b16 %v4101
        %v4917 = vunpack.c.l.b16 %v4102
        %v4918 = vunpack.c.h.b16 %v4102
        %v4919 = vunpack.c.l.b16 %v4103
        %v4920 = vunpack.c.h.b16 %v4103
        %v4921 = vunpack.c.l.b16 %v4104
        %v4922 = vunpack.c.h.b16 %v4104
        %v4923 = vunpack.c.l.b16 %v4105
        %v4924 = vunpack.c.h.b16 %v4105
        %v4925 = vunpack.c.l.b16 %v4106
        %v4926 = vunpack.c.h.b16 %v4106
        %v4927 = vpack.c.b16 %v4737, %v4735
        %v4928 = vpack.c.b16 %v4738, %v4736
        %v4929 = vpack.c.b16 %v4741, %v4739
        %v4930 = vpack.c.b16 %v4742, %v4740
        %v4931 = vpack.c.b16 %v4745, %v4743
        %v4932 = vpack.c.b16 %v4746, %v4744
        %v4933 = vpack.c.b16 %v4749, %v4747
        %v4934 = vpack.c.b16 %v4750, %v4748
        %v4935 = vpack.c.b16 %v4753, %v4751
        %v4936 = vpack.c.b16 %v4754, %v4752
        %v4937 = vpack.c.b16 %v4757, %v4755
        %v4938 = vpack.c.b16 %v4758, %v4756
        %v4939 = vpack.c.b16 %v4761, %v4759
        %v4940 = vpack.c.b16 %v4762, %v4760
        %v4941 = vpack.c.b16 %v4765, %v4763
        %v4942 = vpack.c.b16 %v4766, %v4764
        %v4943 = vpack.c.b16 %v4769, %v4767
        %v4944 = vpack.c.b16 %v4770, %v4768
        %v4945 = vpack.c.b16 %v4773, %v4771
        %v4946 = vpack.c.b16 %v4774, %v4772
        %v4947 = vpack.c.b16 %v4777, %v4775
        %v4948 = vpack.c.b16 %v4778, %v4776
        %v4949 = vpack.c.b16 %v4781, %v4779
        %v4950 = vpack.c.b16 %v4782, %v4780
        %v4951 = vpack.c.b16 %v4785, %v4783
        %v4952 = vpack.c.b16 %v4786, %v4784
        %v4953 = vpack.c.b16 %v4789, %v4787
        %v4954 = vpack.c.b16 %v4790, %v4788
        %v4955 = vpack.c.b16 %v4793, %v4791
        %v4956 = vpack.c.b16 %v4794, %v4792
        %v4957 = vpack.c.b16 %v4797, %v4795
        %v4958 = vpack.c.b16 %v4798, %v4796
        %v4959 = vpack.c.b16 %v4801, %v4799
        %v4960 = vpack.c.b16 %v4802, %v4800
        %v4961 = vpack.c.b16 %v4805, %v4803
        %v4962 = vpack.c.b16 %v4806, %v4804
        %v4963 = vpack.c.b16 %v4809, %v4807
        %v4964 = vpack.c.b16 %v4810, %v4808
        %v4965 = vpack.c.b16 %v4813, %v4811
        %v4966 = vpack.c.b16 %v4814, %v4812
        %v4967 = vpack.c.b16 %v4817, %v4815
        %v4968 = vpack.c.b16 %v4818, %v4816
        %v4969 = vpack.c.b16 %v4821, %v4819
        %v4970 = vpack.c.b16 %v4822, %v4820
        %v4971 = vpack.c.b16 %v4825, %v4823
        %v4972 = vpack.c.b16 %v4826, %v4824
        %v4973 = vpack.c.b16 %v4829, %v4827
        %v4974 = vpack.c.b16 %v4830, %v4828
        %v4975 = vpack.c.b16 %v4833, %v4831
        %v4976 = vpack.c.b16 %v4834, %v4832
        %v4977 = vpack.c.b16 %v4837, %v4835
        %v4978 = vpack.c.b16 %v4838, %v4836
        %v4979 = vpack.c.b16 %v4841, %v4839
        %v4980 = vpack.c.b16 %v4842, %v4840
        %v4981 = vpack.c.b16 %v4845, %v4843
        %v4982 = vpack.c.b16 %v4846, %v4844
        %v4983 = vpack.c.b16 %v4849, %v4847
        %v4984 = vpack.c.b16 %v4850, %v4848
        %v4985 = vpack.c.b16 %v4853, %v4851
        %v4986 = vpack.c.b16 %v4854, %v4852
        %v4987 = vpack.c.b16 %v4857, %v4855
        %v4988 = vpack.c.b16 %v4858, %v4856
        %v4989 = vpack.c.b16 %v4861, %v4859
        %v4990 = vpack.c.b16 %v4862, %v4860
        %v4991 = vpack.c.b16 %v4865, %v4863
        %v4992 = vpack.c.b16 %v4866, %v4864
        %v4993 = vpack.c.b16 %v4869, %v4867
        %v4994 = vpack.c.b16 %v4870, %v4868
        %v4995 = vpack.c.b16 %v4873, %v4871
        %v4996 = vpack.c.b16 %v4874, %v4872
        %v4997 = vpack.c.b16 %v4877, %v4875
        %v4998 = vpack.c.b16 %v4878, %v4876
        %v4999 = vpack.c.b16 %v4881, %v4879
        %v5000 = vpack.c.b16 %v4882, %v4880
        %v5001 = vpack.c.b16 %v4885, %v4883
        %v5002 = vpack.c.b16 %v4886, %v4884
        %v5003 = vpack.c.b16 %v4889, %v4887
        %v5004 = vpack.c.b16 %v4890, %v4888
        %v5005 = vpack.c.b16 %v4893, %v4891
        %v5006 = vpack.c.b16 %v4894, %v4892
        %v5007 = vpack.c.b16 %v4897, %v4895
        %v5008 = vpack.c.b16 %v4898, %v4896
        %v5009 = vpack.c.b16 %v4901, %v4899
        %v5010 = vpack.c.b16 %v4902, %v4900
        %v5011 = vpack.c.b16 %v4905, %v4903
        %v5012 = vpack.c.b16 %v4906, %v4904
        %v5013 = vpack.c.b16 %v4909, %v4907
        %v5014 = vpack.c.b16 %v4910, %v4908
        %v5015 = vpack.c.b16 %v4913, %v4911
        %v5016 = vpack.c.b16 %v4914, %v4912
        %v5017 = vpack.c.b16 %v4917, %v4915
        %v5018 = vpack.c.b16 %v4918, %v4916
        %v5019 = vpack.c.b16 %v4921, %v4919
        %v5020 = vpack.c.b16 %v4922, %v4920
        %v5021 = vpack.c.b16 %v4925, %v4923
        %v5022 = vpack.c.b16 %v4926, %v4924
        %5119 = vmatprep.subr.bf16.mxu0 %v4928
        %5120 = vmatpush1.bf16.msra.mxu0 %v4927
        %5121 = vmatprep.subr.bf16.mxu0 %v4930
        %5122 = vmatpush1.bf16.msra.mxu0 %v4929
        %5123 = vmatprep.subr.bf16.mxu0 %v4932
        %5124 = vmatpush1.bf16.msra.mxu0 %v4931
        %5125 = vmatprep.subr.bf16.mxu0 %v4934
        %5126 = vmatpush1.bf16.msra.mxu0 %v4933
        %5127 = vmatprep.subr.bf16.mxu0 %v4936
        %5128 = vmatpush1.bf16.msra.mxu0 %v4935
        %5129 = vmatprep.subr.bf16.mxu0 %v4938
        %5130 = vmatpush1.bf16.msra.mxu0 %v4937
        %5131 = vmatprep.subr.bf16.mxu0 %v4940
        %5132 = vmatpush1.bf16.msra.mxu0 %v4939
        %5133 = vmatprep.subr.bf16.mxu0 %v4942
        %5134 = vmatpush1.bf16.msra.mxu0 %v4941
        %5135 = vmatprep.subr.bf16.mxu0 %v4944
        %5136 = vmatpush1.bf16.msra.mxu0 %v4943
        %5137 = vmatprep.subr.bf16.mxu0 %v4946
        %5138 = vmatpush1.bf16.msra.mxu0 %v4945
        %5139 = vmatprep.subr.bf16.mxu0 %v4948
        %5140 = vmatpush1.bf16.msra.mxu0 %v4947
        %5141 = vmatprep.subr.bf16.mxu0 %v4950
        %5142 = vmatpush1.bf16.msra.mxu0 %v4949
        %5143 = vmatprep.subr.bf16.mxu0 %v4952
        %5144 = vmatpush1.bf16.msra.mxu0 %v4951
        %5145 = vmatprep.subr.bf16.mxu0 %v4954
        %5146 = vmatpush1.bf16.msra.mxu0 %v4953
        %5147 = vmatprep.subr.bf16.mxu0 %v4956
        %5148 = vmatpush1.bf16.msra.mxu0 %v4955
        %5149 = vmatprep.subr.bf16.mxu0 %v4958
        %5150 = vmatpush1.bf16.msra.mxu0 %v4957
        %5151 = vmatprep.mubr.bf16.mxu0 %v4605
        %5152 = vmatmul.mubr.bf16.gmra.mrb[0].mxu0 %v4604
        %v5153 = vpop.f32.mrb[0].mxu0
        %v5154 = vadd.f32 %v4632, %v5153
        %v5155 = vpop.f32.mrb[0].mxu0
        %v5156 = vadd.f32 %v4636, %v5155
        %v5157 = vpop.f32.mrb[0].mxu0
        %v5158 = vpop.f32.mrb[0].mxu0
        %5159 = vdwg.mxu0
        %5160 = vmatprep.subr.bf16.mxu0 %v4960
        %5161 = vmatpush1.bf16.msra.mxu0 %v4959
        %5162 = vmatprep.subr.bf16.mxu0 %v4962
        %5163 = vmatpush1.bf16.msra.mxu0 %v4961
        %5164 = vmatprep.subr.bf16.mxu0 %v4964
        %5165 = vmatpush1.bf16.msra.mxu0 %v4963
        %5166 = vmatprep.subr.bf16.mxu0 %v4966
        %5167 = vmatpush1.bf16.msra.mxu0 %v4965
        %5168 = vmatprep.subr.bf16.mxu0 %v4968
        %5169 = vmatpush1.bf16.msra.mxu0 %v4967
        %5170 = vmatprep.subr.bf16.mxu0 %v4970
        %5171 = vmatpush1.bf16.msra.mxu0 %v4969
        %5172 = vmatprep.subr.bf16.mxu0 %v4972
        %5173 = vmatpush1.bf16.msra.mxu0 %v4971
        %5174 = vmatprep.subr.bf16.mxu0 %v4974
        %5175 = vmatpush1.bf16.msra.mxu0 %v4973
        %5176 = vmatprep.subr.bf16.mxu0 %v4976
        %5177 = vmatpush1.bf16.msra.mxu0 %v4975
        %5178 = vmatprep.subr.bf16.mxu0 %v4978
        %5179 = vmatpush1.bf16.msra.mxu0 %v4977
        %5180 = vmatprep.subr.bf16.mxu0 %v4980
        %5181 = vmatpush1.bf16.msra.mxu0 %v4979
        %5182 = vmatprep.subr.bf16.mxu0 %v4982
        %5183 = vmatpush1.bf16.msra.mxu0 %v4981
        %5184 = vmatprep.subr.bf16.mxu0 %v4984
        %5185 = vmatpush1.bf16.msra.mxu0 %v4983
        %5186 = vmatprep.subr.bf16.mxu0 %v4986
        %5187 = vmatpush1.bf16.msra.mxu0 %v4985
        %5188 = vmatprep.subr.bf16.mxu0 %v4988
        %5189 = vmatpush1.bf16.msra.mxu0 %v4987
        %5190 = vmatprep.subr.bf16.mxu0 %v4990
        %5191 = vmatpush1.bf16.msra.mxu0 %v4989
        %5192 = vmatprep.mubr.bf16.mxu0 %v4619
        %5193 = vmatmul.mubr.bf16.gmra.mrb[0].mxu0 %v4612
        %v5194 = vpop.f32.mrb[0].mxu0
        %v5195 = vadd.f32 %v5154, %v5194
        %v5196 = vpop.f32.mrb[0].mxu0
        %v5197 = vadd.f32 %v5156, %v5196
        %v5198 = vpop.f32.mrb[0].mxu0
        %v5199 = vpop.f32.mrb[0].mxu0
        %5200 = vdwg.mxu0
        %5201 = vmatprep.subr.bf16.mxu0 %v4992
        %5202 = vmatpush1.bf16.msra.mxu0 %v4991
        %5203 = vmatprep.subr.bf16.mxu0 %v4994
        %5204 = vmatpush1.bf16.msra.mxu0 %v4993
        %5205 = vmatprep.subr.bf16.mxu0 %v4996
        %5206 = vmatpush1.bf16.msra.mxu0 %v4995
        %5207 = vmatprep.subr.bf16.mxu0 %v4998
        %5208 = vmatpush1.bf16.msra.mxu0 %v4997
        %5209 = vmatprep.subr.bf16.mxu0 %v5000
        %5210 = vmatpush1.bf16.msra.mxu0 %v4999
        %5211 = vmatprep.subr.bf16.mxu0 %v5002
        %5212 = vmatpush1.bf16.msra.mxu0 %v5001
        %5213 = vmatprep.subr.bf16.mxu0 %v5004
        %5214 = vmatpush1.bf16.msra.mxu0 %v5003
        %5215 = vmatprep.subr.bf16.mxu0 %v5006
        %5216 = vmatpush1.bf16.msra.mxu0 %v5005
        %5217 = vmatprep.subr.bf16.mxu0 %v5008
        %5218 = vmatpush1.bf16.msra.mxu0 %v5007
        %5219 = vmatprep.subr.bf16.mxu0 %v5010
        %5220 = vmatpush1.bf16.msra.mxu0 %v5009
        %5221 = vmatprep.subr.bf16.mxu0 %v5012
        %5222 = vmatpush1.bf16.msra.mxu0 %v5011
        %5223 = vmatprep.subr.bf16.mxu0 %v5014
        %5224 = vmatpush1.bf16.msra.mxu0 %v5013
        %5225 = vmatprep.subr.bf16.mxu0 %v5016
        %5226 = vmatpush1.bf16.msra.mxu0 %v5015
        %5227 = vmatprep.subr.bf16.mxu0 %v5018
        %5228 = vmatpush1.bf16.msra.mxu0 %v5017
        %5229 = vmatprep.subr.bf16.mxu0 %v5020
        %5230 = vmatpush1.bf16.msra.mxu0 %v5019
        %5231 = vmatprep.subr.bf16.mxu0 %v5022
        %5232 = vmatpush1.bf16.msra.mxu0 %v5021
        %5233 = vmatprep.mubr.bf16.mxu0 %v4625
        %5234 = vmatmul.mubr.bf16.gmra.mrb[0].mxu0 %v4624
        %v5235 = vpop.f32.mrb[0].mxu0
        %v5236 = vadd.f32 %v5195, %v5235
        %v5237 = vpop.f32.mrb[0].mxu0
        %v5238 = vadd.f32 %v5197, %v5237
        %v5239 = vpop.f32.mrb[0].mxu0
        %v5240 = vpop.f32.mrb[0].mxu0
        %5241 = vdwg.mxu0
        %v5243 = vlaneseq
        %v5244 = vshrl.u32 %v5243, 7
        %v5245 = vsub.s32 0, %v5244
        %v5246 = vrot.slane %v4124, %v5245
        %v5247 = vlaneseq
        %v5248 = vshrl.u32 %v5247, 7
        %v5249 = vsub.s32 1, %v5248
        %v5250 = vrot.slane %v4124, %v5249
        %v5269 = vunpack.c.l.b16 %v4108
        %v5270 = vunpack.c.h.b16 %v4108
        %v5271 = vunpack.c.l.b16 %v4109
        %v5272 = vunpack.c.h.b16 %v4109
        %v5273 = vunpack.c.l.b16 %v4110
        %v5274 = vunpack.c.h.b16 %v4110
        %v5275 = vunpack.c.l.b16 %v4111
        %v5276 = vunpack.c.h.b16 %v4111
        %v5277 = vunpack.c.l.b16 %v4112
        %v5278 = vunpack.c.h.b16 %v4112
        %v5279 = vunpack.c.l.b16 %v4113
        %v5280 = vunpack.c.h.b16 %v4113
        %v5281 = vunpack.c.l.b16 %v4114
        %v5282 = vunpack.c.h.b16 %v4114
        %v5283 = vunpack.c.l.b16 %v4115
        %v5284 = vunpack.c.h.b16 %v4115
        %v5285 = vunpack.c.l.b16 %v4116
        %v5286 = vunpack.c.h.b16 %v4116
        %v5287 = vunpack.c.l.b16 %v4117
        %v5288 = vunpack.c.h.b16 %v4117
        %v5289 = vunpack.c.l.b16 %v4118
        %v5290 = vunpack.c.h.b16 %v4118
        %v5291 = vunpack.c.l.b16 %v4119
        %v5292 = vunpack.c.h.b16 %v4119
        %v5293 = vunpack.c.l.b16 %v4120
        %v5294 = vunpack.c.h.b16 %v4120
        %v5295 = vunpack.c.l.b16 %v4121
        %v5296 = vunpack.c.h.b16 %v4121
        %v5297 = vunpack.c.l.b16 %v4122
        %v5298 = vunpack.c.h.b16 %v4122
        %v5299 = vunpack.c.l.b16 %v4123
        %v5300 = vunpack.c.h.b16 %v4123
        %v5301 = vpack.c.b16 %v5271, %v5269
        %v5302 = vpack.c.b16 %v5272, %v5270
        %v5303 = vpack.c.b16 %v5275, %v5273
        %v5304 = vpack.c.b16 %v5276, %v5274
        %v5305 = vpack.c.b16 %v5279, %v5277
        %v5306 = vpack.c.b16 %v5280, %v5278
        %v5307 = vpack.c.b16 %v5283, %v5281
        %v5308 = vpack.c.b16 %v5284, %v5282
        %v5309 = vpack.c.b16 %v5287, %v5285
        %v5310 = vpack.c.b16 %v5288, %v5286
        %v5311 = vpack.c.b16 %v5291, %v5289
        %v5312 = vpack.c.b16 %v5292, %v5290
        %v5313 = vpack.c.b16 %v5295, %v5293
        %v5314 = vpack.c.b16 %v5296, %v5294
        %v5315 = vpack.c.b16 %v5299, %v5297
        %v5316 = vpack.c.b16 %v5300, %v5298
        %5333 = vmatprep.subr.bf16.mxu0 %v5302
        %5334 = vmatpush1.bf16.msra.mxu0 %v5301
        %5335 = vmatprep.subr.bf16.mxu0 %v5304
        %5336 = vmatpush1.bf16.msra.mxu0 %v5303
        %5337 = vmatprep.subr.bf16.mxu0 %v5306
        %5338 = vmatpush1.bf16.msra.mxu0 %v5305
        %5339 = vmatprep.subr.bf16.mxu0 %v5308
        %5340 = vmatpush1.bf16.msra.mxu0 %v5307
        %5341 = vmatprep.subr.bf16.mxu0 %v5310
        %5342 = vmatpush1.bf16.msra.mxu0 %v5309
        %5343 = vmatprep.subr.bf16.mxu0 %v5312
        %5344 = vmatpush1.bf16.msra.mxu0 %v5311
        %5345 = vmatprep.subr.bf16.mxu0 %v5314
        %5346 = vmatpush1.bf16.msra.mxu0 %v5313
        %5347 = vmatprep.subr.bf16.mxu0 %v5316
        %5348 = vmatpush1.bf16.msra.mxu0 %v5315
        %5349 = vmatprep.subr.bf16.mxu0 0
        %5350 = vmatpush1.bf16.msra.mxu0 0
        %5351 = vmatprep.subr.bf16.mxu0 0
        %5352 = vmatpush1.bf16.msra.mxu0 0
        %5353 = vmatprep.subr.bf16.mxu0 0
        %5354 = vmatpush1.bf16.msra.mxu0 0
        %5355 = vmatprep.subr.bf16.mxu0 0
        %5356 = vmatpush1.bf16.msra.mxu0 0
        %5357 = vmatprep.subr.bf16.mxu0 0
        %5358 = vmatpush1.bf16.msra.mxu0 0
        %5359 = vmatprep.subr.bf16.mxu0 0
        %5360 = vmatpush1.bf16.msra.mxu0 0
        %5361 = vmatprep.subr.bf16.mxu0 0
        %5362 = vmatpush1.bf16.msra.mxu0 0
        %5363 = vmatprep.subr.bf16.mxu0 0
        %5364 = vmatpush1.bf16.msra.mxu0 0
        %5365 = vmatprep.mubr.bf16.mxu0 0
        %5366 = vmatmul.mubr.bf16.gmra.mrb[0].mxu0 %v4243
        %v5367 = vpop.f32.mrb[0].mxu0
        %v5368 = vadd.f32 %v5246, %v5367
        %v5369 = vpop.f32.mrb[0].mxu0
        %v5370 = vadd.f32 %v5250, %v5369
        %v5371 = vpop.f32.mrb[0].mxu0
        %v5372 = vpop.f32.mrb[0].mxu0
        %5373 = vdwg.mxu0
        %v5374 = vadd.f32 %v5236, %v5368
        %v5375 = vadd.f32 %v5238, %v5370
        %v5376 = vmul.f32 %v5374, 0.01
        %v5377 = vmul.f32 %v5375, 0.01
        %v5378 = vmax.f32 %v5374, %v5376
        %v5379 = vmax.f32 %v5375, %v5377
        %v5380 = vld [vmem:[%s45] sm:$0xf]
        %v5381 = vld [vmem:[%s45 + $0x4] sm:$0xf]
        %v5382 = vld [vmem:[%s45 + $0x8] sm:$0xf]
        %v5383 = vld [vmem:[%s45 + $0xc] sm:$0xf]
        %v5384 = vld [vmem:[%s45 + $0x10] sm:$0xf]
        %v5385 = vld [vmem:[%s45 + $0x14] sm:$0xf]
        %v5386 = vld [vmem:[%s45 + $0x18] sm:$0xf]
        %v5387 = vld [vmem:[%s45 + $0x1c] sm:$0xf]
        %v5388 = vld [vmem:[%s45 + $0x20] sm:$0xf]
        %v5389 = vld [vmem:[%s45 + $0x24] sm:$0xf]
        %v5390 = vld [vmem:[%s45 + $0x28] sm:$0xf]
        %v5391 = vld [vmem:[%s45 + $0x2c] sm:$0xf]
        %v5392 = vld [vmem:[%s45 + $0x30] sm:$0xf]
        %v5393 = vld [vmem:[%s45 + $0x34] sm:$0xf]
        %v5394 = vld [vmem:[%s45 + $0x38] sm:$0xf]
        %v5395 = vld [vmem:[%s45 + $0x3c] sm:$0xf]
        %v5396 = vld [vmem:[%s45 + $0x40] sm:$0xf]
        %v5397 = vld [vmem:[%s45 + $0x44] sm:$0xf]
        %v5398 = vld [vmem:[%s45 + $0x48] sm:$0xf]
        %v5399 = vld [vmem:[%s45 + $0x4c] sm:$0xf]
        %v5400 = vld [vmem:[%s45 + $0x50] sm:$0xf]
        %v5401 = vld [vmem:[%s45 + $0x54] sm:$0xf]
        %v5402 = vld [vmem:[%s45 + $0x58] sm:$0xf]
        %v5403 = vld [vmem:[%s45 + $0x5c] sm:$0xf]
        %v5404 = vld [vmem:[%s45 + $0x60] sm:$0xf]
        %v5405 = vld [vmem:[%s45 + $0x64] sm:$0xf]
        %v5406 = vld [vmem:[%s45 + $0x68] sm:$0xf]
        %v5407 = vld [vmem:[%s45 + $0x6c] sm:$0xf]
        %v5408 = vld [vmem:[%s45 + $0x70] sm:$0xf]
        %v5409 = vld [vmem:[%s45 + $0x74] sm:$0xf]
        %v5410 = vld [vmem:[%s45 + $0x78] sm:$0xf]
        %v5411 = vld [vmem:[%s45 + $0x7c] sm:$0xf]
        %v5412 = vld [vmem:[%s45 + $0x80] sm:$0xf]
        %v5413 = vld [vmem:[%s45 + $0x84] sm:$0xf]
        %v5414 = vld [vmem:[%s45 + $0x88] sm:$0xf]
        %v5415 = vld [vmem:[%s45 + $0x8c] sm:$0xf]
        %v5416 = vld [vmem:[%s45 + $0x90] sm:$0xf]
        %v5417 = vld [vmem:[%s45 + $0x94] sm:$0xf]
        %v5418 = vld [vmem:[%s45 + $0x98] sm:$0xf]
        %v5419 = vld [vmem:[%s45 + $0x9c] sm:$0xf]
        %v5420 = vld [vmem:[%s45 + $0xa0] sm:$0xf]
        %v5421 = vld [vmem:[%s45 + $0xa4] sm:$0xf]
        %v5422 = vld [vmem:[%s45 + $0xa8] sm:$0xf]
        %v5423 = vld [vmem:[%s45 + $0xac] sm:$0xf]
        %v5424 = vld [vmem:[%s45 + $0xb0] sm:$0xf]
        %v5425 = vld [vmem:[%s45 + $0xb4] sm:$0xf]
        %v5426 = vld [vmem:[%s45 + $0xb8] sm:$0xf]
        %v5427 = vld [vmem:[%s45 + $0xbc] sm:$0xf]
        %v5428 = vld [vmem:[%s45 + $0xc0] sm:$0xf]
        %v5429 = vld [vmem:[%s45 + $0xc4] sm:$0xf]
        %v5430 = vld [vmem:[%s45 + $0xc8] sm:$0xf]
        %v5431 = vld [vmem:[%s45 + $0xcc] sm:$0xf]
        %v5432 = vld [vmem:[%s45 + $0xd0] sm:$0xf]
        %v5433 = vld [vmem:[%s45 + $0xd4] sm:$0xf]
        %v5434 = vld [vmem:[%s45 + $0xd8] sm:$0xf]
        %v5435 = vld [vmem:[%s45 + $0xdc] sm:$0xf]
        %v5436 = vld [vmem:[%s45 + $0xe0] sm:$0xf]
        %v5437 = vld [vmem:[%s45 + $0xe4] sm:$0xf]
        %v5438 = vld [vmem:[%s45 + $0xe8] sm:$0xf]
        %v5439 = vld [vmem:[%s45 + $0xec] sm:$0xf]
        %v5440 = vld [vmem:[%s45 + $0xf0] sm:$0xf]
        %v5441 = vld [vmem:[%s45 + $0xf4] sm:$0xf]
        %v5442 = vld [vmem:[%s45 + $0xf8] sm:$0xf]
        %v5443 = vld [vmem:[%s45 + $0xfc] sm:$0xf]
        %v5444 = vld [vmem:[%s45 + $0x100] sm:$0xf]
        %v5445 = vld [vmem:[%s45 + $0x104] sm:$0xf]
        %v5446 = vld [vmem:[%s45 + $0x108] sm:$0xf]
        %v5447 = vld [vmem:[%s45 + $0x10c] sm:$0xf]
        %v5448 = vld [vmem:[%s45 + $0x110] sm:$0xf]
        %v5449 = vld [vmem:[%s45 + $0x114] sm:$0xf]
        %v5450 = vld [vmem:[%s45 + $0x118] sm:$0xf]
        %v5451 = vld [vmem:[%s45 + $0x11c] sm:$0xf]
        %v5452 = vld [vmem:[%s45 + $0x120] sm:$0xf]
        %v5453 = vld [vmem:[%s45 + $0x124] sm:$0xf]
        %v5454 = vld [vmem:[%s45 + $0x128] sm:$0xf]
        %v5455 = vld [vmem:[%s45 + $0x12c] sm:$0xf]
        %v5456 = vld [vmem:[%s45 + $0x130] sm:$0xf]
        %v5457 = vld [vmem:[%s45 + $0x134] sm:$0xf]
        %v5458 = vld [vmem:[%s45 + $0x138] sm:$0xf]
        %v5459 = vld [vmem:[%s45 + $0x13c] sm:$0xf]
        %v5460 = vld [vmem:[%s45 + $0x140] sm:$0xf]
        %v5461 = vld [vmem:[%s45 + $0x144] sm:$0xf]
        %v5462 = vld [vmem:[%s45 + $0x148] sm:$0xf]
        %v5463 = vld [vmem:[%s45 + $0x14c] sm:$0xf]
        %v5464 = vld [vmem:[%s45 + $0x150] sm:$0xf]
        %v5465 = vld [vmem:[%s45 + $0x154] sm:$0xf]
        %v5466 = vld [vmem:[%s45 + $0x158] sm:$0xf]
        %v5467 = vld [vmem:[%s45 + $0x15c] sm:$0xf]
        %v5468 = vld [vmem:[%s45 + $0x160] sm:$0xf]
        %v5469 = vld [vmem:[%s45 + $0x164] sm:$0xf]
        %v5470 = vld [vmem:[%s45 + $0x168] sm:$0xf]
        %v5471 = vld [vmem:[%s45 + $0x16c] sm:$0xf]
        %v5472 = vld [vmem:[%s45 + $0x170] sm:$0xf]
        %v5473 = vld [vmem:[%s45 + $0x174] sm:$0xf]
        %v5474 = vld [vmem:[%s45 + $0x178] sm:$0xf]
        %v5475 = vld [vmem:[%s45 + $0x17c] sm:$0xf]
        %v5476 = vld [vmem:[#allocation20] sm:$0x1]
        %v5477 = vld [vmem:[%s49] sm:$0xf]
        %v5478 = vld [vmem:[%s49 + $0x4] sm:$0xf]
        %v5479 = vld [vmem:[%s49 + $0x8] sm:$0xf]
        %v5480 = vld [vmem:[%s49 + $0xc] sm:$0xf]
        %v5481 = vld [vmem:[%s49 + $0x10] sm:$0xf]
        %v5482 = vld [vmem:[%s49 + $0x14] sm:$0xf]
        %v5483 = vld [vmem:[%s49 + $0x18] sm:$0xf]
        %v5484 = vld [vmem:[%s49 + $0x1c] sm:$0xf]
        %v5485 = vld [vmem:[%s49 + $0x20] sm:$0xf]
        %v5486 = vld [vmem:[%s49 + $0x24] sm:$0xf]
        %v5487 = vld [vmem:[%s49 + $0x28] sm:$0xf]
        %v5488 = vld [vmem:[%s49 + $0x2c] sm:$0xf]
        %v5489 = vld [vmem:[%s49 + $0x30] sm:$0xf]
        %v5490 = vld [vmem:[%s49 + $0x34] sm:$0xf]
        %v5491 = vld [vmem:[%s49 + $0x38] sm:$0xf]
        %v5492 = vld [vmem:[%s49 + $0x3c] sm:$0xf]
        %v5493 = vld [vmem:[%s49 + $0x40] sm:$0xf]
        %v5494 = vld [vmem:[%s49 + $0x44] sm:$0xf]
        %v5495 = vld [vmem:[%s49 + $0x48] sm:$0xf]
        %v5496 = vld [vmem:[%s49 + $0x4c] sm:$0xf]
        %v5497 = vld [vmem:[%s49 + $0x50] sm:$0xf]
        %v5498 = vld [vmem:[%s49 + $0x54] sm:$0xf]
        %v5499 = vld [vmem:[%s49 + $0x58] sm:$0xf]
        %v5500 = vld [vmem:[%s49 + $0x5c] sm:$0xf]
        %v5501 = vld [vmem:[%s49 + $0x60] sm:$0xf]
        %v5502 = vld [vmem:[%s49 + $0x64] sm:$0xf]
        %v5503 = vld [vmem:[%s49 + $0x68] sm:$0xf]
        %v5504 = vld [vmem:[%s49 + $0x6c] sm:$0xf]
        %v5505 = vld [vmem:[%s49 + $0x70] sm:$0xf]
        %v5506 = vld [vmem:[%s49 + $0x74] sm:$0xf]
        %v5507 = vld [vmem:[%s49 + $0x78] sm:$0xf]
        %v5508 = vld [vmem:[%s49 + $0x7c] sm:$0xf]
        %v5509 = vld [vmem:[%s49 + $0x80] sm:$0xf]
        %v5510 = vld [vmem:[%s49 + $0x84] sm:$0xf]
        %v5511 = vld [vmem:[%s49 + $0x88] sm:$0xf]
        %v5512 = vld [vmem:[%s49 + $0x8c] sm:$0xf]
        %v5513 = vld [vmem:[%s49 + $0x90] sm:$0xf]
        %v5514 = vld [vmem:[%s49 + $0x94] sm:$0xf]
        %v5515 = vld [vmem:[%s49 + $0x98] sm:$0xf]
        %v5516 = vld [vmem:[%s49 + $0x9c] sm:$0xf]
        %v5517 = vld [vmem:[%s49 + $0xa0] sm:$0xf]
        %v5518 = vld [vmem:[%s49 + $0xa4] sm:$0xf]
        %v5519 = vld [vmem:[%s49 + $0xa8] sm:$0xf]
        %v5520 = vld [vmem:[%s49 + $0xac] sm:$0xf]
        %v5521 = vld [vmem:[%s49 + $0xb0] sm:$0xf]
        %v5522 = vld [vmem:[%s49 + $0xb4] sm:$0xf]
        %v5523 = vld [vmem:[%s49 + $0xb8] sm:$0xf]
        %v5524 = vld [vmem:[%s49 + $0xbc] sm:$0xf]
        %v5525 = vld [vmem:[#allocation22] sm:$0x1]
        %v5526 = vld [vmem:[%s53] sm:$0xf]
        %v5527 = vld [vmem:[%s53 + $0x4] sm:$0xf]
        %v5528 = vld [vmem:[%s53 + $0x8] sm:$0xf]
        %v5529 = vld [vmem:[%s53 + $0xc] sm:$0xf]
        %v5530 = vld [vmem:[%s53 + $0x10] sm:$0xf]
        %v5531 = vld [vmem:[%s53 + $0x14] sm:$0xf]
        %v5532 = vld [vmem:[%s53 + $0x18] sm:$0xf]
        %v5533 = vld [vmem:[%s53 + $0x1c] sm:$0xf]
        %v5534 = vld [vmem:[%s53 + $0x20] sm:$0xf]
        %v5535 = vld [vmem:[%s53 + $0x24] sm:$0xf]
        %v5536 = vld [vmem:[%s53 + $0x28] sm:$0xf]
        %v5537 = vld [vmem:[%s53 + $0x2c] sm:$0xf]
        %v5538 = vld [vmem:[%s53 + $0x30] sm:$0xf]
        %v5539 = vld [vmem:[%s53 + $0x34] sm:$0xf]
        %v5540 = vld [vmem:[%s53 + $0x38] sm:$0xf]
        %v5541 = vld [vmem:[%s53 + $0x3c] sm:$0xf]
        %v5542 = vld [vmem:[%s53 + $0x40] sm:$0xf]
        %v5543 = vld [vmem:[%s53 + $0x44] sm:$0xf]
        %v5544 = vld [vmem:[%s53 + $0x48] sm:$0xf]
        %v5545 = vld [vmem:[%s53 + $0x4c] sm:$0xf]
        %v5546 = vld [vmem:[%s53 + $0x50] sm:$0xf]
        %v5547 = vld [vmem:[%s53 + $0x54] sm:$0xf]
        %v5548 = vld [vmem:[%s53 + $0x58] sm:$0xf]
        %v5549 = vld [vmem:[%s53 + $0x5c] sm:$0xf]
        %v5550 = vld [vmem:[%s53 + $0x60] sm:$0xf]
        %v5551 = vld [vmem:[%s53 + $0x64] sm:$0xf]
        %v5552 = vld [vmem:[%s53 + $0x68] sm:$0xf]
        %v5553 = vld [vmem:[%s53 + $0x6c] sm:$0xf]
        %v5554 = vld [vmem:[%s53 + $0x70] sm:$0xf]
        %v5555 = vld [vmem:[%s53 + $0x74] sm:$0xf]
        %v5556 = vld [vmem:[%s53 + $0x78] sm:$0xf]
        %v5557 = vld [vmem:[%s53 + $0x7c] sm:$0xf]
        %v5558 = vld [vmem:[#allocation23] sm:$0x1]
        %v5559 = vld [vmem:[%s57] sm:$0x3]
        %v5562 = vrot.slane %v5378, 7
        %v5563 = vrot.slane %v5379, 7
        %v5566 = vsel %vm2474, 0.0, %v5562
        %v5567 = vsel %vm2474, 0.0, %v5563
        %v5568 = vsel %vm2474, %v5562, 0.0
        %v5569 = vsel %vm2474, %v5563, 0.0
        %v5570 = vpack.c.bf16 %v5568, %v5566
        %v5571 = vpack.c.bf16 %v5569, %v5567
        %v5573 = vshrl.u32 %v5570, 16
        %v5575 = vshll.u32 %v5570, 16
        %v5577 = vrot.slane %v5575, 1
        %v5578 = vor.u32 %v5573, %v5577
        %v5580 = vshrl.u32 %v5571, 16
        %v5582 = vshll.u32 %v5571, 16
        %v5584 = vrot.slane %v5582, 1
        %v5585 = vor.u32 %v5580, %v5584
        %v5588 = vrot.slane %v5570, 1
        %v5589 = vrot.slane %v5571, 1
        %vm5590 = vcmask 64512
        %v5592 = vsel %vm5590, %v5559, 0
        %vm5594 = vcmask 1043456
        %v5595 = vsel %vm5594, %v5570, 0
        %v5597 = vsel %vm5594, %v5571, 0
        %v5600 = vsel %vm5594, %v5578, 0
        %v5603 = vsel %vm5594, %v5585, 0
        %v5606 = vsel %vm5594, %v5588, 0
        %v5609 = vsel %vm5594, %v5589, 0
        %5611 = vmatprep.subr.bf16.mxu0 %v5597
        %5612 = vmatpush1.bf16.msra.mxu0 %v5595
        %5613 = vmatprep.subr.bf16.mxu0 0
        %5614 = vmatpush1.bf16.msra.mxu0 0
        %5615 = vmatprep.subr.bf16.mxu0 0
        %5616 = vmatpush1.bf16.msra.mxu0 0
        %5617 = vmatprep.subr.bf16.mxu0 0
        %5618 = vmatpush1.bf16.msra.mxu0 0
        %5619 = vmatprep.subr.bf16.mxu0 0
        %5620 = vmatpush1.bf16.msra.mxu0 0
        %5621 = vmatprep.subr.bf16.mxu0 0
        %5622 = vmatpush1.bf16.msra.mxu0 0
        %5623 = vmatprep.subr.bf16.mxu0 0
        %5624 = vmatpush1.bf16.msra.mxu0 0
        %5625 = vmatprep.subr.bf16.mxu0 0
        %5626 = vmatpush1.bf16.msra.mxu0 0
        %5627 = vmatprep.subr.bf16.mxu0 0
        %5628 = vmatpush1.bf16.msra.mxu0 0
        %5629 = vmatprep.subr.bf16.mxu0 0
        %5630 = vmatpush1.bf16.msra.mxu0 0
        %5631 = vmatprep.subr.bf16.mxu0 0
        %5632 = vmatpush1.bf16.msra.mxu0 0
        %5633 = vmatprep.subr.bf16.mxu0 0
        %5634 = vmatpush1.bf16.msra.mxu0 0
        %5635 = vmatprep.subr.bf16.mxu0 0
        %5636 = vmatpush1.bf16.msra.mxu0 0
        %5637 = vmatprep.subr.bf16.mxu0 0
        %5638 = vmatpush1.bf16.msra.mxu0 0
        %5639 = vmatprep.subr.bf16.mxu0 0
        %5640 = vmatpush1.bf16.msra.mxu0 0
        %5641 = vmatprep.subr.bf16.mxu0 0
        %5642 = vmatpush1.bf16.msra.mxu0 0
        %5643 = vmatprep.mubr.bf16.mxu0 0
        %5644 = vmatmul.mubr.bf16.gmra.mrb[0].mxu0 %v5592
        %v5645 = vpop.f32.mrb[0].mxu0
        %v5646 = vadd.f32 0.0, %v5645
        %v5647 = vpop.f32.mrb[0].mxu0
        %v5648 = vadd.f32 0.0, %v5647
        %v5649 = vpop.f32.mrb[0].mxu0
        %v5650 = vpop.f32.mrb[0].mxu0
        %5651 = vdwg.mxu0
        %5652 = vmatprep.subr.bf16.mxu0 %v5603
        %5653 = vmatpush1.bf16.msra.mxu0 %v5600
        %5654 = vmatprep.subr.bf16.mxu0 0
        %5655 = vmatpush1.bf16.msra.mxu0 0
        %5656 = vmatprep.subr.bf16.mxu0 0
        %5657 = vmatpush1.bf16.msra.mxu0 0
        %5658 = vmatprep.subr.bf16.mxu0 0
        %5659 = vmatpush1.bf16.msra.mxu0 0
        %5660 = vmatprep.subr.bf16.mxu0 0
        %5661 = vmatpush1.bf16.msra.mxu0 0
        %5662 = vmatprep.subr.bf16.mxu0 0
        %5663 = vmatpush1.bf16.msra.mxu0 0
        %5664 = vmatprep.subr.bf16.mxu0 0
        %5665 = vmatpush1.bf16.msra.mxu0 0
        %5666 = vmatprep.subr.bf16.mxu0 0
        %5667 = vmatpush1.bf16.msra.mxu0 0
        %5668 = vmatprep.subr.bf16.mxu0 0
        %5669 = vmatpush1.bf16.msra.mxu0 0
        %5670 = vmatprep.subr.bf16.mxu0 0
        %5671 = vmatpush1.bf16.msra.mxu0 0
        %5672 = vmatprep.subr.bf16.mxu0 0
        %5673 = vmatpush1.bf16.msra.mxu0 0
        %5674 = vmatprep.subr.bf16.mxu0 0
        %5675 = vmatpush1.bf16.msra.mxu0 0
        %5676 = vmatprep.subr.bf16.mxu0 0
        %5677 = vmatpush1.bf16.msra.mxu0 0
        %5678 = vmatprep.subr.bf16.mxu0 0
        %5679 = vmatpush1.bf16.msra.mxu0 0
        %5680 = vmatprep.subr.bf16.mxu0 0
        %5681 = vmatpush1.bf16.msra.mxu0 0
        %5682 = vmatprep.subr.bf16.mxu0 0
        %5683 = vmatpush1.bf16.msra.mxu0 0
        %5684 = vmatprep.mubr.bf16.mxu0 0
        %5685 = vmatmul.mubr.bf16.gmra.mrb[0].mxu0 %v5592
        %v5686 = vpop.f32.mrb[0].mxu0
        %v5687 = vadd.f32 0.0, %v5686
        %v5688 = vpop.f32.mrb[0].mxu0
        %v5689 = vadd.f32 0.0, %v5688
        %v5690 = vpop.f32.mrb[0].mxu0
        %v5691 = vpop.f32.mrb[0].mxu0
        %5692 = vdwg.mxu0
        %5693 = vmatprep.subr.bf16.mxu0 %v5609
        %5694 = vmatpush1.bf16.msra.mxu0 %v5606
        %5695 = vmatprep.subr.bf16.mxu0 0
        %5696 = vmatpush1.bf16.msra.mxu0 0
        %5697 = vmatprep.subr.bf16.mxu0 0
        %5698 = vmatpush1.bf16.msra.mxu0 0
        %5699 = vmatprep.subr.bf16.mxu0 0
        %5700 = vmatpush1.bf16.msra.mxu0 0
        %5701 = vmatprep.subr.bf16.mxu0 0
        %5702 = vmatpush1.bf16.msra.mxu0 0
        %5703 = vmatprep.subr.bf16.mxu0 0
        %5704 = vmatpush1.bf16.msra.mxu0 0
        %5705 = vmatprep.subr.bf16.mxu0 0
        %5706 = vmatpush1.bf16.msra.mxu0 0
        %5707 = vmatprep.subr.bf16.mxu0 0
        %5708 = vmatpush1.bf16.msra.mxu0 0
        %5709 = vmatprep.subr.bf16.mxu0 0
        %5710 = vmatpush1.bf16.msra.mxu0 0
        %5711 = vmatprep.subr.bf16.mxu0 0
        %5712 = vmatpush1.bf16.msra.mxu0 0
        %5713 = vmatprep.subr.bf16.mxu0 0
        %5714 = vmatpush1.bf16.msra.mxu0 0
        %5715 = vmatprep.subr.bf16.mxu0 0
        %5716 = vmatpush1.bf16.msra.mxu0 0
        %5717 = vmatprep.subr.bf16.mxu0 0
        %5718 = vmatpush1.bf16.msra.mxu0 0
        %5719 = vmatprep.subr.bf16.mxu0 0
        %5720 = vmatpush1.bf16.msra.mxu0 0
        %5721 = vmatprep.subr.bf16.mxu0 0
        %5722 = vmatpush1.bf16.msra.mxu0 0
        %5723 = vmatprep.subr.bf16.mxu0 0
        %5724 = vmatpush1.bf16.msra.mxu0 0
        %5725 = vmatprep.mubr.bf16.mxu0 0
        %5726 = vmatmul.mubr.bf16.gmra.mrb[0].mxu0 %v5592
        %v5727 = vpop.f32.mrb[0].mxu0
        %v5728 = vadd.f32 0.0, %v5727
        %v5729 = vpop.f32.mrb[0].mxu0
        %v5730 = vadd.f32 0.0, %v5729
        %v5731 = vpop.f32.mrb[0].mxu0
        %v5732 = vpop.f32.mrb[0].mxu0
        %5733 = vdwg.mxu0
        %v5734 = vpack.c.bf16 %v5646, %v5646
        %v5735 = vpack.c.bf16 %v5648, %v5648
        %v5736 = vpack.c.bf16 %v5687, %v5687
        %v5737 = vpack.c.bf16 %v5689, %v5689
        %v5738 = vpack.c.bf16 %v5728, %v5728
        %v5739 = vpack.c.bf16 %v5730, %v5730
        %v5741 = vlaneseq
        %v5742 = vshrl.u32 %v5741, 7
        %v5743 = vsub.s32 0, %v5742
        %v5744 = vrot.slane %v5476, %v5743
        %v5842 = vunpack.c.l.b16 %v5380
        %v5843 = vunpack.c.l.b16 %v5381
        %v5844 = vunpack.c.l.b16 %v5382
        %v5845 = vunpack.c.l.b16 %v5383
        %v5846 = vunpack.c.l.b16 %v5384
        %v5847 = vunpack.c.l.b16 %v5385
        %v5848 = vunpack.c.l.b16 %v5386
        %v5849 = vunpack.c.l.b16 %v5387
        %v5850 = vunpack.c.l.b16 %v5388
        %v5851 = vunpack.c.l.b16 %v5389
        %v5852 = vunpack.c.l.b16 %v5390
        %v5853 = vunpack.c.l.b16 %v5391
        %v5854 = vunpack.c.l.b16 %v5392
        %v5855 = vunpack.c.l.b16 %v5393
        %v5856 = vunpack.c.l.b16 %v5394
        %v5857 = vunpack.c.l.b16 %v5395
        %v5858 = vunpack.c.l.b16 %v5396
        %v5859 = vunpack.c.l.b16 %v5397
        %v5860 = vunpack.c.l.b16 %v5398
        %v5861 = vunpack.c.l.b16 %v5399
        %v5862 = vunpack.c.l.b16 %v5400
        %v5863 = vunpack.c.l.b16 %v5401
        %v5864 = vunpack.c.l.b16 %v5402
        %v5865 = vunpack.c.l.b16 %v5403
        %v5866 = vunpack.c.l.b16 %v5404
        %v5867 = vunpack.c.l.b16 %v5405
        %v5868 = vunpack.c.l.b16 %v5406
        %v5869 = vunpack.c.l.b16 %v5407
        %v5870 = vunpack.c.l.b16 %v5408
        %v5871 = vunpack.c.l.b16 %v5409
        %v5872 = vunpack.c.l.b16 %v5410
        %v5873 = vunpack.c.l.b16 %v5411
        %v5874 = vunpack.c.l.b16 %v5412
        %v5875 = vunpack.c.l.b16 %v5413
        %v5876 = vunpack.c.l.b16 %v5414
        %v5877 = vunpack.c.l.b16 %v5415
        %v5878 = vunpack.c.l.b16 %v5416
        %v5879 = vunpack.c.l.b16 %v5417
        %v5880 = vunpack.c.l.b16 %v5418
        %v5881 = vunpack.c.l.b16 %v5419
        %v5882 = vunpack.c.l.b16 %v5420
        %v5883 = vunpack.c.l.b16 %v5421
        %v5884 = vunpack.c.l.b16 %v5422
        %v5885 = vunpack.c.l.b16 %v5423
        %v5886 = vunpack.c.l.b16 %v5424
        %v5887 = vunpack.c.l.b16 %v5425
        %v5888 = vunpack.c.l.b16 %v5426
        %v5889 = vunpack.c.l.b16 %v5427
        %v5890 = vunpack.c.l.b16 %v5428
        %v5891 = vunpack.c.l.b16 %v5429
        %v5892 = vunpack.c.l.b16 %v5430
        %v5893 = vunpack.c.l.b16 %v5431
        %v5894 = vunpack.c.l.b16 %v5432
        %v5895 = vunpack.c.l.b16 %v5433
        %v5896 = vunpack.c.l.b16 %v5434
        %v5897 = vunpack.c.l.b16 %v5435
        %v5898 = vunpack.c.l.b16 %v5436
        %v5899 = vunpack.c.l.b16 %v5437
        %v5900 = vunpack.c.l.b16 %v5438
        %v5901 = vunpack.c.l.b16 %v5439
        %v5902 = vunpack.c.l.b16 %v5440
        %v5903 = vunpack.c.l.b16 %v5441
        %v5904 = vunpack.c.l.b16 %v5442
        %v5905 = vunpack.c.l.b16 %v5443
        %v5906 = vunpack.c.l.b16 %v5444
        %v5907 = vunpack.c.l.b16 %v5445
        %v5908 = vunpack.c.l.b16 %v5446
        %v5909 = vunpack.c.l.b16 %v5447
        %v5910 = vunpack.c.l.b16 %v5448
        %v5911 = vunpack.c.l.b16 %v5449
        %v5912 = vunpack.c.l.b16 %v5450
        %v5913 = vunpack.c.l.b16 %v5451
        %v5914 = vunpack.c.l.b16 %v5452
        %v5915 = vunpack.c.l.b16 %v5453
        %v5916 = vunpack.c.l.b16 %v5454
        %v5917 = vunpack.c.l.b16 %v5455
        %v5918 = vunpack.c.l.b16 %v5456
        %v5919 = vunpack.c.l.b16 %v5457
        %v5920 = vunpack.c.l.b16 %v5458
        %v5921 = vunpack.c.l.b16 %v5459
        %v5922 = vunpack.c.l.b16 %v5460
        %v5923 = vunpack.c.l.b16 %v5461
        %v5924 = vunpack.c.l.b16 %v5462
        %v5925 = vunpack.c.l.b16 %v5463
        %v5926 = vunpack.c.l.b16 %v5464
        %v5927 = vunpack.c.l.b16 %v5465
        %v5928 = vunpack.c.l.b16 %v5466
        %v5929 = vunpack.c.l.b16 %v5467
        %v5930 = vunpack.c.l.b16 %v5468
        %v5931 = vunpack.c.l.b16 %v5469
        %v5932 = vunpack.c.l.b16 %v5470
        %v5933 = vunpack.c.l.b16 %v5471
        %v5934 = vunpack.c.l.b16 %v5472
        %v5935 = vunpack.c.l.b16 %v5473
        %v5936 = vunpack.c.l.b16 %v5474
        %v5937 = vunpack.c.l.b16 %v5475
        %v5938 = vpack.c.b16 %v5843, %v5842
        %v5939 = vpack.c.b16 %v5845, %v5844
        %v5940 = vpack.c.b16 %v5847, %v5846
        %v5941 = vpack.c.b16 %v5849, %v5848
        %v5942 = vpack.c.b16 %v5851, %v5850
        %v5943 = vpack.c.b16 %v5853, %v5852
        %v5944 = vpack.c.b16 %v5855, %v5854
        %v5945 = vpack.c.b16 %v5857, %v5856
        %v5946 = vpack.c.b16 %v5859, %v5858
        %v5947 = vpack.c.b16 %v5861, %v5860
        %v5948 = vpack.c.b16 %v5863, %v5862
        %v5949 = vpack.c.b16 %v5865, %v5864
        %v5950 = vpack.c.b16 %v5867, %v5866
        %v5951 = vpack.c.b16 %v5869, %v5868
        %v5952 = vpack.c.b16 %v5871, %v5870
        %v5953 = vpack.c.b16 %v5873, %v5872
        %v5954 = vpack.c.b16 %v5875, %v5874
        %v5955 = vpack.c.b16 %v5877, %v5876
        %v5956 = vpack.c.b16 %v5879, %v5878
        %v5957 = vpack.c.b16 %v5881, %v5880
        %v5958 = vpack.c.b16 %v5883, %v5882
        %v5959 = vpack.c.b16 %v5885, %v5884
        %v5960 = vpack.c.b16 %v5887, %v5886
        %v5961 = vpack.c.b16 %v5889, %v5888
        %v5962 = vpack.c.b16 %v5891, %v5890
        %v5963 = vpack.c.b16 %v5893, %v5892
        %v5964 = vpack.c.b16 %v5895, %v5894
        %v5965 = vpack.c.b16 %v5897, %v5896
        %v5966 = vpack.c.b16 %v5899, %v5898
        %v5967 = vpack.c.b16 %v5901, %v5900
        %v5968 = vpack.c.b16 %v5903, %v5902
        %v5969 = vpack.c.b16 %v5905, %v5904
        %v5970 = vpack.c.b16 %v5907, %v5906
        %v5971 = vpack.c.b16 %v5909, %v5908
        %v5972 = vpack.c.b16 %v5911, %v5910
        %v5973 = vpack.c.b16 %v5913, %v5912
        %v5974 = vpack.c.b16 %v5915, %v5914
        %v5975 = vpack.c.b16 %v5917, %v5916
        %v5976 = vpack.c.b16 %v5919, %v5918
        %v5977 = vpack.c.b16 %v5921, %v5920
        %v5978 = vpack.c.b16 %v5923, %v5922
        %v5979 = vpack.c.b16 %v5925, %v5924
        %v5980 = vpack.c.b16 %v5927, %v5926
        %v5981 = vpack.c.b16 %v5929, %v5928
        %v5982 = vpack.c.b16 %v5931, %v5930
        %v5983 = vpack.c.b16 %v5933, %v5932
        %v5984 = vpack.c.b16 %v5935, %v5934
        %v5985 = vpack.c.b16 %v5937, %v5936
        %6034 = vmatprep.subr.bf16.mxu0 0
        %6035 = vmatpush1.bf16.msra.mxu0 %v5938
        %6036 = vmatprep.subr.bf16.mxu0 0
        %6037 = vmatpush1.bf16.msra.mxu0 %v5939
        %6038 = vmatprep.subr.bf16.mxu0 0
        %6039 = vmatpush1.bf16.msra.mxu0 %v5940
        %6040 = vmatprep.subr.bf16.mxu0 0
        %6041 = vmatpush1.bf16.msra.mxu0 %v5941
        %6042 = vmatprep.subr.bf16.mxu0 0
        %6043 = vmatpush1.bf16.msra.mxu0 %v5942
        %6044 = vmatprep.subr.bf16.mxu0 0
        %6045 = vmatpush1.bf16.msra.mxu0 %v5943
        %6046 = vmatprep.subr.bf16.mxu0 0
        %6047 = vmatpush1.bf16.msra.mxu0 %v5944
        %6048 = vmatprep.subr.bf16.mxu0 0
        %6049 = vmatpush1.bf16.msra.mxu0 %v5945
        %6050 = vmatprep.subr.bf16.mxu0 0
        %6051 = vmatpush1.bf16.msra.mxu0 %v5946
        %6052 = vmatprep.subr.bf16.mxu0 0
        %6053 = vmatpush1.bf16.msra.mxu0 %v5947
        %6054 = vmatprep.subr.bf16.mxu0 0
        %6055 = vmatpush1.bf16.msra.mxu0 %v5948
        %6056 = vmatprep.subr.bf16.mxu0 0
        %6057 = vmatpush1.bf16.msra.mxu0 %v5949
        %6058 = vmatprep.subr.bf16.mxu0 0
        %6059 = vmatpush1.bf16.msra.mxu0 %v5950
        %6060 = vmatprep.subr.bf16.mxu0 0
        %6061 = vmatpush1.bf16.msra.mxu0 %v5951
        %6062 = vmatprep.subr.bf16.mxu0 0
        %6063 = vmatpush1.bf16.msra.mxu0 %v5952
        %6064 = vmatprep.subr.bf16.mxu0 0
        %6065 = vmatpush1.bf16.msra.mxu0 %v5953
        %6066 = vmatprep.mubr.bf16.mxu0 %v5735
        %6067 = vmatmul.mubr.bf16.gmra.mrb[0].mxu0 %v5734
        %v6068 = vpop.f32.mrb[0].mxu0
        %v6069 = vadd.f32 %v5744, %v6068
        %v6070 = vpop.f32.mrb[0].mxu0
        %v6071 = vpop.f32.mrb[0].mxu0
        %v6072 = vpop.f32.mrb[0].mxu0
        %6073 = vdwg.mxu0
        %6074 = vmatprep.subr.bf16.mxu0 0
        %6075 = vmatpush1.bf16.msra.mxu0 %v5954
        %6076 = vmatprep.subr.bf16.mxu0 0
        %6077 = vmatpush1.bf16.msra.mxu0 %v5955
        %6078 = vmatprep.subr.bf16.mxu0 0
        %6079 = vmatpush1.bf16.msra.mxu0 %v5956
        %6080 = vmatprep.subr.bf16.mxu0 0
        %6081 = vmatpush1.bf16.msra.mxu0 %v5957
        %6082 = vmatprep.subr.bf16.mxu0 0
        %6083 = vmatpush1.bf16.msra.mxu0 %v5958
        %6084 = vmatprep.subr.bf16.mxu0 0
        %6085 = vmatpush1.bf16.msra.mxu0 %v5959
        %6086 = vmatprep.subr.bf16.mxu0 0
        %6087 = vmatpush1.bf16.msra.mxu0 %v5960
        %6088 = vmatprep.subr.bf16.mxu0 0
        %6089 = vmatpush1.bf16.msra.mxu0 %v5961
        %6090 = vmatprep.subr.bf16.mxu0 0
        %6091 = vmatpush1.bf16.msra.mxu0 %v5962
        %6092 = vmatprep.subr.bf16.mxu0 0
        %6093 = vmatpush1.bf16.msra.mxu0 %v5963
        %6094 = vmatprep.subr.bf16.mxu0 0
        %6095 = vmatpush1.bf16.msra.mxu0 %v5964
        %6096 = vmatprep.subr.bf16.mxu0 0
        %6097 = vmatpush1.bf16.msra.mxu0 %v5965
        %6098 = vmatprep.subr.bf16.mxu0 0
        %6099 = vmatpush1.bf16.msra.mxu0 %v5966
        %6100 = vmatprep.subr.bf16.mxu0 0
        %6101 = vmatpush1.bf16.msra.mxu0 %v5967
        %6102 = vmatprep.subr.bf16.mxu0 0
        %6103 = vmatpush1.bf16.msra.mxu0 %v5968
        %6104 = vmatprep.subr.bf16.mxu0 0
        %6105 = vmatpush1.bf16.msra.mxu0 %v5969
        %6106 = vmatprep.mubr.bf16.mxu0 %v5737
        %6107 = vmatmul.mubr.bf16.gmra.mrb[0].mxu0 %v5736
        %v6108 = vpop.f32.mrb[0].mxu0
        %v6109 = vadd.f32 %v6069, %v6108
        %v6110 = vpop.f32.mrb[0].mxu0
        %v6111 = vpop.f32.mrb[0].mxu0
        %v6112 = vpop.f32.mrb[0].mxu0
        %6113 = vdwg.mxu0
        %6114 = vmatprep.subr.bf16.mxu0 0
        %6115 = vmatpush1.bf16.msra.mxu0 %v5970
        %6116 = vmatprep.subr.bf16.mxu0 0
        %6117 = vmatpush1.bf16.msra.mxu0 %v5971
        %6118 = vmatprep.subr.bf16.mxu0 0
        %6119 = vmatpush1.bf16.msra.mxu0 %v5972
        %6120 = vmatprep.subr.bf16.mxu0 0
        %6121 = vmatpush1.bf16.msra.mxu0 %v5973
        %6122 = vmatprep.subr.bf16.mxu0 0
        %6123 = vmatpush1.bf16.msra.mxu0 %v5974
        %6124 = vmatprep.subr.bf16.mxu0 0
        %6125 = vmatpush1.bf16.msra.mxu0 %v5975
        %6126 = vmatprep.subr.bf16.mxu0 0
        %6127 = vmatpush1.bf16.msra.mxu0 %v5976
        %6128 = vmatprep.subr.bf16.mxu0 0
        %6129 = vmatpush1.bf16.msra.mxu0 %v5977
        %6130 = vmatprep.subr.bf16.mxu0 0
        %6131 = vmatpush1.bf16.msra.mxu0 %v5978
        %6132 = vmatprep.subr.bf16.mxu0 0
        %6133 = vmatpush1.bf16.msra.mxu0 %v5979
        %6134 = vmatprep.subr.bf16.mxu0 0
        %6135 = vmatpush1.bf16.msra.mxu0 %v5980
        %6136 = vmatprep.subr.bf16.mxu0 0
        %6137 = vmatpush1.bf16.msra.mxu0 %v5981
        %6138 = vmatprep.subr.bf16.mxu0 0
        %6139 = vmatpush1.bf16.msra.mxu0 %v5982
        %6140 = vmatprep.subr.bf16.mxu0 0
        %6141 = vmatpush1.bf16.msra.mxu0 %v5983
        %6142 = vmatprep.subr.bf16.mxu0 0
        %6143 = vmatpush1.bf16.msra.mxu0 %v5984
        %6144 = vmatprep.subr.bf16.mxu0 0
        %6145 = vmatpush1.bf16.msra.mxu0 %v5985
        %6146 = vmatprep.mubr.bf16.mxu0 %v5739
        %6147 = vmatmul.mubr.bf16.gmra.mrb[0].mxu0 %v5738
        %v6148 = vpop.f32.mrb[0].mxu0
        %v6149 = vadd.f32 %v6109, %v6148
        %v6150 = vpop.f32.mrb[0].mxu0
        %v6151 = vpop.f32.mrb[0].mxu0
        %v6152 = vpop.f32.mrb[0].mxu0
        %6153 = vdwg.mxu0
        %v6154 = vmul.f32 %v6149, 0.01
        %v6155 = vmax.f32 %v6149, %v6154
        %v6156 = vpack.c.bf16 %v6155, %v6155
        %v6158 = vshrl.u32 %v6156, 16
        %v6160 = vrot.slane %v6158, 7
        %v6161 = vshll.u32 %v6156, 16
        %v6163 = vor.u32 %v6160, %v6161
        %v6165 = vsel %vm2802, 0, %v6163
        %vm6166 = vcmask 1042432
        %vm6167 = vsmask.f32 2304
        %vm6168 = vmand %vm6166, %vm6167
        %v6169 = vsel %vm6168, %v6165, 0
        %v6171 = vshrl.u32 %v6169, 16
        %v6173 = vshll.u32 %v6169, 16
        %v6175 = vrot.slane %v6173, 1
        %v6176 = vor.u32 %v6171, %v6175
        %v6179 = vrot.slane %v6169, 1
        %v6182 = vlaneseq
        %v6183 = vshrl.u32 %v6182, 7
        %v6184 = vsub.s32 0, %v6183
        %v6185 = vrot.slane %v5525, %v6184
        %v6235 = vunpack.c.l.b16 %v5477
        %v6236 = vunpack.c.l.b16 %v5478
        %v6237 = vunpack.c.l.b16 %v5479
        %v6238 = vunpack.c.l.b16 %v5480
        %v6239 = vunpack.c.l.b16 %v5481
        %v6240 = vunpack.c.l.b16 %v5482
        %v6241 = vunpack.c.l.b16 %v5483
        %v6242 = vunpack.c.l.b16 %v5484
        %v6243 = vunpack.c.l.b16 %v5485
        %v6244 = vunpack.c.l.b16 %v5486
        %v6245 = vunpack.c.l.b16 %v5487
        %v6246 = vunpack.c.l.b16 %v5488
        %v6247 = vunpack.c.l.b16 %v5489
        %v6248 = vunpack.c.l.b16 %v5490
        %v6249 = vunpack.c.l.b16 %v5491
        %v6250 = vunpack.c.l.b16 %v5492
        %v6251 = vunpack.c.l.b16 %v5493
        %v6252 = vunpack.c.l.b16 %v5494
        %v6253 = vunpack.c.l.b16 %v5495
        %v6254 = vunpack.c.l.b16 %v5496
        %v6255 = vunpack.c.l.b16 %v5497
        %v6256 = vunpack.c.l.b16 %v5498
        %v6257 = vunpack.c.l.b16 %v5499
        %v6258 = vunpack.c.l.b16 %v5500
        %v6259 = vunpack.c.l.b16 %v5501
        %v6260 = vunpack.c.l.b16 %v5502
        %v6261 = vunpack.c.l.b16 %v5503
        %v6262 = vunpack.c.l.b16 %v5504
        %v6263 = vunpack.c.l.b16 %v5505
        %v6264 = vunpack.c.l.b16 %v5506
        %v6265 = vunpack.c.l.b16 %v5507
        %v6266 = vunpack.c.l.b16 %v5508
        %v6267 = vunpack.c.l.b16 %v5509
        %v6268 = vunpack.c.l.b16 %v5510
        %v6269 = vunpack.c.l.b16 %v5511
        %v6270 = vunpack.c.l.b16 %v5512
        %v6271 = vunpack.c.l.b16 %v5513
        %v6272 = vunpack.c.l.b16 %v5514
        %v6273 = vunpack.c.l.b16 %v5515
        %v6274 = vunpack.c.l.b16 %v5516
        %v6275 = vunpack.c.l.b16 %v5517
        %v6276 = vunpack.c.l.b16 %v5518
        %v6277 = vunpack.c.l.b16 %v5519
        %v6278 = vunpack.c.l.b16 %v5520
        %v6279 = vunpack.c.l.b16 %v5521
        %v6280 = vunpack.c.l.b16 %v5522
        %v6281 = vunpack.c.l.b16 %v5523
        %v6282 = vunpack.c.l.b16 %v5524
        %v6283 = vpack.c.b16 %v6236, %v6235
        %v6284 = vpack.c.b16 %v6238, %v6237
        %v6285 = vpack.c.b16 %v6240, %v6239
        %v6286 = vpack.c.b16 %v6242, %v6241
        %v6287 = vpack.c.b16 %v6244, %v6243
        %v6288 = vpack.c.b16 %v6246, %v6245
        %v6289 = vpack.c.b16 %v6248, %v6247
        %v6290 = vpack.c.b16 %v6250, %v6249
        %v6291 = vpack.c.b16 %v6252, %v6251
        %v6292 = vpack.c.b16 %v6254, %v6253
        %v6293 = vpack.c.b16 %v6256, %v6255
        %v6294 = vpack.c.b16 %v6258, %v6257
        %v6295 = vpack.c.b16 %v6260, %v6259
        %v6296 = vpack.c.b16 %v6262, %v6261
        %v6297 = vpack.c.b16 %v6264, %v6263
        %v6298 = vpack.c.b16 %v6266, %v6265
        %v6299 = vpack.c.b16 %v6268, %v6267
        %v6300 = vpack.c.b16 %v6270, %v6269
        %v6301 = vpack.c.b16 %v6272, %v6271
        %v6302 = vpack.c.b16 %v6274, %v6273
        %v6303 = vpack.c.b16 %v6276, %v6275
        %v6304 = vpack.c.b16 %v6278, %v6277
        %v6305 = vpack.c.b16 %v6280, %v6279
        %v6306 = vpack.c.b16 %v6282, %v6281
        %6331 = vmatprep.subr.bf16.mxu0 0
        %6332 = vmatpush1.bf16.msra.mxu0 %v6283
        %6333 = vmatprep.subr.bf16.mxu0 0
        %6334 = vmatpush1.bf16.msra.mxu0 %v6284
        %6335 = vmatprep.subr.bf16.mxu0 0
        %6336 = vmatpush1.bf16.msra.mxu0 %v6285
        %6337 = vmatprep.subr.bf16.mxu0 0
        %6338 = vmatpush1.bf16.msra.mxu0 %v6286
        %6339 = vmatprep.subr.bf16.mxu0 0
        %6340 = vmatpush1.bf16.msra.mxu0 %v6287
        %6341 = vmatprep.subr.bf16.mxu0 0
        %6342 = vmatpush1.bf16.msra.mxu0 %v6288
        %6343 = vmatprep.subr.bf16.mxu0 0
        %6344 = vmatpush1.bf16.msra.mxu0 %v6289
        %6345 = vmatprep.subr.bf16.mxu0 0
        %6346 = vmatpush1.bf16.msra.mxu0 %v6290
        %6347 = vmatprep.subr.bf16.mxu0 0
        %6348 = vmatpush1.bf16.msra.mxu0 %v6291
        %6349 = vmatprep.subr.bf16.mxu0 0
        %6350 = vmatpush1.bf16.msra.mxu0 %v6292
        %6351 = vmatprep.subr.bf16.mxu0 0
        %6352 = vmatpush1.bf16.msra.mxu0 %v6293
        %6353 = vmatprep.subr.bf16.mxu0 0
        %6354 = vmatpush1.bf16.msra.mxu0 %v6294
        %6355 = vmatprep.subr.bf16.mxu0 0
        %6356 = vmatpush1.bf16.msra.mxu0 %v6295
        %6357 = vmatprep.subr.bf16.mxu0 0
        %6358 = vmatpush1.bf16.msra.mxu0 %v6296
        %6359 = vmatprep.subr.bf16.mxu0 0
        %6360 = vmatpush1.bf16.msra.mxu0 %v6297
        %6361 = vmatprep.subr.bf16.mxu0 0
        %6362 = vmatpush1.bf16.msra.mxu0 %v6298
        %6363 = vmatprep.mubr.bf16.mxu0 %v6176
        %6364 = vmatmul.mubr.bf16.gmra.mrb[0].mxu0 %v6169
        %v6365 = vpop.f32.mrb[0].mxu0
        %v6366 = vadd.f32 %v6185, %v6365
        %v6367 = vpop.f32.mrb[0].mxu0
        %v6368 = vpop.f32.mrb[0].mxu0
        %v6369 = vpop.f32.mrb[0].mxu0
        %6370 = vdwg.mxu0
        %6371 = vmatprep.subr.bf16.mxu0 0
        %6372 = vmatpush1.bf16.msra.mxu0 %v6299
        %6373 = vmatprep.subr.bf16.mxu0 0
        %6374 = vmatpush1.bf16.msra.mxu0 %v6300
        %6375 = vmatprep.subr.bf16.mxu0 0
        %6376 = vmatpush1.bf16.msra.mxu0 %v6301
        %6377 = vmatprep.subr.bf16.mxu0 0
        %6378 = vmatpush1.bf16.msra.mxu0 %v6302
        %6379 = vmatprep.subr.bf16.mxu0 0
        %6380 = vmatpush1.bf16.msra.mxu0 %v6303
        %6381 = vmatprep.subr.bf16.mxu0 0
        %6382 = vmatpush1.bf16.msra.mxu0 %v6304
        %6383 = vmatprep.subr.bf16.mxu0 0
        %6384 = vmatpush1.bf16.msra.mxu0 %v6305
        %6385 = vmatprep.subr.bf16.mxu0 0
        %6386 = vmatpush1.bf16.msra.mxu0 %v6306
        %6387 = vmatprep.subr.bf16.mxu0 0
        %6388 = vmatpush1.bf16.msra.mxu0 0
        %6389 = vmatprep.subr.bf16.mxu0 0
        %6390 = vmatpush1.bf16.msra.mxu0 0
        %6391 = vmatprep.subr.bf16.mxu0 0
        %6392 = vmatpush1.bf16.msra.mxu0 0
        %6393 = vmatprep.subr.bf16.mxu0 0
        %6394 = vmatpush1.bf16.msra.mxu0 0
        %6395 = vmatprep.subr.bf16.mxu0 0
        %6396 = vmatpush1.bf16.msra.mxu0 0
        %6397 = vmatprep.subr.bf16.mxu0 0
        %6398 = vmatpush1.bf16.msra.mxu0 0
        %6399 = vmatprep.subr.bf16.mxu0 0
        %6400 = vmatpush1.bf16.msra.mxu0 0
        %6401 = vmatprep.subr.bf16.mxu0 0
        %6402 = vmatpush1.bf16.msra.mxu0 0
        %6403 = vmatprep.mubr.bf16.mxu0 0
        %6404 = vmatmul.mubr.bf16.gmra.mrb[0].mxu0 %v6179
        %v6405 = vpop.f32.mrb[0].mxu0
        %v6406 = vadd.f32 %v6366, %v6405
        %v6407 = vpop.f32.mrb[0].mxu0
        %v6408 = vpop.f32.mrb[0].mxu0
        %v6409 = vpop.f32.mrb[0].mxu0
        %6410 = vdwg.mxu0
        %v6412 = vlaneseq
        %v6413 = vshrl.u32 %v6412, 7
        %v6414 = vsub.s32 0, %v6413
        %v6415 = vrot.slane %v5558, %v6414
        %v6449 = vunpack.c.l.b16 %v5526
        %v6450 = vunpack.c.l.b16 %v5527
        %v6451 = vunpack.c.l.b16 %v5528
        %v6452 = vunpack.c.l.b16 %v5529
        %v6453 = vunpack.c.l.b16 %v5530
        %v6454 = vunpack.c.l.b16 %v5531
        %v6455 = vunpack.c.l.b16 %v5532
        %v6456 = vunpack.c.l.b16 %v5533
        %v6457 = vunpack.c.l.b16 %v5534
        %v6458 = vunpack.c.l.b16 %v5535
        %v6459 = vunpack.c.l.b16 %v5536
        %v6460 = vunpack.c.l.b16 %v5537
        %v6461 = vunpack.c.l.b16 %v5538
        %v6462 = vunpack.c.l.b16 %v5539
        %v6463 = vunpack.c.l.b16 %v5540
        %v6464 = vunpack.c.l.b16 %v5541
        %v6465 = vunpack.c.l.b16 %v5542
        %v6466 = vunpack.c.l.b16 %v5543
        %v6467 = vunpack.c.l.b16 %v5544
        %v6468 = vunpack.c.l.b16 %v5545
        %v6469 = vunpack.c.l.b16 %v5546
        %v6470 = vunpack.c.l.b16 %v5547
        %v6471 = vunpack.c.l.b16 %v5548
        %v6472 = vunpack.c.l.b16 %v5549
        %v6473 = vunpack.c.l.b16 %v5550
        %v6474 = vunpack.c.l.b16 %v5551
        %v6475 = vunpack.c.l.b16 %v5552
        %v6476 = vunpack.c.l.b16 %v5553
        %v6477 = vunpack.c.l.b16 %v5554
        %v6478 = vunpack.c.l.b16 %v5555
        %v6479 = vunpack.c.l.b16 %v5556
        %v6480 = vunpack.c.l.b16 %v5557
        %v6481 = vpack.c.b16 %v6450, %v6449
        %v6482 = vpack.c.b16 %v6452, %v6451
        %v6483 = vpack.c.b16 %v6454, %v6453
        %v6484 = vpack.c.b16 %v6456, %v6455
        %v6485 = vpack.c.b16 %v6458, %v6457
        %v6486 = vpack.c.b16 %v6460, %v6459
        %v6487 = vpack.c.b16 %v6462, %v6461
        %v6488 = vpack.c.b16 %v6464, %v6463
        %v6489 = vpack.c.b16 %v6466, %v6465
        %v6490 = vpack.c.b16 %v6468, %v6467
        %v6491 = vpack.c.b16 %v6470, %v6469
        %v6492 = vpack.c.b16 %v6472, %v6471
        %v6493 = vpack.c.b16 %v6474, %v6473
        %v6494 = vpack.c.b16 %v6476, %v6475
        %v6495 = vpack.c.b16 %v6478, %v6477
        %v6496 = vpack.c.b16 %v6480, %v6479
        %6513 = vmatprep.subr.bf16.mxu0 0
        %6514 = vmatpush1.bf16.msra.mxu0 %v6481
        %6515 = vmatprep.subr.bf16.mxu0 0
        %6516 = vmatpush1.bf16.msra.mxu0 %v6482
        %6517 = vmatprep.subr.bf16.mxu0 0
        %6518 = vmatpush1.bf16.msra.mxu0 %v6483
        %6519 = vmatprep.subr.bf16.mxu0 0
        %6520 = vmatpush1.bf16.msra.mxu0 %v6484
        %6521 = vmatprep.subr.bf16.mxu0 0
        %6522 = vmatpush1.bf16.msra.mxu0 %v6485
        %6523 = vmatprep.subr.bf16.mxu0 0
        %6524 = vmatpush1.bf16.msra.mxu0 %v6486
        %6525 = vmatprep.subr.bf16.mxu0 0
        %6526 = vmatpush1.bf16.msra.mxu0 %v6487
        %6527 = vmatprep.subr.bf16.mxu0 0
        %6528 = vmatpush1.bf16.msra.mxu0 %v6488
        %6529 = vmatprep.subr.bf16.mxu0 0
        %6530 = vmatpush1.bf16.msra.mxu0 %v6489
        %6531 = vmatprep.subr.bf16.mxu0 0
        %6532 = vmatpush1.bf16.msra.mxu0 %v6490
        %6533 = vmatprep.subr.bf16.mxu0 0
        %6534 = vmatpush1.bf16.msra.mxu0 %v6491
        %6535 = vmatprep.subr.bf16.mxu0 0
        %6536 = vmatpush1.bf16.msra.mxu0 %v6492
        %6537 = vmatprep.subr.bf16.mxu0 0
        %6538 = vmatpush1.bf16.msra.mxu0 %v6493
        %6539 = vmatprep.subr.bf16.mxu0 0
        %6540 = vmatpush1.bf16.msra.mxu0 %v6494
        %6541 = vmatprep.subr.bf16.mxu0 0
        %6542 = vmatpush1.bf16.msra.mxu0 %v6495
        %6543 = vmatprep.subr.bf16.mxu0 0
        %6544 = vmatpush1.bf16.msra.mxu0 %v6496
        %6545 = vmatprep.mubr.bf16.mxu0 %v5737
        %6546 = vmatmul.mubr.bf16.gmra.mrb[0].mxu0 %v5736
        %v6547 = vpop.f32.mrb[0].mxu0
        %v6548 = vadd.f32 %v6415, %v6547
        %v6549 = vpop.f32.mrb[0].mxu0
        %v6550 = vpop.f32.mrb[0].mxu0
        %v6551 = vpop.f32.mrb[0].mxu0
        %6552 = vdwg.mxu0
        %v6553 = vadd.f32 %v6406, %v6548
        %v6554 = vmul.f32 %v6553, 0.01
        %v6555 = vmax.f32 %v6553, %v6554
        %v6556 = vld [vmem:[#allocation25] sm:$0xff]
        %v6557 = vld [vmem:[#allocation25 + $0x8] sm:$0xff]
        %v6558 = vld [vmem:[#allocation25 + $0x10] sm:$0xff]
        %v6559 = vld [vmem:[#allocation25 + $0x18] sm:$0xff]
        %v6560 = vld [vmem:[#allocation25 + $0x20] sm:$0xff]
        %v6561 = vld [vmem:[#allocation25 + $0x28] sm:$0xff]
        %v6562 = vld [vmem:[#allocation25 + $0x30] sm:$0xff]
        %v6563 = vld [vmem:[#allocation25 + $0x38] sm:$0xff]
        %v6564 = vld [vmem:[#allocation25 + $0x40] sm:$0xff]
        %v6565 = vld [vmem:[#allocation25 + $0x48] sm:$0xff]
        %v6566 = vld [vmem:[#allocation25 + $0x50] sm:$0xff]
        %v6567 = vld [vmem:[#allocation25 + $0x58] sm:$0xff]
        %v6568 = vld [vmem:[#allocation25 + $0x60] sm:$0xff]
        %v6569 = vld [vmem:[#allocation25 + $0x68] sm:$0xff]
        %v6570 = vld [vmem:[#allocation25 + $0x70] sm:$0xff]
        %v6571 = vld [vmem:[#allocation25 + $0x78] sm:$0xff]
        %v6572 = vld [vmem:[#allocation2] sm:$0x1]
        %v6573 = vld [vmem:[#allocation26] sm:$0xff]
        %v6574 = vld [vmem:[#allocation26 + $0x8] sm:$0xff]
        %v6575 = vld [vmem:[#allocation26 + $0x10] sm:$0xff]
        %v6576 = vld [vmem:[#allocation26 + $0x18] sm:$0xff]
        %v6577 = vld [vmem:[#allocation26 + $0x20] sm:$0xff]
        %v6578 = vld [vmem:[#allocation26 + $0x28] sm:$0xff]
        %v6579 = vld [vmem:[#allocation26 + $0x30] sm:$0xff]
        %v6580 = vld [vmem:[#allocation26 + $0x38] sm:$0xff]
        %v6581 = vld [vmem:[#allocation26 + $0x40] sm:$0xff]
        %v6582 = vld [vmem:[#allocation26 + $0x48] sm:$0xff]
        %v6583 = vld [vmem:[#allocation26 + $0x50] sm:$0xff]
        %v6584 = vld [vmem:[#allocation26 + $0x58] sm:$0xff]
        %v6585 = vld [vmem:[#allocation26 + $0x60] sm:$0xff]
        %v6586 = vld [vmem:[#allocation26 + $0x68] sm:$0xff]
        %v6587 = vld [vmem:[#allocation26 + $0x70] sm:$0xff]
        %v6588 = vld [vmem:[#allocation26 + $0x78] sm:$0xff]
        %v6589 = vld [vmem:[#allocation28] sm:$0x1]
        %v6590 = vld [vmem:[#allocation29] sm:$0xff]
        %v6591 = vld [vmem:[#allocation29 + $0x8] sm:$0xff]
        %v6592 = vld [vmem:[#allocation29 + $0x10] sm:$0xff]
        %v6593 = vld [vmem:[#allocation29 + $0x18] sm:$0xff]
        %v6594 = vld [vmem:[#allocation29 + $0x20] sm:$0xff]
        %v6595 = vld [vmem:[#allocation29 + $0x28] sm:$0xff]
        %v6596 = vld [vmem:[#allocation29 + $0x30] sm:$0xff]
        %v6597 = vld [vmem:[#allocation29 + $0x38] sm:$0xff]
        %v6598 = vld [vmem:[#allocation29 + $0x40] sm:$0xff]
        %v6599 = vld [vmem:[#allocation29 + $0x48] sm:$0xff]
        %v6600 = vld [vmem:[#allocation29 + $0x50] sm:$0xff]
        %v6601 = vld [vmem:[#allocation29 + $0x58] sm:$0xff]
        %v6602 = vld [vmem:[#allocation29 + $0x60] sm:$0xff]
        %v6603 = vld [vmem:[#allocation29 + $0x68] sm:$0xff]
        %v6604 = vld [vmem:[#allocation29 + $0x70] sm:$0xff]
        %v6605 = vld [vmem:[#allocation29 + $0x78] sm:$0xff]
        %v6606 = vld [vmem:[#allocation31] sm:$0x1]
        %v6608 = vlaneseq
        %v6609 = vshrl.u32 %v6608, 7
        %v6610 = vsub.s32 0, %v6609
        %v6611 = vrot.slane %v6572, %v6610
        %6613 = vmatprep.subr.mxu0 0.0
        %6614 = vmatpush1.msra.mxu0 %v6556
        %6615 = vmatprep.subr.mxu0 0.0
        %6616 = vmatpush1.msra.mxu0 %v6557
        %6617 = vmatprep.subr.mxu0 0.0
        %6618 = vmatpush1.msra.mxu0 %v6558
        %6619 = vmatprep.subr.mxu0 0.0
        %6620 = vmatpush1.msra.mxu0 %v6559
        %6621 = vmatprep.subr.mxu0 0.0
        %6622 = vmatpush1.msra.mxu0 %v6560
        %6623 = vmatprep.subr.mxu0 0.0
        %6624 = vmatpush1.msra.mxu0 %v6561
        %6625 = vmatprep.subr.mxu0 0.0
        %6626 = vmatpush1.msra.mxu0 %v6562
        %6627 = vmatprep.subr.mxu0 0.0
        %6628 = vmatpush1.msra.mxu0 %v6563
        %6629 = vmatprep.subr.mxu0 0.0
        %6630 = vmatpush1.msra.mxu0 %v6564
        %6631 = vmatprep.subr.mxu0 0.0
        %6632 = vmatpush1.msra.mxu0 %v6565
        %6633 = vmatprep.subr.mxu0 0.0
        %6634 = vmatpush1.msra.mxu0 %v6566
        %6635 = vmatprep.subr.mxu0 0.0
        %6636 = vmatpush1.msra.mxu0 %v6567
        %6637 = vmatprep.subr.mxu0 0.0
        %6638 = vmatpush1.msra.mxu0 %v6568
        %6639 = vmatprep.subr.mxu0 0.0
        %6640 = vmatpush1.msra.mxu0 %v6569
        %6641 = vmatprep.subr.mxu0 0.0
        %6642 = vmatpush1.msra.mxu0 %v6570
        %6643 = vmatprep.subr.mxu0 0.0
        %6644 = vmatpush1.msra.mxu0 %v6571
        %6645 = vmatprep.subr.mxu0 0.0
        %6646 = vmatpush1.msra.mxu0 0.0
        %6647 = vmatprep.subr.mxu0 0.0
        %6648 = vmatpush1.msra.mxu0 0.0
        %6649 = vmatprep.subr.mxu0 0.0
        %6650 = vmatpush1.msra.mxu0 0.0
        %6651 = vmatprep.subr.mxu0 0.0
        %6652 = vmatpush1.msra.mxu0 0.0
        %6653 = vmatprep.subr.mxu0 0.0
        %6654 = vmatpush1.msra.mxu0 0.0
        %6655 = vmatprep.subr.mxu0 0.0
        %6656 = vmatpush1.msra.mxu0 0.0
        %6657 = vmatprep.subr.mxu0 0.0
        %6658 = vmatpush1.msra.mxu0 0.0
        %6659 = vmatprep.subr.mxu0 0.0
        %6660 = vmatpush1.msra.mxu0 0.0
        %6661 = vmatprep.subr.mxu0 0.0
        %6662 = vmatpush1.msra.mxu0 0.0
        %6663 = vmatprep.subr.mxu0 0.0
        %6664 = vmatpush1.msra.mxu0 0.0
        %6665 = vmatprep.subr.mxu0 0.0
        %6666 = vmatpush1.msra.mxu0 0.0
        %6667 = vmatprep.subr.mxu0 0.0
        %6668 = vmatpush1.msra.mxu0 0.0
        %6669 = vmatprep.subr.mxu0 0.0
        %6670 = vmatpush1.msra.mxu0 0.0
        %6671 = vmatprep.subr.mxu0 0.0
        %6672 = vmatpush1.msra.mxu0 0.0
        %6673 = vmatprep.subr.mxu0 0.0
        %6674 = vmatpush1.msra.mxu0 0.0
        %6675 = vmatprep.subr.mxu0 0.0
        %6676 = vmatpush1.msra.mxu0 0.0
        %6677 = vmatprep.mubr.f32.mxu0 0.0
        %6678 = vmatmul.mubr.f32.gmra.mrb[0].mxu0 %v6555
        %v6679 = vpop.f32.mrb[0].mxu0
        %v6680 = vadd.f32 %v6611, %v6679
        %v6681 = vpop.f32.mrb[0].mxu0
        %6682 = vdwg.mxu0
        %vm6683 = vcmask 3072
        %v6684 = vsel %vm6683, %v6680, -inf
        %v6685 = vrot.slane %v6684, 4
        %v6686 = vmax.f32 %v6684, %v6685
        %v6687 = vrot.slane %v6686, 2
        %v6688 = vmax.f32 %v6686, %v6687
        %v6689 = vrot.slane %v6688, 1
        %v6690 = vmax.f32 %v6688, %v6689
        %v6691 = vsub.f32 %v6680, %v6690
        %v6692 = vmul.f32 %v6691, 1.442695
        %v6693 = vpow.pop %v6692
        %v6694 = vsel %vm6683, %v6693, 0.0
        %v6695 = vrot.slane %v6694, 4
        %v6696 = vadd.f32 %v6694, %v6695
        %v6697 = vrot.slane %v6696, 2
        %v6698 = vadd.f32 %v6696, %v6697
        %v6699 = vrot.slane %v6698, 1
        %v6700 = vadd.f32 %v6698, %v6699
        %v6701 = vrcp.pop %v6700
        %v6702 = vmul.f32 %v6693, %v6701
        %6704 = vset.pattern.permute.xlu0 0
        %6705 = vperm.xlu0 %6704, %v6702
        %v6706 = vpop.permute.xlu0 %6705
        %v6708 = vmul.f32 %v6555, %v6706
        %v6709 = vsel %vm5594, %v6708, 0.0
        %v6710 = vrot.slane %v6709, 4
        %v6711 = vadd.f32 %v6709, %v6710
        %v6712 = vrot.slane %v6711, 2
        %v6713 = vadd.f32 %v6711, %v6712
        %v6714 = vrot.slane %v6713, 1
        %v6715 = vadd.f32 %v6713, %v6714
        %6716 = vmatprep.subr.mxu0 0.0
        %6717 = vmatpush1.msra.mxu0 %v6573
        %6718 = vmatprep.subr.mxu0 0.0
        %6719 = vmatpush1.msra.mxu0 %v6574
        %6720 = vmatprep.subr.mxu0 0.0
        %6721 = vmatpush1.msra.mxu0 %v6575
        %6722 = vmatprep.subr.mxu0 0.0
        %6723 = vmatpush1.msra.mxu0 %v6576
        %6724 = vmatprep.subr.mxu0 0.0
        %6725 = vmatpush1.msra.mxu0 %v6577
        %6726 = vmatprep.subr.mxu0 0.0
        %6727 = vmatpush1.msra.mxu0 %v6578
        %6728 = vmatprep.subr.mxu0 0.0
        %6729 = vmatpush1.msra.mxu0 %v6579
        %6730 = vmatprep.subr.mxu0 0.0
        %6731 = vmatpush1.msra.mxu0 %v6580
        %6732 = vmatprep.subr.mxu0 0.0
        %6733 = vmatpush1.msra.mxu0 %v6581
        %6734 = vmatprep.subr.mxu0 0.0
        %6735 = vmatpush1.msra.mxu0 %v6582
        %6736 = vmatprep.subr.mxu0 0.0
        %6737 = vmatpush1.msra.mxu0 %v6583
        %6738 = vmatprep.subr.mxu0 0.0
        %6739 = vmatpush1.msra.mxu0 %v6584
        %6740 = vmatprep.subr.mxu0 0.0
        %6741 = vmatpush1.msra.mxu0 %v6585
        %6742 = vmatprep.subr.mxu0 0.0
        %6743 = vmatpush1.msra.mxu0 %v6586
        %6744 = vmatprep.subr.mxu0 0.0
        %6745 = vmatpush1.msra.mxu0 %v6587
        %6746 = vmatprep.subr.mxu0 0.0
        %6747 = vmatpush1.msra.mxu0 %v6588
        %6748 = vmatprep.subr.mxu0 0.0
        %6749 = vmatpush1.msra.mxu0 0.0
        %6750 = vmatprep.subr.mxu0 0.0
        %6751 = vmatpush1.msra.mxu0 0.0
        %6752 = vmatprep.subr.mxu0 0.0
        %6753 = vmatpush1.msra.mxu0 0.0
        %6754 = vmatprep.subr.mxu0 0.0
        %6755 = vmatpush1.msra.mxu0 0.0
        %6756 = vmatprep.subr.mxu0 0.0
        %6757 = vmatpush1.msra.mxu0 0.0
        %6758 = vmatprep.subr.mxu0 0.0
        %6759 = vmatpush1.msra.mxu0 0.0
        %6760 = vmatprep.subr.mxu0 0.0
        %6761 = vmatpush1.msra.mxu0 0.0
        %6762 = vmatprep.subr.mxu0 0.0
        %6763 = vmatpush1.msra.mxu0 0.0
        %6764 = vmatprep.subr.mxu0 0.0
        %6765 = vmatpush1.msra.mxu0 0.0
        %6766 = vmatprep.subr.mxu0 0.0
        %6767 = vmatpush1.msra.mxu0 0.0
        %6768 = vmatprep.subr.mxu0 0.0
        %6769 = vmatpush1.msra.mxu0 0.0
        %6770 = vmatprep.subr.mxu0 0.0
        %6771 = vmatpush1.msra.mxu0 0.0
        %6772 = vmatprep.subr.mxu0 0.0
        %6773 = vmatpush1.msra.mxu0 0.0
        %6774 = vmatprep.subr.mxu0 0.0
        %6775 = vmatpush1.msra.mxu0 0.0
        %6776 = vmatprep.subr.mxu0 0.0
        %6777 = vmatpush1.msra.mxu0 0.0
        %6778 = vmatprep.subr.mxu0 0.0
        %6779 = vmatpush1.msra.mxu0 0.0
        %6780 = vmatprep.mubr.f32.mxu0 0.0
        %6781 = vmatmul.mubr.f32.gmra.mrb[0].mxu0 %v6715
        %v6782 = vpop.f32.mrb[0].mxu0
        %v6783 = vadd.f32 %v6589, %v6782
        %v6784 = vpop.f32.mrb[0].mxu0
        %6785 = vdwg.mxu0
        %v6786 = vtanh.pop %v6783
        %6787 = vmatprep.subr.mxu0 0.0
        %6788 = vmatpush1.msra.mxu0 %v6590
        %6789 = vmatprep.subr.mxu0 0.0
        %6790 = vmatpush1.msra.mxu0 %v6591
        %6791 = vmatprep.subr.mxu0 0.0
        %6792 = vmatpush1.msra.mxu0 %v6592
        %6793 = vmatprep.subr.mxu0 0.0
        %6794 = vmatpush1.msra.mxu0 %v6593
        %6795 = vmatprep.subr.mxu0 0.0
        %6796 = vmatpush1.msra.mxu0 %v6594
        %6797 = vmatprep.subr.mxu0 0.0
        %6798 = vmatpush1.msra.mxu0 %v6595
        %6799 = vmatprep.subr.mxu0 0.0
        %6800 = vmatpush1.msra.mxu0 %v6596
        %6801 = vmatprep.subr.mxu0 0.0
        %6802 = vmatpush1.msra.mxu0 %v6597
        %6803 = vmatprep.subr.mxu0 0.0
        %6804 = vmatpush1.msra.mxu0 %v6598
        %6805 = vmatprep.subr.mxu0 0.0
        %6806 = vmatpush1.msra.mxu0 %v6599
        %6807 = vmatprep.subr.mxu0 0.0
        %6808 = vmatpush1.msra.mxu0 %v6600
        %6809 = vmatprep.subr.mxu0 0.0
        %6810 = vmatpush1.msra.mxu0 %v6601
        %6811 = vmatprep.subr.mxu0 0.0
        %6812 = vmatpush1.msra.mxu0 %v6602
        %6813 = vmatprep.subr.mxu0 0.0
        %6814 = vmatpush1.msra.mxu0 %v6603
        %6815 = vmatprep.subr.mxu0 0.0
        %6816 = vmatpush1.msra.mxu0 %v6604
        %6817 = vmatprep.subr.mxu0 0.0
        %6818 = vmatpush1.msra.mxu0 %v6605
        %6819 = vmatprep.subr.mxu0 0.0
        %6820 = vmatpush1.msra.mxu0 0.0
        %6821 = vmatprep.subr.mxu0 0.0
        %6822 = vmatpush1.msra.mxu0 0.0
        %6823 = vmatprep.subr.mxu0 0.0
        %6824 = vmatpush1.msra.mxu0 0.0
        %6825 = vmatprep.subr.mxu0 0.0
        %6826 = vmatpush1.msra.mxu0 0.0
        %6827 = vmatprep.subr.mxu0 0.0
        %6828 = vmatpush1.msra.mxu0 0.0
        %6829 = vmatprep.subr.mxu0 0.0
        %6830 = vmatpush1.msra.mxu0 0.0
        %6831 = vmatprep.subr.mxu0 0.0
        %6832 = vmatpush1.msra.mxu0 0.0
        %6833 = vmatprep.subr.mxu0 0.0
        %6834 = vmatpush1.msra.mxu0 0.0
        %6835 = vmatprep.subr.mxu0 0.0
        %6836 = vmatpush1.msra.mxu0 0.0
        %6837 = vmatprep.subr.mxu0 0.0
        %6838 = vmatpush1.msra.mxu0 0.0
        %6839 = vmatprep.subr.mxu0 0.0
        %6840 = vmatpush1.msra.mxu0 0.0
        %6841 = vmatprep.subr.mxu0 0.0
        %6842 = vmatpush1.msra.mxu0 0.0
        %6843 = vmatprep.subr.mxu0 0.0
        %6844 = vmatpush1.msra.mxu0 0.0
        %6845 = vmatprep.subr.mxu0 0.0
        %6846 = vmatpush1.msra.mxu0 0.0
        %6847 = vmatprep.subr.mxu0 0.0
        %6848 = vmatpush1.msra.mxu0 0.0
        %6849 = vmatprep.subr.mxu0 0.0
        %6850 = vmatpush1.msra.mxu0 0.0
        %6851 = vmatprep.mubr.f32.mxu0 0.0
        %6852 = vmatmul.mubr.f32.gmra.mrb[0].mxu0 %v6715
        %v6853 = vpop.f32.mrb[0].mxu0
        %v6854 = vadd.f32 %v6606, %v6853
        %v6855 = vpop.f32.mrb[0].mxu0
        %6856 = vdwg.mxu0
        %v6857 = vtanh.pop %v6854
        %v6859 = vrot.slane %v6857, 7
        %v6861 = vsel %vm2474, %v6786, %v6859
        %6862 = vst [vmem:[%s1316] sm:$0x3] %v6861
        %p6863 = scmp.lt.s32.totalorder %s94, 1
        %s6864 = scalar_select %p6863, %s94, 1
        %s6865 = smul.addr %s6864, 2
        %s6866 = scalar_lea.vmem %s71, %s6865
        // Predicated region
        $region237: #{_lambda_.1} parent=159 // pred_check
          %p6867 = pneg %p852
        $region238: #{_lambda_.1} parent=159 // pred_check_branch
          %6869 = sbr.rel (%p6867) target = $region240
        $region239: #{_lambda_.1} parent=159 // pred_region
          _
        $region240: #{_lambda_.1} parent=159 // pred_fallthru
          _
      $region160: #{_lambda_.1} parent=5 // pred_fallthru
        _
      %p6870 = scmp.le.s32.totalorder 2, %s89
      // Predicated region
      $region241: #{_lambda_.1} parent=5 // pred_check
        %p6871 = pneg %p6870
      $region242: #{_lambda_.1} parent=5 // pred_check_branch
        %6873 = sbr.rel (%p6871) target = $region244
      $region243: #{_lambda_.1} parent=5 // pred_region
        %s6874 = ssub.s32 %s89, 2
        // Predicated region
        $region245: #{_lambda_.1} parent=243 // pred_check
          %p6875 = pneg %p858
        $region246: #{_lambda_.1} parent=243 // pred_check_branch
          %6877 = sbr.rel (%p6875) target = $region248
        $region247: #{_lambda_.1} parent=243 // pred_region
          %p6878 = scmp.lt.s32.totalorder %s95, 1
          %s6879 = scalar_select %p6878, %s95, 1
          %s6880 = smul.addr %s6879, 2
          %s6881 = scalar_lea.vmem %s71, %s6880
        $region248: #{_lambda_.1} parent=243 // pred_fallthru
          _
      $region244: #{_lambda_.1} parent=5 // pred_fallthru
        _
    $region6: #{_lambda_.1} parent=1 // loop_footer
      %s93 = sadd.s32 1, %s89
    $region7: #{_lambda_.1} parent=1 // loop_footer_branch
      %88 = sbr.rel target = $region3
    $region8: #{_lambda_.1} parent=1 // loop_exit
      _
    %6882 = vsyncpa [#allocation4], 1
    %s6883 = scalar_lea.sflag [#allocation4], 1
    %6884 = vsyncpa %s6883, 1
    %6885 = vsyncpa [#allocation6], 1
    %6886 = vsyncpa [#allocation9], 1
    %6887 = vsyncpa [#allocation12], 1
    %6888 = vsyncpa [#allocation15], 1
    %6889 = vsyncpa [#allocation18], 1
    %6890 = vsyncpa [#allocation21], 1
    %6891 = vsyncpa [#allocation24], 1
    %6892 = vsyncpa [#allocation27], 1
    %6893 = vsyncpa [#allocation30], 1

</llo_original>
